<compile_context>
chip_gen: v7x
topology: tpu7x:2x2x1
jax: 0.10.0
libtpu: 0.0.40
codegen_flags: <defaults>
</compile_context>

<pallas_src>
import numpy as np
import jax
import jax.numpy as jnp
from jax import lax
from jax.experimental import pallas as pl
from jax.experimental.pallas import tpu as pltpu

BN_EPS = 1e-5

_PHASES = ((0, 0), (0, 1), (1, 0), (1, 1))
# ConvTranspose2d(k=4, s=2, p=1) taps per output parity (same table for H and W):
#   out[2a + py] += x[a + dy] @ W[ky]   for (dy, ky) in _TAPS[py]
_TAPS = {0: ((-1, 3), (0, 1)), 1: ((0, 2), (1, 0))}
_OFFSETS = tuple((dy, dx) for dy in (-1, 0, 1) for dx in (-1, 0, 1))
_OFF_IDX = {o: i for i, o in enumerate(_OFFSETS)}


def _full_spec(shape):
    nd = len(shape)
    return pl.BlockSpec(shape, lambda i, _nd=nd: (0,) * _nd)


def _row_mean(x):
    # Mean over rows via a ones-vector matmul (MXU) -> (1, C).  Avoids any
    # cross-sublane reduction / reshape inside the kernel.
    ones = jnp.ones((1, x.shape[0]), jnp.float32)
    return jnp.dot(ones, x, preferred_element_type=jnp.float32) * (1.0 / x.shape[0])


def _batchnorm_rows(x, gamma, beta):
    # Training-mode BatchNorm over every row (= every (n, h, w) position).
    m = _row_mean(x)
    v = _row_mean((x - m) ** 2)
    return (x - m) * gamma * lax.rsqrt(v + BN_EPS) + beta


# ----------------------------------------------------------------------------
# Fused generator kernel
# ----------------------------------------------------------------------------
def _generator_kernel(a_ref, w1_ref, g1_ref, b1_ref,
                      w2_ref, g2_ref, b2_ref, w3_ref,
                      gl2_ref, gl3_ref, out_ref, h2_ref):
    f32 = jnp.float32

    # ---- layer 1: ConvT(L->C1, k=k1, s=1, p=0) as ONE matmul, + BN + ReLU ----
    # a_ref: (R1, k1*k1*L) block-diagonal latent expansion, rows = (n, i, j)
    # w1_ref: (k1*k1*L, C1p)
    h1 = jnp.dot(a_ref[...], w1_ref[...], preferred_element_type=f32)    # (R1, C1p)
    h1 = jnp.maximum(_batchnorm_rows(h1, g1_ref[...], b1_ref[...]), 0.0)
    r1 = h1.shape[0]
    c2p = w2_ref.shape[3]

    # ---- layer 2: ConvT(C1->C2, k=4, s=2, p=1), phase-decomposed ----------
    # gl2_ref[o]: (R1, R1) constant 0/1 gather "shift by (dy,dx), zero at pad"
    for p_idx, (py, px) in enumerate(_PHASES):
        acc = jnp.zeros((r1, c2p), f32)
        for dy, ky in _TAPS[py]:
            for dx, kx in _TAPS[px]:
                src = jnp.dot(gl2_ref[_OFF_IDX[(dy, dx)]], h1,
                              preferred_element_type=f32)                # (R1, C1p)
                acc = acc + jnp.dot(src, w2_ref[ky, kx],
                                    preferred_element_type=f32)          # (R1, C2p)
        h2_ref[pl.ds(p_idx * r1, r1), :] = acc                           # stack phases

    # BN over all 4 phases jointly (rows == every output position), + ReLU.
    h2 = jnp.maximum(_batchnorm_rows(h2_ref[...], g2_ref[...], b2_ref[...]), 0.0)

    # ---- layer 3: ConvT(C2->Cimg, k=4, s=2, p=1) + Tanh, phase-major out ---
    # gl3_ref[o]: (R3, 4*R1) constant gather that ALSO folds in the
    # phase-stack -> NHWC interleave of layer 2's output.
    r3 = gl3_ref.shape[1]
    c3p = w3_ref.shape[3]
    for p_idx, (py, px) in enumerate(_PHASES):
        acc = jnp.zeros((r3, c3p), f32)
        for dy, ky in _TAPS[py]:
            for dx, kx in _TAPS[px]:
                src = jnp.dot(gl3_ref[_OFF_IDX[(dy, dx)]], h2,
                              preferred_element_type=f32)                # (R3, C2p)
                acc = acc + jnp.dot(src, w3_ref[ky, kx],
                                    preferred_element_type=f32)          # (R3, C3p)
        out_ref[p_idx, :, :] = jnp.tanh(acc)


# ----------------------------------------------------------------------------
# Module wrapper
# ----------------------------------------------------------------------------
def _pad_to(arr, axis, target):
    pad = [(0, 0)] * arr.ndim
    pad[axis] = (0, target - arr.shape[axis])
    return jnp.pad(arr, pad)


def _lane_pad(c):
    return max(128, ((c + 127) // 128) * 128)


class GeneratorConvPallas:
    """Pallas re-implementation of models/GAN.py::Generator_Conv.forward."""

    def __init__(self, input_node_size, output_shape,
                 hidden_node_size=256, hidden_node_num=3, *, key):
        del hidden_node_size, hidden_node_num          # unused by the torch module too
        num_channels, width, _ = output_shape
        assert width <= 32 and width % 4 == 0
        self.input_node_size = input_node_size
        self.output_shape = output_shape
        self.num_channels = num_channels
        self.width = width
        self.k1 = width // 4                           # = layer_channels[1]
        self.c1 = width * 8
        self.c2 = width * 4
        self.c1p = _lane_pad(self.c1)
        self.c2p = _lane_pad(self.c2)
        self.c3p = _lane_pad(num_channels)

        ks = jax.random.split(key, 7)
        L, c1, c2, k1 = input_node_size, self.c1, self.c2, self.k1
        # PyTorch ConvTranspose2d weight layout: (C_in, C_out, kH, kW)
        self.W1 = 0.05 * jax.random.normal(ks[0], (L, c1, k1, k1), jnp.float32)
        self.W2 = 0.02 * jax.random.normal(ks[1], (c1, c2, 4, 4), jnp.float32)
        self.W3 = 0.02 * jax.random.normal(ks[2], (c2, num_channels, 4, 4), jnp.float32)
        # BatchNorm affine params (perturbed from 1/0 to exercise them)
        self.g1 = 1.0 + 0.1 * jax.random.normal(ks[3], (c1,), jnp.float32)
        self.b1 = 0.1 * jax.random.normal(ks[4], (c1,), jnp.float32)
        self.g2 = 1.0 + 0.1 * jax.random.normal(ks[5], (c2,), jnp.float32)
        self.b2 = 0.1 * jax.random.normal(ks[6], (c2,), jnp.float32)

        # ---- prearranged, lane-padded kernel operands (computed ONCE) ----
        w1r = jnp.transpose(self.W1, (2, 3, 0, 1)).reshape(k1 * k1 * L, c1)
        self.W1r = _pad_to(w1r, 1, self.c1p)                          # (k1*k1*L, C1p)
        w2r = jnp.transpose(self.W2, (2, 3, 0, 1))                    # (4,4,C1,C2)
        self.W2r = _pad_to(_pad_to(w2r, 2, self.c1p), 3, self.c2p)
        w3r = jnp.transpose(self.W3, (2, 3, 0, 1))                    # (4,4,C2,Cimg)
        self.W3r = _pad_to(_pad_to(w3r, 2, self.c2p), 3, self.c3p)
        # Zero padding for gamma/beta keeps padded channels exactly 0 through BN.
        self.g1p = _pad_to(self.g1.reshape(1, -1), 1, self.c1p)
        self.b1p = _pad_to(self.b1.reshape(1, -1), 1, self.c1p)
        self.g2p = _pad_to(self.g2.reshape(1, -1), 1, self.c2p)
        self.b2p = _pad_to(self.b2.reshape(1, -1), 1, self.c2p)

        self._fwd = jax.jit(self._forward)

    # ----- constant 0/1 row-gather matrices (trace-time numpy constants) -----
    @staticmethod
    def _gather_l2(n, h, w, dy, dx):
        # rows (n, a, b) on h×w grid <- rows (n, a+dy, b+dx); zero row == pad.
        r = n * h * w
        g = np.zeros((r, r), np.float32)
        for nn in range(n):
            for a in range(h):
                for b in range(w):
                    i, j = a + dy, b + dx
                    if 0 <= i < h and 0 <= j < w:
                        g[(nn * h + a) * w + b, (nn * h + i) * w + j] = 1.0
        return g

    @staticmethod
    def _gather_l3(n, h, w, dy, dx):
        # Target rows (n, a', b') on the h×w grid; source = stacked layer-2
        # phase blocks, rows ordered (p = py*2+px, n, a, b) on (h//2)×(w//2).
        hs, ws = h // 2, w // 2
        g = np.zeros((n * h * w, 4 * n * hs * ws), np.float32)
        for nn in range(n):
            for ap in range(h):
                for bp in range(w):
                    hh, ww = ap + dy, bp + dx
                    if 0 <= hh < h and 0 <= ww < w:
                        p = (hh % 2) * 2 + (ww % 2)
                        src = ((p * n + nn) * hs + hh // 2) * ws + ww // 2
                        g[(nn * h + ap) * w + bp, src] = 1.0
        return g

    def _forward(self, x):
        z = x.reshape(-1, self.input_node_size).astype(jnp.float32)
        n = z.shape[0]
        k1, latent = self.k1, self.input_node_size
        r1 = n * k1 * k1                  # rows per layer-1 / layer-2 phase block
        h2sp = 2 * k1                     # layer-2 output spatial == layer-3 input
        r3 = n * h2sp * h2sp              # rows per layer-3 phase block

        # Head LHS: block-diagonal expansion so ConvT1 is ONE matmul whose
        # result rows are ordered (n, i, j).
        eye = jnp.eye(k1 * k1, dtype=jnp.float32)
        a = jnp.einsum('nl,pq->npql', z, eye).reshape(r1, k1 * k1 * latent)

        # Constant gather matrices (compile-time constants under jit).
        # NOTE: at larger batch/width one would tile over N with a grid axis
        # instead of full-array specs; at these sizes everything fits VMEM.
        gl2 = jnp.asarray(np.stack(
            [self._gather_l2(n, k1, k1, dy, dx) for dy, dx in _OFFSETS]))
        gl3 = jnp.asarray(np.stack(
            [self._gather_l3(n, h2sp, h2sp, dy, dx) for dy, dx in _OFFSETS]))

        out_shape = (4, r3, self.c3p)
        operands = (a, self.W1r, self.g1p, self.b1p,
                    self.W2r, self.g2p, self.b2p, self.W3r, gl2, gl3)
        out = pl.pallas_call(
            _generator_kernel,
            out_shape=jax.ShapeDtypeStruct(out_shape, jnp.float32),
            grid=(1,),
            in_specs=[_full_spec(op.shape) for op in operands],
            out_specs=_full_spec(out_shape),
            scratch_shapes=[pltpu.VMEM((4 * r1, self.c2p), jnp.float32)],
            compiler_params=pltpu.CompilerParams(
                dimension_semantics=("arbitrary",)),
        )(*operands)

        # Phase-major (py, px, n, a, b, c) -> NCHW image, real channels only.
        o = out.reshape(2, 2, n, h2sp, h2sp, self.c3p)[..., :self.num_channels]
        o = jnp.transpose(o, (2, 5, 3, 0, 4, 1))            # (n, c, a, py, b, px)
        return o.reshape(n, self.num_channels, 2 * h2sp, 2 * h2sp)

    def __call__(self, x):
        return self._fwd(x)


# ----------------------------------------------------------------------------
# Pure-JAX reference (mirrors the PyTorch forward, training-mode BatchNorm)
# ----------------------------------------------------------------------------
def reference_forward(gen, z):
    x = z.reshape(-1, gen.input_node_size, 1, 1)

    def convT(x, W, stride, pad):
        k = W.shape[2]
        Wf = jnp.flip(W, axis=(2, 3)).transpose(1, 0, 2, 3)   # (C_out, C_in, k, k)
        return lax.conv_general_dilated(
            x, Wf, window_strides=(1, 1),
            padding=[(k - 1 - pad, k - 1 - pad)] * 2,
            lhs_dilation=(stride, stride),
            dimension_numbers=("NCHW", "OIHW", "NCHW"),
            precision=lax.Precision.HIGHEST)

    def bn(x, g, b):
        m = jnp.mean(x, axis=(0, 2, 3), keepdims=True)
        v = jnp.mean((x - m) ** 2, axis=(0, 2, 3), keepdims=True)
        return ((x - m) * lax.rsqrt(v + BN_EPS) * g.reshape(1, -1, 1, 1)
                + b.reshape(1, -1, 1, 1))

    h = jax.nn.relu(bn(convT(x, gen.W1, 1, 0), gen.g1, gen.b1))
    h = jax.nn.relu(bn(convT(h, gen.W2, 2, 1), gen.g2, gen.b2))
    return jnp.tanh(convT(h, gen.W3, 2, 1))


if __name__ == "__main__":
    key = jax.random.PRNGKey(0)
    k_model, k_z = jax.random.split(key)

    batch = 2
    latent = 32
    output_shape = (3, 16, 16)          # (num_channels, width, width), width <= 32

    gen = GeneratorConvPallas(latent, output_shape, key=k_model)
    z = jax.random.normal(k_z, (batch, latent), jnp.float32)

    out = jax.block_until_ready(gen(z))
    assert out.shape == (batch,) + output_shape, out.shape

    ref = jax.block_until_ready(reference_forward(gen, z))
    np.testing.assert_allclose(np.asarray(out), np.asarray(ref),
                               rtol=2e-3, atol=2e-3)
    print("KERNEL_OK")
</pallas_src>

<mosaic_0001>
module attributes {stable_mosaic.version = 11 : i64} {
  func.func @_generator_kernel(%arg0: i32, %arg1: memref<32x512xf32, #tpu.memory_space<vmem>>, %arg2: memref<512x128xf32, #tpu.memory_space<vmem>>, %arg3: memref<1x128xf32, #tpu.memory_space<vmem>>, %arg4: memref<1x128xf32, #tpu.memory_space<vmem>>, %arg5: memref<4x4x128x128xf32, #tpu.memory_space<vmem>>, %arg6: memref<1x128xf32, #tpu.memory_space<vmem>>, %arg7: memref<1x128xf32, #tpu.memory_space<vmem>>, %arg8: memref<4x4x128x128xf32, #tpu.memory_space<vmem>>, %arg9: memref<9x32x32xf32, #tpu.memory_space<vmem>>, %arg10: memref<9x128x128xf32, #tpu.memory_space<vmem>>, %arg11: memref<4x128x128xf32, #tpu.memory_space<vmem>>, %arg12: memref<128x128xf32, #tpu.memory_space<vmem>>) attributes {dimension_semantics = [#tpu.dimension_semantics<arbitrary>], iteration_bounds = array<i64: 1>, scalar_prefetch = 0 : i64, scratch_operands = 1 : i64, tpu.core_type = #tpu.core_type<tc>, window_params = [{pipeline_mode = #tpu.pipeline_mode<synchronous>, transform_indices = @transform_0, window_bounds = array<i64: 32, 512>}, {pipeline_mode = #tpu.pipeline_mode<synchronous>, transform_indices = @transform_1, window_bounds = array<i64: 512, 128>}, {pipeline_mode = #tpu.pipeline_mode<synchronous>, transform_indices = @transform_2, window_bounds = array<i64: 1, 128>}, {pipeline_mode = #tpu.pipeline_mode<synchronous>, transform_indices = @transform_3, window_bounds = array<i64: 1, 128>}, {pipeline_mode = #tpu.pipeline_mode<synchronous>, transform_indices = @transform_4, window_bounds = array<i64: 4, 4, 128, 128>}, {pipeline_mode = #tpu.pipeline_mode<synchronous>, transform_indices = @transform_5, window_bounds = array<i64: 1, 128>}, {pipeline_mode = #tpu.pipeline_mode<synchronous>, transform_indices = @transform_6, window_bounds = array<i64: 1, 128>}, {pipeline_mode = #tpu.pipeline_mode<synchronous>, transform_indices = @transform_7, window_bounds = array<i64: 4, 4, 128, 128>}, {pipeline_mode = #tpu.pipeline_mode<synchronous>, transform_indices = @transform_8, window_bounds = array<i64: 9, 32, 32>}, {pipeline_mode = #tpu.pipeline_mode<synchronous>, transform_indices = @transform_9, window_bounds = array<i64: 9, 128, 128>}, {pipeline_mode = #tpu.pipeline_mode<synchronous>, transform_indices = @transform_10, window_bounds = array<i64: 4, 128, 128>}]} {
    %c0 = arith.constant 0 : index
    %c0_0 = arith.constant 0 : index
    %0 = vector.load %arg1[%c0, %c0_0] : memref<32x512xf32, #tpu.memory_space<vmem>>, vector<32x512xf32>
    %c0_1 = arith.constant 0 : index
    %c0_2 = arith.constant 0 : index
    %1 = vector.load %arg2[%c0_1, %c0_2] : memref<512x128xf32, #tpu.memory_space<vmem>>, vector<512x128xf32>
    %cst = arith.constant dense<0.000000e+00> : vector<32x128xf32>
    %2 = tpu.matmul %0, %1, %cst {dimension_numbers = #tpu.dot_dimension_numbers<[1], [0], [0], [1], [0, 0, 1, 1], [], []>} : vector<32x512xf32>, vector<512x128xf32>, vector<32x128xf32> -> vector<32x128xf32>
    %c0_3 = arith.constant 0 : index
    %c0_4 = arith.constant 0 : index
    %3 = vector.load %arg3[%c0_3, %c0_4] : memref<1x128xf32, #tpu.memory_space<vmem>>, vector<1x128xf32>
    %c0_5 = arith.constant 0 : index
    %c0_6 = arith.constant 0 : index
    %4 = vector.load %arg4[%c0_5, %c0_6] : memref<1x128xf32, #tpu.memory_space<vmem>>, vector<1x128xf32>
    %cst_7 = arith.constant 1.000000e+00 : f32
    %5 = vector.broadcast %cst_7 : f32 to vector<1x32xf32>
    %cst_8 = arith.constant dense<0.000000e+00> : vector<1x128xf32>
    %6 = tpu.matmul %5, %2, %cst_8 {dimension_numbers = #tpu.dot_dimension_numbers<[1], [0], [0], [1], [0, 0, 1, 1], [], []>} : vector<1x32xf32>, vector<32x128xf32>, vector<1x128xf32> -> vector<1x128xf32>
    %cst_9 = arith.constant 3.125000e-02 : f32
    %7 = vector.broadcast %cst_9 : f32 to vector<1x128xf32>
    %8 = arith.mulf %6, %7 : vector<1x128xf32>
    %9 = vector.broadcast %8 : vector<1x128xf32> to vector<32x128xf32>
    %10 = arith.subf %2, %9 : vector<32x128xf32>
    %11 = arith.mulf %10, %10 : vector<32x128xf32>
    %cst_10 = arith.constant 1.000000e+00 : f32
    %12 = vector.broadcast %cst_10 : f32 to vector<1x32xf32>
    %cst_11 = arith.constant dense<0.000000e+00> : vector<1x128xf32>
    %13 = tpu.matmul %12, %11, %cst_11 {dimension_numbers = #tpu.dot_dimension_numbers<[1], [0], [0], [1], [0, 0, 1, 1], [], []>} : vector<1x32xf32>, vector<32x128xf32>, vector<1x128xf32> -> vector<1x128xf32>
    %cst_12 = arith.constant 3.125000e-02 : f32
    %14 = vector.broadcast %cst_12 : f32 to vector<1x128xf32>
    %15 = arith.mulf %13, %14 : vector<1x128xf32>
    %16 = vector.broadcast %8 : vector<1x128xf32> to vector<32x128xf32>
    %17 = arith.subf %2, %16 : vector<32x128xf32>
    %18 = vector.broadcast %3 : vector<1x128xf32> to vector<32x128xf32>
    %19 = arith.mulf %17, %18 : vector<32x128xf32>
    %cst_13 = arith.constant 9.99999974E-6 : f32
    %20 = vector.broadcast %cst_13 : f32 to vector<1x128xf32>
    %21 = arith.addf %15, %20 : vector<1x128xf32>
    %22 = math.rsqrt %21 : vector<1x128xf32>
    %23 = vector.broadcast %22 : vector<1x128xf32> to vector<32x128xf32>
    %24 = arith.mulf %19, %23 : vector<32x128xf32>
    %25 = vector.broadcast %4 : vector<1x128xf32> to vector<32x128xf32>
    %26 = arith.addf %24, %25 : vector<32x128xf32>
    %cst_14 = arith.constant 0.000000e+00 : f32
    %27 = vector.broadcast %cst_14 : f32 to vector<32x128xf32>
    %28 = arith.maximumf %26, %27 : vector<32x128xf32>
    %cst_15 = arith.constant 0.000000e+00 : f32
    %29 = vector.broadcast %cst_15 : f32 to vector<32x128xf32>
    %c0_16 = arith.constant 0 : index
    %c0_17 = arith.constant 0 : index
    %c0_18 = arith.constant 0 : index
    %30 = vector.load %arg9[%c0_16, %c0_17, %c0_18] : memref<9x32x32xf32, #tpu.memory_space<vmem>>, vector<1x32x32xf32>
    %31 = vector.shape_cast %30 : vector<1x32x32xf32> to vector<32x32xf32>
    %cst_19 = arith.constant dense<0.000000e+00> : vector<32x128xf32>
    %32 = tpu.matmul %31, %28, %cst_19 {dimension_numbers = #tpu.dot_dimension_numbers<[1], [0], [0], [1], [0, 0, 1, 1], [], []>} : vector<32x32xf32>, vector<32x128xf32>, vector<32x128xf32> -> vector<32x128xf32>
    %c3 = arith.constant 3 : index
    %c3_20 = arith.constant 3 : index
    %c0_21 = arith.constant 0 : index
    %c0_22 = arith.constant 0 : index
    %33 = vector.load %arg5[%c3, %c3_20, %c0_21, %c0_22] : memref<4x4x128x128xf32, #tpu.memory_space<vmem>>, vector<1x1x128x128xf32>
    %34 = vector.shape_cast %33 : vector<1x1x128x128xf32> to vector<128x128xf32>
    %cst_23 = arith.constant dense<0.000000e+00> : vector<32x128xf32>
    %35 = tpu.matmul %32, %34, %cst_23 {dimension_numbers = #tpu.dot_dimension_numbers<[1], [0], [0], [1], [0, 0, 1, 1], [], []>} : vector<32x128xf32>, vector<128x128xf32>, vector<32x128xf32> -> vector<32x128xf32>
    %36 = arith.addf %29, %35 : vector<32x128xf32>
    %c1 = arith.constant 1 : index
    %c0_24 = arith.constant 0 : index
    %c0_25 = arith.constant 0 : index
    %37 = vector.load %arg9[%c1, %c0_24, %c0_25] : memref<9x32x32xf32, #tpu.memory_space<vmem>>, vector<1x32x32xf32>
    %38 = vector.shape_cast %37 : vector<1x32x32xf32> to vector<32x32xf32>
    %cst_26 = arith.constant dense<0.000000e+00> : vector<32x128xf32>
    %39 = tpu.matmul %38, %28, %cst_26 {dimension_numbers = #tpu.dot_dimension_numbers<[1], [0], [0], [1], [0, 0, 1, 1], [], []>} : vector<32x32xf32>, vector<32x128xf32>, vector<32x128xf32> -> vector<32x128xf32>
    %c3_27 = arith.constant 3 : index
    %c1_28 = arith.constant 1 : index
    %c0_29 = arith.constant 0 : index
    %c0_30 = arith.constant 0 : index
    %40 = vector.load %arg5[%c3_27, %c1_28, %c0_29, %c0_30] : memref<4x4x128x128xf32, #tpu.memory_space<vmem>>, vector<1x1x128x128xf32>
    %41 = vector.shape_cast %40 : vector<1x1x128x128xf32> to vector<128x128xf32>
    %cst_31 = arith.constant dense<0.000000e+00> : vector<32x128xf32>
    %42 = tpu.matmul %39, %41, %cst_31 {dimension_numbers = #tpu.dot_dimension_numbers<[1], [0], [0], [1], [0, 0, 1, 1], [], []>} : vector<32x128xf32>, vector<128x128xf32>, vector<32x128xf32> -> vector<32x128xf32>
    %43 = arith.addf %36, %42 : vector<32x128xf32>
    %c3_32 = arith.constant 3 : index
    %c0_33 = arith.constant 0 : index
    %c0_34 = arith.constant 0 : index
    %44 = vector.load %arg9[%c3_32, %c0_33, %c0_34] : memref<9x32x32xf32, #tpu.memory_space<vmem>>, vector<1x32x32xf32>
    %45 = vector.shape_cast %44 : vector<1x32x32xf32> to vector<32x32xf32>
    %cst_35 = arith.constant dense<0.000000e+00> : vector<32x128xf32>
    %46 = tpu.matmul %45, %28, %cst_35 {dimension_numbers = #tpu.dot_dimension_numbers<[1], [0], [0], [1], [0, 0, 1, 1], [], []>} : vector<32x32xf32>, vector<32x128xf32>, vector<32x128xf32> -> vector<32x128xf32>
    %c1_36 = arith.constant 1 : index
    %c3_37 = arith.constant 3 : index
    %c0_38 = arith.constant 0 : index
    %c0_39 = arith.constant 0 : index
    %47 = vector.load %arg5[%c1_36, %c3_37, %c0_38, %c0_39] : memref<4x4x128x128xf32, #tpu.memory_space<vmem>>, vector<1x1x128x128xf32>
    %48 = vector.shape_cast %47 : vector<1x1x128x128xf32> to vector<128x128xf32>
    %cst_40 = arith.constant dense<0.000000e+00> : vector<32x128xf32>
    %49 = tpu.matmul %46, %48, %cst_40 {dimension_numbers = #tpu.dot_dimension_numbers<[1], [0], [0], [1], [0, 0, 1, 1], [], []>} : vector<32x128xf32>, vector<128x128xf32>, vector<32x128xf32> -> vector<32x128xf32>
    %50 = arith.addf %43, %49 : vector<32x128xf32>
    %c4 = arith.constant 4 : index
    %c0_41 = arith.constant 0 : index
    %c0_42 = arith.constant 0 : index
    %51 = vector.load %arg9[%c4, %c0_41, %c0_42] : memref<9x32x32xf32, #tpu.memory_space<vmem>>, vector<1x32x32xf32>
    %52 = vector.shape_cast %51 : vector<1x32x32xf32> to vector<32x32xf32>
    %cst_43 = arith.constant dense<0.000000e+00> : vector<32x128xf32>
    %53 = tpu.matmul %52, %28, %cst_43 {dimension_numbers = #tpu.dot_dimension_numbers<[1], [0], [0], [1], [0, 0, 1, 1], [], []>} : vector<32x32xf32>, vector<32x128xf32>, vector<32x128xf32> -> vector<32x128xf32>
    %c1_44 = arith.constant 1 : index
    %c1_45 = arith.constant 1 : index
    %c0_46 = arith.constant 0 : index
    %c0_47 = arith.constant 0 : index
    %54 = vector.load %arg5[%c1_44, %c1_45, %c0_46, %c0_47] : memref<4x4x128x128xf32, #tpu.memory_space<vmem>>, vector<1x1x128x128xf32>
    %55 = vector.shape_cast %54 : vector<1x1x128x128xf32> to vector<128x128xf32>
    %cst_48 = arith.constant dense<0.000000e+00> : vector<32x128xf32>
    %56 = tpu.matmul %53, %55, %cst_48 {dimension_numbers = #tpu.dot_dimension_numbers<[1], [0], [0], [1], [0, 0, 1, 1], [], []>} : vector<32x128xf32>, vector<128x128xf32>, vector<32x128xf32> -> vector<32x128xf32>
    %57 = arith.addf %50, %56 : vector<32x128xf32>
    %c0_49 = arith.constant 0 : index
    %c0_50 = arith.constant 0 : index
    %58 = vector.load %arg12[%c0_49, %c0_50] : memref<128x128xf32, #tpu.memory_space<vmem>>, vector<32x128xf32>
    tpu.vector_store %arg12[%c0_49, %c0_50], %57 {strides = array<i32>} : memref<128x128xf32, #tpu.memory_space<vmem>>, vector<32x128xf32>,
    %cst_51 = arith.constant 0.000000e+00 : f32
    %59 = vector.broadcast %cst_51 : f32 to vector<32x128xf32>
    %c1_52 = arith.constant 1 : index
    %c0_53 = arith.constant 0 : index
    %c0_54 = arith.constant 0 : index
    %60 = vector.load %arg9[%c1_52, %c0_53, %c0_54] : memref<9x32x32xf32, #tpu.memory_space<vmem>>, vector<1x32x32xf32>
    %61 = vector.shape_cast %60 : vector<1x32x32xf32> to vector<32x32xf32>
    %cst_55 = arith.constant dense<0.000000e+00> : vector<32x128xf32>
    %62 = tpu.matmul %61, %28, %cst_55 {dimension_numbers = #tpu.dot_dimension_numbers<[1], [0], [0], [1], [0, 0, 1, 1], [], []>} : vector<32x32xf32>, vector<32x128xf32>, vector<32x128xf32> -> vector<32x128xf32>
    %c3_56 = arith.constant 3 : index
    %c2 = arith.constant 2 : index
    %c0_57 = arith.constant 0 : index
    %c0_58 = arith.constant 0 : index
    %63 = vector.load %arg5[%c3_56, %c2, %c0_57, %c0_58] : memref<4x4x128x128xf32, #tpu.memory_space<vmem>>, vector<1x1x128x128xf32>
    %64 = vector.shape_cast %63 : vector<1x1x128x128xf32> to vector<128x128xf32>
    %cst_59 = arith.constant dense<0.000000e+00> : vector<32x128xf32>
    %65 = tpu.matmul %62, %64, %cst_59 {dimension_numbers = #tpu.dot_dimension_numbers<[1], [0], [0], [1], [0, 0, 1, 1], [], []>} : vector<32x128xf32>, vector<128x128xf32>, vector<32x128xf32> -> vector<32x128xf32>
    %66 = arith.addf %59, %65 : vector<32x128xf32>
    %c2_60 = arith.constant 2 : index
    %c0_61 = arith.constant 0 : index
    %c0_62 = arith.constant 0 : index
    %67 = vector.load %arg9[%c2_60, %c0_61, %c0_62] : memref<9x32x32xf32, #tpu.memory_space<vmem>>, vector<1x32x32xf32>
    %68 = vector.shape_cast %67 : vector<1x32x32xf32> to vector<32x32xf32>
    %cst_63 = arith.constant dense<0.000000e+00> : vector<32x128xf32>
    %69 = tpu.matmul %68, %28, %cst_63 {dimension_numbers = #tpu.dot_dimension_numbers<[1], [0], [0], [1], [0, 0, 1, 1], [], []>} : vector<32x32xf32>, vector<32x128xf32>, vector<32x128xf32> -> vector<32x128xf32>
    %c3_64 = arith.constant 3 : index
    %c0_65 = arith.constant 0 : index
    %c0_66 = arith.constant 0 : index
    %c0_67 = arith.constant 0 : index
    %70 = vector.load %arg5[%c3_64, %c0_65, %c0_66, %c0_67] : memref<4x4x128x128xf32, #tpu.memory_space<vmem>>, vector<1x1x128x128xf32>
    %71 = vector.shape_cast %70 : vector<1x1x128x128xf32> to vector<128x128xf32>
    %cst_68 = arith.constant dense<0.000000e+00> : vector<32x128xf32>
    %72 = tpu.matmul %69, %71, %cst_68 {dimension_numbers = #tpu.dot_dimension_numbers<[1], [0], [0], [1], [0, 0, 1, 1], [], []>} : vector<32x128xf32>, vector<128x128xf32>, vector<32x128xf32> -> vector<32x128xf32>
    %73 = arith.addf %66, %72 : vector<32x128xf32>
    %c4_69 = arith.constant 4 : index
    %c0_70 = arith.constant 0 : index
    %c0_71 = arith.constant 0 : index
    %74 = vector.load %arg9[%c4_69, %c0_70, %c0_71] : memref<9x32x32xf32, #tpu.memory_space<vmem>>, vector<1x32x32xf32>
    %75 = vector.shape_cast %74 : vector<1x32x32xf32> to vector<32x32xf32>
    %cst_72 = arith.constant dense<0.000000e+00> : vector<32x128xf32>
    %76 = tpu.matmul %75, %28, %cst_72 {dimension_numbers = #tpu.dot_dimension_numbers<[1], [0], [0], [1], [0, 0, 1, 1], [], []>} : vector<32x32xf32>, vector<32x128xf32>, vector<32x128xf32> -> vector<32x128xf32>
    %c1_73 = arith.constant 1 : index
    %c2_74 = arith.constant 2 : index
    %c0_75 = arith.constant 0 : index
    %c0_76 = arith.constant 0 : index
    %77 = vector.load %arg5[%c1_73, %c2_74, %c0_75, %c0_76] : memref<4x4x128x128xf32, #tpu.memory_space<vmem>>, vector<1x1x128x128xf32>
    %78 = vector.shape_cast %77 : vector<1x1x128x128xf32> to vector<128x128xf32>
    %cst_77 = arith.constant dense<0.000000e+00> : vector<32x128xf32>
    %79 = tpu.matmul %76, %78, %cst_77 {dimension_numbers = #tpu.dot_dimension_numbers<[1], [0], [0], [1], [0, 0, 1, 1], [], []>} : vector<32x128xf32>, vector<128x128xf32>, vector<32x128xf32> -> vector<32x128xf32>
    %80 = arith.addf %73, %79 : vector<32x128xf32>
    %c5 = arith.constant 5 : index
    %c0_78 = arith.constant 0 : index
    %c0_79 = arith.constant 0 : index
    %81 = vector.load %arg9[%c5, %c0_78, %c0_79] : memref<9x32x32xf32, #tpu.memory_space<vmem>>, vector<1x32x32xf32>
    %82 = vector.shape_cast %81 : vector<1x32x32xf32> to vector<32x32xf32>
    %cst_80 = arith.constant dense<0.000000e+00> : vector<32x128xf32>
    %83 = tpu.matmul %82, %28, %cst_80 {dimension_numbers = #tpu.dot_dimension_numbers<[1], [0], [0], [1], [0, 0, 1, 1], [], []>} : vector<32x32xf32>, vector<32x128xf32>, vector<32x128xf32> -> vector<32x128xf32>
    %c1_81 = arith.constant 1 : index
    %c0_82 = arith.constant 0 : index
    %c0_83 = arith.constant 0 : index
    %c0_84 = arith.constant 0 : index
    %84 = vector.load %arg5[%c1_81, %c0_82, %c0_83, %c0_84] : memref<4x4x128x128xf32, #tpu.memory_space<vmem>>, vector<1x1x128x128xf32>
    %85 = vector.shape_cast %84 : vector<1x1x128x128xf32> to vector<128x128xf32>
    %cst_85 = arith.constant dense<0.000000e+00> : vector<32x128xf32>
    %86 = tpu.matmul %83, %85, %cst_85 {dimension_numbers = #tpu.dot_dimension_numbers<[1], [0], [0], [1], [0, 0, 1, 1], [], []>} : vector<32x128xf32>, vector<128x128xf32>, vector<32x128xf32> -> vector<32x128xf32>
    %87 = arith.addf %80, %86 : vector<32x128xf32>
    %c32 = arith.constant 32 : index
    %c0_86 = arith.constant 0 : index
    %88 = vector.load %arg12[%c32, %c0_86] : memref<128x128xf32, #tpu.memory_space<vmem>>, vector<32x128xf32>
    tpu.vector_store %arg12[%c32, %c0_86], %87 {strides = array<i32>} : memref<128x128xf32, #tpu.memory_space<vmem>>, vector<32x128xf32>,
    %cst_87 = arith.constant 0.000000e+00 : f32
    %89 = vector.broadcast %cst_87 : f32 to vector<32x128xf32>
    %c3_88 = arith.constant 3 : index
    %c0_89 = arith.constant 0 : index
    %c0_90 = arith.constant 0 : index
    %90 = vector.load %arg9[%c3_88, %c0_89, %c0_90] : memref<9x32x32xf32, #tpu.memory_space<vmem>>, vector<1x32x32xf32>
    %91 = vector.shape_cast %90 : vector<1x32x32xf32> to vector<32x32xf32>
    %cst_91 = arith.constant dense<0.000000e+00> : vector<32x128xf32>
    %92 = tpu.matmul %91, %28, %cst_91 {dimension_numbers = #tpu.dot_dimension_numbers<[1], [0], [0], [1], [0, 0, 1, 1], [], []>} : vector<32x32xf32>, vector<32x128xf32>, vector<32x128xf32> -> vector<32x128xf32>
    %c2_92 = arith.constant 2 : index
    %c3_93 = arith.constant 3 : index
    %c0_94 = arith.constant 0 : index
    %c0_95 = arith.constant 0 : index
    %93 = vector.load %arg5[%c2_92, %c3_93, %c0_94, %c0_95] : memref<4x4x128x128xf32, #tpu.memory_space<vmem>>, vector<1x1x128x128xf32>
    %94 = vector.shape_cast %93 : vector<1x1x128x128xf32> to vector<128x128xf32>
    %cst_96 = arith.constant dense<0.000000e+00> : vector<32x128xf32>
    %95 = tpu.matmul %92, %94, %cst_96 {dimension_numbers = #tpu.dot_dimension_numbers<[1], [0], [0], [1], [0, 0, 1, 1], [], []>} : vector<32x128xf32>, vector<128x128xf32>, vector<32x128xf32> -> vector<32x128xf32>
    %96 = arith.addf %89, %95 : vector<32x128xf32>
    %c4_97 = arith.constant 4 : index
    %c0_98 = arith.constant 0 : index
    %c0_99 = arith.constant 0 : index
    %97 = vector.load %arg9[%c4_97, %c0_98, %c0_99] : memref<9x32x32xf32, #tpu.memory_space<vmem>>, vector<1x32x32xf32>
    %98 = vector.shape_cast %97 : vector<1x32x32xf32> to vector<32x32xf32>
    %cst_100 = arith.constant dense<0.000000e+00> : vector<32x128xf32>
    %99 = tpu.matmul %98, %28, %cst_100 {dimension_numbers = #tpu.dot_dimension_numbers<[1], [0], [0], [1], [0, 0, 1, 1], [], []>} : vector<32x32xf32>, vector<32x128xf32>, vector<32x128xf32> -> vector<32x128xf32>
    %c2_101 = arith.constant 2 : index
    %c1_102 = arith.constant 1 : index
    %c0_103 = arith.constant 0 : index
    %c0_104 = arith.constant 0 : index
    %100 = vector.load %arg5[%c2_101, %c1_102, %c0_103, %c0_104] : memref<4x4x128x128xf32, #tpu.memory_space<vmem>>, vector<1x1x128x128xf32>
    %101 = vector.shape_cast %100 : vector<1x1x128x128xf32> to vector<128x128xf32>
    %cst_105 = arith.constant dense<0.000000e+00> : vector<32x128xf32>
    %102 = tpu.matmul %99, %101, %cst_105 {dimension_numbers = #tpu.dot_dimension_numbers<[1], [0], [0], [1], [0, 0, 1, 1], [], []>} : vector<32x128xf32>, vector<128x128xf32>, vector<32x128xf32> -> vector<32x128xf32>
    %103 = arith.addf %96, %102 : vector<32x128xf32>
    %c6 = arith.constant 6 : index
    %c0_106 = arith.constant 0 : index
    %c0_107 = arith.constant 0 : index
    %104 = vector.load %arg9[%c6, %c0_106, %c0_107] : memref<9x32x32xf32, #tpu.memory_space<vmem>>, vector<1x32x32xf32>
    %105 = vector.shape_cast %104 : vector<1x32x32xf32> to vector<32x32xf32>
    %cst_108 = arith.constant dense<0.000000e+00> : vector<32x128xf32>
    %106 = tpu.matmul %105, %28, %cst_108 {dimension_numbers = #tpu.dot_dimension_numbers<[1], [0], [0], [1], [0, 0, 1, 1], [], []>} : vector<32x32xf32>, vector<32x128xf32>, vector<32x128xf32> -> vector<32x128xf32>
    %c0_109 = arith.constant 0 : index
    %c3_110 = arith.constant 3 : index
    %c0_111 = arith.constant 0 : index
    %c0_112 = arith.constant 0 : index
    %107 = vector.load %arg5[%c0_109, %c3_110, %c0_111, %c0_112] : memref<4x4x128x128xf32, #tpu.memory_space<vmem>>, vector<1x1x128x128xf32>
    %108 = vector.shape_cast %107 : vector<1x1x128x128xf32> to vector<128x128xf32>
    %cst_113 = arith.constant dense<0.000000e+00> : vector<32x128xf32>
    %109 = tpu.matmul %106, %108, %cst_113 {dimension_numbers = #tpu.dot_dimension_numbers<[1], [0], [0], [1], [0, 0, 1, 1], [], []>} : vector<32x128xf32>, vector<128x128xf32>, vector<32x128xf32> -> vector<32x128xf32>
    %110 = arith.addf %103, %109 : vector<32x128xf32>
    %c7 = arith.constant 7 : index
    %c0_114 = arith.constant 0 : index
    %c0_115 = arith.constant 0 : index
    %111 = vector.load %arg9[%c7, %c0_114, %c0_115] : memref<9x32x32xf32, #tpu.memory_space<vmem>>, vector<1x32x32xf32>
    %112 = vector.shape_cast %111 : vector<1x32x32xf32> to vector<32x32xf32>
    %cst_116 = arith.constant dense<0.000000e+00> : vector<32x128xf32>
    %113 = tpu.matmul %112, %28, %cst_116 {dimension_numbers = #tpu.dot_dimension_numbers<[1], [0], [0], [1], [0, 0, 1, 1], [], []>} : vector<32x32xf32>, vector<32x128xf32>, vector<32x128xf32> -> vector<32x128xf32>
    %c0_117 = arith.constant 0 : index
    %c1_118 = arith.constant 1 : index
    %c0_119 = arith.constant 0 : index
    %c0_120 = arith.constant 0 : index
    %114 = vector.load %arg5[%c0_117, %c1_118, %c0_119, %c0_120] : memref<4x4x128x128xf32, #tpu.memory_space<vmem>>, vector<1x1x128x128xf32>
    %115 = vector.shape_cast %114 : vector<1x1x128x128xf32> to vector<128x128xf32>
    %cst_121 = arith.constant dense<0.000000e+00> : vector<32x128xf32>
    %116 = tpu.matmul %113, %115, %cst_121 {dimension_numbers = #tpu.dot_dimension_numbers<[1], [0], [0], [1], [0, 0, 1, 1], [], []>} : vector<32x128xf32>, vector<128x128xf32>, vector<32x128xf32> -> vector<32x128xf32>
    %117 = arith.addf %110, %116 : vector<32x128xf32>
    %c64 = arith.constant 64 : index
    %c0_122 = arith.constant 0 : index
    %118 = vector.load %arg12[%c64, %c0_122] : memref<128x128xf32, #tpu.memory_space<vmem>>, vector<32x128xf32>
    tpu.vector_store %arg12[%c64, %c0_122], %117 {strides = array<i32>} : memref<128x128xf32, #tpu.memory_space<vmem>>, vector<32x128xf32>,
    %cst_123 = arith.constant 0.000000e+00 : f32
    %119 = vector.broadcast %cst_123 : f32 to vector<32x128xf32>
    %c4_124 = arith.constant 4 : index
    %c0_125 = arith.constant 0 : index
    %c0_126 = arith.constant 0 : index
    %120 = vector.load %arg9[%c4_124, %c0_125, %c0_126] : memref<9x32x32xf32, #tpu.memory_space<vmem>>, vector<1x32x32xf32>
    %121 = vector.shape_cast %120 : vector<1x32x32xf32> to vector<32x32xf32>
    %cst_127 = arith.constant dense<0.000000e+00> : vector<32x128xf32>
    %122 = tpu.matmul %121, %28, %cst_127 {dimension_numbers = #tpu.dot_dimension_numbers<[1], [0], [0], [1], [0, 0, 1, 1], [], []>} : vector<32x32xf32>, vector<32x128xf32>, vector<32x128xf32> -> vector<32x128xf32>
    %c2_128 = arith.constant 2 : index
    %c2_129 = arith.constant 2 : index
    %c0_130 = arith.constant 0 : index
    %c0_131 = arith.constant 0 : index
    %123 = vector.load %arg5[%c2_128, %c2_129, %c0_130, %c0_131] : memref<4x4x128x128xf32, #tpu.memory_space<vmem>>, vector<1x1x128x128xf32>
    %124 = vector.shape_cast %123 : vector<1x1x128x128xf32> to vector<128x128xf32>
    %cst_132 = arith.constant dense<0.000000e+00> : vector<32x128xf32>
    %125 = tpu.matmul %122, %124, %cst_132 {dimension_numbers = #tpu.dot_dimension_numbers<[1], [0], [0], [1], [0, 0, 1, 1], [], []>} : vector<32x128xf32>, vector<128x128xf32>, vector<32x128xf32> -> vector<32x128xf32>
    %126 = arith.addf %119, %125 : vector<32x128xf32>
    %c5_133 = arith.constant 5 : index
    %c0_134 = arith.constant 0 : index
    %c0_135 = arith.constant 0 : index
    %127 = vector.load %arg9[%c5_133, %c0_134, %c0_135] : memref<9x32x32xf32, #tpu.memory_space<vmem>>, vector<1x32x32xf32>
    %128 = vector.shape_cast %127 : vector<1x32x32xf32> to vector<32x32xf32>
    %cst_136 = arith.constant dense<0.000000e+00> : vector<32x128xf32>
    %129 = tpu.matmul %128, %28, %cst_136 {dimension_numbers = #tpu.dot_dimension_numbers<[1], [0], [0], [1], [0, 0, 1, 1], [], []>} : vector<32x32xf32>, vector<32x128xf32>, vector<32x128xf32> -> vector<32x128xf32>
    %c2_137 = arith.constant 2 : index
    %c0_138 = arith.constant 0 : index
    %c0_139 = arith.constant 0 : index
    %c0_140 = arith.constant 0 : index
    %130 = vector.load %arg5[%c2_137, %c0_138, %c0_139, %c0_140] : memref<4x4x128x128xf32, #tpu.memory_space<vmem>>, vector<1x1x128x128xf32>
    %131 = vector.shape_cast %130 : vector<1x1x128x128xf32> to vector<128x128xf32>
    %cst_141 = arith.constant dense<0.000000e+00> : vector<32x128xf32>
    %132 = tpu.matmul %129, %131, %cst_141 {dimension_numbers = #tpu.dot_dimension_numbers<[1], [0], [0], [1], [0, 0, 1, 1], [], []>} : vector<32x128xf32>, vector<128x128xf32>, vector<32x128xf32> -> vector<32x128xf32>
    %133 = arith.addf %126, %132 : vector<32x128xf32>
    %c7_142 = arith.constant 7 : index
    %c0_143 = arith.constant 0 : index
    %c0_144 = arith.constant 0 : index
    %134 = vector.load %arg9[%c7_142, %c0_143, %c0_144] : memref<9x32x32xf32, #tpu.memory_space<vmem>>, vector<1x32x32xf32>
    %135 = vector.shape_cast %134 : vector<1x32x32xf32> to vector<32x32xf32>
    %cst_145 = arith.constant dense<0.000000e+00> : vector<32x128xf32>
    %136 = tpu.matmul %135, %28, %cst_145 {dimension_numbers = #tpu.dot_dimension_numbers<[1], [0], [0], [1], [0, 0, 1, 1], [], []>} : vector<32x32xf32>, vector<32x128xf32>, vector<32x128xf32> -> vector<32x128xf32>
    %c0_146 = arith.constant 0 : index
    %c2_147 = arith.constant 2 : index
    %c0_148 = arith.constant 0 : index
    %c0_149 = arith.constant 0 : index
    %137 = vector.load %arg5[%c0_146, %c2_147, %c0_148, %c0_149] : memref<4x4x128x128xf32, #tpu.memory_space<vmem>>, vector<1x1x128x128xf32>
    %138 = vector.shape_cast %137 : vector<1x1x128x128xf32> to vector<128x128xf32>
    %cst_150 = arith.constant dense<0.000000e+00> : vector<32x128xf32>
    %139 = tpu.matmul %136, %138, %cst_150 {dimension_numbers = #tpu.dot_dimension_numbers<[1], [0], [0], [1], [0, 0, 1, 1], [], []>} : vector<32x128xf32>, vector<128x128xf32>, vector<32x128xf32> -> vector<32x128xf32>
    %140 = arith.addf %133, %139 : vector<32x128xf32>
    %c8 = arith.constant 8 : index
    %c0_151 = arith.constant 0 : index
    %c0_152 = arith.constant 0 : index
    %141 = vector.load %arg9[%c8, %c0_151, %c0_152] : memref<9x32x32xf32, #tpu.memory_space<vmem>>, vector<1x32x32xf32>
    %142 = vector.shape_cast %141 : vector<1x32x32xf32> to vector<32x32xf32>
    %cst_153 = arith.constant dense<0.000000e+00> : vector<32x128xf32>
    %143 = tpu.matmul %142, %28, %cst_153 {dimension_numbers = #tpu.dot_dimension_numbers<[1], [0], [0], [1], [0, 0, 1, 1], [], []>} : vector<32x32xf32>, vector<32x128xf32>, vector<32x128xf32> -> vector<32x128xf32>
    %c0_154 = arith.constant 0 : index
    %c0_155 = arith.constant 0 : index
    %c0_156 = arith.constant 0 : index
    %c0_157 = arith.constant 0 : index
    %144 = vector.load %arg5[%c0_154, %c0_155, %c0_156, %c0_157] : memref<4x4x128x128xf32, #tpu.memory_space<vmem>>, vector<1x1x128x128xf32>
    %145 = vector.shape_cast %144 : vector<1x1x128x128xf32> to vector<128x128xf32>
    %cst_158 = arith.constant dense<0.000000e+00> : vector<32x128xf32>
    %146 = tpu.matmul %143, %145, %cst_158 {dimension_numbers = #tpu.dot_dimension_numbers<[1], [0], [0], [1], [0, 0, 1, 1], [], []>} : vector<32x128xf32>, vector<128x128xf32>, vector<32x128xf32> -> vector<32x128xf32>
    %147 = arith.addf %140, %146 : vector<32x128xf32>
    %c96 = arith.constant 96 : index
    %c0_159 = arith.constant 0 : index
    %148 = vector.load %arg12[%c96, %c0_159] : memref<128x128xf32, #tpu.memory_space<vmem>>, vector<32x128xf32>
    tpu.vector_store %arg12[%c96, %c0_159], %147 {strides = array<i32>} : memref<128x128xf32, #tpu.memory_space<vmem>>, vector<32x128xf32>,
    %c0_160 = arith.constant 0 : index
    %c0_161 = arith.constant 0 : index
    %149 = vector.load %arg12[%c0_160, %c0_161] : memref<128x128xf32, #tpu.memory_space<vmem>>, vector<128x128xf32>
    %c0_162 = arith.constant 0 : index
    %c0_163 = arith.constant 0 : index
    %150 = vector.load %arg6[%c0_162, %c0_163] : memref<1x128xf32, #tpu.memory_space<vmem>>, vector<1x128xf32>
    %c0_164 = arith.constant 0 : index
    %c0_165 = arith.constant 0 : index
    %151 = vector.load %arg7[%c0_164, %c0_165] : memref<1x128xf32, #tpu.memory_space<vmem>>, vector<1x128xf32>
    %cst_166 = arith.constant 1.000000e+00 : f32
    %152 = vector.broadcast %cst_166 : f32 to vector<1x128xf32>
    %cst_167 = arith.constant dense<0.000000e+00> : vector<1x128xf32>
    %153 = tpu.matmul %152, %149, %cst_167 {dimension_numbers = #tpu.dot_dimension_numbers<[1], [0], [0], [1], [0, 0, 1, 1], [], []>} : vector<1x128xf32>, vector<128x128xf32>, vector<1x128xf32> -> vector<1x128xf32>
    %cst_168 = arith.constant 7.812500e-03 : f32
    %154 = vector.broadcast %cst_168 : f32 to vector<1x128xf32>
    %155 = arith.mulf %153, %154 : vector<1x128xf32>
    %156 = vector.broadcast %155 : vector<1x128xf32> to vector<128x128xf32>
    %157 = arith.subf %149, %156 : vector<128x128xf32>
    %158 = arith.mulf %157, %157 : vector<128x128xf32>
    %cst_169 = arith.constant 1.000000e+00 : f32
    %159 = vector.broadcast %cst_169 : f32 to vector<1x128xf32>
    %cst_170 = arith.constant dense<0.000000e+00> : vector<1x128xf32>
    %160 = tpu.matmul %159, %158, %cst_170 {dimension_numbers = #tpu.dot_dimension_numbers<[1], [0], [0], [1], [0, 0, 1, 1], [], []>} : vector<1x128xf32>, vector<128x128xf32>, vector<1x128xf32> -> vector<1x128xf32>
    %cst_171 = arith.constant 7.812500e-03 : f32
    %161 = vector.broadcast %cst_171 : f32 to vector<1x128xf32>
    %162 = arith.mulf %160, %161 : vector<1x128xf32>
    %163 = vector.broadcast %155 : vector<1x128xf32> to vector<128x128xf32>
    %164 = arith.subf %149, %163 : vector<128x128xf32>
    %165 = vector.broadcast %150 : vector<1x128xf32> to vector<128x128xf32>
    %166 = arith.mulf %164, %165 : vector<128x128xf32>
    %cst_172 = arith.constant 9.99999974E-6 : f32
    %167 = vector.broadcast %cst_172 : f32 to vector<1x128xf32>
    %168 = arith.addf %162, %167 : vector<1x128xf32>
    %169 = math.rsqrt %168 : vector<1x128xf32>
    %170 = vector.broadcast %169 : vector<1x128xf32> to vector<128x128xf32>
    %171 = arith.mulf %166, %170 : vector<128x128xf32>
    %172 = vector.broadcast %151 : vector<1x128xf32> to vector<128x128xf32>
    %173 = arith.addf %171, %172 : vector<128x128xf32>
    %cst_173 = arith.constant 0.000000e+00 : f32
    %174 = vector.broadcast %cst_173 : f32 to vector<128x128xf32>
    %175 = arith.maximumf %173, %174 : vector<128x128xf32>
    %cst_174 = arith.constant 0.000000e+00 : f32
    %176 = vector.broadcast %cst_174 : f32 to vector<128x128xf32>
    %c0_175 = arith.constant 0 : index
    %c0_176 = arith.constant 0 : index
    %c0_177 = arith.constant 0 : index
    %177 = vector.load %arg10[%c0_175, %c0_176, %c0_177] : memref<9x128x128xf32, #tpu.memory_space<vmem>>, vector<1x128x128xf32>
    %178 = vector.shape_cast %177 : vector<1x128x128xf32> to vector<128x128xf32>
    %cst_178 = arith.constant dense<0.000000e+00> : vector<128x128xf32>
    %179 = tpu.matmul %178, %175, %cst_178 {dimension_numbers = #tpu.dot_dimension_numbers<[1], [0], [0], [1], [0, 0, 1, 1], [], []>} : vector<128x128xf32>, vector<128x128xf32>, vector<128x128xf32> -> vector<128x128xf32>
    %c3_179 = arith.constant 3 : index
    %c3_180 = arith.constant 3 : index
    %c0_181 = arith.constant 0 : index
    %c0_182 = arith.constant 0 : index
    %180 = vector.load %arg8[%c3_179, %c3_180, %c0_181, %c0_182] : memref<4x4x128x128xf32, #tpu.memory_space<vmem>>, vector<1x1x128x128xf32>
    %181 = vector.shape_cast %180 : vector<1x1x128x128xf32> to vector<128x128xf32>
    %cst_183 = arith.constant dense<0.000000e+00> : vector<128x128xf32>
    %182 = tpu.matmul %179, %181, %cst_183 {dimension_numbers = #tpu.dot_dimension_numbers<[1], [0], [0], [1], [0, 0, 1, 1], [], []>} : vector<128x128xf32>, vector<128x128xf32>, vector<128x128xf32> -> vector<128x128xf32>
    %183 = arith.addf %176, %182 : vector<128x128xf32>
    %c1_184 = arith.constant 1 : index
    %c0_185 = arith.constant 0 : index
    %c0_186 = arith.constant 0 : index
    %184 = vector.load %arg10[%c1_184, %c0_185, %c0_186] : memref<9x128x128xf32, #tpu.memory_space<vmem>>, vector<1x128x128xf32>
    %185 = vector.shape_cast %184 : vector<1x128x128xf32> to vector<128x128xf32>
    %cst_187 = arith.constant dense<0.000000e+00> : vector<128x128xf32>
    %186 = tpu.matmul %185, %175, %cst_187 {dimension_numbers = #tpu.dot_dimension_numbers<[1], [0], [0], [1], [0, 0, 1, 1], [], []>} : vector<128x128xf32>, vector<128x128xf32>, vector<128x128xf32> -> vector<128x128xf32>
    %c3_188 = arith.constant 3 : index
    %c1_189 = arith.constant 1 : index
    %c0_190 = arith.constant 0 : index
    %c0_191 = arith.constant 0 : index
    %187 = vector.load %arg8[%c3_188, %c1_189, %c0_190, %c0_191] : memref<4x4x128x128xf32, #tpu.memory_space<vmem>>, vector<1x1x128x128xf32>
    %188 = vector.shape_cast %187 : vector<1x1x128x128xf32> to vector<128x128xf32>
    %cst_192 = arith.constant dense<0.000000e+00> : vector<128x128xf32>
    %189 = tpu.matmul %186, %188, %cst_192 {dimension_numbers = #tpu.dot_dimension_numbers<[1], [0], [0], [1], [0, 0, 1, 1], [], []>} : vector<128x128xf32>, vector<128x128xf32>, vector<128x128xf32> -> vector<128x128xf32>
    %190 = arith.addf %183, %189 : vector<128x128xf32>
    %c3_193 = arith.constant 3 : index
    %c0_194 = arith.constant 0 : index
    %c0_195 = arith.constant 0 : index
    %191 = vector.load %arg10[%c3_193, %c0_194, %c0_195] : memref<9x128x128xf32, #tpu.memory_space<vmem>>, vector<1x128x128xf32>
    %192 = vector.shape_cast %191 : vector<1x128x128xf32> to vector<128x128xf32>
    %cst_196 = arith.constant dense<0.000000e+00> : vector<128x128xf32>
    %193 = tpu.matmul %192, %175, %cst_196 {dimension_numbers = #tpu.dot_dimension_numbers<[1], [0], [0], [1], [0, 0, 1, 1], [], []>} : vector<128x128xf32>, vector<128x128xf32>, vector<128x128xf32> -> vector<128x128xf32>
    %c1_197 = arith.constant 1 : index
    %c3_198 = arith.constant 3 : index
    %c0_199 = arith.constant 0 : index
    %c0_200 = arith.constant 0 : index
    %194 = vector.load %arg8[%c1_197, %c3_198, %c0_199, %c0_200] : memref<4x4x128x128xf32, #tpu.memory_space<vmem>>, vector<1x1x128x128xf32>
    %195 = vector.shape_cast %194 : vector<1x1x128x128xf32> to vector<128x128xf32>
    %cst_201 = arith.constant dense<0.000000e+00> : vector<128x128xf32>
    %196 = tpu.matmul %193, %195, %cst_201 {dimension_numbers = #tpu.dot_dimension_numbers<[1], [0], [0], [1], [0, 0, 1, 1], [], []>} : vector<128x128xf32>, vector<128x128xf32>, vector<128x128xf32> -> vector<128x128xf32>
    %197 = arith.addf %190, %196 : vector<128x128xf32>
    %c4_202 = arith.constant 4 : index
    %c0_203 = arith.constant 0 : index
    %c0_204 = arith.constant 0 : index
    %198 = vector.load %arg10[%c4_202, %c0_203, %c0_204] : memref<9x128x128xf32, #tpu.memory_space<vmem>>, vector<1x128x128xf32>
    %199 = vector.shape_cast %198 : vector<1x128x128xf32> to vector<128x128xf32>
    %cst_205 = arith.constant dense<0.000000e+00> : vector<128x128xf32>
    %200 = tpu.matmul %199, %175, %cst_205 {dimension_numbers = #tpu.dot_dimension_numbers<[1], [0], [0], [1], [0, 0, 1, 1], [], []>} : vector<128x128xf32>, vector<128x128xf32>, vector<128x128xf32> -> vector<128x128xf32>
    %c1_206 = arith.constant 1 : index
    %c1_207 = arith.constant 1 : index
    %c0_208 = arith.constant 0 : index
    %c0_209 = arith.constant 0 : index
    %201 = vector.load %arg8[%c1_206, %c1_207, %c0_208, %c0_209] : memref<4x4x128x128xf32, #tpu.memory_space<vmem>>, vector<1x1x128x128xf32>
    %202 = vector.shape_cast %201 : vector<1x1x128x128xf32> to vector<128x128xf32>
    %cst_210 = arith.constant dense<0.000000e+00> : vector<128x128xf32>
    %203 = tpu.matmul %200, %202, %cst_210 {dimension_numbers = #tpu.dot_dimension_numbers<[1], [0], [0], [1], [0, 0, 1, 1], [], []>} : vector<128x128xf32>, vector<128x128xf32>, vector<128x128xf32> -> vector<128x128xf32>
    %204 = arith.addf %197, %203 : vector<128x128xf32>
    %205 = math.tanh %204 : vector<128x128xf32>
    %c0_211 = arith.constant 0 : index
    %c0_212 = arith.constant 0 : index
    %c0_213 = arith.constant 0 : index
    %206 = vector.load %arg11[%c0_211, %c0_212, %c0_213] : memref<4x128x128xf32, #tpu.memory_space<vmem>>, vector<1x128x128xf32>
    %207 = vector.shape_cast %206 : vector<1x128x128xf32> to vector<128x128xf32>
    %208 = vector.shape_cast %205 : vector<128x128xf32> to vector<1x128x128xf32>
    tpu.vector_store %arg11[%c0_211, %c0_212, %c0_213], %208 {strides = array<i32>} : memref<4x128x128xf32, #tpu.memory_space<vmem>>, vector<1x128x128xf32>,
    %cst_214 = arith.constant 0.000000e+00 : f32
    %209 = vector.broadcast %cst_214 : f32 to vector<128x128xf32>
    %c1_215 = arith.constant 1 : index
    %c0_216 = arith.constant 0 : index
    %c0_217 = arith.constant 0 : index
    %210 = vector.load %arg10[%c1_215, %c0_216, %c0_217] : memref<9x128x128xf32, #tpu.memory_space<vmem>>, vector<1x128x128xf32>
    %211 = vector.shape_cast %210 : vector<1x128x128xf32> to vector<128x128xf32>
    %cst_218 = arith.constant dense<0.000000e+00> : vector<128x128xf32>
    %212 = tpu.matmul %211, %175, %cst_218 {dimension_numbers = #tpu.dot_dimension_numbers<[1], [0], [0], [1], [0, 0, 1, 1], [], []>} : vector<128x128xf32>, vector<128x128xf32>, vector<128x128xf32> -> vector<128x128xf32>
    %c3_219 = arith.constant 3 : index
    %c2_220 = arith.constant 2 : index
    %c0_221 = arith.constant 0 : index
    %c0_222 = arith.constant 0 : index
    %213 = vector.load %arg8[%c3_219, %c2_220, %c0_221, %c0_222] : memref<4x4x128x128xf32, #tpu.memory_space<vmem>>, vector<1x1x128x128xf32>
    %214 = vector.shape_cast %213 : vector<1x1x128x128xf32> to vector<128x128xf32>
    %cst_223 = arith.constant dense<0.000000e+00> : vector<128x128xf32>
    %215 = tpu.matmul %212, %214, %cst_223 {dimension_numbers = #tpu.dot_dimension_numbers<[1], [0], [0], [1], [0, 0, 1, 1], [], []>} : vector<128x128xf32>, vector<128x128xf32>, vector<128x128xf32> -> vector<128x128xf32>
    %216 = arith.addf %209, %215 : vector<128x128xf32>
    %c2_224 = arith.constant 2 : index
    %c0_225 = arith.constant 0 : index
    %c0_226 = arith.constant 0 : index
    %217 = vector.load %arg10[%c2_224, %c0_225, %c0_226] : memref<9x128x128xf32, #tpu.memory_space<vmem>>, vector<1x128x128xf32>
    %218 = vector.shape_cast %217 : vector<1x128x128xf32> to vector<128x128xf32>
    %cst_227 = arith.constant dense<0.000000e+00> : vector<128x128xf32>
    %219 = tpu.matmul %218, %175, %cst_227 {dimension_numbers = #tpu.dot_dimension_numbers<[1], [0], [0], [1], [0, 0, 1, 1], [], []>} : vector<128x128xf32>, vector<128x128xf32>, vector<128x128xf32> -> vector<128x128xf32>
    %c3_228 = arith.constant 3 : index
    %c0_229 = arith.constant 0 : index
    %c0_230 = arith.constant 0 : index
    %c0_231 = arith.constant 0 : index
    %220 = vector.load %arg8[%c3_228, %c0_229, %c0_230, %c0_231] : memref<4x4x128x128xf32, #tpu.memory_space<vmem>>, vector<1x1x128x128xf32>
    %221 = vector.shape_cast %220 : vector<1x1x128x128xf32> to vector<128x128xf32>
    %cst_232 = arith.constant dense<0.000000e+00> : vector<128x128xf32>
    %222 = tpu.matmul %219, %221, %cst_232 {dimension_numbers = #tpu.dot_dimension_numbers<[1], [0], [0], [1], [0, 0, 1, 1], [], []>} : vector<128x128xf32>, vector<128x128xf32>, vector<128x128xf32> -> vector<128x128xf32>
    %223 = arith.addf %216, %222 : vector<128x128xf32>
    %c4_233 = arith.constant 4 : index
    %c0_234 = arith.constant 0 : index
    %c0_235 = arith.constant 0 : index
    %224 = vector.load %arg10[%c4_233, %c0_234, %c0_235] : memref<9x128x128xf32, #tpu.memory_space<vmem>>, vector<1x128x128xf32>
    %225 = vector.shape_cast %224 : vector<1x128x128xf32> to vector<128x128xf32>
    %cst_236 = arith.constant dense<0.000000e+00> : vector<128x128xf32>
    %226 = tpu.matmul %225, %175, %cst_236 {dimension_numbers = #tpu.dot_dimension_numbers<[1], [0], [0], [1], [0, 0, 1, 1], [], []>} : vector<128x128xf32>, vector<128x128xf32>, vector<128x128xf32> -> vector<128x128xf32>
    %c1_237 = arith.constant 1 : index
    %c2_238 = arith.constant 2 : index
    %c0_239 = arith.constant 0 : index
    %c0_240 = arith.constant 0 : index
    %227 = vector.load %arg8[%c1_237, %c2_238, %c0_239, %c0_240] : memref<4x4x128x128xf32, #tpu.memory_space<vmem>>, vector<1x1x128x128xf32>
    %228 = vector.shape_cast %227 : vector<1x1x128x128xf32> to vector<128x128xf32>
    %cst_241 = arith.constant dense<0.000000e+00> : vector<128x128xf32>
    %229 = tpu.matmul %226, %228, %cst_241 {dimension_numbers = #tpu.dot_dimension_numbers<[1], [0], [0], [1], [0, 0, 1, 1], [], []>} : vector<128x128xf32>, vector<128x128xf32>, vector<128x128xf32> -> vector<128x128xf32>
    %230 = arith.addf %223, %229 : vector<128x128xf32>
    %c5_242 = arith.constant 5 : index
    %c0_243 = arith.constant 0 : index
    %c0_244 = arith.constant 0 : index
    %231 = vector.load %arg10[%c5_242, %c0_243, %c0_244] : memref<9x128x128xf32, #tpu.memory_space<vmem>>, vector<1x128x128xf32>
    %232 = vector.shape_cast %231 : vector<1x128x128xf32> to vector<128x128xf32>
    %cst_245 = arith.constant dense<0.000000e+00> : vector<128x128xf32>
    %233 = tpu.matmul %232, %175, %cst_245 {dimension_numbers = #tpu.dot_dimension_numbers<[1], [0], [0], [1], [0, 0, 1, 1], [], []>} : vector<128x128xf32>, vector<128x128xf32>, vector<128x128xf32> -> vector<128x128xf32>
    %c1_246 = arith.constant 1 : index
    %c0_247 = arith.constant 0 : index
    %c0_248 = arith.constant 0 : index
    %c0_249 = arith.constant 0 : index
    %234 = vector.load %arg8[%c1_246, %c0_247, %c0_248, %c0_249] : memref<4x4x128x128xf32, #tpu.memory_space<vmem>>, vector<1x1x128x128xf32>
    %235 = vector.shape_cast %234 : vector<1x1x128x128xf32> to vector<128x128xf32>
    %cst_250 = arith.constant dense<0.000000e+00> : vector<128x128xf32>
    %236 = tpu.matmul %233, %235, %cst_250 {dimension_numbers = #tpu.dot_dimension_numbers<[1], [0], [0], [1], [0, 0, 1, 1], [], []>} : vector<128x128xf32>, vector<128x128xf32>, vector<128x128xf32> -> vector<128x128xf32>
    %237 = arith.addf %230, %236 : vector<128x128xf32>
    %238 = math.tanh %237 : vector<128x128xf32>
    %c1_251 = arith.constant 1 : index
    %c0_252 = arith.constant 0 : index
    %c0_253 = arith.constant 0 : index
    %239 = vector.load %arg11[%c1_251, %c0_252, %c0_253] : memref<4x128x128xf32, #tpu.memory_space<vmem>>, vector<1x128x128xf32>
    %240 = vector.shape_cast %239 : vector<1x128x128xf32> to vector<128x128xf32>
    %241 = vector.shape_cast %238 : vector<128x128xf32> to vector<1x128x128xf32>
    tpu.vector_store %arg11[%c1_251, %c0_252, %c0_253], %241 {strides = array<i32>} : memref<4x128x128xf32, #tpu.memory_space<vmem>>, vector<1x128x128xf32>,
    %cst_254 = arith.constant 0.000000e+00 : f32
    %242 = vector.broadcast %cst_254 : f32 to vector<128x128xf32>
    %c3_255 = arith.constant 3 : index
    %c0_256 = arith.constant 0 : index
    %c0_257 = arith.constant 0 : index
    %243 = vector.load %arg10[%c3_255, %c0_256, %c0_257] : memref<9x128x128xf32, #tpu.memory_space<vmem>>, vector<1x128x128xf32>
    %244 = vector.shape_cast %243 : vector<1x128x128xf32> to vector<128x128xf32>
    %cst_258 = arith.constant dense<0.000000e+00> : vector<128x128xf32>
    %245 = tpu.matmul %244, %175, %cst_258 {dimension_numbers = #tpu.dot_dimension_numbers<[1], [0], [0], [1], [0, 0, 1, 1], [], []>} : vector<128x128xf32>, vector<128x128xf32>, vector<128x128xf32> -> vector<128x128xf32>
    %c2_259 = arith.constant 2 : index
    %c3_260 = arith.constant 3 : index
    %c0_261 = arith.constant 0 : index
    %c0_262 = arith.constant 0 : index
    %246 = vector.load %arg8[%c2_259, %c3_260, %c0_261, %c0_262] : memref<4x4x128x128xf32, #tpu.memory_space<vmem>>, vector<1x1x128x128xf32>
    %247 = vector.shape_cast %246 : vector<1x1x128x128xf32> to vector<128x128xf32>
    %cst_263 = arith.constant dense<0.000000e+00> : vector<128x128xf32>
    %248 = tpu.matmul %245, %247, %cst_263 {dimension_numbers = #tpu.dot_dimension_numbers<[1], [0], [0], [1], [0, 0, 1, 1], [], []>} : vector<128x128xf32>, vector<128x128xf32>, vector<128x128xf32> -> vector<128x128xf32>
    %249 = arith.addf %242, %248 : vector<128x128xf32>
    %c4_264 = arith.constant 4 : index
    %c0_265 = arith.constant 0 : index
    %c0_266 = arith.constant 0 : index
    %250 = vector.load %arg10[%c4_264, %c0_265, %c0_266] : memref<9x128x128xf32, #tpu.memory_space<vmem>>, vector<1x128x128xf32>
    %251 = vector.shape_cast %250 : vector<1x128x128xf32> to vector<128x128xf32>
    %cst_267 = arith.constant dense<0.000000e+00> : vector<128x128xf32>
    %252 = tpu.matmul %251, %175, %cst_267 {dimension_numbers = #tpu.dot_dimension_numbers<[1], [0], [0], [1], [0, 0, 1, 1], [], []>} : vector<128x128xf32>, vector<128x128xf32>, vector<128x128xf32> -> vector<128x128xf32>
    %c2_268 = arith.constant 2 : index
    %c1_269 = arith.constant 1 : index
    %c0_270 = arith.constant 0 : index
    %c0_271 = arith.constant 0 : index
    %253 = vector.load %arg8[%c2_268, %c1_269, %c0_270, %c0_271] : memref<4x4x128x128xf32, #tpu.memory_space<vmem>>, vector<1x1x128x128xf32>
    %254 = vector.shape_cast %253 : vector<1x1x128x128xf32> to vector<128x128xf32>
    %cst_272 = arith.constant dense<0.000000e+00> : vector<128x128xf32>
    %255 = tpu.matmul %252, %254, %cst_272 {dimension_numbers = #tpu.dot_dimension_numbers<[1], [0], [0], [1], [0, 0, 1, 1], [], []>} : vector<128x128xf32>, vector<128x128xf32>, vector<128x128xf32> -> vector<128x128xf32>
    %256 = arith.addf %249, %255 : vector<128x128xf32>
    %c6_273 = arith.constant 6 : index
    %c0_274 = arith.constant 0 : index
    %c0_275 = arith.constant 0 : index
    %257 = vector.load %arg10[%c6_273, %c0_274, %c0_275] : memref<9x128x128xf32, #tpu.memory_space<vmem>>, vector<1x128x128xf32>
    %258 = vector.shape_cast %257 : vector<1x128x128xf32> to vector<128x128xf32>
    %cst_276 = arith.constant dense<0.000000e+00> : vector<128x128xf32>
    %259 = tpu.matmul %258, %175, %cst_276 {dimension_numbers = #tpu.dot_dimension_numbers<[1], [0], [0], [1], [0, 0, 1, 1], [], []>} : vector<128x128xf32>, vector<128x128xf32>, vector<128x128xf32> -> vector<128x128xf32>
    %c0_277 = arith.constant 0 : index
    %c3_278 = arith.constant 3 : index
    %c0_279 = arith.constant 0 : index
    %c0_280 = arith.constant 0 : index
    %260 = vector.load %arg8[%c0_277, %c3_278, %c0_279, %c0_280] : memref<4x4x128x128xf32, #tpu.memory_space<vmem>>, vector<1x1x128x128xf32>
    %261 = vector.shape_cast %260 : vector<1x1x128x128xf32> to vector<128x128xf32>
    %cst_281 = arith.constant dense<0.000000e+00> : vector<128x128xf32>
    %262 = tpu.matmul %259, %261, %cst_281 {dimension_numbers = #tpu.dot_dimension_numbers<[1], [0], [0], [1], [0, 0, 1, 1], [], []>} : vector<128x128xf32>, vector<128x128xf32>, vector<128x128xf32> -> vector<128x128xf32>
    %263 = arith.addf %256, %262 : vector<128x128xf32>
    %c7_282 = arith.constant 7 : index
    %c0_283 = arith.constant 0 : index
    %c0_284 = arith.constant 0 : index
    %264 = vector.load %arg10[%c7_282, %c0_283, %c0_284] : memref<9x128x128xf32, #tpu.memory_space<vmem>>, vector<1x128x128xf32>
    %265 = vector.shape_cast %264 : vector<1x128x128xf32> to vector<128x128xf32>
    %cst_285 = arith.constant dense<0.000000e+00> : vector<128x128xf32>
    %266 = tpu.matmul %265, %175, %cst_285 {dimension_numbers = #tpu.dot_dimension_numbers<[1], [0], [0], [1], [0, 0, 1, 1], [], []>} : vector<128x128xf32>, vector<128x128xf32>, vector<128x128xf32> -> vector<128x128xf32>
    %c0_286 = arith.constant 0 : index
    %c1_287 = arith.constant 1 : index
    %c0_288 = arith.constant 0 : index
    %c0_289 = arith.constant 0 : index
    %267 = vector.load %arg8[%c0_286, %c1_287, %c0_288, %c0_289] : memref<4x4x128x128xf32, #tpu.memory_space<vmem>>, vector<1x1x128x128xf32>
    %268 = vector.shape_cast %267 : vector<1x1x128x128xf32> to vector<128x128xf32>
    %cst_290 = arith.constant dense<0.000000e+00> : vector<128x128xf32>
    %269 = tpu.matmul %266, %268, %cst_290 {dimension_numbers = #tpu.dot_dimension_numbers<[1], [0], [0], [1], [0, 0, 1, 1], [], []>} : vector<128x128xf32>, vector<128x128xf32>, vector<128x128xf32> -> vector<128x128xf32>
    %270 = arith.addf %263, %269 : vector<128x128xf32>
    %271 = math.tanh %270 : vector<128x128xf32>
    %c2_291 = arith.constant 2 : index
    %c0_292 = arith.constant 0 : index
    %c0_293 = arith.constant 0 : index
    %272 = vector.load %arg11[%c2_291, %c0_292, %c0_293] : memref<4x128x128xf32, #tpu.memory_space<vmem>>, vector<1x128x128xf32>
    %273 = vector.shape_cast %272 : vector<1x128x128xf32> to vector<128x128xf32>
    %274 = vector.shape_cast %271 : vector<128x128xf32> to vector<1x128x128xf32>
    tpu.vector_store %arg11[%c2_291, %c0_292, %c0_293], %274 {strides = array<i32>} : memref<4x128x128xf32, #tpu.memory_space<vmem>>, vector<1x128x128xf32>,
    %cst_294 = arith.constant 0.000000e+00 : f32
    %275 = vector.broadcast %cst_294 : f32 to vector<128x128xf32>
    %c4_295 = arith.constant 4 : index
    %c0_296 = arith.constant 0 : index
    %c0_297 = arith.constant 0 : index
    %276 = vector.load %arg10[%c4_295, %c0_296, %c0_297] : memref<9x128x128xf32, #tpu.memory_space<vmem>>, vector<1x128x128xf32>
    %277 = vector.shape_cast %276 : vector<1x128x128xf32> to vector<128x128xf32>
    %cst_298 = arith.constant dense<0.000000e+00> : vector<128x128xf32>
    %278 = tpu.matmul %277, %175, %cst_298 {dimension_numbers = #tpu.dot_dimension_numbers<[1], [0], [0], [1], [0, 0, 1, 1], [], []>} : vector<128x128xf32>, vector<128x128xf32>, vector<128x128xf32> -> vector<128x128xf32>
    %c2_299 = arith.constant 2 : index
    %c2_300 = arith.constant 2 : index
    %c0_301 = arith.constant 0 : index
    %c0_302 = arith.constant 0 : index
    %279 = vector.load %arg8[%c2_299, %c2_300, %c0_301, %c0_302] : memref<4x4x128x128xf32, #tpu.memory_space<vmem>>, vector<1x1x128x128xf32>
    %280 = vector.shape_cast %279 : vector<1x1x128x128xf32> to vector<128x128xf32>
    %cst_303 = arith.constant dense<0.000000e+00> : vector<128x128xf32>
    %281 = tpu.matmul %278, %280, %cst_303 {dimension_numbers = #tpu.dot_dimension_numbers<[1], [0], [0], [1], [0, 0, 1, 1], [], []>} : vector<128x128xf32>, vector<128x128xf32>, vector<128x128xf32> -> vector<128x128xf32>
    %282 = arith.addf %275, %281 : vector<128x128xf32>
    %c5_304 = arith.constant 5 : index
    %c0_305 = arith.constant 0 : index
    %c0_306 = arith.constant 0 : index
    %283 = vector.load %arg10[%c5_304, %c0_305, %c0_306] : memref<9x128x128xf32, #tpu.memory_space<vmem>>, vector<1x128x128xf32>
    %284 = vector.shape_cast %283 : vector<1x128x128xf32> to vector<128x128xf32>
    %cst_307 = arith.constant dense<0.000000e+00> : vector<128x128xf32>
    %285 = tpu.matmul %284, %175, %cst_307 {dimension_numbers = #tpu.dot_dimension_numbers<[1], [0], [0], [1], [0, 0, 1, 1], [], []>} : vector<128x128xf32>, vector<128x128xf32>, vector<128x128xf32> -> vector<128x128xf32>
    %c2_308 = arith.constant 2 : index
    %c0_309 = arith.constant 0 : index
    %c0_310 = arith.constant 0 : index
    %c0_311 = arith.constant 0 : index
    %286 = vector.load %arg8[%c2_308, %c0_309, %c0_310, %c0_311] : memref<4x4x128x128xf32, #tpu.memory_space<vmem>>, vector<1x1x128x128xf32>
    %287 = vector.shape_cast %286 : vector<1x1x128x128xf32> to vector<128x128xf32>
    %cst_312 = arith.constant dense<0.000000e+00> : vector<128x128xf32>
    %288 = tpu.matmul %285, %287, %cst_312 {dimension_numbers = #tpu.dot_dimension_numbers<[1], [0], [0], [1], [0, 0, 1, 1], [], []>} : vector<128x128xf32>, vector<128x128xf32>, vector<128x128xf32> -> vector<128x128xf32>
    %289 = arith.addf %282, %288 : vector<128x128xf32>
    %c7_313 = arith.constant 7 : index
    %c0_314 = arith.constant 0 : index
    %c0_315 = arith.constant 0 : index
    %290 = vector.load %arg10[%c7_313, %c0_314, %c0_315] : memref<9x128x128xf32, #tpu.memory_space<vmem>>, vector<1x128x128xf32>
    %291 = vector.shape_cast %290 : vector<1x128x128xf32> to vector<128x128xf32>
    %cst_316 = arith.constant dense<0.000000e+00> : vector<128x128xf32>
    %292 = tpu.matmul %291, %175, %cst_316 {dimension_numbers = #tpu.dot_dimension_numbers<[1], [0], [0], [1], [0, 0, 1, 1], [], []>} : vector<128x128xf32>, vector<128x128xf32>, vector<128x128xf32> -> vector<128x128xf32>
    %c0_317 = arith.constant 0 : index
    %c2_318 = arith.constant 2 : index
    %c0_319 = arith.constant 0 : index
    %c0_320 = arith.constant 0 : index
    %293 = vector.load %arg8[%c0_317, %c2_318, %c0_319, %c0_320] : memref<4x4x128x128xf32, #tpu.memory_space<vmem>>, vector<1x1x128x128xf32>
    %294 = vector.shape_cast %293 : vector<1x1x128x128xf32> to vector<128x128xf32>
    %cst_321 = arith.constant dense<0.000000e+00> : vector<128x128xf32>
    %295 = tpu.matmul %292, %294, %cst_321 {dimension_numbers = #tpu.dot_dimension_numbers<[1], [0], [0], [1], [0, 0, 1, 1], [], []>} : vector<128x128xf32>, vector<128x128xf32>, vector<128x128xf32> -> vector<128x128xf32>
    %296 = arith.addf %289, %295 : vector<128x128xf32>
    %c8_322 = arith.constant 8 : index
    %c0_323 = arith.constant 0 : index
    %c0_324 = arith.constant 0 : index
    %297 = vector.load %arg10[%c8_322, %c0_323, %c0_324] : memref<9x128x128xf32, #tpu.memory_space<vmem>>, vector<1x128x128xf32>
    %298 = vector.shape_cast %297 : vector<1x128x128xf32> to vector<128x128xf32>
    %cst_325 = arith.constant dense<0.000000e+00> : vector<128x128xf32>
    %299 = tpu.matmul %298, %175, %cst_325 {dimension_numbers = #tpu.dot_dimension_numbers<[1], [0], [0], [1], [0, 0, 1, 1], [], []>} : vector<128x128xf32>, vector<128x128xf32>, vector<128x128xf32> -> vector<128x128xf32>
    %c0_326 = arith.constant 0 : index
    %c0_327 = arith.constant 0 : index
    %c0_328 = arith.constant 0 : index
    %c0_329 = arith.constant 0 : index
    %300 = vector.load %arg8[%c0_326, %c0_327, %c0_328, %c0_329] : memref<4x4x128x128xf32, #tpu.memory_space<vmem>>, vector<1x1x128x128xf32>
    %301 = vector.shape_cast %300 : vector<1x1x128x128xf32> to vector<128x128xf32>
    %cst_330 = arith.constant dense<0.000000e+00> : vector<128x128xf32>
    %302 = tpu.matmul %299, %301, %cst_330 {dimension_numbers = #tpu.dot_dimension_numbers<[1], [0], [0], [1], [0, 0, 1, 1], [], []>} : vector<128x128xf32>, vector<128x128xf32>, vector<128x128xf32> -> vector<128x128xf32>
    %303 = arith.addf %296, %302 : vector<128x128xf32>
    %304 = math.tanh %303 : vector<128x128xf32>
    %c3_331 = arith.constant 3 : index
    %c0_332 = arith.constant 0 : index
    %c0_333 = arith.constant 0 : index
    %305 = vector.load %arg11[%c3_331, %c0_332, %c0_333] : memref<4x128x128xf32, #tpu.memory_space<vmem>>, vector<1x128x128xf32>
    %306 = vector.shape_cast %305 : vector<1x128x128xf32> to vector<128x128xf32>
    %307 = vector.shape_cast %304 : vector<128x128xf32> to vector<1x128x128xf32>
    tpu.vector_store %arg11[%c3_331, %c0_332, %c0_333], %307 {strides = array<i32>} : memref<4x128x128xf32, #tpu.memory_space<vmem>>, vector<1x128x128xf32>,
    return
  }
  func.func @transform_0(%arg0: i32) -> (i32, i32) {
    %c0_i32 = arith.constant 0 : i32
    %c0_i32_0 = arith.constant 0 : i32
    %c0_i32_1 = arith.constant 0 : i32
    return %c0_i32, %c0_i32_0 : i32, i32
  }
  func.func @transform_1(%arg0: i32) -> (i32, i32) {
    %c0_i32 = arith.constant 0 : i32
    %c0_i32_0 = arith.constant 0 : i32
    %c0_i32_1 = arith.constant 0 : i32
    return %c0_i32, %c0_i32_0 : i32, i32
  }
  func.func @transform_2(%arg0: i32) -> (i32, i32) {
    %c0_i32 = arith.constant 0 : i32
    %c0_i32_0 = arith.constant 0 : i32
    %c0_i32_1 = arith.constant 0 : i32
    return %c0_i32, %c0_i32_0 : i32, i32
  }
  func.func @transform_3(%arg0: i32) -> (i32, i32) {
    %c0_i32 = arith.constant 0 : i32
    %c0_i32_0 = arith.constant 0 : i32
    %c0_i32_1 = arith.constant 0 : i32
    return %c0_i32, %c0_i32_0 : i32, i32
  }
  func.func @transform_4(%arg0: i32) -> (i32, i32, i32, i32) {
    %c0_i32 = arith.constant 0 : i32
    %c0_i32_0 = arith.constant 0 : i32
    %c0_i32_1 = arith.constant 0 : i32
    %c0_i32_2 = arith.constant 0 : i32
    %c0_i32_3 = arith.constant 0 : i32
    return %c0_i32, %c0_i32_0, %c0_i32_1, %c0_i32_2 : i32, i32, i32, i32
  }
  func.func @transform_5(%arg0: i32) -> (i32, i32) {
    %c0_i32 = arith.constant 0 : i32
    %c0_i32_0 = arith.constant 0 : i32
    %c0_i32_1 = arith.constant 0 : i32
    return %c0_i32, %c0_i32_0 : i32, i32
  }
  func.func @transform_6(%arg0: i32) -> (i32, i32) {
    %c0_i32 = arith.constant 0 : i32
    %c0_i32_0 = arith.constant 0 : i32
    %c0_i32_1 = arith.constant 0 : i32
    return %c0_i32, %c0_i32_0 : i32, i32
  }
  func.func @transform_7(%arg0: i32) -> (i32, i32, i32, i32) {
    %c0_i32 = arith.constant 0 : i32
    %c0_i32_0 = arith.constant 0 : i32
    %c0_i32_1 = arith.constant 0 : i32
    %c0_i32_2 = arith.constant 0 : i32
    %c0_i32_3 = arith.constant 0 : i32
    return %c0_i32, %c0_i32_0, %c0_i32_1, %c0_i32_2 : i32, i32, i32, i32
  }
  func.func @transform_8(%arg0: i32) -> (i32, i32, i32) {
    %c0_i32 = arith.constant 0 : i32
    %c0_i32_0 = arith.constant 0 : i32
    %c0_i32_1 = arith.constant 0 : i32
    %c0_i32_2 = arith.constant 0 : i32
    return %c0_i32, %c0_i32_0, %c0_i32_1 : i32, i32, i32
  }
  func.func @transform_9(%arg0: i32) -> (i32, i32, i32) {
    %c0_i32 = arith.constant 0 : i32
    %c0_i32_0 = arith.constant 0 : i32
    %c0_i32_1 = arith.constant 0 : i32
    %c0_i32_2 = arith.constant 0 : i32
    return %c0_i32, %c0_i32_0, %c0_i32_1 : i32, i32, i32
  }
  func.func @transform_10(%arg0: i32) -> (i32, i32, i32) {
    %c0_i32 = arith.constant 0 : i32
    %c0_i32_0 = arith.constant 0 : i32
    %c0_i32_1 = arith.constant 0 : i32
    %c0_i32_2 = arith.constant 0 : i32
    return %c0_i32, %c0_i32_0, %c0_i32_1 : i32, i32, i32
  }
}

</mosaic_0001>

<llo_original>
// kernel: _forward.1
$region0: #{_forward.1}
  #allocation0 [shape = 'u32[]', space=smem, size = 0x4, offset = 0x4, fixed_abs, tag = 'smem constant byte address 0x4 - core index']
  #allocation1 [shape = 'u32[144,128]{1,0:T(1,128)}', space=vmem, size = 0x12000, scoped, tag = 'internal scratch']
  #allocation2 [shape = 'f32[128,128]{1,0:T(8,128)}', space=vmem, size = 0x10000, scoped, tag = 'scratch operand']
  %s0 = inlined_call_operand.vmem [shape: f32[32,512], index: 0, kind: input, shape index: {}]
  %s1 = inlined_call_operand.hbm [shape: f32[512,128], index: 1, kind: input, shape index: {}]
  %s2 = inlined_call_operand.vmem [shape: f32[1,128], index: 2, kind: input, shape index: {}]
  %s3 = inlined_call_operand.vmem [shape: f32[1,128], index: 3, kind: input, shape index: {}]
  %s4 = inlined_call_operand.hbm [shape: f32[4,4,128,128], index: 4, kind: input, shape index: {}]
  %s5 = inlined_call_operand.vmem [shape: f32[1,128], index: 5, kind: input, shape index: {}]
  %s6 = inlined_call_operand.vmem [shape: f32[1,128], index: 6, kind: input, shape index: {}]
  %s7 = inlined_call_operand.hbm [shape: f32[4,4,128,128], index: 7, kind: input, shape index: {}]
  %s8 = inlined_call_operand.hbm [shape: f32[9,32,32], index: 8, kind: input, shape index: {}]
  %s9 = inlined_call_operand.vmem [shape: f32[9,128,128], index: 9, kind: input, shape index: {}]
  %s10 = inlined_call_operand.vmem [shape: f32[4,128,128], index: 10, kind: output, shape index: {}]
  %s11 = sld [smem:[#allocation0]]
  $region66: #{_forward.1} parent=0
    _
  %s13 = ssub.s32 1, %s11
  %s14 = scalar_select 0, %s13, %s11
  $region1: #{_forward.1} parent=0
    #allocation3 [shape = 'u8[262144]{0}', space=vmem, size = 0x40000, scoped, tag = 'input window, operand 1, single buffered']
    #allocation4 [shape = 's32[1]{0}', space=sflag, size = 0x4, scoped, tag = 'scoped memory for _forward.1']
    #allocation5 [shape = 'u8[1048576]{0}', space=vmem, size = 0x100000, scoped, tag = 'input window, operand 4, single buffered']
    #allocation6 [shape = 's32[1]{0}', space=sflag, size = 0x4, scoped, tag = 'scoped memory for _forward.1']
    #allocation7 [shape = 'u8[1048576]{0}', space=vmem, size = 0x100000, scoped, tag = 'input window, operand 7, single buffered']
    #allocation8 [shape = 'u8[147456]{0}', space=vmem, size = 0x24000, scoped, tag = 'input window, operand 8, single buffered']
    #allocation9 [shape = 's32[1]{0}', space=sflag, size = 0x4, scoped, tag = 'scoped memory for _forward.1']
    %15 = vsyncpa [#allocation4], 0
    %16 = vsyncpa [#allocation6], 0
    %17 = vsyncpa [#allocation9], 0
    // Predicated region
    $region2: #{_forward.1} parent=1 // pred_check
      _
    $region3: #{_forward.1} parent=1 // pred_check_branch
      %19 = sbr.rel (0) target = $region5
    $region4: #{_forward.1} parent=1 // pred_region
      _
    $region5: #{_forward.1} parent=1 // pred_fallthru
      _
    // Predicated region
    $region6: #{_forward.1} parent=1 // pred_check
      _
    $region7: #{_forward.1} parent=1 // pred_check_branch
      %21 = sbr.rel (0) target = $region9
    $region8: #{_forward.1} parent=1 // pred_region
      %s23 = ssub.s32 8192, 8192
      %24 = vsyncadd [#allocation4], %s23
      %s25 = sshll.u32 [#allocation3], 4
      %s26 = int_to_ptr.vmem [resolvable:$true] %s25
      %31 = dma.hbm_to_vmem [thread:$0]  %s1, 8192, %s26, [#allocation4], 128, 128, 8
    $region9: #{_forward.1} parent=1 // pred_fallthru
      _
    // Predicated region
    $region10: #{_forward.1} parent=1 // pred_check
      _
    $region11: #{_forward.1} parent=1 // pred_check_branch
      %33 = sbr.rel (0) target = $region13
    $region12: #{_forward.1} parent=1 // pred_region
      _
    $region13: #{_forward.1} parent=1 // pred_fallthru
      _
    // Predicated region
    $region14: #{_forward.1} parent=1 // pred_check
      _
    $region15: #{_forward.1} parent=1 // pred_check_branch
      %35 = sbr.rel (0) target = $region17
    $region16: #{_forward.1} parent=1 // pred_region
      _
    $region17: #{_forward.1} parent=1 // pred_fallthru
      _
    // Predicated region
    $region18: #{_forward.1} parent=1 // pred_check
      _
    $region19: #{_forward.1} parent=1 // pred_check_branch
      %37 = sbr.rel (0) target = $region21
    $region20: #{_forward.1} parent=1 // pred_region
      %s39 = ssub.s32 32768, 32768
      %40 = vsyncadd [#allocation6], %s39
      %s41 = sshll.u32 [#allocation5], 4
      %s42 = int_to_ptr.vmem [resolvable:$true] %s41
      %47 = dma.hbm_to_vmem [thread:$0]  %s4, 32768, %s42, [#allocation6], 128, 128, 8
    $region21: #{_forward.1} parent=1 // pred_fallthru
      _
    // Predicated region
    $region22: #{_forward.1} parent=1 // pred_check
      _
    $region23: #{_forward.1} parent=1 // pred_check_branch
      %49 = sbr.rel (0) target = $region25
    $region24: #{_forward.1} parent=1 // pred_region
      _
    $region25: #{_forward.1} parent=1 // pred_fallthru
      _
    // Predicated region
    $region26: #{_forward.1} parent=1 // pred_check
      _
    $region27: #{_forward.1} parent=1 // pred_check_branch
      %51 = sbr.rel (0) target = $region29
    $region28: #{_forward.1} parent=1 // pred_region
      _
    $region29: #{_forward.1} parent=1 // pred_fallthru
      _
    // Predicated region
    $region30: #{_forward.1} parent=1 // pred_check
      _
    $region31: #{_forward.1} parent=1 // pred_check_branch
      %53 = sbr.rel (0) target = $region33
    $region32: #{_forward.1} parent=1 // pred_region
      %s55 = ssub.s32 32768, 32768
      %56 = vsyncadd [#allocation6], %s55
      %s57 = sshll.u32 [#allocation7], 4
      %s58 = int_to_ptr.vmem [resolvable:$true] %s57
      %63 = dma.hbm_to_vmem [thread:$0]  %s7, 32768, %s58, [#allocation6], 128, 128, 8
    $region33: #{_forward.1} parent=1 // pred_fallthru
      _
    // Predicated region
    $region34: #{_forward.1} parent=1 // pred_check
      _
    $region35: #{_forward.1} parent=1 // pred_check_branch
      %65 = sbr.rel (0) target = $region37
    $region36: #{_forward.1} parent=1 // pred_region
      %s67 = ssub.s32 4608, 4608
      %68 = vsyncadd [#allocation9], %s67
      %s69 = sshll.u32 [#allocation8], 4
      %s70 = int_to_ptr.vmem [resolvable:$true] %s69
      %75 = dma.hbm_to_vmem [thread:$0]  %s8, 4608, %s70, [#allocation9], 128, 128, 8
    $region37: #{_forward.1} parent=1 // pred_fallthru
      _
    // Predicated region
    $region38: #{_forward.1} parent=1 // pred_check
      _
    $region39: #{_forward.1} parent=1 // pred_check_branch
      %77 = sbr.rel (0) target = $region41
    $region40: #{_forward.1} parent=1 // pred_region
      _
    $region41: #{_forward.1} parent=1 // pred_fallthru
      _
    // Predicated region
    $region42: #{_forward.1} parent=1 // pred_check
      _
    $region43: #{_forward.1} parent=1 // pred_check_branch
      %79 = sbr.rel (0) target = $region45
    $region44: #{_forward.1} parent=1 // pred_region
      %80 = dma.done [#allocation4], 8192
    $region45: #{_forward.1} parent=1 // pred_fallthru
      _
    // Predicated region
    $region46: #{_forward.1} parent=1 // pred_check
      _
    $region47: #{_forward.1} parent=1 // pred_check_branch
      %82 = sbr.rel (0) target = $region49
    $region48: #{_forward.1} parent=1 // pred_region
      %83 = dma.done [#allocation6], 32768
    $region49: #{_forward.1} parent=1 // pred_fallthru
      _
    // Predicated region
    $region50: #{_forward.1} parent=1 // pred_check
      _
    $region51: #{_forward.1} parent=1 // pred_check_branch
      %85 = sbr.rel (0) target = $region53
    $region52: #{_forward.1} parent=1 // pred_region
      %86 = dma.done [#allocation6], 32768
    $region53: #{_forward.1} parent=1 // pred_fallthru
      _
    // Predicated region
    $region54: #{_forward.1} parent=1 // pred_check
      _
    $region55: #{_forward.1} parent=1 // pred_check_branch
      %88 = sbr.rel (0) target = $region57
    $region56: #{_forward.1} parent=1 // pred_region
      %89 = dma.done [#allocation9], 4608
    $region57: #{_forward.1} parent=1 // pred_fallthru
      _
    %v90 = vld [vmem:[%s0] sm:$0xff]
    %v91 = vld [vmem:[%s0 + $0x8] sm:$0xff]
    %v92 = vld [vmem:[%s0 + $0x10] sm:$0xff]
    %v93 = vld [vmem:[%s0 + $0x18] sm:$0xff]
    %v94 = vld [vmem:[%s0 + $0x20] sm:$0xff]
    %v95 = vld [vmem:[%s0 + $0x28] sm:$0xff]
    %v96 = vld [vmem:[%s0 + $0x30] sm:$0xff]
    %v97 = vld [vmem:[%s0 + $0x38] sm:$0xff]
    %v98 = vld [vmem:[%s0 + $0x40] sm:$0xff]
    %v99 = vld [vmem:[%s0 + $0x48] sm:$0xff]
    %v100 = vld [vmem:[%s0 + $0x50] sm:$0xff]
    %v101 = vld [vmem:[%s0 + $0x58] sm:$0xff]
    %v102 = vld [vmem:[%s0 + $0x60] sm:$0xff]
    %v103 = vld [vmem:[%s0 + $0x68] sm:$0xff]
    %v104 = vld [vmem:[%s0 + $0x70] sm:$0xff]
    %v105 = vld [vmem:[%s0 + $0x78] sm:$0xff]
    %v106 = vld [vmem:[#allocation3] sm:$0xff]
    %v107 = vld [vmem:[#allocation3 + $0x8] sm:$0xff]
    %v108 = vld [vmem:[#allocation3 + $0x10] sm:$0xff]
    %v109 = vld [vmem:[#allocation3 + $0x18] sm:$0xff]
    %v110 = vld [vmem:[#allocation3 + $0x20] sm:$0xff]
    %v111 = vld [vmem:[#allocation3 + $0x28] sm:$0xff]
    %v112 = vld [vmem:[#allocation3 + $0x30] sm:$0xff]
    %v113 = vld [vmem:[#allocation3 + $0x38] sm:$0xff]
    %v114 = vld [vmem:[#allocation3 + $0x40] sm:$0xff]
    %v115 = vld [vmem:[#allocation3 + $0x48] sm:$0xff]
    %v116 = vld [vmem:[#allocation3 + $0x50] sm:$0xff]
    %v117 = vld [vmem:[#allocation3 + $0x58] sm:$0xff]
    %v118 = vld [vmem:[#allocation3 + $0x60] sm:$0xff]
    %v119 = vld [vmem:[#allocation3 + $0x68] sm:$0xff]
    %v120 = vld [vmem:[#allocation3 + $0x70] sm:$0xff]
    %v121 = vld [vmem:[#allocation3 + $0x78] sm:$0xff]
    %v122 = vld [vmem:[#allocation3 + $0x80] sm:$0xff]
    %v123 = vld [vmem:[#allocation3 + $0x88] sm:$0xff]
    %v124 = vld [vmem:[#allocation3 + $0x90] sm:$0xff]
    %v125 = vld [vmem:[#allocation3 + $0x98] sm:$0xff]
    %v126 = vld [vmem:[#allocation3 + $0xa0] sm:$0xff]
    %v127 = vld [vmem:[#allocation3 + $0xa8] sm:$0xff]
    %v128 = vld [vmem:[#allocation3 + $0xb0] sm:$0xff]
    %v129 = vld [vmem:[#allocation3 + $0xb8] sm:$0xff]
    %v130 = vld [vmem:[#allocation3 + $0xc0] sm:$0xff]
    %v131 = vld [vmem:[#allocation3 + $0xc8] sm:$0xff]
    %v132 = vld [vmem:[#allocation3 + $0xd0] sm:$0xff]
    %v133 = vld [vmem:[#allocation3 + $0xd8] sm:$0xff]
    %v134 = vld [vmem:[#allocation3 + $0xe0] sm:$0xff]
    %v135 = vld [vmem:[#allocation3 + $0xe8] sm:$0xff]
    %v136 = vld [vmem:[#allocation3 + $0xf0] sm:$0xff]
    %v137 = vld [vmem:[#allocation3 + $0xf8] sm:$0xff]
    %v138 = vld [vmem:[#allocation3 + $0x100] sm:$0xff]
    %v139 = vld [vmem:[#allocation3 + $0x108] sm:$0xff]
    %v140 = vld [vmem:[#allocation3 + $0x110] sm:$0xff]
    %v141 = vld [vmem:[#allocation3 + $0x118] sm:$0xff]
    %v142 = vld [vmem:[#allocation3 + $0x120] sm:$0xff]
    %v143 = vld [vmem:[#allocation3 + $0x128] sm:$0xff]
    %v144 = vld [vmem:[#allocation3 + $0x130] sm:$0xff]
    %v145 = vld [vmem:[#allocation3 + $0x138] sm:$0xff]
    %v146 = vld [vmem:[#allocation3 + $0x140] sm:$0xff]
    %v147 = vld [vmem:[#allocation3 + $0x148] sm:$0xff]
    %v148 = vld [vmem:[#allocation3 + $0x150] sm:$0xff]
    %v149 = vld [vmem:[#allocation3 + $0x158] sm:$0xff]
    %v150 = vld [vmem:[#allocation3 + $0x160] sm:$0xff]
    %v151 = vld [vmem:[#allocation3 + $0x168] sm:$0xff]
    %v152 = vld [vmem:[#allocation3 + $0x170] sm:$0xff]
    %v153 = vld [vmem:[#allocation3 + $0x178] sm:$0xff]
    %v154 = vld [vmem:[#allocation3 + $0x180] sm:$0xff]
    %v155 = vld [vmem:[#allocation3 + $0x188] sm:$0xff]
    %v156 = vld [vmem:[#allocation3 + $0x190] sm:$0xff]
    %v157 = vld [vmem:[#allocation3 + $0x198] sm:$0xff]
    %v158 = vld [vmem:[#allocation3 + $0x1a0] sm:$0xff]
    %v159 = vld [vmem:[#allocation3 + $0x1a8] sm:$0xff]
    %v160 = vld [vmem:[#allocation3 + $0x1b0] sm:$0xff]
    %v161 = vld [vmem:[#allocation3 + $0x1b8] sm:$0xff]
    %v162 = vld [vmem:[#allocation3 + $0x1c0] sm:$0xff]
    %v163 = vld [vmem:[#allocation3 + $0x1c8] sm:$0xff]
    %v164 = vld [vmem:[#allocation3 + $0x1d0] sm:$0xff]
    %v165 = vld [vmem:[#allocation3 + $0x1d8] sm:$0xff]
    %v166 = vld [vmem:[#allocation3 + $0x1e0] sm:$0xff]
    %v167 = vld [vmem:[#allocation3 + $0x1e8] sm:$0xff]
    %v168 = vld [vmem:[#allocation3 + $0x1f0] sm:$0xff]
    %v169 = vld [vmem:[#allocation3 + $0x1f8] sm:$0xff]
    %170 = vmatprep.subr.mxu0 0.0
    %171 = vmatpush1.msra.mxu0 %v106
    %172 = vmatprep.subr.mxu0 0.0
    %173 = vmatpush1.msra.mxu0 %v107
    %174 = vmatprep.subr.mxu0 0.0
    %175 = vmatpush1.msra.mxu0 %v108
    %176 = vmatprep.subr.mxu0 0.0
    %177 = vmatpush1.msra.mxu0 %v109
    %178 = vmatprep.subr.mxu0 0.0
    %179 = vmatpush1.msra.mxu0 %v110
    %180 = vmatprep.subr.mxu0 0.0
    %181 = vmatpush1.msra.mxu0 %v111
    %182 = vmatprep.subr.mxu0 0.0
    %183 = vmatpush1.msra.mxu0 %v112
    %184 = vmatprep.subr.mxu0 0.0
    %185 = vmatpush1.msra.mxu0 %v113
    %186 = vmatprep.subr.mxu0 0.0
    %187 = vmatpush1.msra.mxu0 %v114
    %188 = vmatprep.subr.mxu0 0.0
    %189 = vmatpush1.msra.mxu0 %v115
    %190 = vmatprep.subr.mxu0 0.0
    %191 = vmatpush1.msra.mxu0 %v116
    %192 = vmatprep.subr.mxu0 0.0
    %193 = vmatpush1.msra.mxu0 %v117
    %194 = vmatprep.subr.mxu0 0.0
    %195 = vmatpush1.msra.mxu0 %v118
    %196 = vmatprep.subr.mxu0 0.0
    %197 = vmatpush1.msra.mxu0 %v119
    %198 = vmatprep.subr.mxu0 0.0
    %199 = vmatpush1.msra.mxu0 %v120
    %200 = vmatprep.subr.mxu0 0.0
    %201 = vmatpush1.msra.mxu0 %v121
    %202 = vmatprep.subr.mxu0 0.0
    %203 = vmatpush1.msra.mxu0 %v122
    %204 = vmatprep.subr.mxu0 0.0
    %205 = vmatpush1.msra.mxu0 %v123
    %206 = vmatprep.subr.mxu0 0.0
    %207 = vmatpush1.msra.mxu0 %v124
    %208 = vmatprep.subr.mxu0 0.0
    %209 = vmatpush1.msra.mxu0 %v125
    %210 = vmatprep.subr.mxu0 0.0
    %211 = vmatpush1.msra.mxu0 %v126
    %212 = vmatprep.subr.mxu0 0.0
    %213 = vmatpush1.msra.mxu0 %v127
    %214 = vmatprep.subr.mxu0 0.0
    %215 = vmatpush1.msra.mxu0 %v128
    %216 = vmatprep.subr.mxu0 0.0
    %217 = vmatpush1.msra.mxu0 %v129
    %218 = vmatprep.subr.mxu0 0.0
    %219 = vmatpush1.msra.mxu0 %v130
    %220 = vmatprep.subr.mxu0 0.0
    %221 = vmatpush1.msra.mxu0 %v131
    %222 = vmatprep.subr.mxu0 0.0
    %223 = vmatpush1.msra.mxu0 %v132
    %224 = vmatprep.subr.mxu0 0.0
    %225 = vmatpush1.msra.mxu0 %v133
    %226 = vmatprep.subr.mxu0 0.0
    %227 = vmatpush1.msra.mxu0 %v134
    %228 = vmatprep.subr.mxu0 0.0
    %229 = vmatpush1.msra.mxu0 %v135
    %230 = vmatprep.subr.mxu0 0.0
    %231 = vmatpush1.msra.mxu0 %v136
    %232 = vmatprep.subr.mxu0 0.0
    %233 = vmatpush1.msra.mxu0 %v137
    %234 = vmatprep.mubr.f32.mxu0 %v91
    %235 = vmatmul.mubr.f32.gmra.mrb[0].mxu0 %v90
    %v236 = vpop.f32.mrb[0].mxu0
    %v237 = vadd.f32 0.0, %v236
    %v238 = vpop.f32.mrb[0].mxu0
    %239 = vmatprep.mubr.f32.mxu0 %v95
    %240 = vmatmul.mubr.f32.gmra.mrb[0].mxu0 %v94
    %v241 = vpop.f32.mrb[0].mxu0
    %v242 = vadd.f32 0.0, %v241
    %v243 = vpop.f32.mrb[0].mxu0
    %244 = vmatprep.mubr.f32.mxu0 %v99
    %245 = vmatmul.mubr.f32.gmra.mrb[0].mxu0 %v98
    %v246 = vpop.f32.mrb[0].mxu0
    %v247 = vadd.f32 0.0, %v246
    %v248 = vpop.f32.mrb[0].mxu0
    %249 = vmatprep.mubr.f32.mxu0 %v103
    %250 = vmatmul.mubr.f32.gmra.mrb[0].mxu0 %v102
    %v251 = vpop.f32.mrb[0].mxu0
    %v252 = vadd.f32 0.0, %v251
    %v253 = vpop.f32.mrb[0].mxu0
    %254 = vdwg.mxu0
    %255 = vmatprep.subr.mxu0 0.0
    %256 = vmatpush1.msra.mxu0 %v138
    %257 = vmatprep.subr.mxu0 0.0
    %258 = vmatpush1.msra.mxu0 %v139
    %259 = vmatprep.subr.mxu0 0.0
    %260 = vmatpush1.msra.mxu0 %v140
    %261 = vmatprep.subr.mxu0 0.0
    %262 = vmatpush1.msra.mxu0 %v141
    %263 = vmatprep.subr.mxu0 0.0
    %264 = vmatpush1.msra.mxu0 %v142
    %265 = vmatprep.subr.mxu0 0.0
    %266 = vmatpush1.msra.mxu0 %v143
    %267 = vmatprep.subr.mxu0 0.0
    %268 = vmatpush1.msra.mxu0 %v144
    %269 = vmatprep.subr.mxu0 0.0
    %270 = vmatpush1.msra.mxu0 %v145
    %271 = vmatprep.subr.mxu0 0.0
    %272 = vmatpush1.msra.mxu0 %v146
    %273 = vmatprep.subr.mxu0 0.0
    %274 = vmatpush1.msra.mxu0 %v147
    %275 = vmatprep.subr.mxu0 0.0
    %276 = vmatpush1.msra.mxu0 %v148
    %277 = vmatprep.subr.mxu0 0.0
    %278 = vmatpush1.msra.mxu0 %v149
    %279 = vmatprep.subr.mxu0 0.0
    %280 = vmatpush1.msra.mxu0 %v150
    %281 = vmatprep.subr.mxu0 0.0
    %282 = vmatpush1.msra.mxu0 %v151
    %283 = vmatprep.subr.mxu0 0.0
    %284 = vmatpush1.msra.mxu0 %v152
    %285 = vmatprep.subr.mxu0 0.0
    %286 = vmatpush1.msra.mxu0 %v153
    %287 = vmatprep.subr.mxu0 0.0
    %288 = vmatpush1.msra.mxu0 %v154
    %289 = vmatprep.subr.mxu0 0.0
    %290 = vmatpush1.msra.mxu0 %v155
    %291 = vmatprep.subr.mxu0 0.0
    %292 = vmatpush1.msra.mxu0 %v156
    %293 = vmatprep.subr.mxu0 0.0
    %294 = vmatpush1.msra.mxu0 %v157
    %295 = vmatprep.subr.mxu0 0.0
    %296 = vmatpush1.msra.mxu0 %v158
    %297 = vmatprep.subr.mxu0 0.0
    %298 = vmatpush1.msra.mxu0 %v159
    %299 = vmatprep.subr.mxu0 0.0
    %300 = vmatpush1.msra.mxu0 %v160
    %301 = vmatprep.subr.mxu0 0.0
    %302 = vmatpush1.msra.mxu0 %v161
    %303 = vmatprep.subr.mxu0 0.0
    %304 = vmatpush1.msra.mxu0 %v162
    %305 = vmatprep.subr.mxu0 0.0
    %306 = vmatpush1.msra.mxu0 %v163
    %307 = vmatprep.subr.mxu0 0.0
    %308 = vmatpush1.msra.mxu0 %v164
    %309 = vmatprep.subr.mxu0 0.0
    %310 = vmatpush1.msra.mxu0 %v165
    %311 = vmatprep.subr.mxu0 0.0
    %312 = vmatpush1.msra.mxu0 %v166
    %313 = vmatprep.subr.mxu0 0.0
    %314 = vmatpush1.msra.mxu0 %v167
    %315 = vmatprep.subr.mxu0 0.0
    %316 = vmatpush1.msra.mxu0 %v168
    %317 = vmatprep.subr.mxu0 0.0
    %318 = vmatpush1.msra.mxu0 %v169
    %319 = vmatprep.mubr.f32.mxu0 %v93
    %320 = vmatmul.mubr.f32.gmra.mrb[0].mxu0 %v92
    %v321 = vpop.f32.mrb[0].mxu0
    %v322 = vadd.f32 %v237, %v321
    %v323 = vpop.f32.mrb[0].mxu0
    %324 = vmatprep.mubr.f32.mxu0 %v97
    %325 = vmatmul.mubr.f32.gmra.mrb[0].mxu0 %v96
    %v326 = vpop.f32.mrb[0].mxu0
    %v327 = vadd.f32 %v242, %v326
    %v328 = vpop.f32.mrb[0].mxu0
    %329 = vmatprep.mubr.f32.mxu0 %v101
    %330 = vmatmul.mubr.f32.gmra.mrb[0].mxu0 %v100
    %v331 = vpop.f32.mrb[0].mxu0
    %v332 = vadd.f32 %v247, %v331
    %v333 = vpop.f32.mrb[0].mxu0
    %334 = vmatprep.mubr.f32.mxu0 %v105
    %335 = vmatmul.mubr.f32.gmra.mrb[0].mxu0 %v104
    %v336 = vpop.f32.mrb[0].mxu0
    %v337 = vadd.f32 %v252, %v336
    %v338 = vpop.f32.mrb[0].mxu0
    %339 = vdwg.mxu0
    %v340 = vld [vmem:[%s2] sm:$0x1]
    %v341 = vld [vmem:[%s3] sm:$0x1]
    %vm342 = vcmask 261120
    %v344 = vsel %vm342, 1.0, 0
    %346 = vmatprep.subr.mxu0 0.0
    %347 = vmatpush1.msra.mxu0 %v322
    %348 = vmatprep.subr.mxu0 0.0
    %349 = vmatpush1.msra.mxu0 %v327
    %350 = vmatprep.subr.mxu0 0.0
    %351 = vmatpush1.msra.mxu0 %v332
    %352 = vmatprep.subr.mxu0 0.0
    %353 = vmatpush1.msra.mxu0 %v337
    %354 = vmatprep.subr.mxu0 0.0
    %355 = vmatpush1.msra.mxu0 0.0
    %356 = vmatprep.subr.mxu0 0.0
    %357 = vmatpush1.msra.mxu0 0.0
    %358 = vmatprep.subr.mxu0 0.0
    %359 = vmatpush1.msra.mxu0 0.0
    %360 = vmatprep.subr.mxu0 0.0
    %361 = vmatpush1.msra.mxu0 0.0
    %362 = vmatprep.subr.mxu0 0.0
    %363 = vmatpush1.msra.mxu0 0.0
    %364 = vmatprep.subr.mxu0 0.0
    %365 = vmatpush1.msra.mxu0 0.0
    %366 = vmatprep.subr.mxu0 0.0
    %367 = vmatpush1.msra.mxu0 0.0
    %368 = vmatprep.subr.mxu0 0.0
    %369 = vmatpush1.msra.mxu0 0.0
    %370 = vmatprep.subr.mxu0 0.0
    %371 = vmatpush1.msra.mxu0 0.0
    %372 = vmatprep.subr.mxu0 0.0
    %373 = vmatpush1.msra.mxu0 0.0
    %374 = vmatprep.subr.mxu0 0.0
    %375 = vmatpush1.msra.mxu0 0.0
    %376 = vmatprep.subr.mxu0 0.0
    %377 = vmatpush1.msra.mxu0 0.0
    %378 = vmatprep.subr.mxu0 0.0
    %379 = vmatpush1.msra.mxu0 0.0
    %380 = vmatprep.subr.mxu0 0.0
    %381 = vmatpush1.msra.mxu0 0.0
    %382 = vmatprep.subr.mxu0 0.0
    %383 = vmatpush1.msra.mxu0 0.0
    %384 = vmatprep.subr.mxu0 0.0
    %385 = vmatpush1.msra.mxu0 0.0
    %386 = vmatprep.subr.mxu0 0.0
    %387 = vmatpush1.msra.mxu0 0.0
    %388 = vmatprep.subr.mxu0 0.0
    %389 = vmatpush1.msra.mxu0 0.0
    %390 = vmatprep.subr.mxu0 0.0
    %391 = vmatpush1.msra.mxu0 0.0
    %392 = vmatprep.subr.mxu0 0.0
    %393 = vmatpush1.msra.mxu0 0.0
    %394 = vmatprep.subr.mxu0 0.0
    %395 = vmatpush1.msra.mxu0 0.0
    %396 = vmatprep.subr.mxu0 0.0
    %397 = vmatpush1.msra.mxu0 0.0
    %398 = vmatprep.subr.mxu0 0.0
    %399 = vmatpush1.msra.mxu0 0.0
    %400 = vmatprep.subr.mxu0 0.0
    %401 = vmatpush1.msra.mxu0 0.0
    %402 = vmatprep.subr.mxu0 0.0
    %403 = vmatpush1.msra.mxu0 0.0
    %404 = vmatprep.subr.mxu0 0.0
    %405 = vmatpush1.msra.mxu0 0.0
    %406 = vmatprep.subr.mxu0 0.0
    %407 = vmatpush1.msra.mxu0 0.0
    %408 = vmatprep.subr.mxu0 0.0
    %409 = vmatpush1.msra.mxu0 0.0
    %410 = vmatprep.mubr.f32.mxu0 0.0
    %411 = vmatmul.mubr.f32.gmra.mrb[0].mxu0 %v344
    %v412 = vpop.f32.mrb[0].mxu0
    %v413 = vadd.f32 0.0, %v412
    %v414 = vpop.f32.mrb[0].mxu0
    %415 = vdwg.mxu0
    %v416 = vmul.f32 %v413, 0.03125
    %v417 = vlaneseq
    %v418 = vshrl.u32 %v417, 7
    %v419 = vsub.s32 0, %v418
    %v420 = vrot.slane %v416, %v419
    %v421 = vsub.f32 %v322, %v420
    %v422 = vsub.f32 %v327, %v420
    %v423 = vsub.f32 %v332, %v420
    %v424 = vsub.f32 %v337, %v420
    %v425 = vmul.f32 %v421, %v421
    %v426 = vmul.f32 %v422, %v422
    %v427 = vmul.f32 %v423, %v423
    %v428 = vmul.f32 %v424, %v424
    %429 = vmatprep.subr.mxu0 0.0
    %430 = vmatpush1.msra.mxu0 %v425
    %431 = vmatprep.subr.mxu0 0.0
    %432 = vmatpush1.msra.mxu0 %v426
    %433 = vmatprep.subr.mxu0 0.0
    %434 = vmatpush1.msra.mxu0 %v427
    %435 = vmatprep.subr.mxu0 0.0
    %436 = vmatpush1.msra.mxu0 %v428
    %437 = vmatprep.subr.mxu0 0.0
    %438 = vmatpush1.msra.mxu0 0.0
    %439 = vmatprep.subr.mxu0 0.0
    %440 = vmatpush1.msra.mxu0 0.0
    %441 = vmatprep.subr.mxu0 0.0
    %442 = vmatpush1.msra.mxu0 0.0
    %443 = vmatprep.subr.mxu0 0.0
    %444 = vmatpush1.msra.mxu0 0.0
    %445 = vmatprep.subr.mxu0 0.0
    %446 = vmatpush1.msra.mxu0 0.0
    %447 = vmatprep.subr.mxu0 0.0
    %448 = vmatpush1.msra.mxu0 0.0
    %449 = vmatprep.subr.mxu0 0.0
    %450 = vmatpush1.msra.mxu0 0.0
    %451 = vmatprep.subr.mxu0 0.0
    %452 = vmatpush1.msra.mxu0 0.0
    %453 = vmatprep.subr.mxu0 0.0
    %454 = vmatpush1.msra.mxu0 0.0
    %455 = vmatprep.subr.mxu0 0.0
    %456 = vmatpush1.msra.mxu0 0.0
    %457 = vmatprep.subr.mxu0 0.0
    %458 = vmatpush1.msra.mxu0 0.0
    %459 = vmatprep.subr.mxu0 0.0
    %460 = vmatpush1.msra.mxu0 0.0
    %461 = vmatprep.subr.mxu0 0.0
    %462 = vmatpush1.msra.mxu0 0.0
    %463 = vmatprep.subr.mxu0 0.0
    %464 = vmatpush1.msra.mxu0 0.0
    %465 = vmatprep.subr.mxu0 0.0
    %466 = vmatpush1.msra.mxu0 0.0
    %467 = vmatprep.subr.mxu0 0.0
    %468 = vmatpush1.msra.mxu0 0.0
    %469 = vmatprep.subr.mxu0 0.0
    %470 = vmatpush1.msra.mxu0 0.0
    %471 = vmatprep.subr.mxu0 0.0
    %472 = vmatpush1.msra.mxu0 0.0
    %473 = vmatprep.subr.mxu0 0.0
    %474 = vmatpush1.msra.mxu0 0.0
    %475 = vmatprep.subr.mxu0 0.0
    %476 = vmatpush1.msra.mxu0 0.0
    %477 = vmatprep.subr.mxu0 0.0
    %478 = vmatpush1.msra.mxu0 0.0
    %479 = vmatprep.subr.mxu0 0.0
    %480 = vmatpush1.msra.mxu0 0.0
    %481 = vmatprep.subr.mxu0 0.0
    %482 = vmatpush1.msra.mxu0 0.0
    %483 = vmatprep.subr.mxu0 0.0
    %484 = vmatpush1.msra.mxu0 0.0
    %485 = vmatprep.subr.mxu0 0.0
    %486 = vmatpush1.msra.mxu0 0.0
    %487 = vmatprep.subr.mxu0 0.0
    %488 = vmatpush1.msra.mxu0 0.0
    %489 = vmatprep.subr.mxu0 0.0
    %490 = vmatpush1.msra.mxu0 0.0
    %491 = vmatprep.subr.mxu0 0.0
    %492 = vmatpush1.msra.mxu0 0.0
    %493 = vmatprep.mubr.f32.mxu0 0.0
    %494 = vmatmul.mubr.f32.gmra.mrb[0].mxu0 %v344
    %v495 = vpop.f32.mrb[0].mxu0
    %v496 = vadd.f32 0.0, %v495
    %v497 = vpop.f32.mrb[0].mxu0
    %498 = vdwg.mxu0
    %v499 = vmul.f32 %v496, 0.03125
    %v501 = vlaneseq
    %v502 = vshrl.u32 %v501, 7
    %v503 = vsub.s32 0, %v502
    %v504 = vrot.slane %v340, %v503
    %v506 = vmul.f32 %v421, %v504
    %v507 = vmul.f32 %v422, %v504
    %v508 = vmul.f32 %v423, %v504
    %v509 = vmul.f32 %v424, %v504
    %v510 = vadd.f32 %v499, 1e-05
    %v511 = vrsqrt.pop %v510
    %v512 = vlaneseq
    %v513 = vshrl.u32 %v512, 7
    %v514 = vsub.s32 0, %v513
    %v515 = vrot.slane %v511, %v514
    %v516 = vmul.f32 %v506, %v515
    %v517 = vmul.f32 %v507, %v515
    %v518 = vmul.f32 %v508, %v515
    %v519 = vmul.f32 %v509, %v515
    %v521 = vlaneseq
    %v522 = vshrl.u32 %v521, 7
    %v523 = vsub.s32 0, %v522
    %v524 = vrot.slane %v341, %v523
    %v526 = vadd.f32 %v516, %v524
    %v527 = vadd.f32 %v517, %v524
    %v528 = vadd.f32 %v518, %v524
    %v529 = vadd.f32 %v519, %v524
    %v530 = vmax.f32 %v526, 0.0
    %v531 = vmax.f32 %v527, 0.0
    %v532 = vmax.f32 %v528, 0.0
    %v533 = vmax.f32 %v529, 0.0
    %v534 = vld [vmem:[#allocation8] sm:$0xff]
    %v535 = vld [vmem:[#allocation8 + $0x8] sm:$0xff]
    %v536 = vld [vmem:[#allocation8 + $0x10] sm:$0xff]
    %v537 = vld [vmem:[#allocation8 + $0x18] sm:$0xff]
    %v539 = vsel %vm342, %v534, 0
    %v542 = vsel %vm342, %v535, 0
    %v545 = vsel %vm342, %v536, 0
    %v548 = vsel %vm342, %v537, 0
    %550 = vmatprep.subr.mxu0 0.0
    %551 = vmatpush1.msra.mxu0 %v530
    %552 = vmatprep.subr.mxu0 0.0
    %553 = vmatpush1.msra.mxu0 %v531
    %554 = vmatprep.subr.mxu0 0.0
    %555 = vmatpush1.msra.mxu0 %v532
    %556 = vmatprep.subr.mxu0 0.0
    %557 = vmatpush1.msra.mxu0 %v533
    %558 = vmatprep.subr.mxu0 0.0
    %559 = vmatpush1.msra.mxu0 0.0
    %560 = vmatprep.subr.mxu0 0.0
    %561 = vmatpush1.msra.mxu0 0.0
    %562 = vmatprep.subr.mxu0 0.0
    %563 = vmatpush1.msra.mxu0 0.0
    %564 = vmatprep.subr.mxu0 0.0
    %565 = vmatpush1.msra.mxu0 0.0
    %566 = vmatprep.subr.mxu0 0.0
    %567 = vmatpush1.msra.mxu0 0.0
    %568 = vmatprep.subr.mxu0 0.0
    %569 = vmatpush1.msra.mxu0 0.0
    %570 = vmatprep.subr.mxu0 0.0
    %571 = vmatpush1.msra.mxu0 0.0
    %572 = vmatprep.subr.mxu0 0.0
    %573 = vmatpush1.msra.mxu0 0.0
    %574 = vmatprep.subr.mxu0 0.0
    %575 = vmatpush1.msra.mxu0 0.0
    %576 = vmatprep.subr.mxu0 0.0
    %577 = vmatpush1.msra.mxu0 0.0
    %578 = vmatprep.subr.mxu0 0.0
    %579 = vmatpush1.msra.mxu0 0.0
    %580 = vmatprep.subr.mxu0 0.0
    %581 = vmatpush1.msra.mxu0 0.0
    %582 = vmatprep.subr.mxu0 0.0
    %583 = vmatpush1.msra.mxu0 0.0
    %584 = vmatprep.subr.mxu0 0.0
    %585 = vmatpush1.msra.mxu0 0.0
    %586 = vmatprep.subr.mxu0 0.0
    %587 = vmatpush1.msra.mxu0 0.0
    %588 = vmatprep.subr.mxu0 0.0
    %589 = vmatpush1.msra.mxu0 0.0
    %590 = vmatprep.subr.mxu0 0.0
    %591 = vmatpush1.msra.mxu0 0.0
    %592 = vmatprep.subr.mxu0 0.0
    %593 = vmatpush1.msra.mxu0 0.0
    %594 = vmatprep.subr.mxu0 0.0
    %595 = vmatpush1.msra.mxu0 0.0
    %596 = vmatprep.subr.mxu0 0.0
    %597 = vmatpush1.msra.mxu0 0.0
    %598 = vmatprep.subr.mxu0 0.0
    %599 = vmatpush1.msra.mxu0 0.0
    %600 = vmatprep.subr.mxu0 0.0
    %601 = vmatpush1.msra.mxu0 0.0
    %602 = vmatprep.subr.mxu0 0.0
    %603 = vmatpush1.msra.mxu0 0.0
    %604 = vmatprep.subr.mxu0 0.0
    %605 = vmatpush1.msra.mxu0 0.0
    %606 = vmatprep.subr.mxu0 0.0
    %607 = vmatpush1.msra.mxu0 0.0
    %608 = vmatprep.subr.mxu0 0.0
    %609 = vmatpush1.msra.mxu0 0.0
    %610 = vmatprep.subr.mxu0 0.0
    %611 = vmatpush1.msra.mxu0 0.0
    %612 = vmatprep.subr.mxu0 0.0
    %613 = vmatpush1.msra.mxu0 0.0
    %614 = vmatprep.mubr.f32.mxu0 0.0
    %615 = vmatmul.mubr.f32.gmra.mrb[0].mxu0 %v539
    %v616 = vpop.f32.mrb[0].mxu0
    %v617 = vadd.f32 0.0, %v616
    %v618 = vpop.f32.mrb[0].mxu0
    %619 = vmatprep.mubr.f32.mxu0 0.0
    %620 = vmatmul.mubr.f32.gmra.mrb[0].mxu0 %v542
    %v621 = vpop.f32.mrb[0].mxu0
    %v622 = vadd.f32 0.0, %v621
    %v623 = vpop.f32.mrb[0].mxu0
    %624 = vmatprep.mubr.f32.mxu0 0.0
    %625 = vmatmul.mubr.f32.gmra.mrb[0].mxu0 %v545
    %v626 = vpop.f32.mrb[0].mxu0
    %v627 = vadd.f32 0.0, %v626
    %v628 = vpop.f32.mrb[0].mxu0
    %629 = vmatprep.mubr.f32.mxu0 0.0
    %630 = vmatmul.mubr.f32.gmra.mrb[0].mxu0 %v548
    %v631 = vpop.f32.mrb[0].mxu0
    %v632 = vadd.f32 0.0, %v631
    %v633 = vpop.f32.mrb[0].mxu0
    %634 = vdwg.mxu0
    %s635 = scalar_lea.vmem [#allocation5], 1920
    %v636 = vld [vmem:[%s635] sm:$0xff]
    %v637 = vld [vmem:[%s635 + $0x8] sm:$0xff]
    %v638 = vld [vmem:[%s635 + $0x10] sm:$0xff]
    %v639 = vld [vmem:[%s635 + $0x18] sm:$0xff]
    %v640 = vld [vmem:[%s635 + $0x20] sm:$0xff]
    %v641 = vld [vmem:[%s635 + $0x28] sm:$0xff]
    %v642 = vld [vmem:[%s635 + $0x30] sm:$0xff]
    %v643 = vld [vmem:[%s635 + $0x38] sm:$0xff]
    %v644 = vld [vmem:[%s635 + $0x40] sm:$0xff]
    %v645 = vld [vmem:[%s635 + $0x48] sm:$0xff]
    %v646 = vld [vmem:[%s635 + $0x50] sm:$0xff]
    %v647 = vld [vmem:[%s635 + $0x58] sm:$0xff]
    %v648 = vld [vmem:[%s635 + $0x60] sm:$0xff]
    %v649 = vld [vmem:[%s635 + $0x68] sm:$0xff]
    %v650 = vld [vmem:[%s635 + $0x70] sm:$0xff]
    %v651 = vld [vmem:[%s635 + $0x78] sm:$0xff]
    %s652 = scalar_lea.vmem [#allocation8], 32
    %v653 = vld [vmem:[%s652] sm:$0xff]
    %v654 = vld [vmem:[%s652 + $0x8] sm:$0xff]
    %v655 = vld [vmem:[%s652 + $0x10] sm:$0xff]
    %v656 = vld [vmem:[%s652 + $0x18] sm:$0xff]
    %v658 = vsel %vm342, %v653, 0
    %v661 = vsel %vm342, %v654, 0
    %v664 = vsel %vm342, %v655, 0
    %v667 = vsel %vm342, %v656, 0
    %669 = vmatprep.subr.mxu0 0.0
    %670 = vmatpush1.msra.mxu0 %v530
    %671 = vmatprep.subr.mxu0 0.0
    %672 = vmatpush1.msra.mxu0 %v531
    %673 = vmatprep.subr.mxu0 0.0
    %674 = vmatpush1.msra.mxu0 %v532
    %675 = vmatprep.subr.mxu0 0.0
    %676 = vmatpush1.msra.mxu0 %v533
    %677 = vmatprep.subr.mxu0 0.0
    %678 = vmatpush1.msra.mxu0 0.0
    %679 = vmatprep.subr.mxu0 0.0
    %680 = vmatpush1.msra.mxu0 0.0
    %681 = vmatprep.subr.mxu0 0.0
    %682 = vmatpush1.msra.mxu0 0.0
    %683 = vmatprep.subr.mxu0 0.0
    %684 = vmatpush1.msra.mxu0 0.0
    %685 = vmatprep.subr.mxu0 0.0
    %686 = vmatpush1.msra.mxu0 0.0
    %687 = vmatprep.subr.mxu0 0.0
    %688 = vmatpush1.msra.mxu0 0.0
    %689 = vmatprep.subr.mxu0 0.0
    %690 = vmatpush1.msra.mxu0 0.0
    %691 = vmatprep.subr.mxu0 0.0
    %692 = vmatpush1.msra.mxu0 0.0
    %693 = vmatprep.subr.mxu0 0.0
    %694 = vmatpush1.msra.mxu0 0.0
    %695 = vmatprep.subr.mxu0 0.0
    %696 = vmatpush1.msra.mxu0 0.0
    %697 = vmatprep.subr.mxu0 0.0
    %698 = vmatpush1.msra.mxu0 0.0
    %699 = vmatprep.subr.mxu0 0.0
    %700 = vmatpush1.msra.mxu0 0.0
    %701 = vmatprep.subr.mxu0 0.0
    %702 = vmatpush1.msra.mxu0 0.0
    %703 = vmatprep.subr.mxu0 0.0
    %704 = vmatpush1.msra.mxu0 0.0
    %705 = vmatprep.subr.mxu0 0.0
    %706 = vmatpush1.msra.mxu0 0.0
    %707 = vmatprep.subr.mxu0 0.0
    %708 = vmatpush1.msra.mxu0 0.0
    %709 = vmatprep.subr.mxu0 0.0
    %710 = vmatpush1.msra.mxu0 0.0
    %711 = vmatprep.subr.mxu0 0.0
    %712 = vmatpush1.msra.mxu0 0.0
    %713 = vmatprep.subr.mxu0 0.0
    %714 = vmatpush1.msra.mxu0 0.0
    %715 = vmatprep.subr.mxu0 0.0
    %716 = vmatpush1.msra.mxu0 0.0
    %717 = vmatprep.subr.mxu0 0.0
    %718 = vmatpush1.msra.mxu0 0.0
    %719 = vmatprep.subr.mxu0 0.0
    %720 = vmatpush1.msra.mxu0 0.0
    %721 = vmatprep.subr.mxu0 0.0
    %722 = vmatpush1.msra.mxu0 0.0
    %723 = vmatprep.subr.mxu0 0.0
    %724 = vmatpush1.msra.mxu0 0.0
    %725 = vmatprep.subr.mxu0 0.0
    %726 = vmatpush1.msra.mxu0 0.0
    %727 = vmatprep.subr.mxu0 0.0
    %728 = vmatpush1.msra.mxu0 0.0
    %729 = vmatprep.subr.mxu0 0.0
    %730 = vmatpush1.msra.mxu0 0.0
    %731 = vmatprep.subr.mxu0 0.0
    %732 = vmatpush1.msra.mxu0 0.0
    %733 = vmatprep.mubr.f32.mxu0 0.0
    %734 = vmatmul.mubr.f32.gmra.mrb[0].mxu0 %v658
    %v735 = vpop.f32.mrb[0].mxu0
    %v736 = vadd.f32 0.0, %v735
    %v737 = vpop.f32.mrb[0].mxu0
    %738 = vmatprep.mubr.f32.mxu0 0.0
    %739 = vmatmul.mubr.f32.gmra.mrb[0].mxu0 %v661
    %v740 = vpop.f32.mrb[0].mxu0
    %v741 = vadd.f32 0.0, %v740
    %v742 = vpop.f32.mrb[0].mxu0
    %743 = vmatprep.mubr.f32.mxu0 0.0
    %744 = vmatmul.mubr.f32.gmra.mrb[0].mxu0 %v664
    %v745 = vpop.f32.mrb[0].mxu0
    %v746 = vadd.f32 0.0, %v745
    %v747 = vpop.f32.mrb[0].mxu0
    %748 = vmatprep.mubr.f32.mxu0 0.0
    %749 = vmatmul.mubr.f32.gmra.mrb[0].mxu0 %v667
    %v750 = vpop.f32.mrb[0].mxu0
    %v751 = vadd.f32 0.0, %v750
    %v752 = vpop.f32.mrb[0].mxu0
    %753 = vdwg.mxu0
    %s754 = scalar_lea.vmem [#allocation5], 1664
    %v755 = vld [vmem:[%s754] sm:$0xff]
    %v756 = vld [vmem:[%s754 + $0x8] sm:$0xff]
    %v757 = vld [vmem:[%s754 + $0x10] sm:$0xff]
    %v758 = vld [vmem:[%s754 + $0x18] sm:$0xff]
    %v759 = vld [vmem:[%s754 + $0x20] sm:$0xff]
    %v760 = vld [vmem:[%s754 + $0x28] sm:$0xff]
    %v761 = vld [vmem:[%s754 + $0x30] sm:$0xff]
    %v762 = vld [vmem:[%s754 + $0x38] sm:$0xff]
    %v763 = vld [vmem:[%s754 + $0x40] sm:$0xff]
    %v764 = vld [vmem:[%s754 + $0x48] sm:$0xff]
    %v765 = vld [vmem:[%s754 + $0x50] sm:$0xff]
    %v766 = vld [vmem:[%s754 + $0x58] sm:$0xff]
    %v767 = vld [vmem:[%s754 + $0x60] sm:$0xff]
    %v768 = vld [vmem:[%s754 + $0x68] sm:$0xff]
    %v769 = vld [vmem:[%s754 + $0x70] sm:$0xff]
    %v770 = vld [vmem:[%s754 + $0x78] sm:$0xff]
    %771 = vmatprep.subr.mxu0 0.0
    %772 = vmatpush1.msra.mxu0 %v755
    %773 = vmatprep.subr.mxu0 0.0
    %774 = vmatpush1.msra.mxu0 %v756
    %775 = vmatprep.subr.mxu0 0.0
    %776 = vmatpush1.msra.mxu0 %v757
    %777 = vmatprep.subr.mxu0 0.0
    %778 = vmatpush1.msra.mxu0 %v758
    %779 = vmatprep.subr.mxu0 0.0
    %780 = vmatpush1.msra.mxu0 %v759
    %781 = vmatprep.subr.mxu0 0.0
    %782 = vmatpush1.msra.mxu0 %v760
    %783 = vmatprep.subr.mxu0 0.0
    %784 = vmatpush1.msra.mxu0 %v761
    %785 = vmatprep.subr.mxu0 0.0
    %786 = vmatpush1.msra.mxu0 %v762
    %787 = vmatprep.subr.mxu0 0.0
    %788 = vmatpush1.msra.mxu0 %v763
    %789 = vmatprep.subr.mxu0 0.0
    %790 = vmatpush1.msra.mxu0 %v764
    %791 = vmatprep.subr.mxu0 0.0
    %792 = vmatpush1.msra.mxu0 %v765
    %793 = vmatprep.subr.mxu0 0.0
    %794 = vmatpush1.msra.mxu0 %v766
    %795 = vmatprep.subr.mxu0 0.0
    %796 = vmatpush1.msra.mxu0 %v767
    %797 = vmatprep.subr.mxu0 0.0
    %798 = vmatpush1.msra.mxu0 %v768
    %799 = vmatprep.subr.mxu0 0.0
    %800 = vmatpush1.msra.mxu0 %v769
    %801 = vmatprep.subr.mxu0 0.0
    %802 = vmatpush1.msra.mxu0 %v770
    %803 = vmatprep.subr.mxu0 0.0
    %804 = vmatpush1.msra.mxu0 0.0
    %805 = vmatprep.subr.mxu0 0.0
    %806 = vmatpush1.msra.mxu0 0.0
    %807 = vmatprep.subr.mxu0 0.0
    %808 = vmatpush1.msra.mxu0 0.0
    %809 = vmatprep.subr.mxu0 0.0
    %810 = vmatpush1.msra.mxu0 0.0
    %811 = vmatprep.subr.mxu0 0.0
    %812 = vmatpush1.msra.mxu0 0.0
    %813 = vmatprep.subr.mxu0 0.0
    %814 = vmatpush1.msra.mxu0 0.0
    %815 = vmatprep.subr.mxu0 0.0
    %816 = vmatpush1.msra.mxu0 0.0
    %817 = vmatprep.subr.mxu0 0.0
    %818 = vmatpush1.msra.mxu0 0.0
    %819 = vmatprep.subr.mxu0 0.0
    %820 = vmatpush1.msra.mxu0 0.0
    %821 = vmatprep.subr.mxu0 0.0
    %822 = vmatpush1.msra.mxu0 0.0
    %823 = vmatprep.subr.mxu0 0.0
    %824 = vmatpush1.msra.mxu0 0.0
    %825 = vmatprep.subr.mxu0 0.0
    %826 = vmatpush1.msra.mxu0 0.0
    %827 = vmatprep.subr.mxu0 0.0
    %828 = vmatpush1.msra.mxu0 0.0
    %829 = vmatprep.subr.mxu0 0.0
    %830 = vmatpush1.msra.mxu0 0.0
    %831 = vmatprep.subr.mxu0 0.0
    %832 = vmatpush1.msra.mxu0 0.0
    %833 = vmatprep.subr.mxu0 0.0
    %834 = vmatpush1.msra.mxu0 0.0
    %835 = vmatprep.mubr.f32.mxu0 0.0
    %836 = vmatmul.mubr.f32.gmra.mrb[0].mxu0 %v736
    %v837 = vpop.f32.mrb[0].mxu0
    %v838 = vadd.f32 0.0, %v837
    %v839 = vpop.f32.mrb[0].mxu0
    %840 = vmatprep.mubr.f32.mxu0 0.0
    %841 = vmatmul.mubr.f32.gmra.mrb[0].mxu0 %v741
    %v842 = vpop.f32.mrb[0].mxu0
    %v843 = vadd.f32 0.0, %v842
    %v844 = vpop.f32.mrb[0].mxu0
    %845 = vmatprep.mubr.f32.mxu0 0.0
    %846 = vmatmul.mubr.f32.gmra.mrb[0].mxu0 %v746
    %v847 = vpop.f32.mrb[0].mxu0
    %v848 = vadd.f32 0.0, %v847
    %v849 = vpop.f32.mrb[0].mxu0
    %850 = vmatprep.mubr.f32.mxu0 0.0
    %851 = vmatmul.mubr.f32.gmra.mrb[0].mxu0 %v751
    %v852 = vpop.f32.mrb[0].mxu0
    %v853 = vadd.f32 0.0, %v852
    %v854 = vpop.f32.mrb[0].mxu0
    %855 = vdwg.mxu0
    %856 = vmatprep.subr.mxu0 0.0
    %857 = vmatpush1.msra.mxu0 %v636
    %858 = vmatprep.subr.mxu0 0.0
    %859 = vmatpush1.msra.mxu0 %v637
    %860 = vmatprep.subr.mxu0 0.0
    %861 = vmatpush1.msra.mxu0 %v638
    %862 = vmatprep.subr.mxu0 0.0
    %863 = vmatpush1.msra.mxu0 %v639
    %864 = vmatprep.subr.mxu0 0.0
    %865 = vmatpush1.msra.mxu0 %v640
    %866 = vmatprep.subr.mxu0 0.0
    %867 = vmatpush1.msra.mxu0 %v641
    %868 = vmatprep.subr.mxu0 0.0
    %869 = vmatpush1.msra.mxu0 %v642
    %870 = vmatprep.subr.mxu0 0.0
    %871 = vmatpush1.msra.mxu0 %v643
    %872 = vmatprep.subr.mxu0 0.0
    %873 = vmatpush1.msra.mxu0 %v644
    %874 = vmatprep.subr.mxu0 0.0
    %875 = vmatpush1.msra.mxu0 %v645
    %876 = vmatprep.subr.mxu0 0.0
    %877 = vmatpush1.msra.mxu0 %v646
    %878 = vmatprep.subr.mxu0 0.0
    %879 = vmatpush1.msra.mxu0 %v647
    %880 = vmatprep.subr.mxu0 0.0
    %881 = vmatpush1.msra.mxu0 %v648
    %882 = vmatprep.subr.mxu0 0.0
    %883 = vmatpush1.msra.mxu0 %v649
    %884 = vmatprep.subr.mxu0 0.0
    %885 = vmatpush1.msra.mxu0 %v650
    %886 = vmatprep.subr.mxu0 0.0
    %887 = vmatpush1.msra.mxu0 %v651
    %888 = vmatprep.subr.mxu0 0.0
    %889 = vmatpush1.msra.mxu0 0.0
    %890 = vmatprep.subr.mxu0 0.0
    %891 = vmatpush1.msra.mxu0 0.0
    %892 = vmatprep.subr.mxu0 0.0
    %893 = vmatpush1.msra.mxu0 0.0
    %894 = vmatprep.subr.mxu0 0.0
    %895 = vmatpush1.msra.mxu0 0.0
    %896 = vmatprep.subr.mxu0 0.0
    %897 = vmatpush1.msra.mxu0 0.0
    %898 = vmatprep.subr.mxu0 0.0
    %899 = vmatpush1.msra.mxu0 0.0
    %900 = vmatprep.subr.mxu0 0.0
    %901 = vmatpush1.msra.mxu0 0.0
    %902 = vmatprep.subr.mxu0 0.0
    %903 = vmatpush1.msra.mxu0 0.0
    %904 = vmatprep.subr.mxu0 0.0
    %905 = vmatpush1.msra.mxu0 0.0
    %906 = vmatprep.subr.mxu0 0.0
    %907 = vmatpush1.msra.mxu0 0.0
    %908 = vmatprep.subr.mxu0 0.0
    %909 = vmatpush1.msra.mxu0 0.0
    %910 = vmatprep.subr.mxu0 0.0
    %911 = vmatpush1.msra.mxu0 0.0
    %912 = vmatprep.subr.mxu0 0.0
    %913 = vmatpush1.msra.mxu0 0.0
    %914 = vmatprep.subr.mxu0 0.0
    %915 = vmatpush1.msra.mxu0 0.0
    %916 = vmatprep.subr.mxu0 0.0
    %917 = vmatpush1.msra.mxu0 0.0
    %918 = vmatprep.subr.mxu0 0.0
    %919 = vmatpush1.msra.mxu0 0.0
    %920 = vmatprep.mubr.f32.mxu0 0.0
    %921 = vmatmul.mubr.f32.gmra.mrb[0].mxu0 %v617
    %v922 = vpop.f32.mrb[0].mxu0
    %v923 = vadd.f32 %v838, %v922
    %v924 = vpop.f32.mrb[0].mxu0
    %925 = vmatprep.mubr.f32.mxu0 0.0
    %926 = vmatmul.mubr.f32.gmra.mrb[0].mxu0 %v622
    %v927 = vpop.f32.mrb[0].mxu0
    %v928 = vadd.f32 %v843, %v927
    %v929 = vpop.f32.mrb[0].mxu0
    %930 = vmatprep.mubr.f32.mxu0 0.0
    %931 = vmatmul.mubr.f32.gmra.mrb[0].mxu0 %v627
    %v932 = vpop.f32.mrb[0].mxu0
    %v933 = vadd.f32 %v848, %v932
    %v934 = vpop.f32.mrb[0].mxu0
    %935 = vmatprep.mubr.f32.mxu0 0.0
    %936 = vmatmul.mubr.f32.gmra.mrb[0].mxu0 %v632
    %v937 = vpop.f32.mrb[0].mxu0
    %v938 = vadd.f32 %v853, %v937
    %v939 = vpop.f32.mrb[0].mxu0
    %940 = vdwg.mxu0
    %s941 = scalar_lea.vmem [#allocation8], 96
    %v942 = vld [vmem:[%s941] sm:$0xff]
    %v943 = vld [vmem:[%s941 + $0x8] sm:$0xff]
    %v944 = vld [vmem:[%s941 + $0x10] sm:$0xff]
    %v945 = vld [vmem:[%s941 + $0x18] sm:$0xff]
    %v947 = vsel %vm342, %v942, 0
    %v950 = vsel %vm342, %v943, 0
    %v953 = vsel %vm342, %v944, 0
    %v956 = vsel %vm342, %v945, 0
    %958 = vmatprep.subr.mxu0 0.0
    %959 = vmatpush1.msra.mxu0 %v530
    %960 = vmatprep.subr.mxu0 0.0
    %961 = vmatpush1.msra.mxu0 %v531
    %962 = vmatprep.subr.mxu0 0.0
    %963 = vmatpush1.msra.mxu0 %v532
    %964 = vmatprep.subr.mxu0 0.0
    %965 = vmatpush1.msra.mxu0 %v533
    %966 = vmatprep.subr.mxu0 0.0
    %967 = vmatpush1.msra.mxu0 0.0
    %968 = vmatprep.subr.mxu0 0.0
    %969 = vmatpush1.msra.mxu0 0.0
    %970 = vmatprep.subr.mxu0 0.0
    %971 = vmatpush1.msra.mxu0 0.0
    %972 = vmatprep.subr.mxu0 0.0
    %973 = vmatpush1.msra.mxu0 0.0
    %974 = vmatprep.subr.mxu0 0.0
    %975 = vmatpush1.msra.mxu0 0.0
    %976 = vmatprep.subr.mxu0 0.0
    %977 = vmatpush1.msra.mxu0 0.0
    %978 = vmatprep.subr.mxu0 0.0
    %979 = vmatpush1.msra.mxu0 0.0
    %980 = vmatprep.subr.mxu0 0.0
    %981 = vmatpush1.msra.mxu0 0.0
    %982 = vmatprep.subr.mxu0 0.0
    %983 = vmatpush1.msra.mxu0 0.0
    %984 = vmatprep.subr.mxu0 0.0
    %985 = vmatpush1.msra.mxu0 0.0
    %986 = vmatprep.subr.mxu0 0.0
    %987 = vmatpush1.msra.mxu0 0.0
    %988 = vmatprep.subr.mxu0 0.0
    %989 = vmatpush1.msra.mxu0 0.0
    %990 = vmatprep.subr.mxu0 0.0
    %991 = vmatpush1.msra.mxu0 0.0
    %992 = vmatprep.subr.mxu0 0.0
    %993 = vmatpush1.msra.mxu0 0.0
    %994 = vmatprep.subr.mxu0 0.0
    %995 = vmatpush1.msra.mxu0 0.0
    %996 = vmatprep.subr.mxu0 0.0
    %997 = vmatpush1.msra.mxu0 0.0
    %998 = vmatprep.subr.mxu0 0.0
    %999 = vmatpush1.msra.mxu0 0.0
    %1000 = vmatprep.subr.mxu0 0.0
    %1001 = vmatpush1.msra.mxu0 0.0
    %1002 = vmatprep.subr.mxu0 0.0
    %1003 = vmatpush1.msra.mxu0 0.0
    %1004 = vmatprep.subr.mxu0 0.0
    %1005 = vmatpush1.msra.mxu0 0.0
    %1006 = vmatprep.subr.mxu0 0.0
    %1007 = vmatpush1.msra.mxu0 0.0
    %1008 = vmatprep.subr.mxu0 0.0
    %1009 = vmatpush1.msra.mxu0 0.0
    %1010 = vmatprep.subr.mxu0 0.0
    %1011 = vmatpush1.msra.mxu0 0.0
    %1012 = vmatprep.subr.mxu0 0.0
    %1013 = vmatpush1.msra.mxu0 0.0
    %1014 = vmatprep.subr.mxu0 0.0
    %1015 = vmatpush1.msra.mxu0 0.0
    %1016 = vmatprep.subr.mxu0 0.0
    %1017 = vmatpush1.msra.mxu0 0.0
    %1018 = vmatprep.subr.mxu0 0.0
    %1019 = vmatpush1.msra.mxu0 0.0
    %1020 = vmatprep.subr.mxu0 0.0
    %1021 = vmatpush1.msra.mxu0 0.0
    %1022 = vmatprep.mubr.f32.mxu0 0.0
    %1023 = vmatmul.mubr.f32.gmra.mrb[0].mxu0 %v947
    %v1024 = vpop.f32.mrb[0].mxu0
    %v1025 = vadd.f32 0.0, %v1024
    %v1026 = vpop.f32.mrb[0].mxu0
    %1027 = vmatprep.mubr.f32.mxu0 0.0
    %1028 = vmatmul.mubr.f32.gmra.mrb[0].mxu0 %v950
    %v1029 = vpop.f32.mrb[0].mxu0
    %v1030 = vadd.f32 0.0, %v1029
    %v1031 = vpop.f32.mrb[0].mxu0
    %1032 = vmatprep.mubr.f32.mxu0 0.0
    %1033 = vmatmul.mubr.f32.gmra.mrb[0].mxu0 %v953
    %v1034 = vpop.f32.mrb[0].mxu0
    %v1035 = vadd.f32 0.0, %v1034
    %v1036 = vpop.f32.mrb[0].mxu0
    %1037 = vmatprep.mubr.f32.mxu0 0.0
    %1038 = vmatmul.mubr.f32.gmra.mrb[0].mxu0 %v956
    %v1039 = vpop.f32.mrb[0].mxu0
    %v1040 = vadd.f32 0.0, %v1039
    %v1041 = vpop.f32.mrb[0].mxu0
    %1042 = vdwg.mxu0
    %s1043 = scalar_lea.vmem [#allocation5], 896
    %v1044 = vld [vmem:[%s1043] sm:$0xff]
    %v1045 = vld [vmem:[%s1043 + $0x8] sm:$0xff]
    %v1046 = vld [vmem:[%s1043 + $0x10] sm:$0xff]
    %v1047 = vld [vmem:[%s1043 + $0x18] sm:$0xff]
    %v1048 = vld [vmem:[%s1043 + $0x20] sm:$0xff]
    %v1049 = vld [vmem:[%s1043 + $0x28] sm:$0xff]
    %v1050 = vld [vmem:[%s1043 + $0x30] sm:$0xff]
    %v1051 = vld [vmem:[%s1043 + $0x38] sm:$0xff]
    %v1052 = vld [vmem:[%s1043 + $0x40] sm:$0xff]
    %v1053 = vld [vmem:[%s1043 + $0x48] sm:$0xff]
    %v1054 = vld [vmem:[%s1043 + $0x50] sm:$0xff]
    %v1055 = vld [vmem:[%s1043 + $0x58] sm:$0xff]
    %v1056 = vld [vmem:[%s1043 + $0x60] sm:$0xff]
    %v1057 = vld [vmem:[%s1043 + $0x68] sm:$0xff]
    %v1058 = vld [vmem:[%s1043 + $0x70] sm:$0xff]
    %v1059 = vld [vmem:[%s1043 + $0x78] sm:$0xff]
    %1060 = vmatprep.subr.mxu0 0.0
    %1061 = vmatpush1.msra.mxu0 %v1044
    %1062 = vmatprep.subr.mxu0 0.0
    %1063 = vmatpush1.msra.mxu0 %v1045
    %1064 = vmatprep.subr.mxu0 0.0
    %1065 = vmatpush1.msra.mxu0 %v1046
    %1066 = vmatprep.subr.mxu0 0.0
    %1067 = vmatpush1.msra.mxu0 %v1047
    %1068 = vmatprep.subr.mxu0 0.0
    %1069 = vmatpush1.msra.mxu0 %v1048
    %1070 = vmatprep.subr.mxu0 0.0
    %1071 = vmatpush1.msra.mxu0 %v1049
    %1072 = vmatprep.subr.mxu0 0.0
    %1073 = vmatpush1.msra.mxu0 %v1050
    %1074 = vmatprep.subr.mxu0 0.0
    %1075 = vmatpush1.msra.mxu0 %v1051
    %1076 = vmatprep.subr.mxu0 0.0
    %1077 = vmatpush1.msra.mxu0 %v1052
    %1078 = vmatprep.subr.mxu0 0.0
    %1079 = vmatpush1.msra.mxu0 %v1053
    %1080 = vmatprep.subr.mxu0 0.0
    %1081 = vmatpush1.msra.mxu0 %v1054
    %1082 = vmatprep.subr.mxu0 0.0
    %1083 = vmatpush1.msra.mxu0 %v1055
    %1084 = vmatprep.subr.mxu0 0.0
    %1085 = vmatpush1.msra.mxu0 %v1056
    %1086 = vmatprep.subr.mxu0 0.0
    %1087 = vmatpush1.msra.mxu0 %v1057
    %1088 = vmatprep.subr.mxu0 0.0
    %1089 = vmatpush1.msra.mxu0 %v1058
    %1090 = vmatprep.subr.mxu0 0.0
    %1091 = vmatpush1.msra.mxu0 %v1059
    %1092 = vmatprep.subr.mxu0 0.0
    %1093 = vmatpush1.msra.mxu0 0.0
    %1094 = vmatprep.subr.mxu0 0.0
    %1095 = vmatpush1.msra.mxu0 0.0
    %1096 = vmatprep.subr.mxu0 0.0
    %1097 = vmatpush1.msra.mxu0 0.0
    %1098 = vmatprep.subr.mxu0 0.0
    %1099 = vmatpush1.msra.mxu0 0.0
    %1100 = vmatprep.subr.mxu0 0.0
    %1101 = vmatpush1.msra.mxu0 0.0
    %1102 = vmatprep.subr.mxu0 0.0
    %1103 = vmatpush1.msra.mxu0 0.0
    %1104 = vmatprep.subr.mxu0 0.0
    %1105 = vmatpush1.msra.mxu0 0.0
    %1106 = vmatprep.subr.mxu0 0.0
    %1107 = vmatpush1.msra.mxu0 0.0
    %1108 = vmatprep.subr.mxu0 0.0
    %1109 = vmatpush1.msra.mxu0 0.0
    %1110 = vmatprep.subr.mxu0 0.0
    %1111 = vmatpush1.msra.mxu0 0.0
    %1112 = vmatprep.subr.mxu0 0.0
    %1113 = vmatpush1.msra.mxu0 0.0
    %1114 = vmatprep.subr.mxu0 0.0
    %1115 = vmatpush1.msra.mxu0 0.0
    %1116 = vmatprep.subr.mxu0 0.0
    %1117 = vmatpush1.msra.mxu0 0.0
    %1118 = vmatprep.subr.mxu0 0.0
    %1119 = vmatpush1.msra.mxu0 0.0
    %1120 = vmatprep.subr.mxu0 0.0
    %1121 = vmatpush1.msra.mxu0 0.0
    %1122 = vmatprep.subr.mxu0 0.0
    %1123 = vmatpush1.msra.mxu0 0.0
    %1124 = vmatprep.mubr.f32.mxu0 0.0
    %1125 = vmatmul.mubr.f32.gmra.mrb[0].mxu0 %v1025
    %v1126 = vpop.f32.mrb[0].mxu0
    %v1127 = vadd.f32 0.0, %v1126
    %v1128 = vpop.f32.mrb[0].mxu0
    %1129 = vmatprep.mubr.f32.mxu0 0.0
    %1130 = vmatmul.mubr.f32.gmra.mrb[0].mxu0 %v1030
    %v1131 = vpop.f32.mrb[0].mxu0
    %v1132 = vadd.f32 0.0, %v1131
    %v1133 = vpop.f32.mrb[0].mxu0
    %1134 = vmatprep.mubr.f32.mxu0 0.0
    %1135 = vmatmul.mubr.f32.gmra.mrb[0].mxu0 %v1035
    %v1136 = vpop.f32.mrb[0].mxu0
    %v1137 = vadd.f32 0.0, %v1136
    %v1138 = vpop.f32.mrb[0].mxu0
    %1139 = vmatprep.mubr.f32.mxu0 0.0
    %1140 = vmatmul.mubr.f32.gmra.mrb[0].mxu0 %v1040
    %v1141 = vpop.f32.mrb[0].mxu0
    %v1142 = vadd.f32 0.0, %v1141
    %v1143 = vpop.f32.mrb[0].mxu0
    %1144 = vdwg.mxu0
    %v1145 = vadd.f32 %v923, %v1127
    %v1146 = vadd.f32 %v928, %v1132
    %v1147 = vadd.f32 %v933, %v1137
    %v1148 = vadd.f32 %v938, %v1142
    %s1149 = scalar_lea.vmem [#allocation8], 128
    %v1150 = vld [vmem:[%s1149] sm:$0xff]
    %v1151 = vld [vmem:[%s1149 + $0x8] sm:$0xff]
    %v1152 = vld [vmem:[%s1149 + $0x10] sm:$0xff]
    %v1153 = vld [vmem:[%s1149 + $0x18] sm:$0xff]
    %v1155 = vsel %vm342, %v1150, 0
    %v1158 = vsel %vm342, %v1151, 0
    %v1161 = vsel %vm342, %v1152, 0
    %v1164 = vsel %vm342, %v1153, 0
    %1166 = vmatprep.subr.mxu0 0.0
    %1167 = vmatpush1.msra.mxu0 %v530
    %1168 = vmatprep.subr.mxu0 0.0
    %1169 = vmatpush1.msra.mxu0 %v531
    %1170 = vmatprep.subr.mxu0 0.0
    %1171 = vmatpush1.msra.mxu0 %v532
    %1172 = vmatprep.subr.mxu0 0.0
    %1173 = vmatpush1.msra.mxu0 %v533
    %1174 = vmatprep.subr.mxu0 0.0
    %1175 = vmatpush1.msra.mxu0 0.0
    %1176 = vmatprep.subr.mxu0 0.0
    %1177 = vmatpush1.msra.mxu0 0.0
    %1178 = vmatprep.subr.mxu0 0.0
    %1179 = vmatpush1.msra.mxu0 0.0
    %1180 = vmatprep.subr.mxu0 0.0
    %1181 = vmatpush1.msra.mxu0 0.0
    %1182 = vmatprep.subr.mxu0 0.0
    %1183 = vmatpush1.msra.mxu0 0.0
    %1184 = vmatprep.subr.mxu0 0.0
    %1185 = vmatpush1.msra.mxu0 0.0
    %1186 = vmatprep.subr.mxu0 0.0
    %1187 = vmatpush1.msra.mxu0 0.0
    %1188 = vmatprep.subr.mxu0 0.0
    %1189 = vmatpush1.msra.mxu0 0.0
    %1190 = vmatprep.subr.mxu0 0.0
    %1191 = vmatpush1.msra.mxu0 0.0
    %1192 = vmatprep.subr.mxu0 0.0
    %1193 = vmatpush1.msra.mxu0 0.0
    %1194 = vmatprep.subr.mxu0 0.0
    %1195 = vmatpush1.msra.mxu0 0.0
    %1196 = vmatprep.subr.mxu0 0.0
    %1197 = vmatpush1.msra.mxu0 0.0
    %1198 = vmatprep.subr.mxu0 0.0
    %1199 = vmatpush1.msra.mxu0 0.0
    %1200 = vmatprep.subr.mxu0 0.0
    %1201 = vmatpush1.msra.mxu0 0.0
    %1202 = vmatprep.subr.mxu0 0.0
    %1203 = vmatpush1.msra.mxu0 0.0
    %1204 = vmatprep.subr.mxu0 0.0
    %1205 = vmatpush1.msra.mxu0 0.0
    %1206 = vmatprep.subr.mxu0 0.0
    %1207 = vmatpush1.msra.mxu0 0.0
    %1208 = vmatprep.subr.mxu0 0.0
    %1209 = vmatpush1.msra.mxu0 0.0
    %1210 = vmatprep.subr.mxu0 0.0
    %1211 = vmatpush1.msra.mxu0 0.0
    %1212 = vmatprep.subr.mxu0 0.0
    %1213 = vmatpush1.msra.mxu0 0.0
    %1214 = vmatprep.subr.mxu0 0.0
    %1215 = vmatpush1.msra.mxu0 0.0
    %1216 = vmatprep.subr.mxu0 0.0
    %1217 = vmatpush1.msra.mxu0 0.0
    %1218 = vmatprep.subr.mxu0 0.0
    %1219 = vmatpush1.msra.mxu0 0.0
    %1220 = vmatprep.subr.mxu0 0.0
    %1221 = vmatpush1.msra.mxu0 0.0
    %1222 = vmatprep.subr.mxu0 0.0
    %1223 = vmatpush1.msra.mxu0 0.0
    %1224 = vmatprep.subr.mxu0 0.0
    %1225 = vmatpush1.msra.mxu0 0.0
    %1226 = vmatprep.subr.mxu0 0.0
    %1227 = vmatpush1.msra.mxu0 0.0
    %1228 = vmatprep.subr.mxu0 0.0
    %1229 = vmatpush1.msra.mxu0 0.0
    %1230 = vmatprep.mubr.f32.mxu0 0.0
    %1231 = vmatmul.mubr.f32.gmra.mrb[0].mxu0 %v1155
    %v1232 = vpop.f32.mrb[0].mxu0
    %v1233 = vadd.f32 0.0, %v1232
    %v1234 = vpop.f32.mrb[0].mxu0
    %1235 = vmatprep.mubr.f32.mxu0 0.0
    %1236 = vmatmul.mubr.f32.gmra.mrb[0].mxu0 %v1158
    %v1237 = vpop.f32.mrb[0].mxu0
    %v1238 = vadd.f32 0.0, %v1237
    %v1239 = vpop.f32.mrb[0].mxu0
    %1240 = vmatprep.mubr.f32.mxu0 0.0
    %1241 = vmatmul.mubr.f32.gmra.mrb[0].mxu0 %v1161
    %v1242 = vpop.f32.mrb[0].mxu0
    %v1243 = vadd.f32 0.0, %v1242
    %v1244 = vpop.f32.mrb[0].mxu0
    %1245 = vmatprep.mubr.f32.mxu0 0.0
    %1246 = vmatmul.mubr.f32.gmra.mrb[0].mxu0 %v1164
    %v1247 = vpop.f32.mrb[0].mxu0
    %v1248 = vadd.f32 0.0, %v1247
    %v1249 = vpop.f32.mrb[0].mxu0
    %1250 = vdwg.mxu0
    %s1251 = scalar_lea.vmem [#allocation5], 640
    %v1252 = vld [vmem:[%s1251] sm:$0xff]
    %v1253 = vld [vmem:[%s1251 + $0x8] sm:$0xff]
    %v1254 = vld [vmem:[%s1251 + $0x10] sm:$0xff]
    %v1255 = vld [vmem:[%s1251 + $0x18] sm:$0xff]
    %v1256 = vld [vmem:[%s1251 + $0x20] sm:$0xff]
    %v1257 = vld [vmem:[%s1251 + $0x28] sm:$0xff]
    %v1258 = vld [vmem:[%s1251 + $0x30] sm:$0xff]
    %v1259 = vld [vmem:[%s1251 + $0x38] sm:$0xff]
    %v1260 = vld [vmem:[%s1251 + $0x40] sm:$0xff]
    %v1261 = vld [vmem:[%s1251 + $0x48] sm:$0xff]
    %v1262 = vld [vmem:[%s1251 + $0x50] sm:$0xff]
    %v1263 = vld [vmem:[%s1251 + $0x58] sm:$0xff]
    %v1264 = vld [vmem:[%s1251 + $0x60] sm:$0xff]
    %v1265 = vld [vmem:[%s1251 + $0x68] sm:$0xff]
    %v1266 = vld [vmem:[%s1251 + $0x70] sm:$0xff]
    %v1267 = vld [vmem:[%s1251 + $0x78] sm:$0xff]
    %1268 = vmatprep.subr.mxu0 0.0
    %1269 = vmatpush1.msra.mxu0 %v1252
    %1270 = vmatprep.subr.mxu0 0.0
    %1271 = vmatpush1.msra.mxu0 %v1253
    %1272 = vmatprep.subr.mxu0 0.0
    %1273 = vmatpush1.msra.mxu0 %v1254
    %1274 = vmatprep.subr.mxu0 0.0
    %1275 = vmatpush1.msra.mxu0 %v1255
    %1276 = vmatprep.subr.mxu0 0.0
    %1277 = vmatpush1.msra.mxu0 %v1256
    %1278 = vmatprep.subr.mxu0 0.0
    %1279 = vmatpush1.msra.mxu0 %v1257
    %1280 = vmatprep.subr.mxu0 0.0
    %1281 = vmatpush1.msra.mxu0 %v1258
    %1282 = vmatprep.subr.mxu0 0.0
    %1283 = vmatpush1.msra.mxu0 %v1259
    %1284 = vmatprep.subr.mxu0 0.0
    %1285 = vmatpush1.msra.mxu0 %v1260
    %1286 = vmatprep.subr.mxu0 0.0
    %1287 = vmatpush1.msra.mxu0 %v1261
    %1288 = vmatprep.subr.mxu0 0.0
    %1289 = vmatpush1.msra.mxu0 %v1262
    %1290 = vmatprep.subr.mxu0 0.0
    %1291 = vmatpush1.msra.mxu0 %v1263
    %1292 = vmatprep.subr.mxu0 0.0
    %1293 = vmatpush1.msra.mxu0 %v1264
    %1294 = vmatprep.subr.mxu0 0.0
    %1295 = vmatpush1.msra.mxu0 %v1265
    %1296 = vmatprep.subr.mxu0 0.0
    %1297 = vmatpush1.msra.mxu0 %v1266
    %1298 = vmatprep.subr.mxu0 0.0
    %1299 = vmatpush1.msra.mxu0 %v1267
    %1300 = vmatprep.subr.mxu0 0.0
    %1301 = vmatpush1.msra.mxu0 0.0
    %1302 = vmatprep.subr.mxu0 0.0
    %1303 = vmatpush1.msra.mxu0 0.0
    %1304 = vmatprep.subr.mxu0 0.0
    %1305 = vmatpush1.msra.mxu0 0.0
    %1306 = vmatprep.subr.mxu0 0.0
    %1307 = vmatpush1.msra.mxu0 0.0
    %1308 = vmatprep.subr.mxu0 0.0
    %1309 = vmatpush1.msra.mxu0 0.0
    %1310 = vmatprep.subr.mxu0 0.0
    %1311 = vmatpush1.msra.mxu0 0.0
    %1312 = vmatprep.subr.mxu0 0.0
    %1313 = vmatpush1.msra.mxu0 0.0
    %1314 = vmatprep.subr.mxu0 0.0
    %1315 = vmatpush1.msra.mxu0 0.0
    %1316 = vmatprep.subr.mxu0 0.0
    %1317 = vmatpush1.msra.mxu0 0.0
    %1318 = vmatprep.subr.mxu0 0.0
    %1319 = vmatpush1.msra.mxu0 0.0
    %1320 = vmatprep.subr.mxu0 0.0
    %1321 = vmatpush1.msra.mxu0 0.0
    %1322 = vmatprep.subr.mxu0 0.0
    %1323 = vmatpush1.msra.mxu0 0.0
    %1324 = vmatprep.subr.mxu0 0.0
    %1325 = vmatpush1.msra.mxu0 0.0
    %1326 = vmatprep.subr.mxu0 0.0
    %1327 = vmatpush1.msra.mxu0 0.0
    %1328 = vmatprep.subr.mxu0 0.0
    %1329 = vmatpush1.msra.mxu0 0.0
    %1330 = vmatprep.subr.mxu0 0.0
    %1331 = vmatpush1.msra.mxu0 0.0
    %1332 = vmatprep.mubr.f32.mxu0 0.0
    %1333 = vmatmul.mubr.f32.gmra.mrb[0].mxu0 %v1233
    %v1334 = vpop.f32.mrb[0].mxu0
    %v1335 = vadd.f32 0.0, %v1334
    %v1336 = vpop.f32.mrb[0].mxu0
    %1337 = vmatprep.mubr.f32.mxu0 0.0
    %1338 = vmatmul.mubr.f32.gmra.mrb[0].mxu0 %v1238
    %v1339 = vpop.f32.mrb[0].mxu0
    %v1340 = vadd.f32 0.0, %v1339
    %v1341 = vpop.f32.mrb[0].mxu0
    %1342 = vmatprep.mubr.f32.mxu0 0.0
    %1343 = vmatmul.mubr.f32.gmra.mrb[0].mxu0 %v1243
    %v1344 = vpop.f32.mrb[0].mxu0
    %v1345 = vadd.f32 0.0, %v1344
    %v1346 = vpop.f32.mrb[0].mxu0
    %1347 = vmatprep.mubr.f32.mxu0 0.0
    %1348 = vmatmul.mubr.f32.gmra.mrb[0].mxu0 %v1248
    %v1349 = vpop.f32.mrb[0].mxu0
    %v1350 = vadd.f32 0.0, %v1349
    %v1351 = vpop.f32.mrb[0].mxu0
    %1352 = vdwg.mxu0
    %v1353 = vadd.f32 %v1145, %v1335
    %v1354 = vadd.f32 %v1146, %v1340
    %v1355 = vadd.f32 %v1147, %v1345
    %v1356 = vadd.f32 %v1148, %v1350
    %1357 = vst [vmem:[#allocation2] sm:$0xff] %v1353
    %1358 = vst [vmem:[#allocation2 + $0x8] sm:$0xff] %v1354
    %1359 = vst [vmem:[#allocation2 + $0x10] sm:$0xff] %v1355
    %1360 = vst [vmem:[#allocation2 + $0x18] sm:$0xff] %v1356
    %v1361 = vld [vmem:[%s652] sm:$0xff]
    %v1362 = vld [vmem:[%s652 + $0x8] sm:$0xff]
    %v1363 = vld [vmem:[%s652 + $0x10] sm:$0xff]
    %v1364 = vld [vmem:[%s652 + $0x18] sm:$0xff]
    %v1366 = vsel %vm342, %v1361, 0
    %v1369 = vsel %vm342, %v1362, 0
    %v1372 = vsel %vm342, %v1363, 0
    %v1375 = vsel %vm342, %v1364, 0
    %1377 = vmatprep.subr.mxu0 0.0
    %1378 = vmatpush1.msra.mxu0 %v530
    %1379 = vmatprep.subr.mxu0 0.0
    %1380 = vmatpush1.msra.mxu0 %v531
    %1381 = vmatprep.subr.mxu0 0.0
    %1382 = vmatpush1.msra.mxu0 %v532
    %1383 = vmatprep.subr.mxu0 0.0
    %1384 = vmatpush1.msra.mxu0 %v533
    %1385 = vmatprep.subr.mxu0 0.0
    %1386 = vmatpush1.msra.mxu0 0.0
    %1387 = vmatprep.subr.mxu0 0.0
    %1388 = vmatpush1.msra.mxu0 0.0
    %1389 = vmatprep.subr.mxu0 0.0
    %1390 = vmatpush1.msra.mxu0 0.0
    %1391 = vmatprep.subr.mxu0 0.0
    %1392 = vmatpush1.msra.mxu0 0.0
    %1393 = vmatprep.subr.mxu0 0.0
    %1394 = vmatpush1.msra.mxu0 0.0
    %1395 = vmatprep.subr.mxu0 0.0
    %1396 = vmatpush1.msra.mxu0 0.0
    %1397 = vmatprep.subr.mxu0 0.0
    %1398 = vmatpush1.msra.mxu0 0.0
    %1399 = vmatprep.subr.mxu0 0.0
    %1400 = vmatpush1.msra.mxu0 0.0
    %1401 = vmatprep.subr.mxu0 0.0
    %1402 = vmatpush1.msra.mxu0 0.0
    %1403 = vmatprep.subr.mxu0 0.0
    %1404 = vmatpush1.msra.mxu0 0.0
    %1405 = vmatprep.subr.mxu0 0.0
    %1406 = vmatpush1.msra.mxu0 0.0
    %1407 = vmatprep.subr.mxu0 0.0
    %1408 = vmatpush1.msra.mxu0 0.0
    %1409 = vmatprep.subr.mxu0 0.0
    %1410 = vmatpush1.msra.mxu0 0.0
    %1411 = vmatprep.subr.mxu0 0.0
    %1412 = vmatpush1.msra.mxu0 0.0
    %1413 = vmatprep.subr.mxu0 0.0
    %1414 = vmatpush1.msra.mxu0 0.0
    %1415 = vmatprep.subr.mxu0 0.0
    %1416 = vmatpush1.msra.mxu0 0.0
    %1417 = vmatprep.subr.mxu0 0.0
    %1418 = vmatpush1.msra.mxu0 0.0
    %1419 = vmatprep.subr.mxu0 0.0
    %1420 = vmatpush1.msra.mxu0 0.0
    %1421 = vmatprep.subr.mxu0 0.0
    %1422 = vmatpush1.msra.mxu0 0.0
    %1423 = vmatprep.subr.mxu0 0.0
    %1424 = vmatpush1.msra.mxu0 0.0
    %1425 = vmatprep.subr.mxu0 0.0
    %1426 = vmatpush1.msra.mxu0 0.0
    %1427 = vmatprep.subr.mxu0 0.0
    %1428 = vmatpush1.msra.mxu0 0.0
    %1429 = vmatprep.subr.mxu0 0.0
    %1430 = vmatpush1.msra.mxu0 0.0
    %1431 = vmatprep.subr.mxu0 0.0
    %1432 = vmatpush1.msra.mxu0 0.0
    %1433 = vmatprep.subr.mxu0 0.0
    %1434 = vmatpush1.msra.mxu0 0.0
    %1435 = vmatprep.subr.mxu0 0.0
    %1436 = vmatpush1.msra.mxu0 0.0
    %1437 = vmatprep.subr.mxu0 0.0
    %1438 = vmatpush1.msra.mxu0 0.0
    %1439 = vmatprep.subr.mxu0 0.0
    %1440 = vmatpush1.msra.mxu0 0.0
    %1441 = vmatprep.mubr.f32.mxu0 0.0
    %1442 = vmatmul.mubr.f32.gmra.mrb[0].mxu0 %v1366
    %v1443 = vpop.f32.mrb[0].mxu0
    %v1444 = vadd.f32 0.0, %v1443
    %v1445 = vpop.f32.mrb[0].mxu0
    %1446 = vmatprep.mubr.f32.mxu0 0.0
    %1447 = vmatmul.mubr.f32.gmra.mrb[0].mxu0 %v1369
    %v1448 = vpop.f32.mrb[0].mxu0
    %v1449 = vadd.f32 0.0, %v1448
    %v1450 = vpop.f32.mrb[0].mxu0
    %1451 = vmatprep.mubr.f32.mxu0 0.0
    %1452 = vmatmul.mubr.f32.gmra.mrb[0].mxu0 %v1372
    %v1453 = vpop.f32.mrb[0].mxu0
    %v1454 = vadd.f32 0.0, %v1453
    %v1455 = vpop.f32.mrb[0].mxu0
    %1456 = vmatprep.mubr.f32.mxu0 0.0
    %1457 = vmatmul.mubr.f32.gmra.mrb[0].mxu0 %v1375
    %v1458 = vpop.f32.mrb[0].mxu0
    %v1459 = vadd.f32 0.0, %v1458
    %v1460 = vpop.f32.mrb[0].mxu0
    %1461 = vdwg.mxu0
    %s1462 = scalar_lea.vmem [#allocation5], 1792
    %v1463 = vld [vmem:[%s1462] sm:$0xff]
    %v1464 = vld [vmem:[%s1462 + $0x8] sm:$0xff]
    %v1465 = vld [vmem:[%s1462 + $0x10] sm:$0xff]
    %v1466 = vld [vmem:[%s1462 + $0x18] sm:$0xff]
    %v1467 = vld [vmem:[%s1462 + $0x20] sm:$0xff]
    %v1468 = vld [vmem:[%s1462 + $0x28] sm:$0xff]
    %v1469 = vld [vmem:[%s1462 + $0x30] sm:$0xff]
    %v1470 = vld [vmem:[%s1462 + $0x38] sm:$0xff]
    %v1471 = vld [vmem:[%s1462 + $0x40] sm:$0xff]
    %v1472 = vld [vmem:[%s1462 + $0x48] sm:$0xff]
    %v1473 = vld [vmem:[%s1462 + $0x50] sm:$0xff]
    %v1474 = vld [vmem:[%s1462 + $0x58] sm:$0xff]
    %v1475 = vld [vmem:[%s1462 + $0x60] sm:$0xff]
    %v1476 = vld [vmem:[%s1462 + $0x68] sm:$0xff]
    %v1477 = vld [vmem:[%s1462 + $0x70] sm:$0xff]
    %v1478 = vld [vmem:[%s1462 + $0x78] sm:$0xff]
    %s1479 = scalar_lea.vmem [#allocation8], 64
    %v1480 = vld [vmem:[%s1479] sm:$0xff]
    %v1481 = vld [vmem:[%s1479 + $0x8] sm:$0xff]
    %v1482 = vld [vmem:[%s1479 + $0x10] sm:$0xff]
    %v1483 = vld [vmem:[%s1479 + $0x18] sm:$0xff]
    %v1485 = vsel %vm342, %v1480, 0
    %v1488 = vsel %vm342, %v1481, 0
    %v1491 = vsel %vm342, %v1482, 0
    %v1494 = vsel %vm342, %v1483, 0
    %1496 = vmatprep.subr.mxu0 0.0
    %1497 = vmatpush1.msra.mxu0 %v530
    %1498 = vmatprep.subr.mxu0 0.0
    %1499 = vmatpush1.msra.mxu0 %v531
    %1500 = vmatprep.subr.mxu0 0.0
    %1501 = vmatpush1.msra.mxu0 %v532
    %1502 = vmatprep.subr.mxu0 0.0
    %1503 = vmatpush1.msra.mxu0 %v533
    %1504 = vmatprep.subr.mxu0 0.0
    %1505 = vmatpush1.msra.mxu0 0.0
    %1506 = vmatprep.subr.mxu0 0.0
    %1507 = vmatpush1.msra.mxu0 0.0
    %1508 = vmatprep.subr.mxu0 0.0
    %1509 = vmatpush1.msra.mxu0 0.0
    %1510 = vmatprep.subr.mxu0 0.0
    %1511 = vmatpush1.msra.mxu0 0.0
    %1512 = vmatprep.subr.mxu0 0.0
    %1513 = vmatpush1.msra.mxu0 0.0
    %1514 = vmatprep.subr.mxu0 0.0
    %1515 = vmatpush1.msra.mxu0 0.0
    %1516 = vmatprep.subr.mxu0 0.0
    %1517 = vmatpush1.msra.mxu0 0.0
    %1518 = vmatprep.subr.mxu0 0.0
    %1519 = vmatpush1.msra.mxu0 0.0
    %1520 = vmatprep.subr.mxu0 0.0
    %1521 = vmatpush1.msra.mxu0 0.0
    %1522 = vmatprep.subr.mxu0 0.0
    %1523 = vmatpush1.msra.mxu0 0.0
    %1524 = vmatprep.subr.mxu0 0.0
    %1525 = vmatpush1.msra.mxu0 0.0
    %1526 = vmatprep.subr.mxu0 0.0
    %1527 = vmatpush1.msra.mxu0 0.0
    %1528 = vmatprep.subr.mxu0 0.0
    %1529 = vmatpush1.msra.mxu0 0.0
    %1530 = vmatprep.subr.mxu0 0.0
    %1531 = vmatpush1.msra.mxu0 0.0
    %1532 = vmatprep.subr.mxu0 0.0
    %1533 = vmatpush1.msra.mxu0 0.0
    %1534 = vmatprep.subr.mxu0 0.0
    %1535 = vmatpush1.msra.mxu0 0.0
    %1536 = vmatprep.subr.mxu0 0.0
    %1537 = vmatpush1.msra.mxu0 0.0
    %1538 = vmatprep.subr.mxu0 0.0
    %1539 = vmatpush1.msra.mxu0 0.0
    %1540 = vmatprep.subr.mxu0 0.0
    %1541 = vmatpush1.msra.mxu0 0.0
    %1542 = vmatprep.subr.mxu0 0.0
    %1543 = vmatpush1.msra.mxu0 0.0
    %1544 = vmatprep.subr.mxu0 0.0
    %1545 = vmatpush1.msra.mxu0 0.0
    %1546 = vmatprep.subr.mxu0 0.0
    %1547 = vmatpush1.msra.mxu0 0.0
    %1548 = vmatprep.subr.mxu0 0.0
    %1549 = vmatpush1.msra.mxu0 0.0
    %1550 = vmatprep.subr.mxu0 0.0
    %1551 = vmatpush1.msra.mxu0 0.0
    %1552 = vmatprep.subr.mxu0 0.0
    %1553 = vmatpush1.msra.mxu0 0.0
    %1554 = vmatprep.subr.mxu0 0.0
    %1555 = vmatpush1.msra.mxu0 0.0
    %1556 = vmatprep.subr.mxu0 0.0
    %1557 = vmatpush1.msra.mxu0 0.0
    %1558 = vmatprep.subr.mxu0 0.0
    %1559 = vmatpush1.msra.mxu0 0.0
    %1560 = vmatprep.mubr.f32.mxu0 0.0
    %1561 = vmatmul.mubr.f32.gmra.mrb[0].mxu0 %v1485
    %v1562 = vpop.f32.mrb[0].mxu0
    %v1563 = vadd.f32 0.0, %v1562
    %v1564 = vpop.f32.mrb[0].mxu0
    %1565 = vmatprep.mubr.f32.mxu0 0.0
    %1566 = vmatmul.mubr.f32.gmra.mrb[0].mxu0 %v1488
    %v1567 = vpop.f32.mrb[0].mxu0
    %v1568 = vadd.f32 0.0, %v1567
    %v1569 = vpop.f32.mrb[0].mxu0
    %1570 = vmatprep.mubr.f32.mxu0 0.0
    %1571 = vmatmul.mubr.f32.gmra.mrb[0].mxu0 %v1491
    %v1572 = vpop.f32.mrb[0].mxu0
    %v1573 = vadd.f32 0.0, %v1572
    %v1574 = vpop.f32.mrb[0].mxu0
    %1575 = vmatprep.mubr.f32.mxu0 0.0
    %1576 = vmatmul.mubr.f32.gmra.mrb[0].mxu0 %v1494
    %v1577 = vpop.f32.mrb[0].mxu0
    %v1578 = vadd.f32 0.0, %v1577
    %v1579 = vpop.f32.mrb[0].mxu0
    %1580 = vdwg.mxu0
    %s1581 = scalar_lea.vmem [#allocation5], 1536
    %v1582 = vld [vmem:[%s1581] sm:$0xff]
    %v1583 = vld [vmem:[%s1581 + $0x8] sm:$0xff]
    %v1584 = vld [vmem:[%s1581 + $0x10] sm:$0xff]
    %v1585 = vld [vmem:[%s1581 + $0x18] sm:$0xff]
    %v1586 = vld [vmem:[%s1581 + $0x20] sm:$0xff]
    %v1587 = vld [vmem:[%s1581 + $0x28] sm:$0xff]
    %v1588 = vld [vmem:[%s1581 + $0x30] sm:$0xff]
    %v1589 = vld [vmem:[%s1581 + $0x38] sm:$0xff]
    %v1590 = vld [vmem:[%s1581 + $0x40] sm:$0xff]
    %v1591 = vld [vmem:[%s1581 + $0x48] sm:$0xff]
    %v1592 = vld [vmem:[%s1581 + $0x50] sm:$0xff]
    %v1593 = vld [vmem:[%s1581 + $0x58] sm:$0xff]
    %v1594 = vld [vmem:[%s1581 + $0x60] sm:$0xff]
    %v1595 = vld [vmem:[%s1581 + $0x68] sm:$0xff]
    %v1596 = vld [vmem:[%s1581 + $0x70] sm:$0xff]
    %v1597 = vld [vmem:[%s1581 + $0x78] sm:$0xff]
    %1598 = vmatprep.subr.mxu0 0.0
    %1599 = vmatpush1.msra.mxu0 %v1582
    %1600 = vmatprep.subr.mxu0 0.0
    %1601 = vmatpush1.msra.mxu0 %v1583
    %1602 = vmatprep.subr.mxu0 0.0
    %1603 = vmatpush1.msra.mxu0 %v1584
    %1604 = vmatprep.subr.mxu0 0.0
    %1605 = vmatpush1.msra.mxu0 %v1585
    %1606 = vmatprep.subr.mxu0 0.0
    %1607 = vmatpush1.msra.mxu0 %v1586
    %1608 = vmatprep.subr.mxu0 0.0
    %1609 = vmatpush1.msra.mxu0 %v1587
    %1610 = vmatprep.subr.mxu0 0.0
    %1611 = vmatpush1.msra.mxu0 %v1588
    %1612 = vmatprep.subr.mxu0 0.0
    %1613 = vmatpush1.msra.mxu0 %v1589
    %1614 = vmatprep.subr.mxu0 0.0
    %1615 = vmatpush1.msra.mxu0 %v1590
    %1616 = vmatprep.subr.mxu0 0.0
    %1617 = vmatpush1.msra.mxu0 %v1591
    %1618 = vmatprep.subr.mxu0 0.0
    %1619 = vmatpush1.msra.mxu0 %v1592
    %1620 = vmatprep.subr.mxu0 0.0
    %1621 = vmatpush1.msra.mxu0 %v1593
    %1622 = vmatprep.subr.mxu0 0.0
    %1623 = vmatpush1.msra.mxu0 %v1594
    %1624 = vmatprep.subr.mxu0 0.0
    %1625 = vmatpush1.msra.mxu0 %v1595
    %1626 = vmatprep.subr.mxu0 0.0
    %1627 = vmatpush1.msra.mxu0 %v1596
    %1628 = vmatprep.subr.mxu0 0.0
    %1629 = vmatpush1.msra.mxu0 %v1597
    %1630 = vmatprep.subr.mxu0 0.0
    %1631 = vmatpush1.msra.mxu0 0.0
    %1632 = vmatprep.subr.mxu0 0.0
    %1633 = vmatpush1.msra.mxu0 0.0
    %1634 = vmatprep.subr.mxu0 0.0
    %1635 = vmatpush1.msra.mxu0 0.0
    %1636 = vmatprep.subr.mxu0 0.0
    %1637 = vmatpush1.msra.mxu0 0.0
    %1638 = vmatprep.subr.mxu0 0.0
    %1639 = vmatpush1.msra.mxu0 0.0
    %1640 = vmatprep.subr.mxu0 0.0
    %1641 = vmatpush1.msra.mxu0 0.0
    %1642 = vmatprep.subr.mxu0 0.0
    %1643 = vmatpush1.msra.mxu0 0.0
    %1644 = vmatprep.subr.mxu0 0.0
    %1645 = vmatpush1.msra.mxu0 0.0
    %1646 = vmatprep.subr.mxu0 0.0
    %1647 = vmatpush1.msra.mxu0 0.0
    %1648 = vmatprep.subr.mxu0 0.0
    %1649 = vmatpush1.msra.mxu0 0.0
    %1650 = vmatprep.subr.mxu0 0.0
    %1651 = vmatpush1.msra.mxu0 0.0
    %1652 = vmatprep.subr.mxu0 0.0
    %1653 = vmatpush1.msra.mxu0 0.0
    %1654 = vmatprep.subr.mxu0 0.0
    %1655 = vmatpush1.msra.mxu0 0.0
    %1656 = vmatprep.subr.mxu0 0.0
    %1657 = vmatpush1.msra.mxu0 0.0
    %1658 = vmatprep.subr.mxu0 0.0
    %1659 = vmatpush1.msra.mxu0 0.0
    %1660 = vmatprep.subr.mxu0 0.0
    %1661 = vmatpush1.msra.mxu0 0.0
    %1662 = vmatprep.mubr.f32.mxu0 0.0
    %1663 = vmatmul.mubr.f32.gmra.mrb[0].mxu0 %v1563
    %v1664 = vpop.f32.mrb[0].mxu0
    %v1665 = vadd.f32 0.0, %v1664
    %v1666 = vpop.f32.mrb[0].mxu0
    %1667 = vmatprep.mubr.f32.mxu0 0.0
    %1668 = vmatmul.mubr.f32.gmra.mrb[0].mxu0 %v1568
    %v1669 = vpop.f32.mrb[0].mxu0
    %v1670 = vadd.f32 0.0, %v1669
    %v1671 = vpop.f32.mrb[0].mxu0
    %1672 = vmatprep.mubr.f32.mxu0 0.0
    %1673 = vmatmul.mubr.f32.gmra.mrb[0].mxu0 %v1573
    %v1674 = vpop.f32.mrb[0].mxu0
    %v1675 = vadd.f32 0.0, %v1674
    %v1676 = vpop.f32.mrb[0].mxu0
    %1677 = vmatprep.mubr.f32.mxu0 0.0
    %1678 = vmatmul.mubr.f32.gmra.mrb[0].mxu0 %v1578
    %v1679 = vpop.f32.mrb[0].mxu0
    %v1680 = vadd.f32 0.0, %v1679
    %v1681 = vpop.f32.mrb[0].mxu0
    %1682 = vdwg.mxu0
    %1683 = vmatprep.subr.mxu0 0.0
    %1684 = vmatpush1.msra.mxu0 %v1463
    %1685 = vmatprep.subr.mxu0 0.0
    %1686 = vmatpush1.msra.mxu0 %v1464
    %1687 = vmatprep.subr.mxu0 0.0
    %1688 = vmatpush1.msra.mxu0 %v1465
    %1689 = vmatprep.subr.mxu0 0.0
    %1690 = vmatpush1.msra.mxu0 %v1466
    %1691 = vmatprep.subr.mxu0 0.0
    %1692 = vmatpush1.msra.mxu0 %v1467
    %1693 = vmatprep.subr.mxu0 0.0
    %1694 = vmatpush1.msra.mxu0 %v1468
    %1695 = vmatprep.subr.mxu0 0.0
    %1696 = vmatpush1.msra.mxu0 %v1469
    %1697 = vmatprep.subr.mxu0 0.0
    %1698 = vmatpush1.msra.mxu0 %v1470
    %1699 = vmatprep.subr.mxu0 0.0
    %1700 = vmatpush1.msra.mxu0 %v1471
    %1701 = vmatprep.subr.mxu0 0.0
    %1702 = vmatpush1.msra.mxu0 %v1472
    %1703 = vmatprep.subr.mxu0 0.0
    %1704 = vmatpush1.msra.mxu0 %v1473
    %1705 = vmatprep.subr.mxu0 0.0
    %1706 = vmatpush1.msra.mxu0 %v1474
    %1707 = vmatprep.subr.mxu0 0.0
    %1708 = vmatpush1.msra.mxu0 %v1475
    %1709 = vmatprep.subr.mxu0 0.0
    %1710 = vmatpush1.msra.mxu0 %v1476
    %1711 = vmatprep.subr.mxu0 0.0
    %1712 = vmatpush1.msra.mxu0 %v1477
    %1713 = vmatprep.subr.mxu0 0.0
    %1714 = vmatpush1.msra.mxu0 %v1478
    %1715 = vmatprep.subr.mxu0 0.0
    %1716 = vmatpush1.msra.mxu0 0.0
    %1717 = vmatprep.subr.mxu0 0.0
    %1718 = vmatpush1.msra.mxu0 0.0
    %1719 = vmatprep.subr.mxu0 0.0
    %1720 = vmatpush1.msra.mxu0 0.0
    %1721 = vmatprep.subr.mxu0 0.0
    %1722 = vmatpush1.msra.mxu0 0.0
    %1723 = vmatprep.subr.mxu0 0.0
    %1724 = vmatpush1.msra.mxu0 0.0
    %1725 = vmatprep.subr.mxu0 0.0
    %1726 = vmatpush1.msra.mxu0 0.0
    %1727 = vmatprep.subr.mxu0 0.0
    %1728 = vmatpush1.msra.mxu0 0.0
    %1729 = vmatprep.subr.mxu0 0.0
    %1730 = vmatpush1.msra.mxu0 0.0
    %1731 = vmatprep.subr.mxu0 0.0
    %1732 = vmatpush1.msra.mxu0 0.0
    %1733 = vmatprep.subr.mxu0 0.0
    %1734 = vmatpush1.msra.mxu0 0.0
    %1735 = vmatprep.subr.mxu0 0.0
    %1736 = vmatpush1.msra.mxu0 0.0
    %1737 = vmatprep.subr.mxu0 0.0
    %1738 = vmatpush1.msra.mxu0 0.0
    %1739 = vmatprep.subr.mxu0 0.0
    %1740 = vmatpush1.msra.mxu0 0.0
    %1741 = vmatprep.subr.mxu0 0.0
    %1742 = vmatpush1.msra.mxu0 0.0
    %1743 = vmatprep.subr.mxu0 0.0
    %1744 = vmatpush1.msra.mxu0 0.0
    %1745 = vmatprep.subr.mxu0 0.0
    %1746 = vmatpush1.msra.mxu0 0.0
    %1747 = vmatprep.mubr.f32.mxu0 0.0
    %1748 = vmatmul.mubr.f32.gmra.mrb[0].mxu0 %v1444
    %v1749 = vpop.f32.mrb[0].mxu0
    %v1750 = vadd.f32 %v1665, %v1749
    %v1751 = vpop.f32.mrb[0].mxu0
    %1752 = vmatprep.mubr.f32.mxu0 0.0
    %1753 = vmatmul.mubr.f32.gmra.mrb[0].mxu0 %v1449
    %v1754 = vpop.f32.mrb[0].mxu0
    %v1755 = vadd.f32 %v1670, %v1754
    %v1756 = vpop.f32.mrb[0].mxu0
    %1757 = vmatprep.mubr.f32.mxu0 0.0
    %1758 = vmatmul.mubr.f32.gmra.mrb[0].mxu0 %v1454
    %v1759 = vpop.f32.mrb[0].mxu0
    %v1760 = vadd.f32 %v1675, %v1759
    %v1761 = vpop.f32.mrb[0].mxu0
    %1762 = vmatprep.mubr.f32.mxu0 0.0
    %1763 = vmatmul.mubr.f32.gmra.mrb[0].mxu0 %v1459
    %v1764 = vpop.f32.mrb[0].mxu0
    %v1765 = vadd.f32 %v1680, %v1764
    %v1766 = vpop.f32.mrb[0].mxu0
    %1767 = vdwg.mxu0
    %v1768 = vld [vmem:[%s1149] sm:$0xff]
    %v1769 = vld [vmem:[%s1149 + $0x8] sm:$0xff]
    %v1770 = vld [vmem:[%s1149 + $0x10] sm:$0xff]
    %v1771 = vld [vmem:[%s1149 + $0x18] sm:$0xff]
    %v1773 = vsel %vm342, %v1768, 0
    %v1776 = vsel %vm342, %v1769, 0
    %v1779 = vsel %vm342, %v1770, 0
    %v1782 = vsel %vm342, %v1771, 0
    %1784 = vmatprep.subr.mxu0 0.0
    %1785 = vmatpush1.msra.mxu0 %v530
    %1786 = vmatprep.subr.mxu0 0.0
    %1787 = vmatpush1.msra.mxu0 %v531
    %1788 = vmatprep.subr.mxu0 0.0
    %1789 = vmatpush1.msra.mxu0 %v532
    %1790 = vmatprep.subr.mxu0 0.0
    %1791 = vmatpush1.msra.mxu0 %v533
    %1792 = vmatprep.subr.mxu0 0.0
    %1793 = vmatpush1.msra.mxu0 0.0
    %1794 = vmatprep.subr.mxu0 0.0
    %1795 = vmatpush1.msra.mxu0 0.0
    %1796 = vmatprep.subr.mxu0 0.0
    %1797 = vmatpush1.msra.mxu0 0.0
    %1798 = vmatprep.subr.mxu0 0.0
    %1799 = vmatpush1.msra.mxu0 0.0
    %1800 = vmatprep.subr.mxu0 0.0
    %1801 = vmatpush1.msra.mxu0 0.0
    %1802 = vmatprep.subr.mxu0 0.0
    %1803 = vmatpush1.msra.mxu0 0.0
    %1804 = vmatprep.subr.mxu0 0.0
    %1805 = vmatpush1.msra.mxu0 0.0
    %1806 = vmatprep.subr.mxu0 0.0
    %1807 = vmatpush1.msra.mxu0 0.0
    %1808 = vmatprep.subr.mxu0 0.0
    %1809 = vmatpush1.msra.mxu0 0.0
    %1810 = vmatprep.subr.mxu0 0.0
    %1811 = vmatpush1.msra.mxu0 0.0
    %1812 = vmatprep.subr.mxu0 0.0
    %1813 = vmatpush1.msra.mxu0 0.0
    %1814 = vmatprep.subr.mxu0 0.0
    %1815 = vmatpush1.msra.mxu0 0.0
    %1816 = vmatprep.subr.mxu0 0.0
    %1817 = vmatpush1.msra.mxu0 0.0
    %1818 = vmatprep.subr.mxu0 0.0
    %1819 = vmatpush1.msra.mxu0 0.0
    %1820 = vmatprep.subr.mxu0 0.0
    %1821 = vmatpush1.msra.mxu0 0.0
    %1822 = vmatprep.subr.mxu0 0.0
    %1823 = vmatpush1.msra.mxu0 0.0
    %1824 = vmatprep.subr.mxu0 0.0
    %1825 = vmatpush1.msra.mxu0 0.0
    %1826 = vmatprep.subr.mxu0 0.0
    %1827 = vmatpush1.msra.mxu0 0.0
    %1828 = vmatprep.subr.mxu0 0.0
    %1829 = vmatpush1.msra.mxu0 0.0
    %1830 = vmatprep.subr.mxu0 0.0
    %1831 = vmatpush1.msra.mxu0 0.0
    %1832 = vmatprep.subr.mxu0 0.0
    %1833 = vmatpush1.msra.mxu0 0.0
    %1834 = vmatprep.subr.mxu0 0.0
    %1835 = vmatpush1.msra.mxu0 0.0
    %1836 = vmatprep.subr.mxu0 0.0
    %1837 = vmatpush1.msra.mxu0 0.0
    %1838 = vmatprep.subr.mxu0 0.0
    %1839 = vmatpush1.msra.mxu0 0.0
    %1840 = vmatprep.subr.mxu0 0.0
    %1841 = vmatpush1.msra.mxu0 0.0
    %1842 = vmatprep.subr.mxu0 0.0
    %1843 = vmatpush1.msra.mxu0 0.0
    %1844 = vmatprep.subr.mxu0 0.0
    %1845 = vmatpush1.msra.mxu0 0.0
    %1846 = vmatprep.subr.mxu0 0.0
    %1847 = vmatpush1.msra.mxu0 0.0
    %1848 = vmatprep.mubr.f32.mxu0 0.0
    %1849 = vmatmul.mubr.f32.gmra.mrb[0].mxu0 %v1773
    %v1850 = vpop.f32.mrb[0].mxu0
    %v1851 = vadd.f32 0.0, %v1850
    %v1852 = vpop.f32.mrb[0].mxu0
    %1853 = vmatprep.mubr.f32.mxu0 0.0
    %1854 = vmatmul.mubr.f32.gmra.mrb[0].mxu0 %v1776
    %v1855 = vpop.f32.mrb[0].mxu0
    %v1856 = vadd.f32 0.0, %v1855
    %v1857 = vpop.f32.mrb[0].mxu0
    %1858 = vmatprep.mubr.f32.mxu0 0.0
    %1859 = vmatmul.mubr.f32.gmra.mrb[0].mxu0 %v1779
    %v1860 = vpop.f32.mrb[0].mxu0
    %v1861 = vadd.f32 0.0, %v1860
    %v1862 = vpop.f32.mrb[0].mxu0
    %1863 = vmatprep.mubr.f32.mxu0 0.0
    %1864 = vmatmul.mubr.f32.gmra.mrb[0].mxu0 %v1782
    %v1865 = vpop.f32.mrb[0].mxu0
    %v1866 = vadd.f32 0.0, %v1865
    %v1867 = vpop.f32.mrb[0].mxu0
    %1868 = vdwg.mxu0
    %s1869 = scalar_lea.vmem [#allocation5], 768
    %v1870 = vld [vmem:[%s1869] sm:$0xff]
    %v1871 = vld [vmem:[%s1869 + $0x8] sm:$0xff]
    %v1872 = vld [vmem:[%s1869 + $0x10] sm:$0xff]
    %v1873 = vld [vmem:[%s1869 + $0x18] sm:$0xff]
    %v1874 = vld [vmem:[%s1869 + $0x20] sm:$0xff]
    %v1875 = vld [vmem:[%s1869 + $0x28] sm:$0xff]
    %v1876 = vld [vmem:[%s1869 + $0x30] sm:$0xff]
    %v1877 = vld [vmem:[%s1869 + $0x38] sm:$0xff]
    %v1878 = vld [vmem:[%s1869 + $0x40] sm:$0xff]
    %v1879 = vld [vmem:[%s1869 + $0x48] sm:$0xff]
    %v1880 = vld [vmem:[%s1869 + $0x50] sm:$0xff]
    %v1881 = vld [vmem:[%s1869 + $0x58] sm:$0xff]
    %v1882 = vld [vmem:[%s1869 + $0x60] sm:$0xff]
    %v1883 = vld [vmem:[%s1869 + $0x68] sm:$0xff]
    %v1884 = vld [vmem:[%s1869 + $0x70] sm:$0xff]
    %v1885 = vld [vmem:[%s1869 + $0x78] sm:$0xff]
    %1886 = vmatprep.subr.mxu0 0.0
    %1887 = vmatpush1.msra.mxu0 %v1870
    %1888 = vmatprep.subr.mxu0 0.0
    %1889 = vmatpush1.msra.mxu0 %v1871
    %1890 = vmatprep.subr.mxu0 0.0
    %1891 = vmatpush1.msra.mxu0 %v1872
    %1892 = vmatprep.subr.mxu0 0.0
    %1893 = vmatpush1.msra.mxu0 %v1873
    %1894 = vmatprep.subr.mxu0 0.0
    %1895 = vmatpush1.msra.mxu0 %v1874
    %1896 = vmatprep.subr.mxu0 0.0
    %1897 = vmatpush1.msra.mxu0 %v1875
    %1898 = vmatprep.subr.mxu0 0.0
    %1899 = vmatpush1.msra.mxu0 %v1876
    %1900 = vmatprep.subr.mxu0 0.0
    %1901 = vmatpush1.msra.mxu0 %v1877
    %1902 = vmatprep.subr.mxu0 0.0
    %1903 = vmatpush1.msra.mxu0 %v1878
    %1904 = vmatprep.subr.mxu0 0.0
    %1905 = vmatpush1.msra.mxu0 %v1879
    %1906 = vmatprep.subr.mxu0 0.0
    %1907 = vmatpush1.msra.mxu0 %v1880
    %1908 = vmatprep.subr.mxu0 0.0
    %1909 = vmatpush1.msra.mxu0 %v1881
    %1910 = vmatprep.subr.mxu0 0.0
    %1911 = vmatpush1.msra.mxu0 %v1882
    %1912 = vmatprep.subr.mxu0 0.0
    %1913 = vmatpush1.msra.mxu0 %v1883
    %1914 = vmatprep.subr.mxu0 0.0
    %1915 = vmatpush1.msra.mxu0 %v1884
    %1916 = vmatprep.subr.mxu0 0.0
    %1917 = vmatpush1.msra.mxu0 %v1885
    %1918 = vmatprep.subr.mxu0 0.0
    %1919 = vmatpush1.msra.mxu0 0.0
    %1920 = vmatprep.subr.mxu0 0.0
    %1921 = vmatpush1.msra.mxu0 0.0
    %1922 = vmatprep.subr.mxu0 0.0
    %1923 = vmatpush1.msra.mxu0 0.0
    %1924 = vmatprep.subr.mxu0 0.0
    %1925 = vmatpush1.msra.mxu0 0.0
    %1926 = vmatprep.subr.mxu0 0.0
    %1927 = vmatpush1.msra.mxu0 0.0
    %1928 = vmatprep.subr.mxu0 0.0
    %1929 = vmatpush1.msra.mxu0 0.0
    %1930 = vmatprep.subr.mxu0 0.0
    %1931 = vmatpush1.msra.mxu0 0.0
    %1932 = vmatprep.subr.mxu0 0.0
    %1933 = vmatpush1.msra.mxu0 0.0
    %1934 = vmatprep.subr.mxu0 0.0
    %1935 = vmatpush1.msra.mxu0 0.0
    %1936 = vmatprep.subr.mxu0 0.0
    %1937 = vmatpush1.msra.mxu0 0.0
    %1938 = vmatprep.subr.mxu0 0.0
    %1939 = vmatpush1.msra.mxu0 0.0
    %1940 = vmatprep.subr.mxu0 0.0
    %1941 = vmatpush1.msra.mxu0 0.0
    %1942 = vmatprep.subr.mxu0 0.0
    %1943 = vmatpush1.msra.mxu0 0.0
    %1944 = vmatprep.subr.mxu0 0.0
    %1945 = vmatpush1.msra.mxu0 0.0
    %1946 = vmatprep.subr.mxu0 0.0
    %1947 = vmatpush1.msra.mxu0 0.0
    %1948 = vmatprep.subr.mxu0 0.0
    %1949 = vmatpush1.msra.mxu0 0.0
    %1950 = vmatprep.mubr.f32.mxu0 0.0
    %1951 = vmatmul.mubr.f32.gmra.mrb[0].mxu0 %v1851
    %v1952 = vpop.f32.mrb[0].mxu0
    %v1953 = vadd.f32 0.0, %v1952
    %v1954 = vpop.f32.mrb[0].mxu0
    %1955 = vmatprep.mubr.f32.mxu0 0.0
    %1956 = vmatmul.mubr.f32.gmra.mrb[0].mxu0 %v1856
    %v1957 = vpop.f32.mrb[0].mxu0
    %v1958 = vadd.f32 0.0, %v1957
    %v1959 = vpop.f32.mrb[0].mxu0
    %1960 = vmatprep.mubr.f32.mxu0 0.0
    %1961 = vmatmul.mubr.f32.gmra.mrb[0].mxu0 %v1861
    %v1962 = vpop.f32.mrb[0].mxu0
    %v1963 = vadd.f32 0.0, %v1962
    %v1964 = vpop.f32.mrb[0].mxu0
    %1965 = vmatprep.mubr.f32.mxu0 0.0
    %1966 = vmatmul.mubr.f32.gmra.mrb[0].mxu0 %v1866
    %v1967 = vpop.f32.mrb[0].mxu0
    %v1968 = vadd.f32 0.0, %v1967
    %v1969 = vpop.f32.mrb[0].mxu0
    %1970 = vdwg.mxu0
    %v1971 = vadd.f32 %v1750, %v1953
    %v1972 = vadd.f32 %v1755, %v1958
    %v1973 = vadd.f32 %v1760, %v1963
    %v1974 = vadd.f32 %v1765, %v1968
    %s1975 = scalar_lea.vmem [#allocation8], 160
    %v1976 = vld [vmem:[%s1975] sm:$0xff]
    %v1977 = vld [vmem:[%s1975 + $0x8] sm:$0xff]
    %v1978 = vld [vmem:[%s1975 + $0x10] sm:$0xff]
    %v1979 = vld [vmem:[%s1975 + $0x18] sm:$0xff]
    %v1981 = vsel %vm342, %v1976, 0
    %v1984 = vsel %vm342, %v1977, 0
    %v1987 = vsel %vm342, %v1978, 0
    %v1990 = vsel %vm342, %v1979, 0
    %1992 = vmatprep.subr.mxu0 0.0
    %1993 = vmatpush1.msra.mxu0 %v530
    %1994 = vmatprep.subr.mxu0 0.0
    %1995 = vmatpush1.msra.mxu0 %v531
    %1996 = vmatprep.subr.mxu0 0.0
    %1997 = vmatpush1.msra.mxu0 %v532
    %1998 = vmatprep.subr.mxu0 0.0
    %1999 = vmatpush1.msra.mxu0 %v533
    %2000 = vmatprep.subr.mxu0 0.0
    %2001 = vmatpush1.msra.mxu0 0.0
    %2002 = vmatprep.subr.mxu0 0.0
    %2003 = vmatpush1.msra.mxu0 0.0
    %2004 = vmatprep.subr.mxu0 0.0
    %2005 = vmatpush1.msra.mxu0 0.0
    %2006 = vmatprep.subr.mxu0 0.0
    %2007 = vmatpush1.msra.mxu0 0.0
    %2008 = vmatprep.subr.mxu0 0.0
    %2009 = vmatpush1.msra.mxu0 0.0
    %2010 = vmatprep.subr.mxu0 0.0
    %2011 = vmatpush1.msra.mxu0 0.0
    %2012 = vmatprep.subr.mxu0 0.0
    %2013 = vmatpush1.msra.mxu0 0.0
    %2014 = vmatprep.subr.mxu0 0.0
    %2015 = vmatpush1.msra.mxu0 0.0
    %2016 = vmatprep.subr.mxu0 0.0
    %2017 = vmatpush1.msra.mxu0 0.0
    %2018 = vmatprep.subr.mxu0 0.0
    %2019 = vmatpush1.msra.mxu0 0.0
    %2020 = vmatprep.subr.mxu0 0.0
    %2021 = vmatpush1.msra.mxu0 0.0
    %2022 = vmatprep.subr.mxu0 0.0
    %2023 = vmatpush1.msra.mxu0 0.0
    %2024 = vmatprep.subr.mxu0 0.0
    %2025 = vmatpush1.msra.mxu0 0.0
    %2026 = vmatprep.subr.mxu0 0.0
    %2027 = vmatpush1.msra.mxu0 0.0
    %2028 = vmatprep.subr.mxu0 0.0
    %2029 = vmatpush1.msra.mxu0 0.0
    %2030 = vmatprep.subr.mxu0 0.0
    %2031 = vmatpush1.msra.mxu0 0.0
    %2032 = vmatprep.subr.mxu0 0.0
    %2033 = vmatpush1.msra.mxu0 0.0
    %2034 = vmatprep.subr.mxu0 0.0
    %2035 = vmatpush1.msra.mxu0 0.0
    %2036 = vmatprep.subr.mxu0 0.0
    %2037 = vmatpush1.msra.mxu0 0.0
    %2038 = vmatprep.subr.mxu0 0.0
    %2039 = vmatpush1.msra.mxu0 0.0
    %2040 = vmatprep.subr.mxu0 0.0
    %2041 = vmatpush1.msra.mxu0 0.0
    %2042 = vmatprep.subr.mxu0 0.0
    %2043 = vmatpush1.msra.mxu0 0.0
    %2044 = vmatprep.subr.mxu0 0.0
    %2045 = vmatpush1.msra.mxu0 0.0
    %2046 = vmatprep.subr.mxu0 0.0
    %2047 = vmatpush1.msra.mxu0 0.0
    %2048 = vmatprep.subr.mxu0 0.0
    %2049 = vmatpush1.msra.mxu0 0.0
    %2050 = vmatprep.subr.mxu0 0.0
    %2051 = vmatpush1.msra.mxu0 0.0
    %2052 = vmatprep.subr.mxu0 0.0
    %2053 = vmatpush1.msra.mxu0 0.0
    %2054 = vmatprep.subr.mxu0 0.0
    %2055 = vmatpush1.msra.mxu0 0.0
    %2056 = vmatprep.mubr.f32.mxu0 0.0
    %2057 = vmatmul.mubr.f32.gmra.mrb[0].mxu0 %v1981
    %v2058 = vpop.f32.mrb[0].mxu0
    %v2059 = vadd.f32 0.0, %v2058
    %v2060 = vpop.f32.mrb[0].mxu0
    %2061 = vmatprep.mubr.f32.mxu0 0.0
    %2062 = vmatmul.mubr.f32.gmra.mrb[0].mxu0 %v1984
    %v2063 = vpop.f32.mrb[0].mxu0
    %v2064 = vadd.f32 0.0, %v2063
    %v2065 = vpop.f32.mrb[0].mxu0
    %2066 = vmatprep.mubr.f32.mxu0 0.0
    %2067 = vmatmul.mubr.f32.gmra.mrb[0].mxu0 %v1987
    %v2068 = vpop.f32.mrb[0].mxu0
    %v2069 = vadd.f32 0.0, %v2068
    %v2070 = vpop.f32.mrb[0].mxu0
    %2071 = vmatprep.mubr.f32.mxu0 0.0
    %2072 = vmatmul.mubr.f32.gmra.mrb[0].mxu0 %v1990
    %v2073 = vpop.f32.mrb[0].mxu0
    %v2074 = vadd.f32 0.0, %v2073
    %v2075 = vpop.f32.mrb[0].mxu0
    %2076 = vdwg.mxu0
    %s2077 = scalar_lea.vmem [#allocation5], 512
    %v2078 = vld [vmem:[%s2077] sm:$0xff]
    %v2079 = vld [vmem:[%s2077 + $0x8] sm:$0xff]
    %v2080 = vld [vmem:[%s2077 + $0x10] sm:$0xff]
    %v2081 = vld [vmem:[%s2077 + $0x18] sm:$0xff]
    %v2082 = vld [vmem:[%s2077 + $0x20] sm:$0xff]
    %v2083 = vld [vmem:[%s2077 + $0x28] sm:$0xff]
    %v2084 = vld [vmem:[%s2077 + $0x30] sm:$0xff]
    %v2085 = vld [vmem:[%s2077 + $0x38] sm:$0xff]
    %v2086 = vld [vmem:[%s2077 + $0x40] sm:$0xff]
    %v2087 = vld [vmem:[%s2077 + $0x48] sm:$0xff]
    %v2088 = vld [vmem:[%s2077 + $0x50] sm:$0xff]
    %v2089 = vld [vmem:[%s2077 + $0x58] sm:$0xff]
    %v2090 = vld [vmem:[%s2077 + $0x60] sm:$0xff]
    %v2091 = vld [vmem:[%s2077 + $0x68] sm:$0xff]
    %v2092 = vld [vmem:[%s2077 + $0x70] sm:$0xff]
    %v2093 = vld [vmem:[%s2077 + $0x78] sm:$0xff]
    %2094 = vmatprep.subr.mxu0 0.0
    %2095 = vmatpush1.msra.mxu0 %v2078
    %2096 = vmatprep.subr.mxu0 0.0
    %2097 = vmatpush1.msra.mxu0 %v2079
    %2098 = vmatprep.subr.mxu0 0.0
    %2099 = vmatpush1.msra.mxu0 %v2080
    %2100 = vmatprep.subr.mxu0 0.0
    %2101 = vmatpush1.msra.mxu0 %v2081
    %2102 = vmatprep.subr.mxu0 0.0
    %2103 = vmatpush1.msra.mxu0 %v2082
    %2104 = vmatprep.subr.mxu0 0.0
    %2105 = vmatpush1.msra.mxu0 %v2083
    %2106 = vmatprep.subr.mxu0 0.0
    %2107 = vmatpush1.msra.mxu0 %v2084
    %2108 = vmatprep.subr.mxu0 0.0
    %2109 = vmatpush1.msra.mxu0 %v2085
    %2110 = vmatprep.subr.mxu0 0.0
    %2111 = vmatpush1.msra.mxu0 %v2086
    %2112 = vmatprep.subr.mxu0 0.0
    %2113 = vmatpush1.msra.mxu0 %v2087
    %2114 = vmatprep.subr.mxu0 0.0
    %2115 = vmatpush1.msra.mxu0 %v2088
    %2116 = vmatprep.subr.mxu0 0.0
    %2117 = vmatpush1.msra.mxu0 %v2089
    %2118 = vmatprep.subr.mxu0 0.0
    %2119 = vmatpush1.msra.mxu0 %v2090
    %2120 = vmatprep.subr.mxu0 0.0
    %2121 = vmatpush1.msra.mxu0 %v2091
    %2122 = vmatprep.subr.mxu0 0.0
    %2123 = vmatpush1.msra.mxu0 %v2092
    %2124 = vmatprep.subr.mxu0 0.0
    %2125 = vmatpush1.msra.mxu0 %v2093
    %2126 = vmatprep.subr.mxu0 0.0
    %2127 = vmatpush1.msra.mxu0 0.0
    %2128 = vmatprep.subr.mxu0 0.0
    %2129 = vmatpush1.msra.mxu0 0.0
    %2130 = vmatprep.subr.mxu0 0.0
    %2131 = vmatpush1.msra.mxu0 0.0
    %2132 = vmatprep.subr.mxu0 0.0
    %2133 = vmatpush1.msra.mxu0 0.0
    %2134 = vmatprep.subr.mxu0 0.0
    %2135 = vmatpush1.msra.mxu0 0.0
    %2136 = vmatprep.subr.mxu0 0.0
    %2137 = vmatpush1.msra.mxu0 0.0
    %2138 = vmatprep.subr.mxu0 0.0
    %2139 = vmatpush1.msra.mxu0 0.0
    %2140 = vmatprep.subr.mxu0 0.0
    %2141 = vmatpush1.msra.mxu0 0.0
    %2142 = vmatprep.subr.mxu0 0.0
    %2143 = vmatpush1.msra.mxu0 0.0
    %2144 = vmatprep.subr.mxu0 0.0
    %2145 = vmatpush1.msra.mxu0 0.0
    %2146 = vmatprep.subr.mxu0 0.0
    %2147 = vmatpush1.msra.mxu0 0.0
    %2148 = vmatprep.subr.mxu0 0.0
    %2149 = vmatpush1.msra.mxu0 0.0
    %2150 = vmatprep.subr.mxu0 0.0
    %2151 = vmatpush1.msra.mxu0 0.0
    %2152 = vmatprep.subr.mxu0 0.0
    %2153 = vmatpush1.msra.mxu0 0.0
    %2154 = vmatprep.subr.mxu0 0.0
    %2155 = vmatpush1.msra.mxu0 0.0
    %2156 = vmatprep.subr.mxu0 0.0
    %2157 = vmatpush1.msra.mxu0 0.0
    %2158 = vmatprep.mubr.f32.mxu0 0.0
    %2159 = vmatmul.mubr.f32.gmra.mrb[0].mxu0 %v2059
    %v2160 = vpop.f32.mrb[0].mxu0
    %v2161 = vadd.f32 0.0, %v2160
    %v2162 = vpop.f32.mrb[0].mxu0
    %2163 = vmatprep.mubr.f32.mxu0 0.0
    %2164 = vmatmul.mubr.f32.gmra.mrb[0].mxu0 %v2064
    %v2165 = vpop.f32.mrb[0].mxu0
    %v2166 = vadd.f32 0.0, %v2165
    %v2167 = vpop.f32.mrb[0].mxu0
    %2168 = vmatprep.mubr.f32.mxu0 0.0
    %2169 = vmatmul.mubr.f32.gmra.mrb[0].mxu0 %v2069
    %v2170 = vpop.f32.mrb[0].mxu0
    %v2171 = vadd.f32 0.0, %v2170
    %v2172 = vpop.f32.mrb[0].mxu0
    %2173 = vmatprep.mubr.f32.mxu0 0.0
    %2174 = vmatmul.mubr.f32.gmra.mrb[0].mxu0 %v2074
    %v2175 = vpop.f32.mrb[0].mxu0
    %v2176 = vadd.f32 0.0, %v2175
    %v2177 = vpop.f32.mrb[0].mxu0
    %2178 = vdwg.mxu0
    %v2179 = vadd.f32 %v1971, %v2161
    %v2180 = vadd.f32 %v1972, %v2166
    %v2181 = vadd.f32 %v1973, %v2171
    %v2182 = vadd.f32 %v1974, %v2176
    %2183 = vst [vmem:[#allocation2 + $0x20] sm:$0xff] %v2179
    %2184 = vst [vmem:[#allocation2 + $0x28] sm:$0xff] %v2180
    %2185 = vst [vmem:[#allocation2 + $0x30] sm:$0xff] %v2181
    %2186 = vst [vmem:[#allocation2 + $0x38] sm:$0xff] %v2182
    %v2187 = vld [vmem:[%s941] sm:$0xff]
    %v2188 = vld [vmem:[%s941 + $0x8] sm:$0xff]
    %v2189 = vld [vmem:[%s941 + $0x10] sm:$0xff]
    %v2190 = vld [vmem:[%s941 + $0x18] sm:$0xff]
    %v2192 = vsel %vm342, %v2187, 0
    %v2195 = vsel %vm342, %v2188, 0
    %v2198 = vsel %vm342, %v2189, 0
    %v2201 = vsel %vm342, %v2190, 0
    %2203 = vmatprep.subr.mxu0 0.0
    %2204 = vmatpush1.msra.mxu0 %v530
    %2205 = vmatprep.subr.mxu0 0.0
    %2206 = vmatpush1.msra.mxu0 %v531
    %2207 = vmatprep.subr.mxu0 0.0
    %2208 = vmatpush1.msra.mxu0 %v532
    %2209 = vmatprep.subr.mxu0 0.0
    %2210 = vmatpush1.msra.mxu0 %v533
    %2211 = vmatprep.subr.mxu0 0.0
    %2212 = vmatpush1.msra.mxu0 0.0
    %2213 = vmatprep.subr.mxu0 0.0
    %2214 = vmatpush1.msra.mxu0 0.0
    %2215 = vmatprep.subr.mxu0 0.0
    %2216 = vmatpush1.msra.mxu0 0.0
    %2217 = vmatprep.subr.mxu0 0.0
    %2218 = vmatpush1.msra.mxu0 0.0
    %2219 = vmatprep.subr.mxu0 0.0
    %2220 = vmatpush1.msra.mxu0 0.0
    %2221 = vmatprep.subr.mxu0 0.0
    %2222 = vmatpush1.msra.mxu0 0.0
    %2223 = vmatprep.subr.mxu0 0.0
    %2224 = vmatpush1.msra.mxu0 0.0
    %2225 = vmatprep.subr.mxu0 0.0
    %2226 = vmatpush1.msra.mxu0 0.0
    %2227 = vmatprep.subr.mxu0 0.0
    %2228 = vmatpush1.msra.mxu0 0.0
    %2229 = vmatprep.subr.mxu0 0.0
    %2230 = vmatpush1.msra.mxu0 0.0
    %2231 = vmatprep.subr.mxu0 0.0
    %2232 = vmatpush1.msra.mxu0 0.0
    %2233 = vmatprep.subr.mxu0 0.0
    %2234 = vmatpush1.msra.mxu0 0.0
    %2235 = vmatprep.subr.mxu0 0.0
    %2236 = vmatpush1.msra.mxu0 0.0
    %2237 = vmatprep.subr.mxu0 0.0
    %2238 = vmatpush1.msra.mxu0 0.0
    %2239 = vmatprep.subr.mxu0 0.0
    %2240 = vmatpush1.msra.mxu0 0.0
    %2241 = vmatprep.subr.mxu0 0.0
    %2242 = vmatpush1.msra.mxu0 0.0
    %2243 = vmatprep.subr.mxu0 0.0
    %2244 = vmatpush1.msra.mxu0 0.0
    %2245 = vmatprep.subr.mxu0 0.0
    %2246 = vmatpush1.msra.mxu0 0.0
    %2247 = vmatprep.subr.mxu0 0.0
    %2248 = vmatpush1.msra.mxu0 0.0
    %2249 = vmatprep.subr.mxu0 0.0
    %2250 = vmatpush1.msra.mxu0 0.0
    %2251 = vmatprep.subr.mxu0 0.0
    %2252 = vmatpush1.msra.mxu0 0.0
    %2253 = vmatprep.subr.mxu0 0.0
    %2254 = vmatpush1.msra.mxu0 0.0
    %2255 = vmatprep.subr.mxu0 0.0
    %2256 = vmatpush1.msra.mxu0 0.0
    %2257 = vmatprep.subr.mxu0 0.0
    %2258 = vmatpush1.msra.mxu0 0.0
    %2259 = vmatprep.subr.mxu0 0.0
    %2260 = vmatpush1.msra.mxu0 0.0
    %2261 = vmatprep.subr.mxu0 0.0
    %2262 = vmatpush1.msra.mxu0 0.0
    %2263 = vmatprep.subr.mxu0 0.0
    %2264 = vmatpush1.msra.mxu0 0.0
    %2265 = vmatprep.subr.mxu0 0.0
    %2266 = vmatpush1.msra.mxu0 0.0
    %2267 = vmatprep.mubr.f32.mxu0 0.0
    %2268 = vmatmul.mubr.f32.gmra.mrb[0].mxu0 %v2192
    %v2269 = vpop.f32.mrb[0].mxu0
    %v2270 = vadd.f32 0.0, %v2269
    %v2271 = vpop.f32.mrb[0].mxu0
    %2272 = vmatprep.mubr.f32.mxu0 0.0
    %2273 = vmatmul.mubr.f32.gmra.mrb[0].mxu0 %v2195
    %v2274 = vpop.f32.mrb[0].mxu0
    %v2275 = vadd.f32 0.0, %v2274
    %v2276 = vpop.f32.mrb[0].mxu0
    %2277 = vmatprep.mubr.f32.mxu0 0.0
    %2278 = vmatmul.mubr.f32.gmra.mrb[0].mxu0 %v2198
    %v2279 = vpop.f32.mrb[0].mxu0
    %v2280 = vadd.f32 0.0, %v2279
    %v2281 = vpop.f32.mrb[0].mxu0
    %2282 = vmatprep.mubr.f32.mxu0 0.0
    %2283 = vmatmul.mubr.f32.gmra.mrb[0].mxu0 %v2201
    %v2284 = vpop.f32.mrb[0].mxu0
    %v2285 = vadd.f32 0.0, %v2284
    %v2286 = vpop.f32.mrb[0].mxu0
    %2287 = vdwg.mxu0
    %s2288 = scalar_lea.vmem [#allocation5], 1408
    %v2289 = vld [vmem:[%s2288] sm:$0xff]
    %v2290 = vld [vmem:[%s2288 + $0x8] sm:$0xff]
    %v2291 = vld [vmem:[%s2288 + $0x10] sm:$0xff]
    %v2292 = vld [vmem:[%s2288 + $0x18] sm:$0xff]
    %v2293 = vld [vmem:[%s2288 + $0x20] sm:$0xff]
    %v2294 = vld [vmem:[%s2288 + $0x28] sm:$0xff]
    %v2295 = vld [vmem:[%s2288 + $0x30] sm:$0xff]
    %v2296 = vld [vmem:[%s2288 + $0x38] sm:$0xff]
    %v2297 = vld [vmem:[%s2288 + $0x40] sm:$0xff]
    %v2298 = vld [vmem:[%s2288 + $0x48] sm:$0xff]
    %v2299 = vld [vmem:[%s2288 + $0x50] sm:$0xff]
    %v2300 = vld [vmem:[%s2288 + $0x58] sm:$0xff]
    %v2301 = vld [vmem:[%s2288 + $0x60] sm:$0xff]
    %v2302 = vld [vmem:[%s2288 + $0x68] sm:$0xff]
    %v2303 = vld [vmem:[%s2288 + $0x70] sm:$0xff]
    %v2304 = vld [vmem:[%s2288 + $0x78] sm:$0xff]
    %v2305 = vld [vmem:[%s1149] sm:$0xff]
    %v2306 = vld [vmem:[%s1149 + $0x8] sm:$0xff]
    %v2307 = vld [vmem:[%s1149 + $0x10] sm:$0xff]
    %v2308 = vld [vmem:[%s1149 + $0x18] sm:$0xff]
    %v2310 = vsel %vm342, %v2305, 0
    %v2313 = vsel %vm342, %v2306, 0
    %v2316 = vsel %vm342, %v2307, 0
    %v2319 = vsel %vm342, %v2308, 0
    %2321 = vmatprep.subr.mxu0 0.0
    %2322 = vmatpush1.msra.mxu0 %v530
    %2323 = vmatprep.subr.mxu0 0.0
    %2324 = vmatpush1.msra.mxu0 %v531
    %2325 = vmatprep.subr.mxu0 0.0
    %2326 = vmatpush1.msra.mxu0 %v532
    %2327 = vmatprep.subr.mxu0 0.0
    %2328 = vmatpush1.msra.mxu0 %v533
    %2329 = vmatprep.subr.mxu0 0.0
    %2330 = vmatpush1.msra.mxu0 0.0
    %2331 = vmatprep.subr.mxu0 0.0
    %2332 = vmatpush1.msra.mxu0 0.0
    %2333 = vmatprep.subr.mxu0 0.0
    %2334 = vmatpush1.msra.mxu0 0.0
    %2335 = vmatprep.subr.mxu0 0.0
    %2336 = vmatpush1.msra.mxu0 0.0
    %2337 = vmatprep.subr.mxu0 0.0
    %2338 = vmatpush1.msra.mxu0 0.0
    %2339 = vmatprep.subr.mxu0 0.0
    %2340 = vmatpush1.msra.mxu0 0.0
    %2341 = vmatprep.subr.mxu0 0.0
    %2342 = vmatpush1.msra.mxu0 0.0
    %2343 = vmatprep.subr.mxu0 0.0
    %2344 = vmatpush1.msra.mxu0 0.0
    %2345 = vmatprep.subr.mxu0 0.0
    %2346 = vmatpush1.msra.mxu0 0.0
    %2347 = vmatprep.subr.mxu0 0.0
    %2348 = vmatpush1.msra.mxu0 0.0
    %2349 = vmatprep.subr.mxu0 0.0
    %2350 = vmatpush1.msra.mxu0 0.0
    %2351 = vmatprep.subr.mxu0 0.0
    %2352 = vmatpush1.msra.mxu0 0.0
    %2353 = vmatprep.subr.mxu0 0.0
    %2354 = vmatpush1.msra.mxu0 0.0
    %2355 = vmatprep.subr.mxu0 0.0
    %2356 = vmatpush1.msra.mxu0 0.0
    %2357 = vmatprep.subr.mxu0 0.0
    %2358 = vmatpush1.msra.mxu0 0.0
    %2359 = vmatprep.subr.mxu0 0.0
    %2360 = vmatpush1.msra.mxu0 0.0
    %2361 = vmatprep.subr.mxu0 0.0
    %2362 = vmatpush1.msra.mxu0 0.0
    %2363 = vmatprep.subr.mxu0 0.0
    %2364 = vmatpush1.msra.mxu0 0.0
    %2365 = vmatprep.subr.mxu0 0.0
    %2366 = vmatpush1.msra.mxu0 0.0
    %2367 = vmatprep.subr.mxu0 0.0
    %2368 = vmatpush1.msra.mxu0 0.0
    %2369 = vmatprep.subr.mxu0 0.0
    %2370 = vmatpush1.msra.mxu0 0.0
    %2371 = vmatprep.subr.mxu0 0.0
    %2372 = vmatpush1.msra.mxu0 0.0
    %2373 = vmatprep.subr.mxu0 0.0
    %2374 = vmatpush1.msra.mxu0 0.0
    %2375 = vmatprep.subr.mxu0 0.0
    %2376 = vmatpush1.msra.mxu0 0.0
    %2377 = vmatprep.subr.mxu0 0.0
    %2378 = vmatpush1.msra.mxu0 0.0
    %2379 = vmatprep.subr.mxu0 0.0
    %2380 = vmatpush1.msra.mxu0 0.0
    %2381 = vmatprep.subr.mxu0 0.0
    %2382 = vmatpush1.msra.mxu0 0.0
    %2383 = vmatprep.subr.mxu0 0.0
    %2384 = vmatpush1.msra.mxu0 0.0
    %2385 = vmatprep.mubr.f32.mxu0 0.0
    %2386 = vmatmul.mubr.f32.gmra.mrb[0].mxu0 %v2310
    %v2387 = vpop.f32.mrb[0].mxu0
    %v2388 = vadd.f32 0.0, %v2387
    %v2389 = vpop.f32.mrb[0].mxu0
    %2390 = vmatprep.mubr.f32.mxu0 0.0
    %2391 = vmatmul.mubr.f32.gmra.mrb[0].mxu0 %v2313
    %v2392 = vpop.f32.mrb[0].mxu0
    %v2393 = vadd.f32 0.0, %v2392
    %v2394 = vpop.f32.mrb[0].mxu0
    %2395 = vmatprep.mubr.f32.mxu0 0.0
    %2396 = vmatmul.mubr.f32.gmra.mrb[0].mxu0 %v2316
    %v2397 = vpop.f32.mrb[0].mxu0
    %v2398 = vadd.f32 0.0, %v2397
    %v2399 = vpop.f32.mrb[0].mxu0
    %2400 = vmatprep.mubr.f32.mxu0 0.0
    %2401 = vmatmul.mubr.f32.gmra.mrb[0].mxu0 %v2319
    %v2402 = vpop.f32.mrb[0].mxu0
    %v2403 = vadd.f32 0.0, %v2402
    %v2404 = vpop.f32.mrb[0].mxu0
    %2405 = vdwg.mxu0
    %s2406 = scalar_lea.vmem [#allocation5], 1152
    %v2407 = vld [vmem:[%s2406] sm:$0xff]
    %v2408 = vld [vmem:[%s2406 + $0x8] sm:$0xff]
    %v2409 = vld [vmem:[%s2406 + $0x10] sm:$0xff]
    %v2410 = vld [vmem:[%s2406 + $0x18] sm:$0xff]
    %v2411 = vld [vmem:[%s2406 + $0x20] sm:$0xff]
    %v2412 = vld [vmem:[%s2406 + $0x28] sm:$0xff]
    %v2413 = vld [vmem:[%s2406 + $0x30] sm:$0xff]
    %v2414 = vld [vmem:[%s2406 + $0x38] sm:$0xff]
    %v2415 = vld [vmem:[%s2406 + $0x40] sm:$0xff]
    %v2416 = vld [vmem:[%s2406 + $0x48] sm:$0xff]
    %v2417 = vld [vmem:[%s2406 + $0x50] sm:$0xff]
    %v2418 = vld [vmem:[%s2406 + $0x58] sm:$0xff]
    %v2419 = vld [vmem:[%s2406 + $0x60] sm:$0xff]
    %v2420 = vld [vmem:[%s2406 + $0x68] sm:$0xff]
    %v2421 = vld [vmem:[%s2406 + $0x70] sm:$0xff]
    %v2422 = vld [vmem:[%s2406 + $0x78] sm:$0xff]
    %2423 = vmatprep.subr.mxu0 0.0
    %2424 = vmatpush1.msra.mxu0 %v2407
    %2425 = vmatprep.subr.mxu0 0.0
    %2426 = vmatpush1.msra.mxu0 %v2408
    %2427 = vmatprep.subr.mxu0 0.0
    %2428 = vmatpush1.msra.mxu0 %v2409
    %2429 = vmatprep.subr.mxu0 0.0
    %2430 = vmatpush1.msra.mxu0 %v2410
    %2431 = vmatprep.subr.mxu0 0.0
    %2432 = vmatpush1.msra.mxu0 %v2411
    %2433 = vmatprep.subr.mxu0 0.0
    %2434 = vmatpush1.msra.mxu0 %v2412
    %2435 = vmatprep.subr.mxu0 0.0
    %2436 = vmatpush1.msra.mxu0 %v2413
    %2437 = vmatprep.subr.mxu0 0.0
    %2438 = vmatpush1.msra.mxu0 %v2414
    %2439 = vmatprep.subr.mxu0 0.0
    %2440 = vmatpush1.msra.mxu0 %v2415
    %2441 = vmatprep.subr.mxu0 0.0
    %2442 = vmatpush1.msra.mxu0 %v2416
    %2443 = vmatprep.subr.mxu0 0.0
    %2444 = vmatpush1.msra.mxu0 %v2417
    %2445 = vmatprep.subr.mxu0 0.0
    %2446 = vmatpush1.msra.mxu0 %v2418
    %2447 = vmatprep.subr.mxu0 0.0
    %2448 = vmatpush1.msra.mxu0 %v2419
    %2449 = vmatprep.subr.mxu0 0.0
    %2450 = vmatpush1.msra.mxu0 %v2420
    %2451 = vmatprep.subr.mxu0 0.0
    %2452 = vmatpush1.msra.mxu0 %v2421
    %2453 = vmatprep.subr.mxu0 0.0
    %2454 = vmatpush1.msra.mxu0 %v2422
    %2455 = vmatprep.subr.mxu0 0.0
    %2456 = vmatpush1.msra.mxu0 0.0
    %2457 = vmatprep.subr.mxu0 0.0
    %2458 = vmatpush1.msra.mxu0 0.0
    %2459 = vmatprep.subr.mxu0 0.0
    %2460 = vmatpush1.msra.mxu0 0.0
    %2461 = vmatprep.subr.mxu0 0.0
    %2462 = vmatpush1.msra.mxu0 0.0
    %2463 = vmatprep.subr.mxu0 0.0
    %2464 = vmatpush1.msra.mxu0 0.0
    %2465 = vmatprep.subr.mxu0 0.0
    %2466 = vmatpush1.msra.mxu0 0.0
    %2467 = vmatprep.subr.mxu0 0.0
    %2468 = vmatpush1.msra.mxu0 0.0
    %2469 = vmatprep.subr.mxu0 0.0
    %2470 = vmatpush1.msra.mxu0 0.0
    %2471 = vmatprep.subr.mxu0 0.0
    %2472 = vmatpush1.msra.mxu0 0.0
    %2473 = vmatprep.subr.mxu0 0.0
    %2474 = vmatpush1.msra.mxu0 0.0
    %2475 = vmatprep.subr.mxu0 0.0
    %2476 = vmatpush1.msra.mxu0 0.0
    %2477 = vmatprep.subr.mxu0 0.0
    %2478 = vmatpush1.msra.mxu0 0.0
    %2479 = vmatprep.subr.mxu0 0.0
    %2480 = vmatpush1.msra.mxu0 0.0
    %2481 = vmatprep.subr.mxu0 0.0
    %2482 = vmatpush1.msra.mxu0 0.0
    %2483 = vmatprep.subr.mxu0 0.0
    %2484 = vmatpush1.msra.mxu0 0.0
    %2485 = vmatprep.subr.mxu0 0.0
    %2486 = vmatpush1.msra.mxu0 0.0
    %2487 = vmatprep.mubr.f32.mxu0 0.0
    %2488 = vmatmul.mubr.f32.gmra.mrb[0].mxu0 %v2388
    %v2489 = vpop.f32.mrb[0].mxu0
    %v2490 = vadd.f32 0.0, %v2489
    %v2491 = vpop.f32.mrb[0].mxu0
    %2492 = vmatprep.mubr.f32.mxu0 0.0
    %2493 = vmatmul.mubr.f32.gmra.mrb[0].mxu0 %v2393
    %v2494 = vpop.f32.mrb[0].mxu0
    %v2495 = vadd.f32 0.0, %v2494
    %v2496 = vpop.f32.mrb[0].mxu0
    %2497 = vmatprep.mubr.f32.mxu0 0.0
    %2498 = vmatmul.mubr.f32.gmra.mrb[0].mxu0 %v2398
    %v2499 = vpop.f32.mrb[0].mxu0
    %v2500 = vadd.f32 0.0, %v2499
    %v2501 = vpop.f32.mrb[0].mxu0
    %2502 = vmatprep.mubr.f32.mxu0 0.0
    %2503 = vmatmul.mubr.f32.gmra.mrb[0].mxu0 %v2403
    %v2504 = vpop.f32.mrb[0].mxu0
    %v2505 = vadd.f32 0.0, %v2504
    %v2506 = vpop.f32.mrb[0].mxu0
    %2507 = vdwg.mxu0
    %2508 = vmatprep.subr.mxu0 0.0
    %2509 = vmatpush1.msra.mxu0 %v2289
    %2510 = vmatprep.subr.mxu0 0.0
    %2511 = vmatpush1.msra.mxu0 %v2290
    %2512 = vmatprep.subr.mxu0 0.0
    %2513 = vmatpush1.msra.mxu0 %v2291
    %2514 = vmatprep.subr.mxu0 0.0
    %2515 = vmatpush1.msra.mxu0 %v2292
    %2516 = vmatprep.subr.mxu0 0.0
    %2517 = vmatpush1.msra.mxu0 %v2293
    %2518 = vmatprep.subr.mxu0 0.0
    %2519 = vmatpush1.msra.mxu0 %v2294
    %2520 = vmatprep.subr.mxu0 0.0
    %2521 = vmatpush1.msra.mxu0 %v2295
    %2522 = vmatprep.subr.mxu0 0.0
    %2523 = vmatpush1.msra.mxu0 %v2296
    %2524 = vmatprep.subr.mxu0 0.0
    %2525 = vmatpush1.msra.mxu0 %v2297
    %2526 = vmatprep.subr.mxu0 0.0
    %2527 = vmatpush1.msra.mxu0 %v2298
    %2528 = vmatprep.subr.mxu0 0.0
    %2529 = vmatpush1.msra.mxu0 %v2299
    %2530 = vmatprep.subr.mxu0 0.0
    %2531 = vmatpush1.msra.mxu0 %v2300
    %2532 = vmatprep.subr.mxu0 0.0
    %2533 = vmatpush1.msra.mxu0 %v2301
    %2534 = vmatprep.subr.mxu0 0.0
    %2535 = vmatpush1.msra.mxu0 %v2302
    %2536 = vmatprep.subr.mxu0 0.0
    %2537 = vmatpush1.msra.mxu0 %v2303
    %2538 = vmatprep.subr.mxu0 0.0
    %2539 = vmatpush1.msra.mxu0 %v2304
    %2540 = vmatprep.subr.mxu0 0.0
    %2541 = vmatpush1.msra.mxu0 0.0
    %2542 = vmatprep.subr.mxu0 0.0
    %2543 = vmatpush1.msra.mxu0 0.0
    %2544 = vmatprep.subr.mxu0 0.0
    %2545 = vmatpush1.msra.mxu0 0.0
    %2546 = vmatprep.subr.mxu0 0.0
    %2547 = vmatpush1.msra.mxu0 0.0
    %2548 = vmatprep.subr.mxu0 0.0
    %2549 = vmatpush1.msra.mxu0 0.0
    %2550 = vmatprep.subr.mxu0 0.0
    %2551 = vmatpush1.msra.mxu0 0.0
    %2552 = vmatprep.subr.mxu0 0.0
    %2553 = vmatpush1.msra.mxu0 0.0
    %2554 = vmatprep.subr.mxu0 0.0
    %2555 = vmatpush1.msra.mxu0 0.0
    %2556 = vmatprep.subr.mxu0 0.0
    %2557 = vmatpush1.msra.mxu0 0.0
    %2558 = vmatprep.subr.mxu0 0.0
    %2559 = vmatpush1.msra.mxu0 0.0
    %2560 = vmatprep.subr.mxu0 0.0
    %2561 = vmatpush1.msra.mxu0 0.0
    %2562 = vmatprep.subr.mxu0 0.0
    %2563 = vmatpush1.msra.mxu0 0.0
    %2564 = vmatprep.subr.mxu0 0.0
    %2565 = vmatpush1.msra.mxu0 0.0
    %2566 = vmatprep.subr.mxu0 0.0
    %2567 = vmatpush1.msra.mxu0 0.0
    %2568 = vmatprep.subr.mxu0 0.0
    %2569 = vmatpush1.msra.mxu0 0.0
    %2570 = vmatprep.subr.mxu0 0.0
    %2571 = vmatpush1.msra.mxu0 0.0
    %2572 = vmatprep.mubr.f32.mxu0 0.0
    %2573 = vmatmul.mubr.f32.gmra.mrb[0].mxu0 %v2270
    %v2574 = vpop.f32.mrb[0].mxu0
    %v2575 = vadd.f32 %v2490, %v2574
    %v2576 = vpop.f32.mrb[0].mxu0
    %2577 = vmatprep.mubr.f32.mxu0 0.0
    %2578 = vmatmul.mubr.f32.gmra.mrb[0].mxu0 %v2275
    %v2579 = vpop.f32.mrb[0].mxu0
    %v2580 = vadd.f32 %v2495, %v2579
    %v2581 = vpop.f32.mrb[0].mxu0
    %2582 = vmatprep.mubr.f32.mxu0 0.0
    %2583 = vmatmul.mubr.f32.gmra.mrb[0].mxu0 %v2280
    %v2584 = vpop.f32.mrb[0].mxu0
    %v2585 = vadd.f32 %v2500, %v2584
    %v2586 = vpop.f32.mrb[0].mxu0
    %2587 = vmatprep.mubr.f32.mxu0 0.0
    %2588 = vmatmul.mubr.f32.gmra.mrb[0].mxu0 %v2285
    %v2589 = vpop.f32.mrb[0].mxu0
    %v2590 = vadd.f32 %v2505, %v2589
    %v2591 = vpop.f32.mrb[0].mxu0
    %2592 = vdwg.mxu0
    %s2593 = scalar_lea.vmem [#allocation8], 192
    %v2594 = vld [vmem:[%s2593] sm:$0xff]
    %v2595 = vld [vmem:[%s2593 + $0x8] sm:$0xff]
    %v2596 = vld [vmem:[%s2593 + $0x10] sm:$0xff]
    %v2597 = vld [vmem:[%s2593 + $0x18] sm:$0xff]
    %v2599 = vsel %vm342, %v2594, 0
    %v2602 = vsel %vm342, %v2595, 0
    %v2605 = vsel %vm342, %v2596, 0
    %v2608 = vsel %vm342, %v2597, 0
    %2610 = vmatprep.subr.mxu0 0.0
    %2611 = vmatpush1.msra.mxu0 %v530
    %2612 = vmatprep.subr.mxu0 0.0
    %2613 = vmatpush1.msra.mxu0 %v531
    %2614 = vmatprep.subr.mxu0 0.0
    %2615 = vmatpush1.msra.mxu0 %v532
    %2616 = vmatprep.subr.mxu0 0.0
    %2617 = vmatpush1.msra.mxu0 %v533
    %2618 = vmatprep.subr.mxu0 0.0
    %2619 = vmatpush1.msra.mxu0 0.0
    %2620 = vmatprep.subr.mxu0 0.0
    %2621 = vmatpush1.msra.mxu0 0.0
    %2622 = vmatprep.subr.mxu0 0.0
    %2623 = vmatpush1.msra.mxu0 0.0
    %2624 = vmatprep.subr.mxu0 0.0
    %2625 = vmatpush1.msra.mxu0 0.0
    %2626 = vmatprep.subr.mxu0 0.0
    %2627 = vmatpush1.msra.mxu0 0.0
    %2628 = vmatprep.subr.mxu0 0.0
    %2629 = vmatpush1.msra.mxu0 0.0
    %2630 = vmatprep.subr.mxu0 0.0
    %2631 = vmatpush1.msra.mxu0 0.0
    %2632 = vmatprep.subr.mxu0 0.0
    %2633 = vmatpush1.msra.mxu0 0.0
    %2634 = vmatprep.subr.mxu0 0.0
    %2635 = vmatpush1.msra.mxu0 0.0
    %2636 = vmatprep.subr.mxu0 0.0
    %2637 = vmatpush1.msra.mxu0 0.0
    %2638 = vmatprep.subr.mxu0 0.0
    %2639 = vmatpush1.msra.mxu0 0.0
    %2640 = vmatprep.subr.mxu0 0.0
    %2641 = vmatpush1.msra.mxu0 0.0
    %2642 = vmatprep.subr.mxu0 0.0
    %2643 = vmatpush1.msra.mxu0 0.0
    %2644 = vmatprep.subr.mxu0 0.0
    %2645 = vmatpush1.msra.mxu0 0.0
    %2646 = vmatprep.subr.mxu0 0.0
    %2647 = vmatpush1.msra.mxu0 0.0
    %2648 = vmatprep.subr.mxu0 0.0
    %2649 = vmatpush1.msra.mxu0 0.0
    %2650 = vmatprep.subr.mxu0 0.0
    %2651 = vmatpush1.msra.mxu0 0.0
    %2652 = vmatprep.subr.mxu0 0.0
    %2653 = vmatpush1.msra.mxu0 0.0
    %2654 = vmatprep.subr.mxu0 0.0
    %2655 = vmatpush1.msra.mxu0 0.0
    %2656 = vmatprep.subr.mxu0 0.0
    %2657 = vmatpush1.msra.mxu0 0.0
    %2658 = vmatprep.subr.mxu0 0.0
    %2659 = vmatpush1.msra.mxu0 0.0
    %2660 = vmatprep.subr.mxu0 0.0
    %2661 = vmatpush1.msra.mxu0 0.0
    %2662 = vmatprep.subr.mxu0 0.0
    %2663 = vmatpush1.msra.mxu0 0.0
    %2664 = vmatprep.subr.mxu0 0.0
    %2665 = vmatpush1.msra.mxu0 0.0
    %2666 = vmatprep.subr.mxu0 0.0
    %2667 = vmatpush1.msra.mxu0 0.0
    %2668 = vmatprep.subr.mxu0 0.0
    %2669 = vmatpush1.msra.mxu0 0.0
    %2670 = vmatprep.subr.mxu0 0.0
    %2671 = vmatpush1.msra.mxu0 0.0
    %2672 = vmatprep.subr.mxu0 0.0
    %2673 = vmatpush1.msra.mxu0 0.0
    %2674 = vmatprep.mubr.f32.mxu0 0.0
    %2675 = vmatmul.mubr.f32.gmra.mrb[0].mxu0 %v2599
    %v2676 = vpop.f32.mrb[0].mxu0
    %v2677 = vadd.f32 0.0, %v2676
    %v2678 = vpop.f32.mrb[0].mxu0
    %2679 = vmatprep.mubr.f32.mxu0 0.0
    %2680 = vmatmul.mubr.f32.gmra.mrb[0].mxu0 %v2602
    %v2681 = vpop.f32.mrb[0].mxu0
    %v2682 = vadd.f32 0.0, %v2681
    %v2683 = vpop.f32.mrb[0].mxu0
    %2684 = vmatprep.mubr.f32.mxu0 0.0
    %2685 = vmatmul.mubr.f32.gmra.mrb[0].mxu0 %v2605
    %v2686 = vpop.f32.mrb[0].mxu0
    %v2687 = vadd.f32 0.0, %v2686
    %v2688 = vpop.f32.mrb[0].mxu0
    %2689 = vmatprep.mubr.f32.mxu0 0.0
    %2690 = vmatmul.mubr.f32.gmra.mrb[0].mxu0 %v2608
    %v2691 = vpop.f32.mrb[0].mxu0
    %v2692 = vadd.f32 0.0, %v2691
    %v2693 = vpop.f32.mrb[0].mxu0
    %2694 = vdwg.mxu0
    %s2695 = scalar_lea.vmem [#allocation5], 384
    %v2696 = vld [vmem:[%s2695] sm:$0xff]
    %v2697 = vld [vmem:[%s2695 + $0x8] sm:$0xff]
    %v2698 = vld [vmem:[%s2695 + $0x10] sm:$0xff]
    %v2699 = vld [vmem:[%s2695 + $0x18] sm:$0xff]
    %v2700 = vld [vmem:[%s2695 + $0x20] sm:$0xff]
    %v2701 = vld [vmem:[%s2695 + $0x28] sm:$0xff]
    %v2702 = vld [vmem:[%s2695 + $0x30] sm:$0xff]
    %v2703 = vld [vmem:[%s2695 + $0x38] sm:$0xff]
    %v2704 = vld [vmem:[%s2695 + $0x40] sm:$0xff]
    %v2705 = vld [vmem:[%s2695 + $0x48] sm:$0xff]
    %v2706 = vld [vmem:[%s2695 + $0x50] sm:$0xff]
    %v2707 = vld [vmem:[%s2695 + $0x58] sm:$0xff]
    %v2708 = vld [vmem:[%s2695 + $0x60] sm:$0xff]
    %v2709 = vld [vmem:[%s2695 + $0x68] sm:$0xff]
    %v2710 = vld [vmem:[%s2695 + $0x70] sm:$0xff]
    %v2711 = vld [vmem:[%s2695 + $0x78] sm:$0xff]
    %2712 = vmatprep.subr.mxu0 0.0
    %2713 = vmatpush1.msra.mxu0 %v2696
    %2714 = vmatprep.subr.mxu0 0.0
    %2715 = vmatpush1.msra.mxu0 %v2697
    %2716 = vmatprep.subr.mxu0 0.0
    %2717 = vmatpush1.msra.mxu0 %v2698
    %2718 = vmatprep.subr.mxu0 0.0
    %2719 = vmatpush1.msra.mxu0 %v2699
    %2720 = vmatprep.subr.mxu0 0.0
    %2721 = vmatpush1.msra.mxu0 %v2700
    %2722 = vmatprep.subr.mxu0 0.0
    %2723 = vmatpush1.msra.mxu0 %v2701
    %2724 = vmatprep.subr.mxu0 0.0
    %2725 = vmatpush1.msra.mxu0 %v2702
    %2726 = vmatprep.subr.mxu0 0.0
    %2727 = vmatpush1.msra.mxu0 %v2703
    %2728 = vmatprep.subr.mxu0 0.0
    %2729 = vmatpush1.msra.mxu0 %v2704
    %2730 = vmatprep.subr.mxu0 0.0
    %2731 = vmatpush1.msra.mxu0 %v2705
    %2732 = vmatprep.subr.mxu0 0.0
    %2733 = vmatpush1.msra.mxu0 %v2706
    %2734 = vmatprep.subr.mxu0 0.0
    %2735 = vmatpush1.msra.mxu0 %v2707
    %2736 = vmatprep.subr.mxu0 0.0
    %2737 = vmatpush1.msra.mxu0 %v2708
    %2738 = vmatprep.subr.mxu0 0.0
    %2739 = vmatpush1.msra.mxu0 %v2709
    %2740 = vmatprep.subr.mxu0 0.0
    %2741 = vmatpush1.msra.mxu0 %v2710
    %2742 = vmatprep.subr.mxu0 0.0
    %2743 = vmatpush1.msra.mxu0 %v2711
    %2744 = vmatprep.subr.mxu0 0.0
    %2745 = vmatpush1.msra.mxu0 0.0
    %2746 = vmatprep.subr.mxu0 0.0
    %2747 = vmatpush1.msra.mxu0 0.0
    %2748 = vmatprep.subr.mxu0 0.0
    %2749 = vmatpush1.msra.mxu0 0.0
    %2750 = vmatprep.subr.mxu0 0.0
    %2751 = vmatpush1.msra.mxu0 0.0
    %2752 = vmatprep.subr.mxu0 0.0
    %2753 = vmatpush1.msra.mxu0 0.0
    %2754 = vmatprep.subr.mxu0 0.0
    %2755 = vmatpush1.msra.mxu0 0.0
    %2756 = vmatprep.subr.mxu0 0.0
    %2757 = vmatpush1.msra.mxu0 0.0
    %2758 = vmatprep.subr.mxu0 0.0
    %2759 = vmatpush1.msra.mxu0 0.0
    %2760 = vmatprep.subr.mxu0 0.0
    %2761 = vmatpush1.msra.mxu0 0.0
    %2762 = vmatprep.subr.mxu0 0.0
    %2763 = vmatpush1.msra.mxu0 0.0
    %2764 = vmatprep.subr.mxu0 0.0
    %2765 = vmatpush1.msra.mxu0 0.0
    %2766 = vmatprep.subr.mxu0 0.0
    %2767 = vmatpush1.msra.mxu0 0.0
    %2768 = vmatprep.subr.mxu0 0.0
    %2769 = vmatpush1.msra.mxu0 0.0
    %2770 = vmatprep.subr.mxu0 0.0
    %2771 = vmatpush1.msra.mxu0 0.0
    %2772 = vmatprep.subr.mxu0 0.0
    %2773 = vmatpush1.msra.mxu0 0.0
    %2774 = vmatprep.subr.mxu0 0.0
    %2775 = vmatpush1.msra.mxu0 0.0
    %2776 = vmatprep.mubr.f32.mxu0 0.0
    %2777 = vmatmul.mubr.f32.gmra.mrb[0].mxu0 %v2677
    %v2778 = vpop.f32.mrb[0].mxu0
    %v2779 = vadd.f32 0.0, %v2778
    %v2780 = vpop.f32.mrb[0].mxu0
    %2781 = vmatprep.mubr.f32.mxu0 0.0
    %2782 = vmatmul.mubr.f32.gmra.mrb[0].mxu0 %v2682
    %v2783 = vpop.f32.mrb[0].mxu0
    %v2784 = vadd.f32 0.0, %v2783
    %v2785 = vpop.f32.mrb[0].mxu0
    %2786 = vmatprep.mubr.f32.mxu0 0.0
    %2787 = vmatmul.mubr.f32.gmra.mrb[0].mxu0 %v2687
    %v2788 = vpop.f32.mrb[0].mxu0
    %v2789 = vadd.f32 0.0, %v2788
    %v2790 = vpop.f32.mrb[0].mxu0
    %2791 = vmatprep.mubr.f32.mxu0 0.0
    %2792 = vmatmul.mubr.f32.gmra.mrb[0].mxu0 %v2692
    %v2793 = vpop.f32.mrb[0].mxu0
    %v2794 = vadd.f32 0.0, %v2793
    %v2795 = vpop.f32.mrb[0].mxu0
    %2796 = vdwg.mxu0
    %v2797 = vadd.f32 %v2575, %v2779
    %v2798 = vadd.f32 %v2580, %v2784
    %v2799 = vadd.f32 %v2585, %v2789
    %v2800 = vadd.f32 %v2590, %v2794
    %s2801 = scalar_lea.vmem [#allocation8], 224
    %v2802 = vld [vmem:[%s2801] sm:$0xff]
    %v2803 = vld [vmem:[%s2801 + $0x8] sm:$0xff]
    %v2804 = vld [vmem:[%s2801 + $0x10] sm:$0xff]
    %v2805 = vld [vmem:[%s2801 + $0x18] sm:$0xff]
    %v2807 = vsel %vm342, %v2802, 0
    %v2810 = vsel %vm342, %v2803, 0
    %v2813 = vsel %vm342, %v2804, 0
    %v2816 = vsel %vm342, %v2805, 0
    %2818 = vmatprep.subr.mxu0 0.0
    %2819 = vmatpush1.msra.mxu0 %v530
    %2820 = vmatprep.subr.mxu0 0.0
    %2821 = vmatpush1.msra.mxu0 %v531
    %2822 = vmatprep.subr.mxu0 0.0
    %2823 = vmatpush1.msra.mxu0 %v532
    %2824 = vmatprep.subr.mxu0 0.0
    %2825 = vmatpush1.msra.mxu0 %v533
    %2826 = vmatprep.subr.mxu0 0.0
    %2827 = vmatpush1.msra.mxu0 0.0
    %2828 = vmatprep.subr.mxu0 0.0
    %2829 = vmatpush1.msra.mxu0 0.0
    %2830 = vmatprep.subr.mxu0 0.0
    %2831 = vmatpush1.msra.mxu0 0.0
    %2832 = vmatprep.subr.mxu0 0.0
    %2833 = vmatpush1.msra.mxu0 0.0
    %2834 = vmatprep.subr.mxu0 0.0
    %2835 = vmatpush1.msra.mxu0 0.0
    %2836 = vmatprep.subr.mxu0 0.0
    %2837 = vmatpush1.msra.mxu0 0.0
    %2838 = vmatprep.subr.mxu0 0.0
    %2839 = vmatpush1.msra.mxu0 0.0
    %2840 = vmatprep.subr.mxu0 0.0
    %2841 = vmatpush1.msra.mxu0 0.0
    %2842 = vmatprep.subr.mxu0 0.0
    %2843 = vmatpush1.msra.mxu0 0.0
    %2844 = vmatprep.subr.mxu0 0.0
    %2845 = vmatpush1.msra.mxu0 0.0
    %2846 = vmatprep.subr.mxu0 0.0
    %2847 = vmatpush1.msra.mxu0 0.0
    %2848 = vmatprep.subr.mxu0 0.0
    %2849 = vmatpush1.msra.mxu0 0.0
    %2850 = vmatprep.subr.mxu0 0.0
    %2851 = vmatpush1.msra.mxu0 0.0
    %2852 = vmatprep.subr.mxu0 0.0
    %2853 = vmatpush1.msra.mxu0 0.0
    %2854 = vmatprep.subr.mxu0 0.0
    %2855 = vmatpush1.msra.mxu0 0.0
    %2856 = vmatprep.subr.mxu0 0.0
    %2857 = vmatpush1.msra.mxu0 0.0
    %2858 = vmatprep.subr.mxu0 0.0
    %2859 = vmatpush1.msra.mxu0 0.0
    %2860 = vmatprep.subr.mxu0 0.0
    %2861 = vmatpush1.msra.mxu0 0.0
    %2862 = vmatprep.subr.mxu0 0.0
    %2863 = vmatpush1.msra.mxu0 0.0
    %2864 = vmatprep.subr.mxu0 0.0
    %2865 = vmatpush1.msra.mxu0 0.0
    %2866 = vmatprep.subr.mxu0 0.0
    %2867 = vmatpush1.msra.mxu0 0.0
    %2868 = vmatprep.subr.mxu0 0.0
    %2869 = vmatpush1.msra.mxu0 0.0
    %2870 = vmatprep.subr.mxu0 0.0
    %2871 = vmatpush1.msra.mxu0 0.0
    %2872 = vmatprep.subr.mxu0 0.0
    %2873 = vmatpush1.msra.mxu0 0.0
    %2874 = vmatprep.subr.mxu0 0.0
    %2875 = vmatpush1.msra.mxu0 0.0
    %2876 = vmatprep.subr.mxu0 0.0
    %2877 = vmatpush1.msra.mxu0 0.0
    %2878 = vmatprep.subr.mxu0 0.0
    %2879 = vmatpush1.msra.mxu0 0.0
    %2880 = vmatprep.subr.mxu0 0.0
    %2881 = vmatpush1.msra.mxu0 0.0
    %2882 = vmatprep.mubr.f32.mxu0 0.0
    %2883 = vmatmul.mubr.f32.gmra.mrb[0].mxu0 %v2807
    %v2884 = vpop.f32.mrb[0].mxu0
    %v2885 = vadd.f32 0.0, %v2884
    %v2886 = vpop.f32.mrb[0].mxu0
    %2887 = vmatprep.mubr.f32.mxu0 0.0
    %2888 = vmatmul.mubr.f32.gmra.mrb[0].mxu0 %v2810
    %v2889 = vpop.f32.mrb[0].mxu0
    %v2890 = vadd.f32 0.0, %v2889
    %v2891 = vpop.f32.mrb[0].mxu0
    %2892 = vmatprep.mubr.f32.mxu0 0.0
    %2893 = vmatmul.mubr.f32.gmra.mrb[0].mxu0 %v2813
    %v2894 = vpop.f32.mrb[0].mxu0
    %v2895 = vadd.f32 0.0, %v2894
    %v2896 = vpop.f32.mrb[0].mxu0
    %2897 = vmatprep.mubr.f32.mxu0 0.0
    %2898 = vmatmul.mubr.f32.gmra.mrb[0].mxu0 %v2816
    %v2899 = vpop.f32.mrb[0].mxu0
    %v2900 = vadd.f32 0.0, %v2899
    %v2901 = vpop.f32.mrb[0].mxu0
    %2902 = vdwg.mxu0
    %s2903 = scalar_lea.vmem [#allocation5], 128
    %v2904 = vld [vmem:[%s2903] sm:$0xff]
    %v2905 = vld [vmem:[%s2903 + $0x8] sm:$0xff]
    %v2906 = vld [vmem:[%s2903 + $0x10] sm:$0xff]
    %v2907 = vld [vmem:[%s2903 + $0x18] sm:$0xff]
    %v2908 = vld [vmem:[%s2903 + $0x20] sm:$0xff]
    %v2909 = vld [vmem:[%s2903 + $0x28] sm:$0xff]
    %v2910 = vld [vmem:[%s2903 + $0x30] sm:$0xff]
    %v2911 = vld [vmem:[%s2903 + $0x38] sm:$0xff]
    %v2912 = vld [vmem:[%s2903 + $0x40] sm:$0xff]
    %v2913 = vld [vmem:[%s2903 + $0x48] sm:$0xff]
    %v2914 = vld [vmem:[%s2903 + $0x50] sm:$0xff]
    %v2915 = vld [vmem:[%s2903 + $0x58] sm:$0xff]
    %v2916 = vld [vmem:[%s2903 + $0x60] sm:$0xff]
    %v2917 = vld [vmem:[%s2903 + $0x68] sm:$0xff]
    %v2918 = vld [vmem:[%s2903 + $0x70] sm:$0xff]
    %v2919 = vld [vmem:[%s2903 + $0x78] sm:$0xff]
    %2920 = vmatprep.subr.mxu0 0.0
    %2921 = vmatpush1.msra.mxu0 %v2904
    %2922 = vmatprep.subr.mxu0 0.0
    %2923 = vmatpush1.msra.mxu0 %v2905
    %2924 = vmatprep.subr.mxu0 0.0
    %2925 = vmatpush1.msra.mxu0 %v2906
    %2926 = vmatprep.subr.mxu0 0.0
    %2927 = vmatpush1.msra.mxu0 %v2907
    %2928 = vmatprep.subr.mxu0 0.0
    %2929 = vmatpush1.msra.mxu0 %v2908
    %2930 = vmatprep.subr.mxu0 0.0
    %2931 = vmatpush1.msra.mxu0 %v2909
    %2932 = vmatprep.subr.mxu0 0.0
    %2933 = vmatpush1.msra.mxu0 %v2910
    %2934 = vmatprep.subr.mxu0 0.0
    %2935 = vmatpush1.msra.mxu0 %v2911
    %2936 = vmatprep.subr.mxu0 0.0
    %2937 = vmatpush1.msra.mxu0 %v2912
    %2938 = vmatprep.subr.mxu0 0.0
    %2939 = vmatpush1.msra.mxu0 %v2913
    %2940 = vmatprep.subr.mxu0 0.0
    %2941 = vmatpush1.msra.mxu0 %v2914
    %2942 = vmatprep.subr.mxu0 0.0
    %2943 = vmatpush1.msra.mxu0 %v2915
    %2944 = vmatprep.subr.mxu0 0.0
    %2945 = vmatpush1.msra.mxu0 %v2916
    %2946 = vmatprep.subr.mxu0 0.0
    %2947 = vmatpush1.msra.mxu0 %v2917
    %2948 = vmatprep.subr.mxu0 0.0
    %2949 = vmatpush1.msra.mxu0 %v2918
    %2950 = vmatprep.subr.mxu0 0.0
    %2951 = vmatpush1.msra.mxu0 %v2919
    %2952 = vmatprep.subr.mxu0 0.0
    %2953 = vmatpush1.msra.mxu0 0.0
    %2954 = vmatprep.subr.mxu0 0.0
    %2955 = vmatpush1.msra.mxu0 0.0
    %2956 = vmatprep.subr.mxu0 0.0
    %2957 = vmatpush1.msra.mxu0 0.0
    %2958 = vmatprep.subr.mxu0 0.0
    %2959 = vmatpush1.msra.mxu0 0.0
    %2960 = vmatprep.subr.mxu0 0.0
    %2961 = vmatpush1.msra.mxu0 0.0
    %2962 = vmatprep.subr.mxu0 0.0
    %2963 = vmatpush1.msra.mxu0 0.0
    %2964 = vmatprep.subr.mxu0 0.0
    %2965 = vmatpush1.msra.mxu0 0.0
    %2966 = vmatprep.subr.mxu0 0.0
    %2967 = vmatpush1.msra.mxu0 0.0
    %2968 = vmatprep.subr.mxu0 0.0
    %2969 = vmatpush1.msra.mxu0 0.0
    %2970 = vmatprep.subr.mxu0 0.0
    %2971 = vmatpush1.msra.mxu0 0.0
    %2972 = vmatprep.subr.mxu0 0.0
    %2973 = vmatpush1.msra.mxu0 0.0
    %2974 = vmatprep.subr.mxu0 0.0
    %2975 = vmatpush1.msra.mxu0 0.0
    %2976 = vmatprep.subr.mxu0 0.0
    %2977 = vmatpush1.msra.mxu0 0.0
    %2978 = vmatprep.subr.mxu0 0.0
    %2979 = vmatpush1.msra.mxu0 0.0
    %2980 = vmatprep.subr.mxu0 0.0
    %2981 = vmatpush1.msra.mxu0 0.0
    %2982 = vmatprep.subr.mxu0 0.0
    %2983 = vmatpush1.msra.mxu0 0.0
    %2984 = vmatprep.mubr.f32.mxu0 0.0
    %2985 = vmatmul.mubr.f32.gmra.mrb[0].mxu0 %v2885
    %v2986 = vpop.f32.mrb[0].mxu0
    %v2987 = vadd.f32 0.0, %v2986
    %v2988 = vpop.f32.mrb[0].mxu0
    %2989 = vmatprep.mubr.f32.mxu0 0.0
    %2990 = vmatmul.mubr.f32.gmra.mrb[0].mxu0 %v2890
    %v2991 = vpop.f32.mrb[0].mxu0
    %v2992 = vadd.f32 0.0, %v2991
    %v2993 = vpop.f32.mrb[0].mxu0
    %2994 = vmatprep.mubr.f32.mxu0 0.0
    %2995 = vmatmul.mubr.f32.gmra.mrb[0].mxu0 %v2895
    %v2996 = vpop.f32.mrb[0].mxu0
    %v2997 = vadd.f32 0.0, %v2996
    %v2998 = vpop.f32.mrb[0].mxu0
    %2999 = vmatprep.mubr.f32.mxu0 0.0
    %3000 = vmatmul.mubr.f32.gmra.mrb[0].mxu0 %v2900
    %v3001 = vpop.f32.mrb[0].mxu0
    %v3002 = vadd.f32 0.0, %v3001
    %v3003 = vpop.f32.mrb[0].mxu0
    %3004 = vdwg.mxu0
    %v3005 = vadd.f32 %v2797, %v2987
    %v3006 = vadd.f32 %v2798, %v2992
    %v3007 = vadd.f32 %v2799, %v2997
    %v3008 = vadd.f32 %v2800, %v3002
    %3009 = vst [vmem:[#allocation2 + $0x40] sm:$0xff] %v3005
    %3010 = vst [vmem:[#allocation2 + $0x48] sm:$0xff] %v3006
    %3011 = vst [vmem:[#allocation2 + $0x50] sm:$0xff] %v3007
    %3012 = vst [vmem:[#allocation2 + $0x58] sm:$0xff] %v3008
    %v3013 = vld [vmem:[%s1149] sm:$0xff]
    %v3014 = vld [vmem:[%s1149 + $0x8] sm:$0xff]
    %v3015 = vld [vmem:[%s1149 + $0x10] sm:$0xff]
    %v3016 = vld [vmem:[%s1149 + $0x18] sm:$0xff]
    %v3018 = vsel %vm342, %v3013, 0
    %v3021 = vsel %vm342, %v3014, 0
    %v3024 = vsel %vm342, %v3015, 0
    %v3027 = vsel %vm342, %v3016, 0
    %3029 = vmatprep.subr.mxu0 0.0
    %3030 = vmatpush1.msra.mxu0 %v530
    %3031 = vmatprep.subr.mxu0 0.0
    %3032 = vmatpush1.msra.mxu0 %v531
    %3033 = vmatprep.subr.mxu0 0.0
    %3034 = vmatpush1.msra.mxu0 %v532
    %3035 = vmatprep.subr.mxu0 0.0
    %3036 = vmatpush1.msra.mxu0 %v533
    %3037 = vmatprep.subr.mxu0 0.0
    %3038 = vmatpush1.msra.mxu0 0.0
    %3039 = vmatprep.subr.mxu0 0.0
    %3040 = vmatpush1.msra.mxu0 0.0
    %3041 = vmatprep.subr.mxu0 0.0
    %3042 = vmatpush1.msra.mxu0 0.0
    %3043 = vmatprep.subr.mxu0 0.0
    %3044 = vmatpush1.msra.mxu0 0.0
    %3045 = vmatprep.subr.mxu0 0.0
    %3046 = vmatpush1.msra.mxu0 0.0
    %3047 = vmatprep.subr.mxu0 0.0
    %3048 = vmatpush1.msra.mxu0 0.0
    %3049 = vmatprep.subr.mxu0 0.0
    %3050 = vmatpush1.msra.mxu0 0.0
    %3051 = vmatprep.subr.mxu0 0.0
    %3052 = vmatpush1.msra.mxu0 0.0
    %3053 = vmatprep.subr.mxu0 0.0
    %3054 = vmatpush1.msra.mxu0 0.0
    %3055 = vmatprep.subr.mxu0 0.0
    %3056 = vmatpush1.msra.mxu0 0.0
    %3057 = vmatprep.subr.mxu0 0.0
    %3058 = vmatpush1.msra.mxu0 0.0
    %3059 = vmatprep.subr.mxu0 0.0
    %3060 = vmatpush1.msra.mxu0 0.0
    %3061 = vmatprep.subr.mxu0 0.0
    %3062 = vmatpush1.msra.mxu0 0.0
    %3063 = vmatprep.subr.mxu0 0.0
    %3064 = vmatpush1.msra.mxu0 0.0
    %3065 = vmatprep.subr.mxu0 0.0
    %3066 = vmatpush1.msra.mxu0 0.0
    %3067 = vmatprep.subr.mxu0 0.0
    %3068 = vmatpush1.msra.mxu0 0.0
    %3069 = vmatprep.subr.mxu0 0.0
    %3070 = vmatpush1.msra.mxu0 0.0
    %3071 = vmatprep.subr.mxu0 0.0
    %3072 = vmatpush1.msra.mxu0 0.0
    %3073 = vmatprep.subr.mxu0 0.0
    %3074 = vmatpush1.msra.mxu0 0.0
    %3075 = vmatprep.subr.mxu0 0.0
    %3076 = vmatpush1.msra.mxu0 0.0
    %3077 = vmatprep.subr.mxu0 0.0
    %3078 = vmatpush1.msra.mxu0 0.0
    %3079 = vmatprep.subr.mxu0 0.0
    %3080 = vmatpush1.msra.mxu0 0.0
    %3081 = vmatprep.subr.mxu0 0.0
    %3082 = vmatpush1.msra.mxu0 0.0
    %3083 = vmatprep.subr.mxu0 0.0
    %3084 = vmatpush1.msra.mxu0 0.0
    %3085 = vmatprep.subr.mxu0 0.0
    %3086 = vmatpush1.msra.mxu0 0.0
    %3087 = vmatprep.subr.mxu0 0.0
    %3088 = vmatpush1.msra.mxu0 0.0
    %3089 = vmatprep.subr.mxu0 0.0
    %3090 = vmatpush1.msra.mxu0 0.0
    %3091 = vmatprep.subr.mxu0 0.0
    %3092 = vmatpush1.msra.mxu0 0.0
    %3093 = vmatprep.mubr.f32.mxu0 0.0
    %3094 = vmatmul.mubr.f32.gmra.mrb[0].mxu0 %v3018
    %v3095 = vpop.f32.mrb[0].mxu0
    %v3096 = vadd.f32 0.0, %v3095
    %v3097 = vpop.f32.mrb[0].mxu0
    %3098 = vmatprep.mubr.f32.mxu0 0.0
    %3099 = vmatmul.mubr.f32.gmra.mrb[0].mxu0 %v3021
    %v3100 = vpop.f32.mrb[0].mxu0
    %v3101 = vadd.f32 0.0, %v3100
    %v3102 = vpop.f32.mrb[0].mxu0
    %3103 = vmatprep.mubr.f32.mxu0 0.0
    %3104 = vmatmul.mubr.f32.gmra.mrb[0].mxu0 %v3024
    %v3105 = vpop.f32.mrb[0].mxu0
    %v3106 = vadd.f32 0.0, %v3105
    %v3107 = vpop.f32.mrb[0].mxu0
    %3108 = vmatprep.mubr.f32.mxu0 0.0
    %3109 = vmatmul.mubr.f32.gmra.mrb[0].mxu0 %v3027
    %v3110 = vpop.f32.mrb[0].mxu0
    %v3111 = vadd.f32 0.0, %v3110
    %v3112 = vpop.f32.mrb[0].mxu0
    %3113 = vdwg.mxu0
    %s3114 = scalar_lea.vmem [#allocation5], 1280
    %v3115 = vld [vmem:[%s3114] sm:$0xff]
    %v3116 = vld [vmem:[%s3114 + $0x8] sm:$0xff]
    %v3117 = vld [vmem:[%s3114 + $0x10] sm:$0xff]
    %v3118 = vld [vmem:[%s3114 + $0x18] sm:$0xff]
    %v3119 = vld [vmem:[%s3114 + $0x20] sm:$0xff]
    %v3120 = vld [vmem:[%s3114 + $0x28] sm:$0xff]
    %v3121 = vld [vmem:[%s3114 + $0x30] sm:$0xff]
    %v3122 = vld [vmem:[%s3114 + $0x38] sm:$0xff]
    %v3123 = vld [vmem:[%s3114 + $0x40] sm:$0xff]
    %v3124 = vld [vmem:[%s3114 + $0x48] sm:$0xff]
    %v3125 = vld [vmem:[%s3114 + $0x50] sm:$0xff]
    %v3126 = vld [vmem:[%s3114 + $0x58] sm:$0xff]
    %v3127 = vld [vmem:[%s3114 + $0x60] sm:$0xff]
    %v3128 = vld [vmem:[%s3114 + $0x68] sm:$0xff]
    %v3129 = vld [vmem:[%s3114 + $0x70] sm:$0xff]
    %v3130 = vld [vmem:[%s3114 + $0x78] sm:$0xff]
    %v3131 = vld [vmem:[%s1975] sm:$0xff]
    %v3132 = vld [vmem:[%s1975 + $0x8] sm:$0xff]
    %v3133 = vld [vmem:[%s1975 + $0x10] sm:$0xff]
    %v3134 = vld [vmem:[%s1975 + $0x18] sm:$0xff]
    %v3136 = vsel %vm342, %v3131, 0
    %v3139 = vsel %vm342, %v3132, 0
    %v3142 = vsel %vm342, %v3133, 0
    %v3145 = vsel %vm342, %v3134, 0
    %3147 = vmatprep.subr.mxu0 0.0
    %3148 = vmatpush1.msra.mxu0 %v530
    %3149 = vmatprep.subr.mxu0 0.0
    %3150 = vmatpush1.msra.mxu0 %v531
    %3151 = vmatprep.subr.mxu0 0.0
    %3152 = vmatpush1.msra.mxu0 %v532
    %3153 = vmatprep.subr.mxu0 0.0
    %3154 = vmatpush1.msra.mxu0 %v533
    %3155 = vmatprep.subr.mxu0 0.0
    %3156 = vmatpush1.msra.mxu0 0.0
    %3157 = vmatprep.subr.mxu0 0.0
    %3158 = vmatpush1.msra.mxu0 0.0
    %3159 = vmatprep.subr.mxu0 0.0
    %3160 = vmatpush1.msra.mxu0 0.0
    %3161 = vmatprep.subr.mxu0 0.0
    %3162 = vmatpush1.msra.mxu0 0.0
    %3163 = vmatprep.subr.mxu0 0.0
    %3164 = vmatpush1.msra.mxu0 0.0
    %3165 = vmatprep.subr.mxu0 0.0
    %3166 = vmatpush1.msra.mxu0 0.0
    %3167 = vmatprep.subr.mxu0 0.0
    %3168 = vmatpush1.msra.mxu0 0.0
    %3169 = vmatprep.subr.mxu0 0.0
    %3170 = vmatpush1.msra.mxu0 0.0
    %3171 = vmatprep.subr.mxu0 0.0
    %3172 = vmatpush1.msra.mxu0 0.0
    %3173 = vmatprep.subr.mxu0 0.0
    %3174 = vmatpush1.msra.mxu0 0.0
    %3175 = vmatprep.subr.mxu0 0.0
    %3176 = vmatpush1.msra.mxu0 0.0
    %3177 = vmatprep.subr.mxu0 0.0
    %3178 = vmatpush1.msra.mxu0 0.0
    %3179 = vmatprep.subr.mxu0 0.0
    %3180 = vmatpush1.msra.mxu0 0.0
    %3181 = vmatprep.subr.mxu0 0.0
    %3182 = vmatpush1.msra.mxu0 0.0
    %3183 = vmatprep.subr.mxu0 0.0
    %3184 = vmatpush1.msra.mxu0 0.0
    %3185 = vmatprep.subr.mxu0 0.0
    %3186 = vmatpush1.msra.mxu0 0.0
    %3187 = vmatprep.subr.mxu0 0.0
    %3188 = vmatpush1.msra.mxu0 0.0
    %3189 = vmatprep.subr.mxu0 0.0
    %3190 = vmatpush1.msra.mxu0 0.0
    %3191 = vmatprep.subr.mxu0 0.0
    %3192 = vmatpush1.msra.mxu0 0.0
    %3193 = vmatprep.subr.mxu0 0.0
    %3194 = vmatpush1.msra.mxu0 0.0
    %3195 = vmatprep.subr.mxu0 0.0
    %3196 = vmatpush1.msra.mxu0 0.0
    %3197 = vmatprep.subr.mxu0 0.0
    %3198 = vmatpush1.msra.mxu0 0.0
    %3199 = vmatprep.subr.mxu0 0.0
    %3200 = vmatpush1.msra.mxu0 0.0
    %3201 = vmatprep.subr.mxu0 0.0
    %3202 = vmatpush1.msra.mxu0 0.0
    %3203 = vmatprep.subr.mxu0 0.0
    %3204 = vmatpush1.msra.mxu0 0.0
    %3205 = vmatprep.subr.mxu0 0.0
    %3206 = vmatpush1.msra.mxu0 0.0
    %3207 = vmatprep.subr.mxu0 0.0
    %3208 = vmatpush1.msra.mxu0 0.0
    %3209 = vmatprep.subr.mxu0 0.0
    %3210 = vmatpush1.msra.mxu0 0.0
    %3211 = vmatprep.mubr.f32.mxu0 0.0
    %3212 = vmatmul.mubr.f32.gmra.mrb[0].mxu0 %v3136
    %v3213 = vpop.f32.mrb[0].mxu0
    %v3214 = vadd.f32 0.0, %v3213
    %v3215 = vpop.f32.mrb[0].mxu0
    %3216 = vmatprep.mubr.f32.mxu0 0.0
    %3217 = vmatmul.mubr.f32.gmra.mrb[0].mxu0 %v3139
    %v3218 = vpop.f32.mrb[0].mxu0
    %v3219 = vadd.f32 0.0, %v3218
    %v3220 = vpop.f32.mrb[0].mxu0
    %3221 = vmatprep.mubr.f32.mxu0 0.0
    %3222 = vmatmul.mubr.f32.gmra.mrb[0].mxu0 %v3142
    %v3223 = vpop.f32.mrb[0].mxu0
    %v3224 = vadd.f32 0.0, %v3223
    %v3225 = vpop.f32.mrb[0].mxu0
    %3226 = vmatprep.mubr.f32.mxu0 0.0
    %3227 = vmatmul.mubr.f32.gmra.mrb[0].mxu0 %v3145
    %v3228 = vpop.f32.mrb[0].mxu0
    %v3229 = vadd.f32 0.0, %v3228
    %v3230 = vpop.f32.mrb[0].mxu0
    %3231 = vdwg.mxu0
    %s3232 = scalar_lea.vmem [#allocation5], 1024
    %v3233 = vld [vmem:[%s3232] sm:$0xff]
    %v3234 = vld [vmem:[%s3232 + $0x8] sm:$0xff]
    %v3235 = vld [vmem:[%s3232 + $0x10] sm:$0xff]
    %v3236 = vld [vmem:[%s3232 + $0x18] sm:$0xff]
    %v3237 = vld [vmem:[%s3232 + $0x20] sm:$0xff]
    %v3238 = vld [vmem:[%s3232 + $0x28] sm:$0xff]
    %v3239 = vld [vmem:[%s3232 + $0x30] sm:$0xff]
    %v3240 = vld [vmem:[%s3232 + $0x38] sm:$0xff]
    %v3241 = vld [vmem:[%s3232 + $0x40] sm:$0xff]
    %v3242 = vld [vmem:[%s3232 + $0x48] sm:$0xff]
    %v3243 = vld [vmem:[%s3232 + $0x50] sm:$0xff]
    %v3244 = vld [vmem:[%s3232 + $0x58] sm:$0xff]
    %v3245 = vld [vmem:[%s3232 + $0x60] sm:$0xff]
    %v3246 = vld [vmem:[%s3232 + $0x68] sm:$0xff]
    %v3247 = vld [vmem:[%s3232 + $0x70] sm:$0xff]
    %v3248 = vld [vmem:[%s3232 + $0x78] sm:$0xff]
    %3249 = vmatprep.subr.mxu0 0.0
    %3250 = vmatpush1.msra.mxu0 %v3233
    %3251 = vmatprep.subr.mxu0 0.0
    %3252 = vmatpush1.msra.mxu0 %v3234
    %3253 = vmatprep.subr.mxu0 0.0
    %3254 = vmatpush1.msra.mxu0 %v3235
    %3255 = vmatprep.subr.mxu0 0.0
    %3256 = vmatpush1.msra.mxu0 %v3236
    %3257 = vmatprep.subr.mxu0 0.0
    %3258 = vmatpush1.msra.mxu0 %v3237
    %3259 = vmatprep.subr.mxu0 0.0
    %3260 = vmatpush1.msra.mxu0 %v3238
    %3261 = vmatprep.subr.mxu0 0.0
    %3262 = vmatpush1.msra.mxu0 %v3239
    %3263 = vmatprep.subr.mxu0 0.0
    %3264 = vmatpush1.msra.mxu0 %v3240
    %3265 = vmatprep.subr.mxu0 0.0
    %3266 = vmatpush1.msra.mxu0 %v3241
    %3267 = vmatprep.subr.mxu0 0.0
    %3268 = vmatpush1.msra.mxu0 %v3242
    %3269 = vmatprep.subr.mxu0 0.0
    %3270 = vmatpush1.msra.mxu0 %v3243
    %3271 = vmatprep.subr.mxu0 0.0
    %3272 = vmatpush1.msra.mxu0 %v3244
    %3273 = vmatprep.subr.mxu0 0.0
    %3274 = vmatpush1.msra.mxu0 %v3245
    %3275 = vmatprep.subr.mxu0 0.0
    %3276 = vmatpush1.msra.mxu0 %v3246
    %3277 = vmatprep.subr.mxu0 0.0
    %3278 = vmatpush1.msra.mxu0 %v3247
    %3279 = vmatprep.subr.mxu0 0.0
    %3280 = vmatpush1.msra.mxu0 %v3248
    %3281 = vmatprep.subr.mxu0 0.0
    %3282 = vmatpush1.msra.mxu0 0.0
    %3283 = vmatprep.subr.mxu0 0.0
    %3284 = vmatpush1.msra.mxu0 0.0
    %3285 = vmatprep.subr.mxu0 0.0
    %3286 = vmatpush1.msra.mxu0 0.0
    %3287 = vmatprep.subr.mxu0 0.0
    %3288 = vmatpush1.msra.mxu0 0.0
    %3289 = vmatprep.subr.mxu0 0.0
    %3290 = vmatpush1.msra.mxu0 0.0
    %3291 = vmatprep.subr.mxu0 0.0
    %3292 = vmatpush1.msra.mxu0 0.0
    %3293 = vmatprep.subr.mxu0 0.0
    %3294 = vmatpush1.msra.mxu0 0.0
    %3295 = vmatprep.subr.mxu0 0.0
    %3296 = vmatpush1.msra.mxu0 0.0
    %3297 = vmatprep.subr.mxu0 0.0
    %3298 = vmatpush1.msra.mxu0 0.0
    %3299 = vmatprep.subr.mxu0 0.0
    %3300 = vmatpush1.msra.mxu0 0.0
    %3301 = vmatprep.subr.mxu0 0.0
    %3302 = vmatpush1.msra.mxu0 0.0
    %3303 = vmatprep.subr.mxu0 0.0
    %3304 = vmatpush1.msra.mxu0 0.0
    %3305 = vmatprep.subr.mxu0 0.0
    %3306 = vmatpush1.msra.mxu0 0.0
    %3307 = vmatprep.subr.mxu0 0.0
    %3308 = vmatpush1.msra.mxu0 0.0
    %3309 = vmatprep.subr.mxu0 0.0
    %3310 = vmatpush1.msra.mxu0 0.0
    %3311 = vmatprep.subr.mxu0 0.0
    %3312 = vmatpush1.msra.mxu0 0.0
    %3313 = vmatprep.mubr.f32.mxu0 0.0
    %3314 = vmatmul.mubr.f32.gmra.mrb[0].mxu0 %v3214
    %v3315 = vpop.f32.mrb[0].mxu0
    %v3316 = vadd.f32 0.0, %v3315
    %v3317 = vpop.f32.mrb[0].mxu0
    %3318 = vmatprep.mubr.f32.mxu0 0.0
    %3319 = vmatmul.mubr.f32.gmra.mrb[0].mxu0 %v3219
    %v3320 = vpop.f32.mrb[0].mxu0
    %v3321 = vadd.f32 0.0, %v3320
    %v3322 = vpop.f32.mrb[0].mxu0
    %3323 = vmatprep.mubr.f32.mxu0 0.0
    %3324 = vmatmul.mubr.f32.gmra.mrb[0].mxu0 %v3224
    %v3325 = vpop.f32.mrb[0].mxu0
    %v3326 = vadd.f32 0.0, %v3325
    %v3327 = vpop.f32.mrb[0].mxu0
    %3328 = vmatprep.mubr.f32.mxu0 0.0
    %3329 = vmatmul.mubr.f32.gmra.mrb[0].mxu0 %v3229
    %v3330 = vpop.f32.mrb[0].mxu0
    %v3331 = vadd.f32 0.0, %v3330
    %v3332 = vpop.f32.mrb[0].mxu0
    %3333 = vdwg.mxu0
    %3334 = vmatprep.subr.mxu0 0.0
    %3335 = vmatpush1.msra.mxu0 %v3115
    %3336 = vmatprep.subr.mxu0 0.0
    %3337 = vmatpush1.msra.mxu0 %v3116
    %3338 = vmatprep.subr.mxu0 0.0
    %3339 = vmatpush1.msra.mxu0 %v3117
    %3340 = vmatprep.subr.mxu0 0.0
    %3341 = vmatpush1.msra.mxu0 %v3118
    %3342 = vmatprep.subr.mxu0 0.0
    %3343 = vmatpush1.msra.mxu0 %v3119
    %3344 = vmatprep.subr.mxu0 0.0
    %3345 = vmatpush1.msra.mxu0 %v3120
    %3346 = vmatprep.subr.mxu0 0.0
    %3347 = vmatpush1.msra.mxu0 %v3121
    %3348 = vmatprep.subr.mxu0 0.0
    %3349 = vmatpush1.msra.mxu0 %v3122
    %3350 = vmatprep.subr.mxu0 0.0
    %3351 = vmatpush1.msra.mxu0 %v3123
    %3352 = vmatprep.subr.mxu0 0.0
    %3353 = vmatpush1.msra.mxu0 %v3124
    %3354 = vmatprep.subr.mxu0 0.0
    %3355 = vmatpush1.msra.mxu0 %v3125
    %3356 = vmatprep.subr.mxu0 0.0
    %3357 = vmatpush1.msra.mxu0 %v3126
    %3358 = vmatprep.subr.mxu0 0.0
    %3359 = vmatpush1.msra.mxu0 %v3127
    %3360 = vmatprep.subr.mxu0 0.0
    %3361 = vmatpush1.msra.mxu0 %v3128
    %3362 = vmatprep.subr.mxu0 0.0
    %3363 = vmatpush1.msra.mxu0 %v3129
    %3364 = vmatprep.subr.mxu0 0.0
    %3365 = vmatpush1.msra.mxu0 %v3130
    %3366 = vmatprep.subr.mxu0 0.0
    %3367 = vmatpush1.msra.mxu0 0.0
    %3368 = vmatprep.subr.mxu0 0.0
    %3369 = vmatpush1.msra.mxu0 0.0
    %3370 = vmatprep.subr.mxu0 0.0
    %3371 = vmatpush1.msra.mxu0 0.0
    %3372 = vmatprep.subr.mxu0 0.0
    %3373 = vmatpush1.msra.mxu0 0.0
    %3374 = vmatprep.subr.mxu0 0.0
    %3375 = vmatpush1.msra.mxu0 0.0
    %3376 = vmatprep.subr.mxu0 0.0
    %3377 = vmatpush1.msra.mxu0 0.0
    %3378 = vmatprep.subr.mxu0 0.0
    %3379 = vmatpush1.msra.mxu0 0.0
    %3380 = vmatprep.subr.mxu0 0.0
    %3381 = vmatpush1.msra.mxu0 0.0
    %3382 = vmatprep.subr.mxu0 0.0
    %3383 = vmatpush1.msra.mxu0 0.0
    %3384 = vmatprep.subr.mxu0 0.0
    %3385 = vmatpush1.msra.mxu0 0.0
    %3386 = vmatprep.subr.mxu0 0.0
    %3387 = vmatpush1.msra.mxu0 0.0
    %3388 = vmatprep.subr.mxu0 0.0
    %3389 = vmatpush1.msra.mxu0 0.0
    %3390 = vmatprep.subr.mxu0 0.0
    %3391 = vmatpush1.msra.mxu0 0.0
    %3392 = vmatprep.subr.mxu0 0.0
    %3393 = vmatpush1.msra.mxu0 0.0
    %3394 = vmatprep.subr.mxu0 0.0
    %3395 = vmatpush1.msra.mxu0 0.0
    %3396 = vmatprep.subr.mxu0 0.0
    %3397 = vmatpush1.msra.mxu0 0.0
    %3398 = vmatprep.mubr.f32.mxu0 0.0
    %3399 = vmatmul.mubr.f32.gmra.mrb[0].mxu0 %v3096
    %v3400 = vpop.f32.mrb[0].mxu0
    %v3401 = vadd.f32 %v3316, %v3400
    %v3402 = vpop.f32.mrb[0].mxu0
    %3403 = vmatprep.mubr.f32.mxu0 0.0
    %3404 = vmatmul.mubr.f32.gmra.mrb[0].mxu0 %v3101
    %v3405 = vpop.f32.mrb[0].mxu0
    %v3406 = vadd.f32 %v3321, %v3405
    %v3407 = vpop.f32.mrb[0].mxu0
    %3408 = vmatprep.mubr.f32.mxu0 0.0
    %3409 = vmatmul.mubr.f32.gmra.mrb[0].mxu0 %v3106
    %v3410 = vpop.f32.mrb[0].mxu0
    %v3411 = vadd.f32 %v3326, %v3410
    %v3412 = vpop.f32.mrb[0].mxu0
    %3413 = vmatprep.mubr.f32.mxu0 0.0
    %3414 = vmatmul.mubr.f32.gmra.mrb[0].mxu0 %v3111
    %v3415 = vpop.f32.mrb[0].mxu0
    %v3416 = vadd.f32 %v3331, %v3415
    %v3417 = vpop.f32.mrb[0].mxu0
    %3418 = vdwg.mxu0
    %v3419 = vld [vmem:[%s2801] sm:$0xff]
    %v3420 = vld [vmem:[%s2801 + $0x8] sm:$0xff]
    %v3421 = vld [vmem:[%s2801 + $0x10] sm:$0xff]
    %v3422 = vld [vmem:[%s2801 + $0x18] sm:$0xff]
    %v3424 = vsel %vm342, %v3419, 0
    %v3427 = vsel %vm342, %v3420, 0
    %v3430 = vsel %vm342, %v3421, 0
    %v3433 = vsel %vm342, %v3422, 0
    %3435 = vmatprep.subr.mxu0 0.0
    %3436 = vmatpush1.msra.mxu0 %v530
    %3437 = vmatprep.subr.mxu0 0.0
    %3438 = vmatpush1.msra.mxu0 %v531
    %3439 = vmatprep.subr.mxu0 0.0
    %3440 = vmatpush1.msra.mxu0 %v532
    %3441 = vmatprep.subr.mxu0 0.0
    %3442 = vmatpush1.msra.mxu0 %v533
    %3443 = vmatprep.subr.mxu0 0.0
    %3444 = vmatpush1.msra.mxu0 0.0
    %3445 = vmatprep.subr.mxu0 0.0
    %3446 = vmatpush1.msra.mxu0 0.0
    %3447 = vmatprep.subr.mxu0 0.0
    %3448 = vmatpush1.msra.mxu0 0.0
    %3449 = vmatprep.subr.mxu0 0.0
    %3450 = vmatpush1.msra.mxu0 0.0
    %3451 = vmatprep.subr.mxu0 0.0
    %3452 = vmatpush1.msra.mxu0 0.0
    %3453 = vmatprep.subr.mxu0 0.0
    %3454 = vmatpush1.msra.mxu0 0.0
    %3455 = vmatprep.subr.mxu0 0.0
    %3456 = vmatpush1.msra.mxu0 0.0
    %3457 = vmatprep.subr.mxu0 0.0
    %3458 = vmatpush1.msra.mxu0 0.0
    %3459 = vmatprep.subr.mxu0 0.0
    %3460 = vmatpush1.msra.mxu0 0.0
    %3461 = vmatprep.subr.mxu0 0.0
    %3462 = vmatpush1.msra.mxu0 0.0
    %3463 = vmatprep.subr.mxu0 0.0
    %3464 = vmatpush1.msra.mxu0 0.0
    %3465 = vmatprep.subr.mxu0 0.0
    %3466 = vmatpush1.msra.mxu0 0.0
    %3467 = vmatprep.subr.mxu0 0.0
    %3468 = vmatpush1.msra.mxu0 0.0
    %3469 = vmatprep.subr.mxu0 0.0
    %3470 = vmatpush1.msra.mxu0 0.0
    %3471 = vmatprep.subr.mxu0 0.0
    %3472 = vmatpush1.msra.mxu0 0.0
    %3473 = vmatprep.subr.mxu0 0.0
    %3474 = vmatpush1.msra.mxu0 0.0
    %3475 = vmatprep.subr.mxu0 0.0
    %3476 = vmatpush1.msra.mxu0 0.0
    %3477 = vmatprep.subr.mxu0 0.0
    %3478 = vmatpush1.msra.mxu0 0.0
    %3479 = vmatprep.subr.mxu0 0.0
    %3480 = vmatpush1.msra.mxu0 0.0
    %3481 = vmatprep.subr.mxu0 0.0
    %3482 = vmatpush1.msra.mxu0 0.0
    %3483 = vmatprep.subr.mxu0 0.0
    %3484 = vmatpush1.msra.mxu0 0.0
    %3485 = vmatprep.subr.mxu0 0.0
    %3486 = vmatpush1.msra.mxu0 0.0
    %3487 = vmatprep.subr.mxu0 0.0
    %3488 = vmatpush1.msra.mxu0 0.0
    %3489 = vmatprep.subr.mxu0 0.0
    %3490 = vmatpush1.msra.mxu0 0.0
    %3491 = vmatprep.subr.mxu0 0.0
    %3492 = vmatpush1.msra.mxu0 0.0
    %3493 = vmatprep.subr.mxu0 0.0
    %3494 = vmatpush1.msra.mxu0 0.0
    %3495 = vmatprep.subr.mxu0 0.0
    %3496 = vmatpush1.msra.mxu0 0.0
    %3497 = vmatprep.subr.mxu0 0.0
    %3498 = vmatpush1.msra.mxu0 0.0
    %3499 = vmatprep.mubr.f32.mxu0 0.0
    %3500 = vmatmul.mubr.f32.gmra.mrb[0].mxu0 %v3424
    %v3501 = vpop.f32.mrb[0].mxu0
    %v3502 = vadd.f32 0.0, %v3501
    %v3503 = vpop.f32.mrb[0].mxu0
    %3504 = vmatprep.mubr.f32.mxu0 0.0
    %3505 = vmatmul.mubr.f32.gmra.mrb[0].mxu0 %v3427
    %v3506 = vpop.f32.mrb[0].mxu0
    %v3507 = vadd.f32 0.0, %v3506
    %v3508 = vpop.f32.mrb[0].mxu0
    %3509 = vmatprep.mubr.f32.mxu0 0.0
    %3510 = vmatmul.mubr.f32.gmra.mrb[0].mxu0 %v3430
    %v3511 = vpop.f32.mrb[0].mxu0
    %v3512 = vadd.f32 0.0, %v3511
    %v3513 = vpop.f32.mrb[0].mxu0
    %3514 = vmatprep.mubr.f32.mxu0 0.0
    %3515 = vmatmul.mubr.f32.gmra.mrb[0].mxu0 %v3433
    %v3516 = vpop.f32.mrb[0].mxu0
    %v3517 = vadd.f32 0.0, %v3516
    %v3518 = vpop.f32.mrb[0].mxu0
    %3519 = vdwg.mxu0
    %s3520 = scalar_lea.vmem [#allocation5], 256
    %v3521 = vld [vmem:[%s3520] sm:$0xff]
    %v3522 = vld [vmem:[%s3520 + $0x8] sm:$0xff]
    %v3523 = vld [vmem:[%s3520 + $0x10] sm:$0xff]
    %v3524 = vld [vmem:[%s3520 + $0x18] sm:$0xff]
    %v3525 = vld [vmem:[%s3520 + $0x20] sm:$0xff]
    %v3526 = vld [vmem:[%s3520 + $0x28] sm:$0xff]
    %v3527 = vld [vmem:[%s3520 + $0x30] sm:$0xff]
    %v3528 = vld [vmem:[%s3520 + $0x38] sm:$0xff]
    %v3529 = vld [vmem:[%s3520 + $0x40] sm:$0xff]
    %v3530 = vld [vmem:[%s3520 + $0x48] sm:$0xff]
    %v3531 = vld [vmem:[%s3520 + $0x50] sm:$0xff]
    %v3532 = vld [vmem:[%s3520 + $0x58] sm:$0xff]
    %v3533 = vld [vmem:[%s3520 + $0x60] sm:$0xff]
    %v3534 = vld [vmem:[%s3520 + $0x68] sm:$0xff]
    %v3535 = vld [vmem:[%s3520 + $0x70] sm:$0xff]
    %v3536 = vld [vmem:[%s3520 + $0x78] sm:$0xff]
    %3537 = vmatprep.subr.mxu0 0.0
    %3538 = vmatpush1.msra.mxu0 %v3521
    %3539 = vmatprep.subr.mxu0 0.0
    %3540 = vmatpush1.msra.mxu0 %v3522
    %3541 = vmatprep.subr.mxu0 0.0
    %3542 = vmatpush1.msra.mxu0 %v3523
    %3543 = vmatprep.subr.mxu0 0.0
    %3544 = vmatpush1.msra.mxu0 %v3524
    %3545 = vmatprep.subr.mxu0 0.0
    %3546 = vmatpush1.msra.mxu0 %v3525
    %3547 = vmatprep.subr.mxu0 0.0
    %3548 = vmatpush1.msra.mxu0 %v3526
    %3549 = vmatprep.subr.mxu0 0.0
    %3550 = vmatpush1.msra.mxu0 %v3527
    %3551 = vmatprep.subr.mxu0 0.0
    %3552 = vmatpush1.msra.mxu0 %v3528
    %3553 = vmatprep.subr.mxu0 0.0
    %3554 = vmatpush1.msra.mxu0 %v3529
    %3555 = vmatprep.subr.mxu0 0.0
    %3556 = vmatpush1.msra.mxu0 %v3530
    %3557 = vmatprep.subr.mxu0 0.0
    %3558 = vmatpush1.msra.mxu0 %v3531
    %3559 = vmatprep.subr.mxu0 0.0
    %3560 = vmatpush1.msra.mxu0 %v3532
    %3561 = vmatprep.subr.mxu0 0.0
    %3562 = vmatpush1.msra.mxu0 %v3533
    %3563 = vmatprep.subr.mxu0 0.0
    %3564 = vmatpush1.msra.mxu0 %v3534
    %3565 = vmatprep.subr.mxu0 0.0
    %3566 = vmatpush1.msra.mxu0 %v3535
    %3567 = vmatprep.subr.mxu0 0.0
    %3568 = vmatpush1.msra.mxu0 %v3536
    %3569 = vmatprep.subr.mxu0 0.0
    %3570 = vmatpush1.msra.mxu0 0.0
    %3571 = vmatprep.subr.mxu0 0.0
    %3572 = vmatpush1.msra.mxu0 0.0
    %3573 = vmatprep.subr.mxu0 0.0
    %3574 = vmatpush1.msra.mxu0 0.0
    %3575 = vmatprep.subr.mxu0 0.0
    %3576 = vmatpush1.msra.mxu0 0.0
    %3577 = vmatprep.subr.mxu0 0.0
    %3578 = vmatpush1.msra.mxu0 0.0
    %3579 = vmatprep.subr.mxu0 0.0
    %3580 = vmatpush1.msra.mxu0 0.0
    %3581 = vmatprep.subr.mxu0 0.0
    %3582 = vmatpush1.msra.mxu0 0.0
    %3583 = vmatprep.subr.mxu0 0.0
    %3584 = vmatpush1.msra.mxu0 0.0
    %3585 = vmatprep.subr.mxu0 0.0
    %3586 = vmatpush1.msra.mxu0 0.0
    %3587 = vmatprep.subr.mxu0 0.0
    %3588 = vmatpush1.msra.mxu0 0.0
    %3589 = vmatprep.subr.mxu0 0.0
    %3590 = vmatpush1.msra.mxu0 0.0
    %3591 = vmatprep.subr.mxu0 0.0
    %3592 = vmatpush1.msra.mxu0 0.0
    %3593 = vmatprep.subr.mxu0 0.0
    %3594 = vmatpush1.msra.mxu0 0.0
    %3595 = vmatprep.subr.mxu0 0.0
    %3596 = vmatpush1.msra.mxu0 0.0
    %3597 = vmatprep.subr.mxu0 0.0
    %3598 = vmatpush1.msra.mxu0 0.0
    %3599 = vmatprep.subr.mxu0 0.0
    %3600 = vmatpush1.msra.mxu0 0.0
    %3601 = vmatprep.mubr.f32.mxu0 0.0
    %3602 = vmatmul.mubr.f32.gmra.mrb[0].mxu0 %v3502
    %v3603 = vpop.f32.mrb[0].mxu0
    %v3604 = vadd.f32 0.0, %v3603
    %v3605 = vpop.f32.mrb[0].mxu0
    %3606 = vmatprep.mubr.f32.mxu0 0.0
    %3607 = vmatmul.mubr.f32.gmra.mrb[0].mxu0 %v3507
    %v3608 = vpop.f32.mrb[0].mxu0
    %v3609 = vadd.f32 0.0, %v3608
    %v3610 = vpop.f32.mrb[0].mxu0
    %3611 = vmatprep.mubr.f32.mxu0 0.0
    %3612 = vmatmul.mubr.f32.gmra.mrb[0].mxu0 %v3512
    %v3613 = vpop.f32.mrb[0].mxu0
    %v3614 = vadd.f32 0.0, %v3613
    %v3615 = vpop.f32.mrb[0].mxu0
    %3616 = vmatprep.mubr.f32.mxu0 0.0
    %3617 = vmatmul.mubr.f32.gmra.mrb[0].mxu0 %v3517
    %v3618 = vpop.f32.mrb[0].mxu0
    %v3619 = vadd.f32 0.0, %v3618
    %v3620 = vpop.f32.mrb[0].mxu0
    %3621 = vdwg.mxu0
    %v3622 = vadd.f32 %v3401, %v3604
    %v3623 = vadd.f32 %v3406, %v3609
    %v3624 = vadd.f32 %v3411, %v3614
    %v3625 = vadd.f32 %v3416, %v3619
    %s3626 = scalar_lea.vmem [#allocation8], 256
    %v3627 = vld [vmem:[%s3626] sm:$0xff]
    %v3628 = vld [vmem:[%s3626 + $0x8] sm:$0xff]
    %v3629 = vld [vmem:[%s3626 + $0x10] sm:$0xff]
    %v3630 = vld [vmem:[%s3626 + $0x18] sm:$0xff]
    %v3632 = vsel %vm342, %v3627, 0
    %v3635 = vsel %vm342, %v3628, 0
    %v3638 = vsel %vm342, %v3629, 0
    %v3641 = vsel %vm342, %v3630, 0
    %3643 = vmatprep.subr.mxu0 0.0
    %3644 = vmatpush1.msra.mxu0 %v530
    %3645 = vmatprep.subr.mxu0 0.0
    %3646 = vmatpush1.msra.mxu0 %v531
    %3647 = vmatprep.subr.mxu0 0.0
    %3648 = vmatpush1.msra.mxu0 %v532
    %3649 = vmatprep.subr.mxu0 0.0
    %3650 = vmatpush1.msra.mxu0 %v533
    %3651 = vmatprep.subr.mxu0 0.0
    %3652 = vmatpush1.msra.mxu0 0.0
    %3653 = vmatprep.subr.mxu0 0.0
    %3654 = vmatpush1.msra.mxu0 0.0
    %3655 = vmatprep.subr.mxu0 0.0
    %3656 = vmatpush1.msra.mxu0 0.0
    %3657 = vmatprep.subr.mxu0 0.0
    %3658 = vmatpush1.msra.mxu0 0.0
    %3659 = vmatprep.subr.mxu0 0.0
    %3660 = vmatpush1.msra.mxu0 0.0
    %3661 = vmatprep.subr.mxu0 0.0
    %3662 = vmatpush1.msra.mxu0 0.0
    %3663 = vmatprep.subr.mxu0 0.0
    %3664 = vmatpush1.msra.mxu0 0.0
    %3665 = vmatprep.subr.mxu0 0.0
    %3666 = vmatpush1.msra.mxu0 0.0
    %3667 = vmatprep.subr.mxu0 0.0
    %3668 = vmatpush1.msra.mxu0 0.0
    %3669 = vmatprep.subr.mxu0 0.0
    %3670 = vmatpush1.msra.mxu0 0.0
    %3671 = vmatprep.subr.mxu0 0.0
    %3672 = vmatpush1.msra.mxu0 0.0
    %3673 = vmatprep.subr.mxu0 0.0
    %3674 = vmatpush1.msra.mxu0 0.0
    %3675 = vmatprep.subr.mxu0 0.0
    %3676 = vmatpush1.msra.mxu0 0.0
    %3677 = vmatprep.subr.mxu0 0.0
    %3678 = vmatpush1.msra.mxu0 0.0
    %3679 = vmatprep.subr.mxu0 0.0
    %3680 = vmatpush1.msra.mxu0 0.0
    %3681 = vmatprep.subr.mxu0 0.0
    %3682 = vmatpush1.msra.mxu0 0.0
    %3683 = vmatprep.subr.mxu0 0.0
    %3684 = vmatpush1.msra.mxu0 0.0
    %3685 = vmatprep.subr.mxu0 0.0
    %3686 = vmatpush1.msra.mxu0 0.0
    %3687 = vmatprep.subr.mxu0 0.0
    %3688 = vmatpush1.msra.mxu0 0.0
    %3689 = vmatprep.subr.mxu0 0.0
    %3690 = vmatpush1.msra.mxu0 0.0
    %3691 = vmatprep.subr.mxu0 0.0
    %3692 = vmatpush1.msra.mxu0 0.0
    %3693 = vmatprep.subr.mxu0 0.0
    %3694 = vmatpush1.msra.mxu0 0.0
    %3695 = vmatprep.subr.mxu0 0.0
    %3696 = vmatpush1.msra.mxu0 0.0
    %3697 = vmatprep.subr.mxu0 0.0
    %3698 = vmatpush1.msra.mxu0 0.0
    %3699 = vmatprep.subr.mxu0 0.0
    %3700 = vmatpush1.msra.mxu0 0.0
    %3701 = vmatprep.subr.mxu0 0.0
    %3702 = vmatpush1.msra.mxu0 0.0
    %3703 = vmatprep.subr.mxu0 0.0
    %3704 = vmatpush1.msra.mxu0 0.0
    %3705 = vmatprep.subr.mxu0 0.0
    %3706 = vmatpush1.msra.mxu0 0.0
    %3707 = vmatprep.mubr.f32.mxu0 0.0
    %3708 = vmatmul.mubr.f32.gmra.mrb[0].mxu0 %v3632
    %v3709 = vpop.f32.mrb[0].mxu0
    %v3710 = vadd.f32 0.0, %v3709
    %v3711 = vpop.f32.mrb[0].mxu0
    %3712 = vmatprep.mubr.f32.mxu0 0.0
    %3713 = vmatmul.mubr.f32.gmra.mrb[0].mxu0 %v3635
    %v3714 = vpop.f32.mrb[0].mxu0
    %v3715 = vadd.f32 0.0, %v3714
    %v3716 = vpop.f32.mrb[0].mxu0
    %3717 = vmatprep.mubr.f32.mxu0 0.0
    %3718 = vmatmul.mubr.f32.gmra.mrb[0].mxu0 %v3638
    %v3719 = vpop.f32.mrb[0].mxu0
    %v3720 = vadd.f32 0.0, %v3719
    %v3721 = vpop.f32.mrb[0].mxu0
    %3722 = vmatprep.mubr.f32.mxu0 0.0
    %3723 = vmatmul.mubr.f32.gmra.mrb[0].mxu0 %v3641
    %v3724 = vpop.f32.mrb[0].mxu0
    %v3725 = vadd.f32 0.0, %v3724
    %v3726 = vpop.f32.mrb[0].mxu0
    %3727 = vdwg.mxu0
    %v3728 = vld [vmem:[#allocation5] sm:$0xff]
    %v3729 = vld [vmem:[#allocation5 + $0x8] sm:$0xff]
    %v3730 = vld [vmem:[#allocation5 + $0x10] sm:$0xff]
    %v3731 = vld [vmem:[#allocation5 + $0x18] sm:$0xff]
    %v3732 = vld [vmem:[#allocation5 + $0x20] sm:$0xff]
    %v3733 = vld [vmem:[#allocation5 + $0x28] sm:$0xff]
    %v3734 = vld [vmem:[#allocation5 + $0x30] sm:$0xff]
    %v3735 = vld [vmem:[#allocation5 + $0x38] sm:$0xff]
    %v3736 = vld [vmem:[#allocation5 + $0x40] sm:$0xff]
    %v3737 = vld [vmem:[#allocation5 + $0x48] sm:$0xff]
    %v3738 = vld [vmem:[#allocation5 + $0x50] sm:$0xff]
    %v3739 = vld [vmem:[#allocation5 + $0x58] sm:$0xff]
    %v3740 = vld [vmem:[#allocation5 + $0x60] sm:$0xff]
    %v3741 = vld [vmem:[#allocation5 + $0x68] sm:$0xff]
    %v3742 = vld [vmem:[#allocation5 + $0x70] sm:$0xff]
    %v3743 = vld [vmem:[#allocation5 + $0x78] sm:$0xff]
    %3744 = vmatprep.subr.mxu0 0.0
    %3745 = vmatpush1.msra.mxu0 %v3728
    %3746 = vmatprep.subr.mxu0 0.0
    %3747 = vmatpush1.msra.mxu0 %v3729
    %3748 = vmatprep.subr.mxu0 0.0
    %3749 = vmatpush1.msra.mxu0 %v3730
    %3750 = vmatprep.subr.mxu0 0.0
    %3751 = vmatpush1.msra.mxu0 %v3731
    %3752 = vmatprep.subr.mxu0 0.0
    %3753 = vmatpush1.msra.mxu0 %v3732
    %3754 = vmatprep.subr.mxu0 0.0
    %3755 = vmatpush1.msra.mxu0 %v3733
    %3756 = vmatprep.subr.mxu0 0.0
    %3757 = vmatpush1.msra.mxu0 %v3734
    %3758 = vmatprep.subr.mxu0 0.0
    %3759 = vmatpush1.msra.mxu0 %v3735
    %3760 = vmatprep.subr.mxu0 0.0
    %3761 = vmatpush1.msra.mxu0 %v3736
    %3762 = vmatprep.subr.mxu0 0.0
    %3763 = vmatpush1.msra.mxu0 %v3737
    %3764 = vmatprep.subr.mxu0 0.0
    %3765 = vmatpush1.msra.mxu0 %v3738
    %3766 = vmatprep.subr.mxu0 0.0
    %3767 = vmatpush1.msra.mxu0 %v3739
    %3768 = vmatprep.subr.mxu0 0.0
    %3769 = vmatpush1.msra.mxu0 %v3740
    %3770 = vmatprep.subr.mxu0 0.0
    %3771 = vmatpush1.msra.mxu0 %v3741
    %3772 = vmatprep.subr.mxu0 0.0
    %3773 = vmatpush1.msra.mxu0 %v3742
    %3774 = vmatprep.subr.mxu0 0.0
    %3775 = vmatpush1.msra.mxu0 %v3743
    %3776 = vmatprep.subr.mxu0 0.0
    %3777 = vmatpush1.msra.mxu0 0.0
    %3778 = vmatprep.subr.mxu0 0.0
    %3779 = vmatpush1.msra.mxu0 0.0
    %3780 = vmatprep.subr.mxu0 0.0
    %3781 = vmatpush1.msra.mxu0 0.0
    %3782 = vmatprep.subr.mxu0 0.0
    %3783 = vmatpush1.msra.mxu0 0.0
    %3784 = vmatprep.subr.mxu0 0.0
    %3785 = vmatpush1.msra.mxu0 0.0
    %3786 = vmatprep.subr.mxu0 0.0
    %3787 = vmatpush1.msra.mxu0 0.0
    %3788 = vmatprep.subr.mxu0 0.0
    %3789 = vmatpush1.msra.mxu0 0.0
    %3790 = vmatprep.subr.mxu0 0.0
    %3791 = vmatpush1.msra.mxu0 0.0
    %3792 = vmatprep.subr.mxu0 0.0
    %3793 = vmatpush1.msra.mxu0 0.0
    %3794 = vmatprep.subr.mxu0 0.0
    %3795 = vmatpush1.msra.mxu0 0.0
    %3796 = vmatprep.subr.mxu0 0.0
    %3797 = vmatpush1.msra.mxu0 0.0
    %3798 = vmatprep.subr.mxu0 0.0
    %3799 = vmatpush1.msra.mxu0 0.0
    %3800 = vmatprep.subr.mxu0 0.0
    %3801 = vmatpush1.msra.mxu0 0.0
    %3802 = vmatprep.subr.mxu0 0.0
    %3803 = vmatpush1.msra.mxu0 0.0
    %3804 = vmatprep.subr.mxu0 0.0
    %3805 = vmatpush1.msra.mxu0 0.0
    %3806 = vmatprep.subr.mxu0 0.0
    %3807 = vmatpush1.msra.mxu0 0.0
    %3808 = vmatprep.mubr.f32.mxu0 0.0
    %3809 = vmatmul.mubr.f32.gmra.mrb[0].mxu0 %v3710
    %v3810 = vpop.f32.mrb[0].mxu0
    %v3811 = vadd.f32 0.0, %v3810
    %v3812 = vpop.f32.mrb[0].mxu0
    %3813 = vmatprep.mubr.f32.mxu0 0.0
    %3814 = vmatmul.mubr.f32.gmra.mrb[0].mxu0 %v3715
    %v3815 = vpop.f32.mrb[0].mxu0
    %v3816 = vadd.f32 0.0, %v3815
    %v3817 = vpop.f32.mrb[0].mxu0
    %3818 = vmatprep.mubr.f32.mxu0 0.0
    %3819 = vmatmul.mubr.f32.gmra.mrb[0].mxu0 %v3720
    %v3820 = vpop.f32.mrb[0].mxu0
    %v3821 = vadd.f32 0.0, %v3820
    %v3822 = vpop.f32.mrb[0].mxu0
    %3823 = vmatprep.mubr.f32.mxu0 0.0
    %3824 = vmatmul.mubr.f32.gmra.mrb[0].mxu0 %v3725
    %v3825 = vpop.f32.mrb[0].mxu0
    %v3826 = vadd.f32 0.0, %v3825
    %v3827 = vpop.f32.mrb[0].mxu0
    %3828 = vdwg.mxu0
    %v3829 = vadd.f32 %v3622, %v3811
    %v3830 = vadd.f32 %v3623, %v3816
    %v3831 = vadd.f32 %v3624, %v3821
    %v3832 = vadd.f32 %v3625, %v3826
    %3833 = vst [vmem:[#allocation2 + $0x60] sm:$0xff] %v3829
    %3834 = vst [vmem:[#allocation2 + $0x68] sm:$0xff] %v3830
    %3835 = vst [vmem:[#allocation2 + $0x70] sm:$0xff] %v3831
    %3836 = vst [vmem:[#allocation2 + $0x78] sm:$0xff] %v3832
    %v3837 = vld [vmem:[#allocation2] sm:$0xff]
    %v3838 = vld [vmem:[#allocation2 + $0x8] sm:$0xff]
    %v3839 = vld [vmem:[#allocation2 + $0x10] sm:$0xff]
    %v3840 = vld [vmem:[#allocation2 + $0x18] sm:$0xff]
    %v3841 = vld [vmem:[#allocation2 + $0x20] sm:$0xff]
    %v3842 = vld [vmem:[#allocation2 + $0x28] sm:$0xff]
    %v3843 = vld [vmem:[#allocation2 + $0x30] sm:$0xff]
    %v3844 = vld [vmem:[#allocation2 + $0x38] sm:$0xff]
    %v3845 = vld [vmem:[#allocation2 + $0x40] sm:$0xff]
    %v3846 = vld [vmem:[#allocation2 + $0x48] sm:$0xff]
    %v3847 = vld [vmem:[#allocation2 + $0x50] sm:$0xff]
    %v3848 = vld [vmem:[#allocation2 + $0x58] sm:$0xff]
    %v3849 = vld [vmem:[#allocation2 + $0x60] sm:$0xff]
    %v3850 = vld [vmem:[#allocation2 + $0x68] sm:$0xff]
    %v3851 = vld [vmem:[#allocation2 + $0x70] sm:$0xff]
    %v3852 = vld [vmem:[#allocation2 + $0x78] sm:$0xff]
    %v3853 = vld [vmem:[%s5] sm:$0x1]
    %v3854 = vld [vmem:[%s6] sm:$0x1]
    %3855 = vmatprep.subr.mxu0 0.0
    %3856 = vmatpush1.msra.mxu0 %v3837
    %3857 = vmatprep.subr.mxu0 0.0
    %3858 = vmatpush1.msra.mxu0 %v3838
    %3859 = vmatprep.subr.mxu0 0.0
    %3860 = vmatpush1.msra.mxu0 %v3839
    %3861 = vmatprep.subr.mxu0 0.0
    %3862 = vmatpush1.msra.mxu0 %v3840
    %3863 = vmatprep.subr.mxu0 0.0
    %3864 = vmatpush1.msra.mxu0 %v3841
    %3865 = vmatprep.subr.mxu0 0.0
    %3866 = vmatpush1.msra.mxu0 %v3842
    %3867 = vmatprep.subr.mxu0 0.0
    %3868 = vmatpush1.msra.mxu0 %v3843
    %3869 = vmatprep.subr.mxu0 0.0
    %3870 = vmatpush1.msra.mxu0 %v3844
    %3871 = vmatprep.subr.mxu0 0.0
    %3872 = vmatpush1.msra.mxu0 %v3845
    %3873 = vmatprep.subr.mxu0 0.0
    %3874 = vmatpush1.msra.mxu0 %v3846
    %3875 = vmatprep.subr.mxu0 0.0
    %3876 = vmatpush1.msra.mxu0 %v3847
    %3877 = vmatprep.subr.mxu0 0.0
    %3878 = vmatpush1.msra.mxu0 %v3848
    %3879 = vmatprep.subr.mxu0 0.0
    %3880 = vmatpush1.msra.mxu0 %v3849
    %3881 = vmatprep.subr.mxu0 0.0
    %3882 = vmatpush1.msra.mxu0 %v3850
    %3883 = vmatprep.subr.mxu0 0.0
    %3884 = vmatpush1.msra.mxu0 %v3851
    %3885 = vmatprep.subr.mxu0 0.0
    %3886 = vmatpush1.msra.mxu0 %v3852
    %3887 = vmatprep.subr.mxu0 0.0
    %3888 = vmatpush1.msra.mxu0 0.0
    %3889 = vmatprep.subr.mxu0 0.0
    %3890 = vmatpush1.msra.mxu0 0.0
    %3891 = vmatprep.subr.mxu0 0.0
    %3892 = vmatpush1.msra.mxu0 0.0
    %3893 = vmatprep.subr.mxu0 0.0
    %3894 = vmatpush1.msra.mxu0 0.0
    %3895 = vmatprep.subr.mxu0 0.0
    %3896 = vmatpush1.msra.mxu0 0.0
    %3897 = vmatprep.subr.mxu0 0.0
    %3898 = vmatpush1.msra.mxu0 0.0
    %3899 = vmatprep.subr.mxu0 0.0
    %3900 = vmatpush1.msra.mxu0 0.0
    %3901 = vmatprep.subr.mxu0 0.0
    %3902 = vmatpush1.msra.mxu0 0.0
    %3903 = vmatprep.subr.mxu0 0.0
    %3904 = vmatpush1.msra.mxu0 0.0
    %3905 = vmatprep.subr.mxu0 0.0
    %3906 = vmatpush1.msra.mxu0 0.0
    %3907 = vmatprep.subr.mxu0 0.0
    %3908 = vmatpush1.msra.mxu0 0.0
    %3909 = vmatprep.subr.mxu0 0.0
    %3910 = vmatpush1.msra.mxu0 0.0
    %3911 = vmatprep.subr.mxu0 0.0
    %3912 = vmatpush1.msra.mxu0 0.0
    %3913 = vmatprep.subr.mxu0 0.0
    %3914 = vmatpush1.msra.mxu0 0.0
    %3915 = vmatprep.subr.mxu0 0.0
    %3916 = vmatpush1.msra.mxu0 0.0
    %3917 = vmatprep.subr.mxu0 0.0
    %3918 = vmatpush1.msra.mxu0 0.0
    %3919 = vmatprep.mubr.f32.mxu0 0.0
    %3920 = vmatmul.mubr.f32.gmra.mrb[0].mxu0 1.0
    %v3921 = vpop.f32.mrb[0].mxu0
    %v3922 = vadd.f32 0.0, %v3921
    %v3923 = vpop.f32.mrb[0].mxu0
    %3924 = vdwg.mxu0
    %v3925 = vmul.f32 %v3922, 0.0078125
    %v3926 = vlaneseq
    %v3927 = vshrl.u32 %v3926, 7
    %v3928 = vsub.s32 0, %v3927
    %v3929 = vrot.slane %v3925, %v3928
    %v3930 = vsub.f32 %v3837, %v3929
    %v3931 = vsub.f32 %v3838, %v3929
    %v3932 = vsub.f32 %v3839, %v3929
    %v3933 = vsub.f32 %v3840, %v3929
    %v3934 = vsub.f32 %v3841, %v3929
    %v3935 = vsub.f32 %v3842, %v3929
    %v3936 = vsub.f32 %v3843, %v3929
    %v3937 = vsub.f32 %v3844, %v3929
    %v3938 = vsub.f32 %v3845, %v3929
    %v3939 = vsub.f32 %v3846, %v3929
    %v3940 = vsub.f32 %v3847, %v3929
    %v3941 = vsub.f32 %v3848, %v3929
    %v3942 = vsub.f32 %v3849, %v3929
    %v3943 = vsub.f32 %v3850, %v3929
    %v3944 = vsub.f32 %v3851, %v3929
    %v3945 = vsub.f32 %v3852, %v3929
    %v3946 = vmul.f32 %v3930, %v3930
    %v3947 = vmul.f32 %v3931, %v3931
    %v3948 = vmul.f32 %v3932, %v3932
    %v3949 = vmul.f32 %v3933, %v3933
    %v3950 = vmul.f32 %v3934, %v3934
    %v3951 = vmul.f32 %v3935, %v3935
    %v3952 = vmul.f32 %v3936, %v3936
    %v3953 = vmul.f32 %v3937, %v3937
    %v3954 = vmul.f32 %v3938, %v3938
    %v3955 = vmul.f32 %v3939, %v3939
    %v3956 = vmul.f32 %v3940, %v3940
    %v3957 = vmul.f32 %v3941, %v3941
    %v3958 = vmul.f32 %v3942, %v3942
    %v3959 = vmul.f32 %v3943, %v3943
    %v3960 = vmul.f32 %v3944, %v3944
    %v3961 = vmul.f32 %v3945, %v3945
    %3962 = vmatprep.subr.mxu0 0.0
    %3963 = vmatpush1.msra.mxu0 %v3946
    %3964 = vmatprep.subr.mxu0 0.0
    %3965 = vmatpush1.msra.mxu0 %v3947
    %3966 = vmatprep.subr.mxu0 0.0
    %3967 = vmatpush1.msra.mxu0 %v3948
    %3968 = vmatprep.subr.mxu0 0.0
    %3969 = vmatpush1.msra.mxu0 %v3949
    %3970 = vmatprep.subr.mxu0 0.0
    %3971 = vmatpush1.msra.mxu0 %v3950
    %3972 = vmatprep.subr.mxu0 0.0
    %3973 = vmatpush1.msra.mxu0 %v3951
    %3974 = vmatprep.subr.mxu0 0.0
    %3975 = vmatpush1.msra.mxu0 %v3952
    %3976 = vmatprep.subr.mxu0 0.0
    %3977 = vmatpush1.msra.mxu0 %v3953
    %3978 = vmatprep.subr.mxu0 0.0
    %3979 = vmatpush1.msra.mxu0 %v3954
    %3980 = vmatprep.subr.mxu0 0.0
    %3981 = vmatpush1.msra.mxu0 %v3955
    %3982 = vmatprep.subr.mxu0 0.0
    %3983 = vmatpush1.msra.mxu0 %v3956
    %3984 = vmatprep.subr.mxu0 0.0
    %3985 = vmatpush1.msra.mxu0 %v3957
    %3986 = vmatprep.subr.mxu0 0.0
    %3987 = vmatpush1.msra.mxu0 %v3958
    %3988 = vmatprep.subr.mxu0 0.0
    %3989 = vmatpush1.msra.mxu0 %v3959
    %3990 = vmatprep.subr.mxu0 0.0
    %3991 = vmatpush1.msra.mxu0 %v3960
    %3992 = vmatprep.subr.mxu0 0.0
    %3993 = vmatpush1.msra.mxu0 %v3961
    %3994 = vmatprep.subr.mxu0 0.0
    %3995 = vmatpush1.msra.mxu0 0.0
    %3996 = vmatprep.subr.mxu0 0.0
    %3997 = vmatpush1.msra.mxu0 0.0
    %3998 = vmatprep.subr.mxu0 0.0
    %3999 = vmatpush1.msra.mxu0 0.0
    %4000 = vmatprep.subr.mxu0 0.0
    %4001 = vmatpush1.msra.mxu0 0.0
    %4002 = vmatprep.subr.mxu0 0.0
    %4003 = vmatpush1.msra.mxu0 0.0
    %4004 = vmatprep.subr.mxu0 0.0
    %4005 = vmatpush1.msra.mxu0 0.0
    %4006 = vmatprep.subr.mxu0 0.0
    %4007 = vmatpush1.msra.mxu0 0.0
    %4008 = vmatprep.subr.mxu0 0.0
    %4009 = vmatpush1.msra.mxu0 0.0
    %4010 = vmatprep.subr.mxu0 0.0
    %4011 = vmatpush1.msra.mxu0 0.0
    %4012 = vmatprep.subr.mxu0 0.0
    %4013 = vmatpush1.msra.mxu0 0.0
    %4014 = vmatprep.subr.mxu0 0.0
    %4015 = vmatpush1.msra.mxu0 0.0
    %4016 = vmatprep.subr.mxu0 0.0
    %4017 = vmatpush1.msra.mxu0 0.0
    %4018 = vmatprep.subr.mxu0 0.0
    %4019 = vmatpush1.msra.mxu0 0.0
    %4020 = vmatprep.subr.mxu0 0.0
    %4021 = vmatpush1.msra.mxu0 0.0
    %4022 = vmatprep.subr.mxu0 0.0
    %4023 = vmatpush1.msra.mxu0 0.0
    %4024 = vmatprep.subr.mxu0 0.0
    %4025 = vmatpush1.msra.mxu0 0.0
    %4026 = vmatprep.mubr.f32.mxu0 0.0
    %4027 = vmatmul.mubr.f32.gmra.mrb[0].mxu0 1.0
    %v4028 = vpop.f32.mrb[0].mxu0
    %v4029 = vadd.f32 0.0, %v4028
    %v4030 = vpop.f32.mrb[0].mxu0
    %4031 = vdwg.mxu0
    %v4032 = vmul.f32 %v4029, 0.0078125
    %v4034 = vlaneseq
    %v4035 = vshrl.u32 %v4034, 7
    %v4036 = vsub.s32 0, %v4035
    %v4037 = vrot.slane %v3853, %v4036
    %v4039 = vmul.f32 %v3930, %v4037
    %v4040 = vmul.f32 %v3931, %v4037
    %v4041 = vmul.f32 %v3932, %v4037
    %v4042 = vmul.f32 %v3933, %v4037
    %v4043 = vmul.f32 %v3934, %v4037
    %v4044 = vmul.f32 %v3935, %v4037
    %v4045 = vmul.f32 %v3936, %v4037
    %v4046 = vmul.f32 %v3937, %v4037
    %v4047 = vmul.f32 %v3938, %v4037
    %v4048 = vmul.f32 %v3939, %v4037
    %v4049 = vmul.f32 %v3940, %v4037
    %v4050 = vmul.f32 %v3941, %v4037
    %v4051 = vmul.f32 %v3942, %v4037
    %v4052 = vmul.f32 %v3943, %v4037
    %v4053 = vmul.f32 %v3944, %v4037
    %v4054 = vmul.f32 %v3945, %v4037
    %v4055 = vadd.f32 %v4032, 1e-05
    %v4056 = vrsqrt.pop %v4055
    %v4057 = vlaneseq
    %v4058 = vshrl.u32 %v4057, 7
    %v4059 = vsub.s32 0, %v4058
    %v4060 = vrot.slane %v4056, %v4059
    %v4061 = vmul.f32 %v4039, %v4060
    %v4062 = vmul.f32 %v4040, %v4060
    %v4063 = vmul.f32 %v4041, %v4060
    %v4064 = vmul.f32 %v4042, %v4060
    %v4065 = vmul.f32 %v4043, %v4060
    %v4066 = vmul.f32 %v4044, %v4060
    %v4067 = vmul.f32 %v4045, %v4060
    %v4068 = vmul.f32 %v4046, %v4060
    %v4069 = vmul.f32 %v4047, %v4060
    %v4070 = vmul.f32 %v4048, %v4060
    %v4071 = vmul.f32 %v4049, %v4060
    %v4072 = vmul.f32 %v4050, %v4060
    %v4073 = vmul.f32 %v4051, %v4060
    %v4074 = vmul.f32 %v4052, %v4060
    %v4075 = vmul.f32 %v4053, %v4060
    %v4076 = vmul.f32 %v4054, %v4060
    %v4078 = vlaneseq
    %v4079 = vshrl.u32 %v4078, 7
    %v4080 = vsub.s32 0, %v4079
    %v4081 = vrot.slane %v3854, %v4080
    %v4083 = vadd.f32 %v4061, %v4081
    %v4084 = vadd.f32 %v4062, %v4081
    %v4085 = vadd.f32 %v4063, %v4081
    %v4086 = vadd.f32 %v4064, %v4081
    %v4087 = vadd.f32 %v4065, %v4081
    %v4088 = vadd.f32 %v4066, %v4081
    %v4089 = vadd.f32 %v4067, %v4081
    %v4090 = vadd.f32 %v4068, %v4081
    %v4091 = vadd.f32 %v4069, %v4081
    %v4092 = vadd.f32 %v4070, %v4081
    %v4093 = vadd.f32 %v4071, %v4081
    %v4094 = vadd.f32 %v4072, %v4081
    %v4095 = vadd.f32 %v4073, %v4081
    %v4096 = vadd.f32 %v4074, %v4081
    %v4097 = vadd.f32 %v4075, %v4081
    %v4098 = vadd.f32 %v4076, %v4081
    %v4099 = vmax.f32 %v4083, 0.0
    %v4100 = vmax.f32 %v4084, 0.0
    %v4101 = vmax.f32 %v4085, 0.0
    %v4102 = vmax.f32 %v4086, 0.0
    %v4103 = vmax.f32 %v4087, 0.0
    %v4104 = vmax.f32 %v4088, 0.0
    %v4105 = vmax.f32 %v4089, 0.0
    %v4106 = vmax.f32 %v4090, 0.0
    %v4107 = vmax.f32 %v4091, 0.0
    %v4108 = vmax.f32 %v4092, 0.0
    %v4109 = vmax.f32 %v4093, 0.0
    %v4110 = vmax.f32 %v4094, 0.0
    %v4111 = vmax.f32 %v4095, 0.0
    %v4112 = vmax.f32 %v4096, 0.0
    %v4113 = vmax.f32 %v4097, 0.0
    %v4114 = vmax.f32 %v4098, 0.0
    %v4115 = vld [vmem:[%s9] sm:$0xff]
    %v4116 = vld [vmem:[%s9 + $0x8] sm:$0xff]
    %v4117 = vld [vmem:[%s9 + $0x10] sm:$0xff]
    %v4118 = vld [vmem:[%s9 + $0x18] sm:$0xff]
    %v4119 = vld [vmem:[%s9 + $0x20] sm:$0xff]
    %v4120 = vld [vmem:[%s9 + $0x28] sm:$0xff]
    %v4121 = vld [vmem:[%s9 + $0x30] sm:$0xff]
    %v4122 = vld [vmem:[%s9 + $0x38] sm:$0xff]
    %v4123 = vld [vmem:[%s9 + $0x40] sm:$0xff]
    %v4124 = vld [vmem:[%s9 + $0x48] sm:$0xff]
    %v4125 = vld [vmem:[%s9 + $0x50] sm:$0xff]
    %v4126 = vld [vmem:[%s9 + $0x58] sm:$0xff]
    %v4127 = vld [vmem:[%s9 + $0x60] sm:$0xff]
    %v4128 = vld [vmem:[%s9 + $0x68] sm:$0xff]
    %v4129 = vld [vmem:[%s9 + $0x70] sm:$0xff]
    %v4130 = vld [vmem:[%s9 + $0x78] sm:$0xff]
    %4131 = vmatprep.subr.mxu0 0.0
    %4132 = vmatpush1.msra.mxu0 %v4099
    %4133 = vmatprep.subr.mxu0 0.0
    %4134 = vmatpush1.msra.mxu0 %v4100
    %4135 = vmatprep.subr.mxu0 0.0
    %4136 = vmatpush1.msra.mxu0 %v4101
    %4137 = vmatprep.subr.mxu0 0.0
    %4138 = vmatpush1.msra.mxu0 %v4102
    %4139 = vmatprep.subr.mxu0 0.0
    %4140 = vmatpush1.msra.mxu0 %v4103
    %4141 = vmatprep.subr.mxu0 0.0
    %4142 = vmatpush1.msra.mxu0 %v4104
    %4143 = vmatprep.subr.mxu0 0.0
    %4144 = vmatpush1.msra.mxu0 %v4105
    %4145 = vmatprep.subr.mxu0 0.0
    %4146 = vmatpush1.msra.mxu0 %v4106
    %4147 = vmatprep.subr.mxu0 0.0
    %4148 = vmatpush1.msra.mxu0 %v4107
    %4149 = vmatprep.subr.mxu0 0.0
    %4150 = vmatpush1.msra.mxu0 %v4108
    %4151 = vmatprep.subr.mxu0 0.0
    %4152 = vmatpush1.msra.mxu0 %v4109
    %4153 = vmatprep.subr.mxu0 0.0
    %4154 = vmatpush1.msra.mxu0 %v4110
    %4155 = vmatprep.subr.mxu0 0.0
    %4156 = vmatpush1.msra.mxu0 %v4111
    %4157 = vmatprep.subr.mxu0 0.0
    %4158 = vmatpush1.msra.mxu0 %v4112
    %4159 = vmatprep.subr.mxu0 0.0
    %4160 = vmatpush1.msra.mxu0 %v4113
    %4161 = vmatprep.subr.mxu0 0.0
    %4162 = vmatpush1.msra.mxu0 %v4114
    %4163 = vmatprep.subr.mxu0 0.0
    %4164 = vmatpush1.msra.mxu0 0.0
    %4165 = vmatprep.subr.mxu0 0.0
    %4166 = vmatpush1.msra.mxu0 0.0
    %4167 = vmatprep.subr.mxu0 0.0
    %4168 = vmatpush1.msra.mxu0 0.0
    %4169 = vmatprep.subr.mxu0 0.0
    %4170 = vmatpush1.msra.mxu0 0.0
    %4171 = vmatprep.subr.mxu0 0.0
    %4172 = vmatpush1.msra.mxu0 0.0
    %4173 = vmatprep.subr.mxu0 0.0
    %4174 = vmatpush1.msra.mxu0 0.0
    %4175 = vmatprep.subr.mxu0 0.0
    %4176 = vmatpush1.msra.mxu0 0.0
    %4177 = vmatprep.subr.mxu0 0.0
    %4178 = vmatpush1.msra.mxu0 0.0
    %4179 = vmatprep.subr.mxu0 0.0
    %4180 = vmatpush1.msra.mxu0 0.0
    %4181 = vmatprep.subr.mxu0 0.0
    %4182 = vmatpush1.msra.mxu0 0.0
    %4183 = vmatprep.subr.mxu0 0.0
    %4184 = vmatpush1.msra.mxu0 0.0
    %4185 = vmatprep.subr.mxu0 0.0
    %4186 = vmatpush1.msra.mxu0 0.0
    %4187 = vmatprep.subr.mxu0 0.0
    %4188 = vmatpush1.msra.mxu0 0.0
    %4189 = vmatprep.subr.mxu0 0.0
    %4190 = vmatpush1.msra.mxu0 0.0
    %4191 = vmatprep.subr.mxu0 0.0
    %4192 = vmatpush1.msra.mxu0 0.0
    %4193 = vmatprep.subr.mxu0 0.0
    %4194 = vmatpush1.msra.mxu0 0.0
    %4195 = vmatprep.mubr.f32.mxu0 0.0
    %4196 = vmatmul.mubr.f32.gmra.mrb[0].mxu0 %v4115
    %v4197 = vpop.f32.mrb[0].mxu0
    %v4198 = vadd.f32 0.0, %v4197
    %v4199 = vpop.f32.mrb[0].mxu0
    %4200 = vmatprep.mubr.f32.mxu0 0.0
    %4201 = vmatmul.mubr.f32.gmra.mrb[0].mxu0 %v4116
    %v4202 = vpop.f32.mrb[0].mxu0
    %v4203 = vadd.f32 0.0, %v4202
    %v4204 = vpop.f32.mrb[0].mxu0
    %4205 = vmatprep.mubr.f32.mxu0 0.0
    %4206 = vmatmul.mubr.f32.gmra.mrb[0].mxu0 %v4117
    %v4207 = vpop.f32.mrb[0].mxu0
    %v4208 = vadd.f32 0.0, %v4207
    %v4209 = vpop.f32.mrb[0].mxu0
    %4210 = vmatprep.mubr.f32.mxu0 0.0
    %4211 = vmatmul.mubr.f32.gmra.mrb[0].mxu0 %v4118
    %v4212 = vpop.f32.mrb[0].mxu0
    %v4213 = vadd.f32 0.0, %v4212
    %v4214 = vpop.f32.mrb[0].mxu0
    %4215 = vmatprep.mubr.f32.mxu0 0.0
    %4216 = vmatmul.mubr.f32.gmra.mrb[0].mxu0 %v4119
    %v4217 = vpop.f32.mrb[0].mxu0
    %v4218 = vadd.f32 0.0, %v4217
    %v4219 = vpop.f32.mrb[0].mxu0
    %4220 = vmatprep.mubr.f32.mxu0 0.0
    %4221 = vmatmul.mubr.f32.gmra.mrb[0].mxu0 %v4120
    %v4222 = vpop.f32.mrb[0].mxu0
    %v4223 = vadd.f32 0.0, %v4222
    %v4224 = vpop.f32.mrb[0].mxu0
    %4225 = vmatprep.mubr.f32.mxu0 0.0
    %4226 = vmatmul.mubr.f32.gmra.mrb[0].mxu0 %v4121
    %v4227 = vpop.f32.mrb[0].mxu0
    %v4228 = vadd.f32 0.0, %v4227
    %v4229 = vpop.f32.mrb[0].mxu0
    %4230 = vmatprep.mubr.f32.mxu0 0.0
    %4231 = vmatmul.mubr.f32.gmra.mrb[0].mxu0 %v4122
    %v4232 = vpop.f32.mrb[0].mxu0
    %v4233 = vadd.f32 0.0, %v4232
    %v4234 = vpop.f32.mrb[0].mxu0
    %4235 = vmatprep.mubr.f32.mxu0 0.0
    %4236 = vmatmul.mubr.f32.gmra.mrb[0].mxu0 %v4123
    %v4237 = vpop.f32.mrb[0].mxu0
    %v4238 = vadd.f32 0.0, %v4237
    %v4239 = vpop.f32.mrb[0].mxu0
    %4240 = vmatprep.mubr.f32.mxu0 0.0
    %4241 = vmatmul.mubr.f32.gmra.mrb[0].mxu0 %v4124
    %v4242 = vpop.f32.mrb[0].mxu0
    %v4243 = vadd.f32 0.0, %v4242
    %v4244 = vpop.f32.mrb[0].mxu0
    %4245 = vmatprep.mubr.f32.mxu0 0.0
    %4246 = vmatmul.mubr.f32.gmra.mrb[0].mxu0 %v4125
    %v4247 = vpop.f32.mrb[0].mxu0
    %v4248 = vadd.f32 0.0, %v4247
    %v4249 = vpop.f32.mrb[0].mxu0
    %4250 = vmatprep.mubr.f32.mxu0 0.0
    %4251 = vmatmul.mubr.f32.gmra.mrb[0].mxu0 %v4126
    %v4252 = vpop.f32.mrb[0].mxu0
    %v4253 = vadd.f32 0.0, %v4252
    %v4254 = vpop.f32.mrb[0].mxu0
    %4255 = vmatprep.mubr.f32.mxu0 0.0
    %4256 = vmatmul.mubr.f32.gmra.mrb[0].mxu0 %v4127
    %v4257 = vpop.f32.mrb[0].mxu0
    %v4258 = vadd.f32 0.0, %v4257
    %v4259 = vpop.f32.mrb[0].mxu0
    %4260 = vmatprep.mubr.f32.mxu0 0.0
    %4261 = vmatmul.mubr.f32.gmra.mrb[0].mxu0 %v4128
    %v4262 = vpop.f32.mrb[0].mxu0
    %v4263 = vadd.f32 0.0, %v4262
    %v4264 = vpop.f32.mrb[0].mxu0
    %4265 = vmatprep.mubr.f32.mxu0 0.0
    %4266 = vmatmul.mubr.f32.gmra.mrb[0].mxu0 %v4129
    %v4267 = vpop.f32.mrb[0].mxu0
    %v4268 = vadd.f32 0.0, %v4267
    %v4269 = vpop.f32.mrb[0].mxu0
    %4270 = vmatprep.mubr.f32.mxu0 0.0
    %4271 = vmatmul.mubr.f32.gmra.mrb[0].mxu0 %v4130
    %v4272 = vpop.f32.mrb[0].mxu0
    %v4273 = vadd.f32 0.0, %v4272
    %v4274 = vpop.f32.mrb[0].mxu0
    %4275 = vdwg.mxu0
    %s4276 = scalar_lea.vmem [#allocation7], 1920
    %v4277 = vld [vmem:[%s4276] sm:$0xff]
    %v4278 = vld [vmem:[%s4276 + $0x8] sm:$0xff]
    %v4279 = vld [vmem:[%s4276 + $0x10] sm:$0xff]
    %v4280 = vld [vmem:[%s4276 + $0x18] sm:$0xff]
    %v4281 = vld [vmem:[%s4276 + $0x20] sm:$0xff]
    %v4282 = vld [vmem:[%s4276 + $0x28] sm:$0xff]
    %v4283 = vld [vmem:[%s4276 + $0x30] sm:$0xff]
    %v4284 = vld [vmem:[%s4276 + $0x38] sm:$0xff]
    %v4285 = vld [vmem:[%s4276 + $0x40] sm:$0xff]
    %v4286 = vld [vmem:[%s4276 + $0x48] sm:$0xff]
    %v4287 = vld [vmem:[%s4276 + $0x50] sm:$0xff]
    %v4288 = vld [vmem:[%s4276 + $0x58] sm:$0xff]
    %v4289 = vld [vmem:[%s4276 + $0x60] sm:$0xff]
    %v4290 = vld [vmem:[%s4276 + $0x68] sm:$0xff]
    %v4291 = vld [vmem:[%s4276 + $0x70] sm:$0xff]
    %v4292 = vld [vmem:[%s4276 + $0x78] sm:$0xff]
    %s4293 = scalar_lea.vmem %s9, 128
    %v4294 = vld [vmem:[%s4293] sm:$0xff]
    %v4295 = vld [vmem:[%s4293 + $0x8] sm:$0xff]
    %v4296 = vld [vmem:[%s4293 + $0x10] sm:$0xff]
    %v4297 = vld [vmem:[%s4293 + $0x18] sm:$0xff]
    %v4298 = vld [vmem:[%s4293 + $0x20] sm:$0xff]
    %v4299 = vld [vmem:[%s4293 + $0x28] sm:$0xff]
    %v4300 = vld [vmem:[%s4293 + $0x30] sm:$0xff]
    %v4301 = vld [vmem:[%s4293 + $0x38] sm:$0xff]
    %v4302 = vld [vmem:[%s4293 + $0x40] sm:$0xff]
    %v4303 = vld [vmem:[%s4293 + $0x48] sm:$0xff]
    %v4304 = vld [vmem:[%s4293 + $0x50] sm:$0xff]
    %v4305 = vld [vmem:[%s4293 + $0x58] sm:$0xff]
    %v4306 = vld [vmem:[%s4293 + $0x60] sm:$0xff]
    %v4307 = vld [vmem:[%s4293 + $0x68] sm:$0xff]
    %v4308 = vld [vmem:[%s4293 + $0x70] sm:$0xff]
    %v4309 = vld [vmem:[%s4293 + $0x78] sm:$0xff]
    %4310 = vmatprep.subr.mxu0 0.0
    %4311 = vmatpush1.msra.mxu0 %v4099
    %4312 = vmatprep.subr.mxu0 0.0
    %4313 = vmatpush1.msra.mxu0 %v4100
    %4314 = vmatprep.subr.mxu0 0.0
    %4315 = vmatpush1.msra.mxu0 %v4101
    %4316 = vmatprep.subr.mxu0 0.0
    %4317 = vmatpush1.msra.mxu0 %v4102
    %4318 = vmatprep.subr.mxu0 0.0
    %4319 = vmatpush1.msra.mxu0 %v4103
    %4320 = vmatprep.subr.mxu0 0.0
    %4321 = vmatpush1.msra.mxu0 %v4104
    %4322 = vmatprep.subr.mxu0 0.0
    %4323 = vmatpush1.msra.mxu0 %v4105
    %4324 = vmatprep.subr.mxu0 0.0
    %4325 = vmatpush1.msra.mxu0 %v4106
    %4326 = vmatprep.subr.mxu0 0.0
    %4327 = vmatpush1.msra.mxu0 %v4107
    %4328 = vmatprep.subr.mxu0 0.0
    %4329 = vmatpush1.msra.mxu0 %v4108
    %4330 = vmatprep.subr.mxu0 0.0
    %4331 = vmatpush1.msra.mxu0 %v4109
    %4332 = vmatprep.subr.mxu0 0.0
    %4333 = vmatpush1.msra.mxu0 %v4110
    %4334 = vmatprep.subr.mxu0 0.0
    %4335 = vmatpush1.msra.mxu0 %v4111
    %4336 = vmatprep.subr.mxu0 0.0
    %4337 = vmatpush1.msra.mxu0 %v4112
    %4338 = vmatprep.subr.mxu0 0.0
    %4339 = vmatpush1.msra.mxu0 %v4113
    %4340 = vmatprep.subr.mxu0 0.0
    %4341 = vmatpush1.msra.mxu0 %v4114
    %4342 = vmatprep.subr.mxu0 0.0
    %4343 = vmatpush1.msra.mxu0 0.0
    %4344 = vmatprep.subr.mxu0 0.0
    %4345 = vmatpush1.msra.mxu0 0.0
    %4346 = vmatprep.subr.mxu0 0.0
    %4347 = vmatpush1.msra.mxu0 0.0
    %4348 = vmatprep.subr.mxu0 0.0
    %4349 = vmatpush1.msra.mxu0 0.0
    %4350 = vmatprep.subr.mxu0 0.0
    %4351 = vmatpush1.msra.mxu0 0.0
    %4352 = vmatprep.subr.mxu0 0.0
    %4353 = vmatpush1.msra.mxu0 0.0
    %4354 = vmatprep.subr.mxu0 0.0
    %4355 = vmatpush1.msra.mxu0 0.0
    %4356 = vmatprep.subr.mxu0 0.0
    %4357 = vmatpush1.msra.mxu0 0.0
    %4358 = vmatprep.subr.mxu0 0.0
    %4359 = vmatpush1.msra.mxu0 0.0
    %4360 = vmatprep.subr.mxu0 0.0
    %4361 = vmatpush1.msra.mxu0 0.0
    %4362 = vmatprep.subr.mxu0 0.0
    %4363 = vmatpush1.msra.mxu0 0.0
    %4364 = vmatprep.subr.mxu0 0.0
    %4365 = vmatpush1.msra.mxu0 0.0
    %4366 = vmatprep.subr.mxu0 0.0
    %4367 = vmatpush1.msra.mxu0 0.0
    %4368 = vmatprep.subr.mxu0 0.0
    %4369 = vmatpush1.msra.mxu0 0.0
    %4370 = vmatprep.subr.mxu0 0.0
    %4371 = vmatpush1.msra.mxu0 0.0
    %4372 = vmatprep.subr.mxu0 0.0
    %4373 = vmatpush1.msra.mxu0 0.0
    %4374 = vmatprep.mubr.f32.mxu0 0.0
    %4375 = vmatmul.mubr.f32.gmra.mrb[0].mxu0 %v4294
    %v4376 = vpop.f32.mrb[0].mxu0
    %v4377 = vadd.f32 0.0, %v4376
    %v4378 = vpop.f32.mrb[0].mxu0
    %4379 = vmatprep.mubr.f32.mxu0 0.0
    %4380 = vmatmul.mubr.f32.gmra.mrb[0].mxu0 %v4295
    %v4381 = vpop.f32.mrb[0].mxu0
    %v4382 = vadd.f32 0.0, %v4381
    %v4383 = vpop.f32.mrb[0].mxu0
    %4384 = vmatprep.mubr.f32.mxu0 0.0
    %4385 = vmatmul.mubr.f32.gmra.mrb[0].mxu0 %v4296
    %v4386 = vpop.f32.mrb[0].mxu0
    %v4387 = vadd.f32 0.0, %v4386
    %v4388 = vpop.f32.mrb[0].mxu0
    %4389 = vmatprep.mubr.f32.mxu0 0.0
    %4390 = vmatmul.mubr.f32.gmra.mrb[0].mxu0 %v4297
    %v4391 = vpop.f32.mrb[0].mxu0
    %v4392 = vadd.f32 0.0, %v4391
    %v4393 = vpop.f32.mrb[0].mxu0
    %4394 = vmatprep.mubr.f32.mxu0 0.0
    %4395 = vmatmul.mubr.f32.gmra.mrb[0].mxu0 %v4298
    %v4396 = vpop.f32.mrb[0].mxu0
    %v4397 = vadd.f32 0.0, %v4396
    %v4398 = vpop.f32.mrb[0].mxu0
    %4399 = vmatprep.mubr.f32.mxu0 0.0
    %4400 = vmatmul.mubr.f32.gmra.mrb[0].mxu0 %v4299
    %v4401 = vpop.f32.mrb[0].mxu0
    %v4402 = vadd.f32 0.0, %v4401
    %v4403 = vpop.f32.mrb[0].mxu0
    %4404 = vmatprep.mubr.f32.mxu0 0.0
    %4405 = vmatmul.mubr.f32.gmra.mrb[0].mxu0 %v4300
    %v4406 = vpop.f32.mrb[0].mxu0
    %v4407 = vadd.f32 0.0, %v4406
    %v4408 = vpop.f32.mrb[0].mxu0
    %4409 = vmatprep.mubr.f32.mxu0 0.0
    %4410 = vmatmul.mubr.f32.gmra.mrb[0].mxu0 %v4301
    %v4411 = vpop.f32.mrb[0].mxu0
    %v4412 = vadd.f32 0.0, %v4411
    %v4413 = vpop.f32.mrb[0].mxu0
    %4414 = vmatprep.mubr.f32.mxu0 0.0
    %4415 = vmatmul.mubr.f32.gmra.mrb[0].mxu0 %v4302
    %v4416 = vpop.f32.mrb[0].mxu0
    %v4417 = vadd.f32 0.0, %v4416
    %v4418 = vpop.f32.mrb[0].mxu0
    %4419 = vmatprep.mubr.f32.mxu0 0.0
    %4420 = vmatmul.mubr.f32.gmra.mrb[0].mxu0 %v4303
    %v4421 = vpop.f32.mrb[0].mxu0
    %v4422 = vadd.f32 0.0, %v4421
    %v4423 = vpop.f32.mrb[0].mxu0
    %4424 = vmatprep.mubr.f32.mxu0 0.0
    %4425 = vmatmul.mubr.f32.gmra.mrb[0].mxu0 %v4304
    %v4426 = vpop.f32.mrb[0].mxu0
    %v4427 = vadd.f32 0.0, %v4426
    %v4428 = vpop.f32.mrb[0].mxu0
    %4429 = vmatprep.mubr.f32.mxu0 0.0
    %4430 = vmatmul.mubr.f32.gmra.mrb[0].mxu0 %v4305
    %v4431 = vpop.f32.mrb[0].mxu0
    %v4432 = vadd.f32 0.0, %v4431
    %v4433 = vpop.f32.mrb[0].mxu0
    %4434 = vmatprep.mubr.f32.mxu0 0.0
    %4435 = vmatmul.mubr.f32.gmra.mrb[0].mxu0 %v4306
    %v4436 = vpop.f32.mrb[0].mxu0
    %v4437 = vadd.f32 0.0, %v4436
    %v4438 = vpop.f32.mrb[0].mxu0
    %4439 = vmatprep.mubr.f32.mxu0 0.0
    %4440 = vmatmul.mubr.f32.gmra.mrb[0].mxu0 %v4307
    %v4441 = vpop.f32.mrb[0].mxu0
    %v4442 = vadd.f32 0.0, %v4441
    %v4443 = vpop.f32.mrb[0].mxu0
    %4444 = vmatprep.mubr.f32.mxu0 0.0
    %4445 = vmatmul.mubr.f32.gmra.mrb[0].mxu0 %v4308
    %v4446 = vpop.f32.mrb[0].mxu0
    %v4447 = vadd.f32 0.0, %v4446
    %v4448 = vpop.f32.mrb[0].mxu0
    %4449 = vmatprep.mubr.f32.mxu0 0.0
    %4450 = vmatmul.mubr.f32.gmra.mrb[0].mxu0 %v4309
    %v4451 = vpop.f32.mrb[0].mxu0
    %v4452 = vadd.f32 0.0, %v4451
    %v4453 = vpop.f32.mrb[0].mxu0
    %4454 = vdwg.mxu0
    %s4455 = scalar_lea.vmem [#allocation7], 1664
    %v4456 = vld [vmem:[%s4455] sm:$0xff]
    %v4457 = vld [vmem:[%s4455 + $0x8] sm:$0xff]
    %v4458 = vld [vmem:[%s4455 + $0x10] sm:$0xff]
    %v4459 = vld [vmem:[%s4455 + $0x18] sm:$0xff]
    %v4460 = vld [vmem:[%s4455 + $0x20] sm:$0xff]
    %v4461 = vld [vmem:[%s4455 + $0x28] sm:$0xff]
    %v4462 = vld [vmem:[%s4455 + $0x30] sm:$0xff]
    %v4463 = vld [vmem:[%s4455 + $0x38] sm:$0xff]
    %v4464 = vld [vmem:[%s4455 + $0x40] sm:$0xff]
    %v4465 = vld [vmem:[%s4455 + $0x48] sm:$0xff]
    %v4466 = vld [vmem:[%s4455 + $0x50] sm:$0xff]
    %v4467 = vld [vmem:[%s4455 + $0x58] sm:$0xff]
    %v4468 = vld [vmem:[%s4455 + $0x60] sm:$0xff]
    %v4469 = vld [vmem:[%s4455 + $0x68] sm:$0xff]
    %v4470 = vld [vmem:[%s4455 + $0x70] sm:$0xff]
    %v4471 = vld [vmem:[%s4455 + $0x78] sm:$0xff]
    %4472 = vmatprep.subr.mxu0 0.0
    %4473 = vmatpush1.msra.mxu0 %v4456
    %4474 = vmatprep.subr.mxu0 0.0
    %4475 = vmatpush1.msra.mxu0 %v4457
    %4476 = vmatprep.subr.mxu0 0.0
    %4477 = vmatpush1.msra.mxu0 %v4458
    %4478 = vmatprep.subr.mxu0 0.0
    %4479 = vmatpush1.msra.mxu0 %v4459
    %4480 = vmatprep.subr.mxu0 0.0
    %4481 = vmatpush1.msra.mxu0 %v4460
    %4482 = vmatprep.subr.mxu0 0.0
    %4483 = vmatpush1.msra.mxu0 %v4461
    %4484 = vmatprep.subr.mxu0 0.0
    %4485 = vmatpush1.msra.mxu0 %v4462
    %4486 = vmatprep.subr.mxu0 0.0
    %4487 = vmatpush1.msra.mxu0 %v4463
    %4488 = vmatprep.subr.mxu0 0.0
    %4489 = vmatpush1.msra.mxu0 %v4464
    %4490 = vmatprep.subr.mxu0 0.0
    %4491 = vmatpush1.msra.mxu0 %v4465
    %4492 = vmatprep.subr.mxu0 0.0
    %4493 = vmatpush1.msra.mxu0 %v4466
    %4494 = vmatprep.subr.mxu0 0.0
    %4495 = vmatpush1.msra.mxu0 %v4467
    %4496 = vmatprep.subr.mxu0 0.0
    %4497 = vmatpush1.msra.mxu0 %v4468
    %4498 = vmatprep.subr.mxu0 0.0
    %4499 = vmatpush1.msra.mxu0 %v4469
    %4500 = vmatprep.subr.mxu0 0.0
    %4501 = vmatpush1.msra.mxu0 %v4470
    %4502 = vmatprep.subr.mxu0 0.0
    %4503 = vmatpush1.msra.mxu0 %v4471
    %4504 = vmatprep.subr.mxu0 0.0
    %4505 = vmatpush1.msra.mxu0 0.0
    %4506 = vmatprep.subr.mxu0 0.0
    %4507 = vmatpush1.msra.mxu0 0.0
    %4508 = vmatprep.subr.mxu0 0.0
    %4509 = vmatpush1.msra.mxu0 0.0
    %4510 = vmatprep.subr.mxu0 0.0
    %4511 = vmatpush1.msra.mxu0 0.0
    %4512 = vmatprep.subr.mxu0 0.0
    %4513 = vmatpush1.msra.mxu0 0.0
    %4514 = vmatprep.subr.mxu0 0.0
    %4515 = vmatpush1.msra.mxu0 0.0
    %4516 = vmatprep.subr.mxu0 0.0
    %4517 = vmatpush1.msra.mxu0 0.0
    %4518 = vmatprep.subr.mxu0 0.0
    %4519 = vmatpush1.msra.mxu0 0.0
    %4520 = vmatprep.subr.mxu0 0.0
    %4521 = vmatpush1.msra.mxu0 0.0
    %4522 = vmatprep.subr.mxu0 0.0
    %4523 = vmatpush1.msra.mxu0 0.0
    %4524 = vmatprep.subr.mxu0 0.0
    %4525 = vmatpush1.msra.mxu0 0.0
    %4526 = vmatprep.subr.mxu0 0.0
    %4527 = vmatpush1.msra.mxu0 0.0
    %4528 = vmatprep.subr.mxu0 0.0
    %4529 = vmatpush1.msra.mxu0 0.0
    %4530 = vmatprep.subr.mxu0 0.0
    %4531 = vmatpush1.msra.mxu0 0.0
    %4532 = vmatprep.subr.mxu0 0.0
    %4533 = vmatpush1.msra.mxu0 0.0
    %4534 = vmatprep.subr.mxu0 0.0
    %4535 = vmatpush1.msra.mxu0 0.0
    %4536 = vmatprep.mubr.f32.mxu0 0.0
    %4537 = vmatmul.mubr.f32.gmra.mrb[0].mxu0 %v4377
    %v4538 = vpop.f32.mrb[0].mxu0
    %v4539 = vadd.f32 0.0, %v4538
    %v4540 = vpop.f32.mrb[0].mxu0
    %4541 = vmatprep.mubr.f32.mxu0 0.0
    %4542 = vmatmul.mubr.f32.gmra.mrb[0].mxu0 %v4382
    %v4543 = vpop.f32.mrb[0].mxu0
    %v4544 = vadd.f32 0.0, %v4543
    %v4545 = vpop.f32.mrb[0].mxu0
    %4546 = vmatprep.mubr.f32.mxu0 0.0
    %4547 = vmatmul.mubr.f32.gmra.mrb[0].mxu0 %v4387
    %v4548 = vpop.f32.mrb[0].mxu0
    %v4549 = vadd.f32 0.0, %v4548
    %v4550 = vpop.f32.mrb[0].mxu0
    %4551 = vmatprep.mubr.f32.mxu0 0.0
    %4552 = vmatmul.mubr.f32.gmra.mrb[0].mxu0 %v4392
    %v4553 = vpop.f32.mrb[0].mxu0
    %v4554 = vadd.f32 0.0, %v4553
    %v4555 = vpop.f32.mrb[0].mxu0
    %4556 = vmatprep.mubr.f32.mxu0 0.0
    %4557 = vmatmul.mubr.f32.gmra.mrb[0].mxu0 %v4397
    %v4558 = vpop.f32.mrb[0].mxu0
    %v4559 = vadd.f32 0.0, %v4558
    %v4560 = vpop.f32.mrb[0].mxu0
    %4561 = vmatprep.mubr.f32.mxu0 0.0
    %4562 = vmatmul.mubr.f32.gmra.mrb[0].mxu0 %v4402
    %v4563 = vpop.f32.mrb[0].mxu0
    %v4564 = vadd.f32 0.0, %v4563
    %v4565 = vpop.f32.mrb[0].mxu0
    %4566 = vmatprep.mubr.f32.mxu0 0.0
    %4567 = vmatmul.mubr.f32.gmra.mrb[0].mxu0 %v4407
    %v4568 = vpop.f32.mrb[0].mxu0
    %v4569 = vadd.f32 0.0, %v4568
    %v4570 = vpop.f32.mrb[0].mxu0
    %4571 = vmatprep.mubr.f32.mxu0 0.0
    %4572 = vmatmul.mubr.f32.gmra.mrb[0].mxu0 %v4412
    %v4573 = vpop.f32.mrb[0].mxu0
    %v4574 = vadd.f32 0.0, %v4573
    %v4575 = vpop.f32.mrb[0].mxu0
    %4576 = vmatprep.mubr.f32.mxu0 0.0
    %4577 = vmatmul.mubr.f32.gmra.mrb[0].mxu0 %v4417
    %v4578 = vpop.f32.mrb[0].mxu0
    %v4579 = vadd.f32 0.0, %v4578
    %v4580 = vpop.f32.mrb[0].mxu0
    %4581 = vmatprep.mubr.f32.mxu0 0.0
    %4582 = vmatmul.mubr.f32.gmra.mrb[0].mxu0 %v4422
    %v4583 = vpop.f32.mrb[0].mxu0
    %v4584 = vadd.f32 0.0, %v4583
    %v4585 = vpop.f32.mrb[0].mxu0
    %4586 = vmatprep.mubr.f32.mxu0 0.0
    %4587 = vmatmul.mubr.f32.gmra.mrb[0].mxu0 %v4427
    %v4588 = vpop.f32.mrb[0].mxu0
    %v4589 = vadd.f32 0.0, %v4588
    %v4590 = vpop.f32.mrb[0].mxu0
    %4591 = vmatprep.mubr.f32.mxu0 0.0
    %4592 = vmatmul.mubr.f32.gmra.mrb[0].mxu0 %v4432
    %v4593 = vpop.f32.mrb[0].mxu0
    %v4594 = vadd.f32 0.0, %v4593
    %v4595 = vpop.f32.mrb[0].mxu0
    %4596 = vmatprep.mubr.f32.mxu0 0.0
    %4597 = vmatmul.mubr.f32.gmra.mrb[0].mxu0 %v4437
    %v4598 = vpop.f32.mrb[0].mxu0
    %v4599 = vadd.f32 0.0, %v4598
    %v4600 = vpop.f32.mrb[0].mxu0
    %4601 = vmatprep.mubr.f32.mxu0 0.0
    %4602 = vmatmul.mubr.f32.gmra.mrb[0].mxu0 %v4442
    %v4603 = vpop.f32.mrb[0].mxu0
    %v4604 = vadd.f32 0.0, %v4603
    %v4605 = vpop.f32.mrb[0].mxu0
    %4606 = vmatprep.mubr.f32.mxu0 0.0
    %4607 = vmatmul.mubr.f32.gmra.mrb[0].mxu0 %v4447
    %v4608 = vpop.f32.mrb[0].mxu0
    %v4609 = vadd.f32 0.0, %v4608
    %v4610 = vpop.f32.mrb[0].mxu0
    %4611 = vmatprep.mubr.f32.mxu0 0.0
    %4612 = vmatmul.mubr.f32.gmra.mrb[0].mxu0 %v4452
    %v4613 = vpop.f32.mrb[0].mxu0
    %v4614 = vadd.f32 0.0, %v4613
    %v4615 = vpop.f32.mrb[0].mxu0
    %4616 = vdwg.mxu0
    %4617 = vmatprep.subr.mxu0 0.0
    %4618 = vmatpush1.msra.mxu0 %v4277
    %4619 = vmatprep.subr.mxu0 0.0
    %4620 = vmatpush1.msra.mxu0 %v4278
    %4621 = vmatprep.subr.mxu0 0.0
    %4622 = vmatpush1.msra.mxu0 %v4279
    %4623 = vmatprep.subr.mxu0 0.0
    %4624 = vmatpush1.msra.mxu0 %v4280
    %4625 = vmatprep.subr.mxu0 0.0
    %4626 = vmatpush1.msra.mxu0 %v4281
    %4627 = vmatprep.subr.mxu0 0.0
    %4628 = vmatpush1.msra.mxu0 %v4282
    %4629 = vmatprep.subr.mxu0 0.0
    %4630 = vmatpush1.msra.mxu0 %v4283
    %4631 = vmatprep.subr.mxu0 0.0
    %4632 = vmatpush1.msra.mxu0 %v4284
    %4633 = vmatprep.subr.mxu0 0.0
    %4634 = vmatpush1.msra.mxu0 %v4285
    %4635 = vmatprep.subr.mxu0 0.0
    %4636 = vmatpush1.msra.mxu0 %v4286
    %4637 = vmatprep.subr.mxu0 0.0
    %4638 = vmatpush1.msra.mxu0 %v4287
    %4639 = vmatprep.subr.mxu0 0.0
    %4640 = vmatpush1.msra.mxu0 %v4288
    %4641 = vmatprep.subr.mxu0 0.0
    %4642 = vmatpush1.msra.mxu0 %v4289
    %4643 = vmatprep.subr.mxu0 0.0
    %4644 = vmatpush1.msra.mxu0 %v4290
    %4645 = vmatprep.subr.mxu0 0.0
    %4646 = vmatpush1.msra.mxu0 %v4291
    %4647 = vmatprep.subr.mxu0 0.0
    %4648 = vmatpush1.msra.mxu0 %v4292
    %4649 = vmatprep.subr.mxu0 0.0
    %4650 = vmatpush1.msra.mxu0 0.0
    %4651 = vmatprep.subr.mxu0 0.0
    %4652 = vmatpush1.msra.mxu0 0.0
    %4653 = vmatprep.subr.mxu0 0.0
    %4654 = vmatpush1.msra.mxu0 0.0
    %4655 = vmatprep.subr.mxu0 0.0
    %4656 = vmatpush1.msra.mxu0 0.0
    %4657 = vmatprep.subr.mxu0 0.0
    %4658 = vmatpush1.msra.mxu0 0.0
    %4659 = vmatprep.subr.mxu0 0.0
    %4660 = vmatpush1.msra.mxu0 0.0
    %4661 = vmatprep.subr.mxu0 0.0
    %4662 = vmatpush1.msra.mxu0 0.0
    %4663 = vmatprep.subr.mxu0 0.0
    %4664 = vmatpush1.msra.mxu0 0.0
    %4665 = vmatprep.subr.mxu0 0.0
    %4666 = vmatpush1.msra.mxu0 0.0
    %4667 = vmatprep.subr.mxu0 0.0
    %4668 = vmatpush1.msra.mxu0 0.0
    %4669 = vmatprep.subr.mxu0 0.0
    %4670 = vmatpush1.msra.mxu0 0.0
    %4671 = vmatprep.subr.mxu0 0.0
    %4672 = vmatpush1.msra.mxu0 0.0
    %4673 = vmatprep.subr.mxu0 0.0
    %4674 = vmatpush1.msra.mxu0 0.0
    %4675 = vmatprep.subr.mxu0 0.0
    %4676 = vmatpush1.msra.mxu0 0.0
    %4677 = vmatprep.subr.mxu0 0.0
    %4678 = vmatpush1.msra.mxu0 0.0
    %4679 = vmatprep.subr.mxu0 0.0
    %4680 = vmatpush1.msra.mxu0 0.0
    %4681 = vmatprep.mubr.f32.mxu0 0.0
    %4682 = vmatmul.mubr.f32.gmra.mrb[0].mxu0 %v4198
    %v4683 = vpop.f32.mrb[0].mxu0
    %v4684 = vadd.f32 %v4539, %v4683
    %v4685 = vpop.f32.mrb[0].mxu0
    %4686 = vmatprep.mubr.f32.mxu0 0.0
    %4687 = vmatmul.mubr.f32.gmra.mrb[0].mxu0 %v4203
    %v4688 = vpop.f32.mrb[0].mxu0
    %v4689 = vadd.f32 %v4544, %v4688
    %v4690 = vpop.f32.mrb[0].mxu0
    %4691 = vmatprep.mubr.f32.mxu0 0.0
    %4692 = vmatmul.mubr.f32.gmra.mrb[0].mxu0 %v4208
    %v4693 = vpop.f32.mrb[0].mxu0
    %v4694 = vadd.f32 %v4549, %v4693
    %v4695 = vpop.f32.mrb[0].mxu0
    %4696 = vmatprep.mubr.f32.mxu0 0.0
    %4697 = vmatmul.mubr.f32.gmra.mrb[0].mxu0 %v4213
    %v4698 = vpop.f32.mrb[0].mxu0
    %v4699 = vadd.f32 %v4554, %v4698
    %v4700 = vpop.f32.mrb[0].mxu0
    %4701 = vmatprep.mubr.f32.mxu0 0.0
    %4702 = vmatmul.mubr.f32.gmra.mrb[0].mxu0 %v4218
    %v4703 = vpop.f32.mrb[0].mxu0
    %v4704 = vadd.f32 %v4559, %v4703
    %v4705 = vpop.f32.mrb[0].mxu0
    %4706 = vmatprep.mubr.f32.mxu0 0.0
    %4707 = vmatmul.mubr.f32.gmra.mrb[0].mxu0 %v4223
    %v4708 = vpop.f32.mrb[0].mxu0
    %v4709 = vadd.f32 %v4564, %v4708
    %v4710 = vpop.f32.mrb[0].mxu0
    %4711 = vmatprep.mubr.f32.mxu0 0.0
    %4712 = vmatmul.mubr.f32.gmra.mrb[0].mxu0 %v4228
    %v4713 = vpop.f32.mrb[0].mxu0
    %v4714 = vadd.f32 %v4569, %v4713
    %v4715 = vpop.f32.mrb[0].mxu0
    %4716 = vmatprep.mubr.f32.mxu0 0.0
    %4717 = vmatmul.mubr.f32.gmra.mrb[0].mxu0 %v4233
    %v4718 = vpop.f32.mrb[0].mxu0
    %v4719 = vadd.f32 %v4574, %v4718
    %v4720 = vpop.f32.mrb[0].mxu0
    %4721 = vmatprep.mubr.f32.mxu0 0.0
    %4722 = vmatmul.mubr.f32.gmra.mrb[0].mxu0 %v4238
    %v4723 = vpop.f32.mrb[0].mxu0
    %v4724 = vadd.f32 %v4579, %v4723
    %v4725 = vpop.f32.mrb[0].mxu0
    %4726 = vmatprep.mubr.f32.mxu0 0.0
    %4727 = vmatmul.mubr.f32.gmra.mrb[0].mxu0 %v4243
    %v4728 = vpop.f32.mrb[0].mxu0
    %v4729 = vadd.f32 %v4584, %v4728
    %v4730 = vpop.f32.mrb[0].mxu0
    %4731 = vmatprep.mubr.f32.mxu0 0.0
    %4732 = vmatmul.mubr.f32.gmra.mrb[0].mxu0 %v4248
    %v4733 = vpop.f32.mrb[0].mxu0
    %v4734 = vadd.f32 %v4589, %v4733
    %v4735 = vpop.f32.mrb[0].mxu0
    %4736 = vmatprep.mubr.f32.mxu0 0.0
    %4737 = vmatmul.mubr.f32.gmra.mrb[0].mxu0 %v4253
    %v4738 = vpop.f32.mrb[0].mxu0
    %v4739 = vadd.f32 %v4594, %v4738
    %v4740 = vpop.f32.mrb[0].mxu0
    %4741 = vmatprep.mubr.f32.mxu0 0.0
    %4742 = vmatmul.mubr.f32.gmra.mrb[0].mxu0 %v4258
    %v4743 = vpop.f32.mrb[0].mxu0
    %v4744 = vadd.f32 %v4599, %v4743
    %v4745 = vpop.f32.mrb[0].mxu0
    %4746 = vmatprep.mubr.f32.mxu0 0.0
    %4747 = vmatmul.mubr.f32.gmra.mrb[0].mxu0 %v4263
    %v4748 = vpop.f32.mrb[0].mxu0
    %v4749 = vadd.f32 %v4604, %v4748
    %v4750 = vpop.f32.mrb[0].mxu0
    %4751 = vmatprep.mubr.f32.mxu0 0.0
    %4752 = vmatmul.mubr.f32.gmra.mrb[0].mxu0 %v4268
    %v4753 = vpop.f32.mrb[0].mxu0
    %v4754 = vadd.f32 %v4609, %v4753
    %v4755 = vpop.f32.mrb[0].mxu0
    %4756 = vmatprep.mubr.f32.mxu0 0.0
    %4757 = vmatmul.mubr.f32.gmra.mrb[0].mxu0 %v4273
    %v4758 = vpop.f32.mrb[0].mxu0
    %v4759 = vadd.f32 %v4614, %v4758
    %v4760 = vpop.f32.mrb[0].mxu0
    %4761 = vdwg.mxu0
    %s4762 = scalar_lea.vmem %s9, 384
    %v4763 = vld [vmem:[%s4762] sm:$0xff]
    %v4764 = vld [vmem:[%s4762 + $0x8] sm:$0xff]
    %v4765 = vld [vmem:[%s4762 + $0x10] sm:$0xff]
    %v4766 = vld [vmem:[%s4762 + $0x18] sm:$0xff]
    %v4767 = vld [vmem:[%s4762 + $0x20] sm:$0xff]
    %v4768 = vld [vmem:[%s4762 + $0x28] sm:$0xff]
    %v4769 = vld [vmem:[%s4762 + $0x30] sm:$0xff]
    %v4770 = vld [vmem:[%s4762 + $0x38] sm:$0xff]
    %v4771 = vld [vmem:[%s4762 + $0x40] sm:$0xff]
    %v4772 = vld [vmem:[%s4762 + $0x48] sm:$0xff]
    %v4773 = vld [vmem:[%s4762 + $0x50] sm:$0xff]
    %v4774 = vld [vmem:[%s4762 + $0x58] sm:$0xff]
    %v4775 = vld [vmem:[%s4762 + $0x60] sm:$0xff]
    %v4776 = vld [vmem:[%s4762 + $0x68] sm:$0xff]
    %v4777 = vld [vmem:[%s4762 + $0x70] sm:$0xff]
    %v4778 = vld [vmem:[%s4762 + $0x78] sm:$0xff]
    %4779 = vmatprep.subr.mxu0 0.0
    %4780 = vmatpush1.msra.mxu0 %v4099
    %4781 = vmatprep.subr.mxu0 0.0
    %4782 = vmatpush1.msra.mxu0 %v4100
    %4783 = vmatprep.subr.mxu0 0.0
    %4784 = vmatpush1.msra.mxu0 %v4101
    %4785 = vmatprep.subr.mxu0 0.0
    %4786 = vmatpush1.msra.mxu0 %v4102
    %4787 = vmatprep.subr.mxu0 0.0
    %4788 = vmatpush1.msra.mxu0 %v4103
    %4789 = vmatprep.subr.mxu0 0.0
    %4790 = vmatpush1.msra.mxu0 %v4104
    %4791 = vmatprep.subr.mxu0 0.0
    %4792 = vmatpush1.msra.mxu0 %v4105
    %4793 = vmatprep.subr.mxu0 0.0
    %4794 = vmatpush1.msra.mxu0 %v4106
    %4795 = vmatprep.subr.mxu0 0.0
    %4796 = vmatpush1.msra.mxu0 %v4107
    %4797 = vmatprep.subr.mxu0 0.0
    %4798 = vmatpush1.msra.mxu0 %v4108
    %4799 = vmatprep.subr.mxu0 0.0
    %4800 = vmatpush1.msra.mxu0 %v4109
    %4801 = vmatprep.subr.mxu0 0.0
    %4802 = vmatpush1.msra.mxu0 %v4110
    %4803 = vmatprep.subr.mxu0 0.0
    %4804 = vmatpush1.msra.mxu0 %v4111
    %4805 = vmatprep.subr.mxu0 0.0
    %4806 = vmatpush1.msra.mxu0 %v4112
    %4807 = vmatprep.subr.mxu0 0.0
    %4808 = vmatpush1.msra.mxu0 %v4113
    %4809 = vmatprep.subr.mxu0 0.0
    %4810 = vmatpush1.msra.mxu0 %v4114
    %4811 = vmatprep.subr.mxu0 0.0
    %4812 = vmatpush1.msra.mxu0 0.0
    %4813 = vmatprep.subr.mxu0 0.0
    %4814 = vmatpush1.msra.mxu0 0.0
    %4815 = vmatprep.subr.mxu0 0.0
    %4816 = vmatpush1.msra.mxu0 0.0
    %4817 = vmatprep.subr.mxu0 0.0
    %4818 = vmatpush1.msra.mxu0 0.0
    %4819 = vmatprep.subr.mxu0 0.0
    %4820 = vmatpush1.msra.mxu0 0.0
    %4821 = vmatprep.subr.mxu0 0.0
    %4822 = vmatpush1.msra.mxu0 0.0
    %4823 = vmatprep.subr.mxu0 0.0
    %4824 = vmatpush1.msra.mxu0 0.0
    %4825 = vmatprep.subr.mxu0 0.0
    %4826 = vmatpush1.msra.mxu0 0.0
    %4827 = vmatprep.subr.mxu0 0.0
    %4828 = vmatpush1.msra.mxu0 0.0
    %4829 = vmatprep.subr.mxu0 0.0
    %4830 = vmatpush1.msra.mxu0 0.0
    %4831 = vmatprep.subr.mxu0 0.0
    %4832 = vmatpush1.msra.mxu0 0.0
    %4833 = vmatprep.subr.mxu0 0.0
    %4834 = vmatpush1.msra.mxu0 0.0
    %4835 = vmatprep.subr.mxu0 0.0
    %4836 = vmatpush1.msra.mxu0 0.0
    %4837 = vmatprep.subr.mxu0 0.0
    %4838 = vmatpush1.msra.mxu0 0.0
    %4839 = vmatprep.subr.mxu0 0.0
    %4840 = vmatpush1.msra.mxu0 0.0
    %4841 = vmatprep.subr.mxu0 0.0
    %4842 = vmatpush1.msra.mxu0 0.0
    %4843 = vmatprep.mubr.f32.mxu0 0.0
    %4844 = vmatmul.mubr.f32.gmra.mrb[0].mxu0 %v4763
    %v4845 = vpop.f32.mrb[0].mxu0
    %v4846 = vadd.f32 0.0, %v4845
    %v4847 = vpop.f32.mrb[0].mxu0
    %4848 = vmatprep.mubr.f32.mxu0 0.0
    %4849 = vmatmul.mubr.f32.gmra.mrb[0].mxu0 %v4764
    %v4850 = vpop.f32.mrb[0].mxu0
    %v4851 = vadd.f32 0.0, %v4850
    %v4852 = vpop.f32.mrb[0].mxu0
    %4853 = vmatprep.mubr.f32.mxu0 0.0
    %4854 = vmatmul.mubr.f32.gmra.mrb[0].mxu0 %v4765
    %v4855 = vpop.f32.mrb[0].mxu0
    %v4856 = vadd.f32 0.0, %v4855
    %v4857 = vpop.f32.mrb[0].mxu0
    %4858 = vmatprep.mubr.f32.mxu0 0.0
    %4859 = vmatmul.mubr.f32.gmra.mrb[0].mxu0 %v4766
    %v4860 = vpop.f32.mrb[0].mxu0
    %v4861 = vadd.f32 0.0, %v4860
    %v4862 = vpop.f32.mrb[0].mxu0
    %4863 = vmatprep.mubr.f32.mxu0 0.0
    %4864 = vmatmul.mubr.f32.gmra.mrb[0].mxu0 %v4767
    %v4865 = vpop.f32.mrb[0].mxu0
    %v4866 = vadd.f32 0.0, %v4865
    %v4867 = vpop.f32.mrb[0].mxu0
    %4868 = vmatprep.mubr.f32.mxu0 0.0
    %4869 = vmatmul.mubr.f32.gmra.mrb[0].mxu0 %v4768
    %v4870 = vpop.f32.mrb[0].mxu0
    %v4871 = vadd.f32 0.0, %v4870
    %v4872 = vpop.f32.mrb[0].mxu0
    %4873 = vmatprep.mubr.f32.mxu0 0.0
    %4874 = vmatmul.mubr.f32.gmra.mrb[0].mxu0 %v4769
    %v4875 = vpop.f32.mrb[0].mxu0
    %v4876 = vadd.f32 0.0, %v4875
    %v4877 = vpop.f32.mrb[0].mxu0
    %4878 = vmatprep.mubr.f32.mxu0 0.0
    %4879 = vmatmul.mubr.f32.gmra.mrb[0].mxu0 %v4770
    %v4880 = vpop.f32.mrb[0].mxu0
    %v4881 = vadd.f32 0.0, %v4880
    %v4882 = vpop.f32.mrb[0].mxu0
    %4883 = vmatprep.mubr.f32.mxu0 0.0
    %4884 = vmatmul.mubr.f32.gmra.mrb[0].mxu0 %v4771
    %v4885 = vpop.f32.mrb[0].mxu0
    %v4886 = vadd.f32 0.0, %v4885
    %v4887 = vpop.f32.mrb[0].mxu0
    %4888 = vmatprep.mubr.f32.mxu0 0.0
    %4889 = vmatmul.mubr.f32.gmra.mrb[0].mxu0 %v4772
    %v4890 = vpop.f32.mrb[0].mxu0
    %v4891 = vadd.f32 0.0, %v4890
    %v4892 = vpop.f32.mrb[0].mxu0
    %4893 = vmatprep.mubr.f32.mxu0 0.0
    %4894 = vmatmul.mubr.f32.gmra.mrb[0].mxu0 %v4773
    %v4895 = vpop.f32.mrb[0].mxu0
    %v4896 = vadd.f32 0.0, %v4895
    %v4897 = vpop.f32.mrb[0].mxu0
    %4898 = vmatprep.mubr.f32.mxu0 0.0
    %4899 = vmatmul.mubr.f32.gmra.mrb[0].mxu0 %v4774
    %v4900 = vpop.f32.mrb[0].mxu0
    %v4901 = vadd.f32 0.0, %v4900
    %v4902 = vpop.f32.mrb[0].mxu0
    %4903 = vmatprep.mubr.f32.mxu0 0.0
    %4904 = vmatmul.mubr.f32.gmra.mrb[0].mxu0 %v4775
    %v4905 = vpop.f32.mrb[0].mxu0
    %v4906 = vadd.f32 0.0, %v4905
    %v4907 = vpop.f32.mrb[0].mxu0
    %4908 = vmatprep.mubr.f32.mxu0 0.0
    %4909 = vmatmul.mubr.f32.gmra.mrb[0].mxu0 %v4776
    %v4910 = vpop.f32.mrb[0].mxu0
    %v4911 = vadd.f32 0.0, %v4910
    %v4912 = vpop.f32.mrb[0].mxu0
    %4913 = vmatprep.mubr.f32.mxu0 0.0
    %4914 = vmatmul.mubr.f32.gmra.mrb[0].mxu0 %v4777
    %v4915 = vpop.f32.mrb[0].mxu0
    %v4916 = vadd.f32 0.0, %v4915
    %v4917 = vpop.f32.mrb[0].mxu0
    %4918 = vmatprep.mubr.f32.mxu0 0.0
    %4919 = vmatmul.mubr.f32.gmra.mrb[0].mxu0 %v4778
    %v4920 = vpop.f32.mrb[0].mxu0
    %v4921 = vadd.f32 0.0, %v4920
    %v4922 = vpop.f32.mrb[0].mxu0
    %4923 = vdwg.mxu0
    %s4924 = scalar_lea.vmem [#allocation7], 896
    %v4925 = vld [vmem:[%s4924] sm:$0xff]
    %v4926 = vld [vmem:[%s4924 + $0x8] sm:$0xff]
    %v4927 = vld [vmem:[%s4924 + $0x10] sm:$0xff]
    %v4928 = vld [vmem:[%s4924 + $0x18] sm:$0xff]
    %v4929 = vld [vmem:[%s4924 + $0x20] sm:$0xff]
    %v4930 = vld [vmem:[%s4924 + $0x28] sm:$0xff]
    %v4931 = vld [vmem:[%s4924 + $0x30] sm:$0xff]
    %v4932 = vld [vmem:[%s4924 + $0x38] sm:$0xff]
    %v4933 = vld [vmem:[%s4924 + $0x40] sm:$0xff]
    %v4934 = vld [vmem:[%s4924 + $0x48] sm:$0xff]
    %v4935 = vld [vmem:[%s4924 + $0x50] sm:$0xff]
    %v4936 = vld [vmem:[%s4924 + $0x58] sm:$0xff]
    %v4937 = vld [vmem:[%s4924 + $0x60] sm:$0xff]
    %v4938 = vld [vmem:[%s4924 + $0x68] sm:$0xff]
    %v4939 = vld [vmem:[%s4924 + $0x70] sm:$0xff]
    %v4940 = vld [vmem:[%s4924 + $0x78] sm:$0xff]
    %4941 = vmatprep.subr.mxu0 0.0
    %4942 = vmatpush1.msra.mxu0 %v4925
    %4943 = vmatprep.subr.mxu0 0.0
    %4944 = vmatpush1.msra.mxu0 %v4926
    %4945 = vmatprep.subr.mxu0 0.0
    %4946 = vmatpush1.msra.mxu0 %v4927
    %4947 = vmatprep.subr.mxu0 0.0
    %4948 = vmatpush1.msra.mxu0 %v4928
    %4949 = vmatprep.subr.mxu0 0.0
    %4950 = vmatpush1.msra.mxu0 %v4929
    %4951 = vmatprep.subr.mxu0 0.0
    %4952 = vmatpush1.msra.mxu0 %v4930
    %4953 = vmatprep.subr.mxu0 0.0
    %4954 = vmatpush1.msra.mxu0 %v4931
    %4955 = vmatprep.subr.mxu0 0.0
    %4956 = vmatpush1.msra.mxu0 %v4932
    %4957 = vmatprep.subr.mxu0 0.0
    %4958 = vmatpush1.msra.mxu0 %v4933
    %4959 = vmatprep.subr.mxu0 0.0
    %4960 = vmatpush1.msra.mxu0 %v4934
    %4961 = vmatprep.subr.mxu0 0.0
    %4962 = vmatpush1.msra.mxu0 %v4935
    %4963 = vmatprep.subr.mxu0 0.0
    %4964 = vmatpush1.msra.mxu0 %v4936
    %4965 = vmatprep.subr.mxu0 0.0
    %4966 = vmatpush1.msra.mxu0 %v4937
    %4967 = vmatprep.subr.mxu0 0.0
    %4968 = vmatpush1.msra.mxu0 %v4938
    %4969 = vmatprep.subr.mxu0 0.0
    %4970 = vmatpush1.msra.mxu0 %v4939
    %4971 = vmatprep.subr.mxu0 0.0
    %4972 = vmatpush1.msra.mxu0 %v4940
    %4973 = vmatprep.subr.mxu0 0.0
    %4974 = vmatpush1.msra.mxu0 0.0
    %4975 = vmatprep.subr.mxu0 0.0
    %4976 = vmatpush1.msra.mxu0 0.0
    %4977 = vmatprep.subr.mxu0 0.0
    %4978 = vmatpush1.msra.mxu0 0.0
    %4979 = vmatprep.subr.mxu0 0.0
    %4980 = vmatpush1.msra.mxu0 0.0
    %4981 = vmatprep.subr.mxu0 0.0
    %4982 = vmatpush1.msra.mxu0 0.0
    %4983 = vmatprep.subr.mxu0 0.0
    %4984 = vmatpush1.msra.mxu0 0.0
    %4985 = vmatprep.subr.mxu0 0.0
    %4986 = vmatpush1.msra.mxu0 0.0
    %4987 = vmatprep.subr.mxu0 0.0
    %4988 = vmatpush1.msra.mxu0 0.0
    %4989 = vmatprep.subr.mxu0 0.0
    %4990 = vmatpush1.msra.mxu0 0.0
    %4991 = vmatprep.subr.mxu0 0.0
    %4992 = vmatpush1.msra.mxu0 0.0
    %4993 = vmatprep.subr.mxu0 0.0
    %4994 = vmatpush1.msra.mxu0 0.0
    %4995 = vmatprep.subr.mxu0 0.0
    %4996 = vmatpush1.msra.mxu0 0.0
    %4997 = vmatprep.subr.mxu0 0.0
    %4998 = vmatpush1.msra.mxu0 0.0
    %4999 = vmatprep.subr.mxu0 0.0
    %5000 = vmatpush1.msra.mxu0 0.0
    %5001 = vmatprep.subr.mxu0 0.0
    %5002 = vmatpush1.msra.mxu0 0.0
    %5003 = vmatprep.subr.mxu0 0.0
    %5004 = vmatpush1.msra.mxu0 0.0
    %5005 = vmatprep.mubr.f32.mxu0 0.0
    %5006 = vmatmul.mubr.f32.gmra.mrb[0].mxu0 %v4846
    %v5007 = vpop.f32.mrb[0].mxu0
    %v5008 = vadd.f32 0.0, %v5007
    %v5009 = vpop.f32.mrb[0].mxu0
    %5010 = vmatprep.mubr.f32.mxu0 0.0
    %5011 = vmatmul.mubr.f32.gmra.mrb[0].mxu0 %v4851
    %v5012 = vpop.f32.mrb[0].mxu0
    %v5013 = vadd.f32 0.0, %v5012
    %v5014 = vpop.f32.mrb[0].mxu0
    %5015 = vmatprep.mubr.f32.mxu0 0.0
    %5016 = vmatmul.mubr.f32.gmra.mrb[0].mxu0 %v4856
    %v5017 = vpop.f32.mrb[0].mxu0
    %v5018 = vadd.f32 0.0, %v5017
    %v5019 = vpop.f32.mrb[0].mxu0
    %5020 = vmatprep.mubr.f32.mxu0 0.0
    %5021 = vmatmul.mubr.f32.gmra.mrb[0].mxu0 %v4861
    %v5022 = vpop.f32.mrb[0].mxu0
    %v5023 = vadd.f32 0.0, %v5022
    %v5024 = vpop.f32.mrb[0].mxu0
    %5025 = vmatprep.mubr.f32.mxu0 0.0
    %5026 = vmatmul.mubr.f32.gmra.mrb[0].mxu0 %v4866
    %v5027 = vpop.f32.mrb[0].mxu0
    %v5028 = vadd.f32 0.0, %v5027
    %v5029 = vpop.f32.mrb[0].mxu0
    %5030 = vmatprep.mubr.f32.mxu0 0.0
    %5031 = vmatmul.mubr.f32.gmra.mrb[0].mxu0 %v4871
    %v5032 = vpop.f32.mrb[0].mxu0
    %v5033 = vadd.f32 0.0, %v5032
    %v5034 = vpop.f32.mrb[0].mxu0
    %5035 = vmatprep.mubr.f32.mxu0 0.0
    %5036 = vmatmul.mubr.f32.gmra.mrb[0].mxu0 %v4876
    %v5037 = vpop.f32.mrb[0].mxu0
    %v5038 = vadd.f32 0.0, %v5037
    %v5039 = vpop.f32.mrb[0].mxu0
    %5040 = vmatprep.mubr.f32.mxu0 0.0
    %5041 = vmatmul.mubr.f32.gmra.mrb[0].mxu0 %v4881
    %v5042 = vpop.f32.mrb[0].mxu0
    %v5043 = vadd.f32 0.0, %v5042
    %v5044 = vpop.f32.mrb[0].mxu0
    %5045 = vmatprep.mubr.f32.mxu0 0.0
    %5046 = vmatmul.mubr.f32.gmra.mrb[0].mxu0 %v4886
    %v5047 = vpop.f32.mrb[0].mxu0
    %v5048 = vadd.f32 0.0, %v5047
    %v5049 = vpop.f32.mrb[0].mxu0
    %5050 = vmatprep.mubr.f32.mxu0 0.0
    %5051 = vmatmul.mubr.f32.gmra.mrb[0].mxu0 %v4891
    %v5052 = vpop.f32.mrb[0].mxu0
    %v5053 = vadd.f32 0.0, %v5052
    %v5054 = vpop.f32.mrb[0].mxu0
    %5055 = vmatprep.mubr.f32.mxu0 0.0
    %5056 = vmatmul.mubr.f32.gmra.mrb[0].mxu0 %v4896
    %v5057 = vpop.f32.mrb[0].mxu0
    %v5058 = vadd.f32 0.0, %v5057
    %v5059 = vpop.f32.mrb[0].mxu0
    %5060 = vmatprep.mubr.f32.mxu0 0.0
    %5061 = vmatmul.mubr.f32.gmra.mrb[0].mxu0 %v4901
    %v5062 = vpop.f32.mrb[0].mxu0
    %v5063 = vadd.f32 0.0, %v5062
    %v5064 = vpop.f32.mrb[0].mxu0
    %5065 = vmatprep.mubr.f32.mxu0 0.0
    %5066 = vmatmul.mubr.f32.gmra.mrb[0].mxu0 %v4906
    %v5067 = vpop.f32.mrb[0].mxu0
    %v5068 = vadd.f32 0.0, %v5067
    %v5069 = vpop.f32.mrb[0].mxu0
    %5070 = vmatprep.mubr.f32.mxu0 0.0
    %5071 = vmatmul.mubr.f32.gmra.mrb[0].mxu0 %v4911
    %v5072 = vpop.f32.mrb[0].mxu0
    %v5073 = vadd.f32 0.0, %v5072
    %v5074 = vpop.f32.mrb[0].mxu0
    %5075 = vmatprep.mubr.f32.mxu0 0.0
    %5076 = vmatmul.mubr.f32.gmra.mrb[0].mxu0 %v4916
    %v5077 = vpop.f32.mrb[0].mxu0
    %v5078 = vadd.f32 0.0, %v5077
    %v5079 = vpop.f32.mrb[0].mxu0
    %5080 = vmatprep.mubr.f32.mxu0 0.0
    %5081 = vmatmul.mubr.f32.gmra.mrb[0].mxu0 %v4921
    %v5082 = vpop.f32.mrb[0].mxu0
    %v5083 = vadd.f32 0.0, %v5082
    %v5084 = vpop.f32.mrb[0].mxu0
    %5085 = vdwg.mxu0
    %v5086 = vadd.f32 %v4684, %v5008
    %v5087 = vadd.f32 %v4689, %v5013
    %v5088 = vadd.f32 %v4694, %v5018
    %v5089 = vadd.f32 %v4699, %v5023
    %v5090 = vadd.f32 %v4704, %v5028
    %v5091 = vadd.f32 %v4709, %v5033
    %v5092 = vadd.f32 %v4714, %v5038
    %v5093 = vadd.f32 %v4719, %v5043
    %v5094 = vadd.f32 %v4724, %v5048
    %v5095 = vadd.f32 %v4729, %v5053
    %v5096 = vadd.f32 %v4734, %v5058
    %v5097 = vadd.f32 %v4739, %v5063
    %v5098 = vadd.f32 %v4744, %v5068
    %v5099 = vadd.f32 %v4749, %v5073
    %v5100 = vadd.f32 %v4754, %v5078
    %v5101 = vadd.f32 %v4759, %v5083
    %s5102 = scalar_lea.vmem %s9, 512
    %v5103 = vld [vmem:[%s5102] sm:$0xff]
    %v5104 = vld [vmem:[%s5102 + $0x8] sm:$0xff]
    %v5105 = vld [vmem:[%s5102 + $0x10] sm:$0xff]
    %v5106 = vld [vmem:[%s5102 + $0x18] sm:$0xff]
    %v5107 = vld [vmem:[%s5102 + $0x20] sm:$0xff]
    %v5108 = vld [vmem:[%s5102 + $0x28] sm:$0xff]
    %v5109 = vld [vmem:[%s5102 + $0x30] sm:$0xff]
    %v5110 = vld [vmem:[%s5102 + $0x38] sm:$0xff]
    %v5111 = vld [vmem:[%s5102 + $0x40] sm:$0xff]
    %v5112 = vld [vmem:[%s5102 + $0x48] sm:$0xff]
    %v5113 = vld [vmem:[%s5102 + $0x50] sm:$0xff]
    %v5114 = vld [vmem:[%s5102 + $0x58] sm:$0xff]
    %v5115 = vld [vmem:[%s5102 + $0x60] sm:$0xff]
    %v5116 = vld [vmem:[%s5102 + $0x68] sm:$0xff]
    %v5117 = vld [vmem:[%s5102 + $0x70] sm:$0xff]
    %v5118 = vld [vmem:[%s5102 + $0x78] sm:$0xff]
    %5119 = vmatprep.subr.mxu0 0.0
    %5120 = vmatpush1.msra.mxu0 %v4099
    %5121 = vmatprep.subr.mxu0 0.0
    %5122 = vmatpush1.msra.mxu0 %v4100
    %5123 = vmatprep.subr.mxu0 0.0
    %5124 = vmatpush1.msra.mxu0 %v4101
    %5125 = vmatprep.subr.mxu0 0.0
    %5126 = vmatpush1.msra.mxu0 %v4102
    %5127 = vmatprep.subr.mxu0 0.0
    %5128 = vmatpush1.msra.mxu0 %v4103
    %5129 = vmatprep.subr.mxu0 0.0
    %5130 = vmatpush1.msra.mxu0 %v4104
    %5131 = vmatprep.subr.mxu0 0.0
    %5132 = vmatpush1.msra.mxu0 %v4105
    %5133 = vmatprep.subr.mxu0 0.0
    %5134 = vmatpush1.msra.mxu0 %v4106
    %5135 = vmatprep.subr.mxu0 0.0
    %5136 = vmatpush1.msra.mxu0 %v4107
    %5137 = vmatprep.subr.mxu0 0.0
    %5138 = vmatpush1.msra.mxu0 %v4108
    %5139 = vmatprep.subr.mxu0 0.0
    %5140 = vmatpush1.msra.mxu0 %v4109
    %5141 = vmatprep.subr.mxu0 0.0
    %5142 = vmatpush1.msra.mxu0 %v4110
    %5143 = vmatprep.subr.mxu0 0.0
    %5144 = vmatpush1.msra.mxu0 %v4111
    %5145 = vmatprep.subr.mxu0 0.0
    %5146 = vmatpush1.msra.mxu0 %v4112
    %5147 = vmatprep.subr.mxu0 0.0
    %5148 = vmatpush1.msra.mxu0 %v4113
    %5149 = vmatprep.subr.mxu0 0.0
    %5150 = vmatpush1.msra.mxu0 %v4114
    %5151 = vmatprep.subr.mxu0 0.0
    %5152 = vmatpush1.msra.mxu0 0.0
    %5153 = vmatprep.subr.mxu0 0.0
    %5154 = vmatpush1.msra.mxu0 0.0
    %5155 = vmatprep.subr.mxu0 0.0
    %5156 = vmatpush1.msra.mxu0 0.0
    %5157 = vmatprep.subr.mxu0 0.0
    %5158 = vmatpush1.msra.mxu0 0.0
    %5159 = vmatprep.subr.mxu0 0.0
    %5160 = vmatpush1.msra.mxu0 0.0
    %5161 = vmatprep.subr.mxu0 0.0
    %5162 = vmatpush1.msra.mxu0 0.0
    %5163 = vmatprep.subr.mxu0 0.0
    %5164 = vmatpush1.msra.mxu0 0.0
    %5165 = vmatprep.subr.mxu0 0.0
    %5166 = vmatpush1.msra.mxu0 0.0
    %5167 = vmatprep.subr.mxu0 0.0
    %5168 = vmatpush1.msra.mxu0 0.0
    %5169 = vmatprep.subr.mxu0 0.0
    %5170 = vmatpush1.msra.mxu0 0.0
    %5171 = vmatprep.subr.mxu0 0.0
    %5172 = vmatpush1.msra.mxu0 0.0
    %5173 = vmatprep.subr.mxu0 0.0
    %5174 = vmatpush1.msra.mxu0 0.0
    %5175 = vmatprep.subr.mxu0 0.0
    %5176 = vmatpush1.msra.mxu0 0.0
    %5177 = vmatprep.subr.mxu0 0.0
    %5178 = vmatpush1.msra.mxu0 0.0
    %5179 = vmatprep.subr.mxu0 0.0
    %5180 = vmatpush1.msra.mxu0 0.0
    %5181 = vmatprep.subr.mxu0 0.0
    %5182 = vmatpush1.msra.mxu0 0.0
    %5183 = vmatprep.mubr.f32.mxu0 0.0
    %5184 = vmatmul.mubr.f32.gmra.mrb[0].mxu0 %v5103
    %v5185 = vpop.f32.mrb[0].mxu0
    %v5186 = vadd.f32 0.0, %v5185
    %v5187 = vpop.f32.mrb[0].mxu0
    %5188 = vmatprep.mubr.f32.mxu0 0.0
    %5189 = vmatmul.mubr.f32.gmra.mrb[0].mxu0 %v5104
    %v5190 = vpop.f32.mrb[0].mxu0
    %v5191 = vadd.f32 0.0, %v5190
    %v5192 = vpop.f32.mrb[0].mxu0
    %5193 = vmatprep.mubr.f32.mxu0 0.0
    %5194 = vmatmul.mubr.f32.gmra.mrb[0].mxu0 %v5105
    %v5195 = vpop.f32.mrb[0].mxu0
    %v5196 = vadd.f32 0.0, %v5195
    %v5197 = vpop.f32.mrb[0].mxu0
    %5198 = vmatprep.mubr.f32.mxu0 0.0
    %5199 = vmatmul.mubr.f32.gmra.mrb[0].mxu0 %v5106
    %v5200 = vpop.f32.mrb[0].mxu0
    %v5201 = vadd.f32 0.0, %v5200
    %v5202 = vpop.f32.mrb[0].mxu0
    %5203 = vmatprep.mubr.f32.mxu0 0.0
    %5204 = vmatmul.mubr.f32.gmra.mrb[0].mxu0 %v5107
    %v5205 = vpop.f32.mrb[0].mxu0
    %v5206 = vadd.f32 0.0, %v5205
    %v5207 = vpop.f32.mrb[0].mxu0
    %5208 = vmatprep.mubr.f32.mxu0 0.0
    %5209 = vmatmul.mubr.f32.gmra.mrb[0].mxu0 %v5108
    %v5210 = vpop.f32.mrb[0].mxu0
    %v5211 = vadd.f32 0.0, %v5210
    %v5212 = vpop.f32.mrb[0].mxu0
    %5213 = vmatprep.mubr.f32.mxu0 0.0
    %5214 = vmatmul.mubr.f32.gmra.mrb[0].mxu0 %v5109
    %v5215 = vpop.f32.mrb[0].mxu0
    %v5216 = vadd.f32 0.0, %v5215
    %v5217 = vpop.f32.mrb[0].mxu0
    %5218 = vmatprep.mubr.f32.mxu0 0.0
    %5219 = vmatmul.mubr.f32.gmra.mrb[0].mxu0 %v5110
    %v5220 = vpop.f32.mrb[0].mxu0
    %v5221 = vadd.f32 0.0, %v5220
    %v5222 = vpop.f32.mrb[0].mxu0
    %5223 = vmatprep.mubr.f32.mxu0 0.0
    %5224 = vmatmul.mubr.f32.gmra.mrb[0].mxu0 %v5111
    %v5225 = vpop.f32.mrb[0].mxu0
    %v5226 = vadd.f32 0.0, %v5225
    %v5227 = vpop.f32.mrb[0].mxu0
    %5228 = vmatprep.mubr.f32.mxu0 0.0
    %5229 = vmatmul.mubr.f32.gmra.mrb[0].mxu0 %v5112
    %v5230 = vpop.f32.mrb[0].mxu0
    %v5231 = vadd.f32 0.0, %v5230
    %v5232 = vpop.f32.mrb[0].mxu0
    %5233 = vmatprep.mubr.f32.mxu0 0.0
    %5234 = vmatmul.mubr.f32.gmra.mrb[0].mxu0 %v5113
    %v5235 = vpop.f32.mrb[0].mxu0
    %v5236 = vadd.f32 0.0, %v5235
    %v5237 = vpop.f32.mrb[0].mxu0
    %5238 = vmatprep.mubr.f32.mxu0 0.0
    %5239 = vmatmul.mubr.f32.gmra.mrb[0].mxu0 %v5114
    %v5240 = vpop.f32.mrb[0].mxu0
    %v5241 = vadd.f32 0.0, %v5240
    %v5242 = vpop.f32.mrb[0].mxu0
    %5243 = vmatprep.mubr.f32.mxu0 0.0
    %5244 = vmatmul.mubr.f32.gmra.mrb[0].mxu0 %v5115
    %v5245 = vpop.f32.mrb[0].mxu0
    %v5246 = vadd.f32 0.0, %v5245
    %v5247 = vpop.f32.mrb[0].mxu0
    %5248 = vmatprep.mubr.f32.mxu0 0.0
    %5249 = vmatmul.mubr.f32.gmra.mrb[0].mxu0 %v5116
    %v5250 = vpop.f32.mrb[0].mxu0
    %v5251 = vadd.f32 0.0, %v5250
    %v5252 = vpop.f32.mrb[0].mxu0
    %5253 = vmatprep.mubr.f32.mxu0 0.0
    %5254 = vmatmul.mubr.f32.gmra.mrb[0].mxu0 %v5117
    %v5255 = vpop.f32.mrb[0].mxu0
    %v5256 = vadd.f32 0.0, %v5255
    %v5257 = vpop.f32.mrb[0].mxu0
    %5258 = vmatprep.mubr.f32.mxu0 0.0
    %5259 = vmatmul.mubr.f32.gmra.mrb[0].mxu0 %v5118
    %v5260 = vpop.f32.mrb[0].mxu0
    %v5261 = vadd.f32 0.0, %v5260
    %v5262 = vpop.f32.mrb[0].mxu0
    %5263 = vdwg.mxu0
    %s5264 = scalar_lea.vmem [#allocation7], 640
    %v5265 = vld [vmem:[%s5264] sm:$0xff]
    %v5266 = vld [vmem:[%s5264 + $0x8] sm:$0xff]
    %v5267 = vld [vmem:[%s5264 + $0x10] sm:$0xff]
    %v5268 = vld [vmem:[%s5264 + $0x18] sm:$0xff]
    %v5269 = vld [vmem:[%s5264 + $0x20] sm:$0xff]
    %v5270 = vld [vmem:[%s5264 + $0x28] sm:$0xff]
    %v5271 = vld [vmem:[%s5264 + $0x30] sm:$0xff]
    %v5272 = vld [vmem:[%s5264 + $0x38] sm:$0xff]
    %v5273 = vld [vmem:[%s5264 + $0x40] sm:$0xff]
    %v5274 = vld [vmem:[%s5264 + $0x48] sm:$0xff]
    %v5275 = vld [vmem:[%s5264 + $0x50] sm:$0xff]
    %v5276 = vld [vmem:[%s5264 + $0x58] sm:$0xff]
    %v5277 = vld [vmem:[%s5264 + $0x60] sm:$0xff]
    %v5278 = vld [vmem:[%s5264 + $0x68] sm:$0xff]
    %v5279 = vld [vmem:[%s5264 + $0x70] sm:$0xff]
    %v5280 = vld [vmem:[%s5264 + $0x78] sm:$0xff]
    %5281 = vmatprep.subr.mxu0 0.0
    %5282 = vmatpush1.msra.mxu0 %v5265
    %5283 = vmatprep.subr.mxu0 0.0
    %5284 = vmatpush1.msra.mxu0 %v5266
    %5285 = vmatprep.subr.mxu0 0.0
    %5286 = vmatpush1.msra.mxu0 %v5267
    %5287 = vmatprep.subr.mxu0 0.0
    %5288 = vmatpush1.msra.mxu0 %v5268
    %5289 = vmatprep.subr.mxu0 0.0
    %5290 = vmatpush1.msra.mxu0 %v5269
    %5291 = vmatprep.subr.mxu0 0.0
    %5292 = vmatpush1.msra.mxu0 %v5270
    %5293 = vmatprep.subr.mxu0 0.0
    %5294 = vmatpush1.msra.mxu0 %v5271
    %5295 = vmatprep.subr.mxu0 0.0
    %5296 = vmatpush1.msra.mxu0 %v5272
    %5297 = vmatprep.subr.mxu0 0.0
    %5298 = vmatpush1.msra.mxu0 %v5273
    %5299 = vmatprep.subr.mxu0 0.0
    %5300 = vmatpush1.msra.mxu0 %v5274
    %5301 = vmatprep.subr.mxu0 0.0
    %5302 = vmatpush1.msra.mxu0 %v5275
    %5303 = vmatprep.subr.mxu0 0.0
    %5304 = vmatpush1.msra.mxu0 %v5276
    %5305 = vmatprep.subr.mxu0 0.0
    %5306 = vmatpush1.msra.mxu0 %v5277
    %5307 = vmatprep.subr.mxu0 0.0
    %5308 = vmatpush1.msra.mxu0 %v5278
    %5309 = vmatprep.subr.mxu0 0.0
    %5310 = vmatpush1.msra.mxu0 %v5279
    %5311 = vmatprep.subr.mxu0 0.0
    %5312 = vmatpush1.msra.mxu0 %v5280
    %5313 = vmatprep.subr.mxu0 0.0
    %5314 = vmatpush1.msra.mxu0 0.0
    %5315 = vmatprep.subr.mxu0 0.0
    %5316 = vmatpush1.msra.mxu0 0.0
    %5317 = vmatprep.subr.mxu0 0.0
    %5318 = vmatpush1.msra.mxu0 0.0
    %5319 = vmatprep.subr.mxu0 0.0
    %5320 = vmatpush1.msra.mxu0 0.0
    %5321 = vmatprep.subr.mxu0 0.0
    %5322 = vmatpush1.msra.mxu0 0.0
    %5323 = vmatprep.subr.mxu0 0.0
    %5324 = vmatpush1.msra.mxu0 0.0
    %5325 = vmatprep.subr.mxu0 0.0
    %5326 = vmatpush1.msra.mxu0 0.0
    %5327 = vmatprep.subr.mxu0 0.0
    %5328 = vmatpush1.msra.mxu0 0.0
    %5329 = vmatprep.subr.mxu0 0.0
    %5330 = vmatpush1.msra.mxu0 0.0
    %5331 = vmatprep.subr.mxu0 0.0
    %5332 = vmatpush1.msra.mxu0 0.0
    %5333 = vmatprep.subr.mxu0 0.0
    %5334 = vmatpush1.msra.mxu0 0.0
    %5335 = vmatprep.subr.mxu0 0.0
    %5336 = vmatpush1.msra.mxu0 0.0
    %5337 = vmatprep.subr.mxu0 0.0
    %5338 = vmatpush1.msra.mxu0 0.0
    %5339 = vmatprep.subr.mxu0 0.0
    %5340 = vmatpush1.msra.mxu0 0.0
    %5341 = vmatprep.subr.mxu0 0.0
    %5342 = vmatpush1.msra.mxu0 0.0
    %5343 = vmatprep.subr.mxu0 0.0
    %5344 = vmatpush1.msra.mxu0 0.0
    %5345 = vmatprep.mubr.f32.mxu0 0.0
    %5346 = vmatmul.mubr.f32.gmra.mrb[0].mxu0 %v5186
    %v5347 = vpop.f32.mrb[0].mxu0
    %v5348 = vadd.f32 0.0, %v5347
    %v5349 = vpop.f32.mrb[0].mxu0
    %5350 = vmatprep.mubr.f32.mxu0 0.0
    %5351 = vmatmul.mubr.f32.gmra.mrb[0].mxu0 %v5191
    %v5352 = vpop.f32.mrb[0].mxu0
    %v5353 = vadd.f32 0.0, %v5352
    %v5354 = vpop.f32.mrb[0].mxu0
    %5355 = vmatprep.mubr.f32.mxu0 0.0
    %5356 = vmatmul.mubr.f32.gmra.mrb[0].mxu0 %v5196
    %v5357 = vpop.f32.mrb[0].mxu0
    %v5358 = vadd.f32 0.0, %v5357
    %v5359 = vpop.f32.mrb[0].mxu0
    %5360 = vmatprep.mubr.f32.mxu0 0.0
    %5361 = vmatmul.mubr.f32.gmra.mrb[0].mxu0 %v5201
    %v5362 = vpop.f32.mrb[0].mxu0
    %v5363 = vadd.f32 0.0, %v5362
    %v5364 = vpop.f32.mrb[0].mxu0
    %5365 = vmatprep.mubr.f32.mxu0 0.0
    %5366 = vmatmul.mubr.f32.gmra.mrb[0].mxu0 %v5206
    %v5367 = vpop.f32.mrb[0].mxu0
    %v5368 = vadd.f32 0.0, %v5367
    %v5369 = vpop.f32.mrb[0].mxu0
    %5370 = vmatprep.mubr.f32.mxu0 0.0
    %5371 = vmatmul.mubr.f32.gmra.mrb[0].mxu0 %v5211
    %v5372 = vpop.f32.mrb[0].mxu0
    %v5373 = vadd.f32 0.0, %v5372
    %v5374 = vpop.f32.mrb[0].mxu0
    %5375 = vmatprep.mubr.f32.mxu0 0.0
    %5376 = vmatmul.mubr.f32.gmra.mrb[0].mxu0 %v5216
    %v5377 = vpop.f32.mrb[0].mxu0
    %v5378 = vadd.f32 0.0, %v5377
    %v5379 = vpop.f32.mrb[0].mxu0
    %5380 = vmatprep.mubr.f32.mxu0 0.0
    %5381 = vmatmul.mubr.f32.gmra.mrb[0].mxu0 %v5221
    %v5382 = vpop.f32.mrb[0].mxu0
    %v5383 = vadd.f32 0.0, %v5382
    %v5384 = vpop.f32.mrb[0].mxu0
    %5385 = vmatprep.mubr.f32.mxu0 0.0
    %5386 = vmatmul.mubr.f32.gmra.mrb[0].mxu0 %v5226
    %v5387 = vpop.f32.mrb[0].mxu0
    %v5388 = vadd.f32 0.0, %v5387
    %v5389 = vpop.f32.mrb[0].mxu0
    %5390 = vmatprep.mubr.f32.mxu0 0.0
    %5391 = vmatmul.mubr.f32.gmra.mrb[0].mxu0 %v5231
    %v5392 = vpop.f32.mrb[0].mxu0
    %v5393 = vadd.f32 0.0, %v5392
    %v5394 = vpop.f32.mrb[0].mxu0
    %5395 = vmatprep.mubr.f32.mxu0 0.0
    %5396 = vmatmul.mubr.f32.gmra.mrb[0].mxu0 %v5236
    %v5397 = vpop.f32.mrb[0].mxu0
    %v5398 = vadd.f32 0.0, %v5397
    %v5399 = vpop.f32.mrb[0].mxu0
    %5400 = vmatprep.mubr.f32.mxu0 0.0
    %5401 = vmatmul.mubr.f32.gmra.mrb[0].mxu0 %v5241
    %v5402 = vpop.f32.mrb[0].mxu0
    %v5403 = vadd.f32 0.0, %v5402
    %v5404 = vpop.f32.mrb[0].mxu0
    %5405 = vmatprep.mubr.f32.mxu0 0.0
    %5406 = vmatmul.mubr.f32.gmra.mrb[0].mxu0 %v5246
    %v5407 = vpop.f32.mrb[0].mxu0
    %v5408 = vadd.f32 0.0, %v5407
    %v5409 = vpop.f32.mrb[0].mxu0
    %5410 = vmatprep.mubr.f32.mxu0 0.0
    %5411 = vmatmul.mubr.f32.gmra.mrb[0].mxu0 %v5251
    %v5412 = vpop.f32.mrb[0].mxu0
    %v5413 = vadd.f32 0.0, %v5412
    %v5414 = vpop.f32.mrb[0].mxu0
    %5415 = vmatprep.mubr.f32.mxu0 0.0
    %5416 = vmatmul.mubr.f32.gmra.mrb[0].mxu0 %v5256
    %v5417 = vpop.f32.mrb[0].mxu0
    %v5418 = vadd.f32 0.0, %v5417
    %v5419 = vpop.f32.mrb[0].mxu0
    %5420 = vmatprep.mubr.f32.mxu0 0.0
    %5421 = vmatmul.mubr.f32.gmra.mrb[0].mxu0 %v5261
    %v5422 = vpop.f32.mrb[0].mxu0
    %v5423 = vadd.f32 0.0, %v5422
    %v5424 = vpop.f32.mrb[0].mxu0
    %5425 = vdwg.mxu0
    %v5426 = vadd.f32 %v5086, %v5348
    %v5427 = vadd.f32 %v5087, %v5353
    %v5428 = vadd.f32 %v5088, %v5358
    %v5429 = vadd.f32 %v5089, %v5363
    %v5430 = vadd.f32 %v5090, %v5368
    %v5431 = vadd.f32 %v5091, %v5373
    %v5432 = vadd.f32 %v5092, %v5378
    %v5433 = vadd.f32 %v5093, %v5383
    %v5434 = vadd.f32 %v5094, %v5388
    %v5435 = vadd.f32 %v5095, %v5393
    %v5436 = vadd.f32 %v5096, %v5398
    %v5437 = vadd.f32 %v5097, %v5403
    %v5438 = vadd.f32 %v5098, %v5408
    %v5439 = vadd.f32 %v5099, %v5413
    %v5440 = vadd.f32 %v5100, %v5418
    %v5441 = vadd.f32 %v5101, %v5423
    %v5442 = vtanh.pop %v5426
    %v5443 = vtanh.pop %v5427
    %v5444 = vtanh.pop %v5428
    %v5445 = vtanh.pop %v5429
    %v5446 = vtanh.pop %v5430
    %v5447 = vtanh.pop %v5431
    %v5448 = vtanh.pop %v5432
    %v5449 = vtanh.pop %v5433
    %v5450 = vtanh.pop %v5434
    %v5451 = vtanh.pop %v5435
    %v5452 = vtanh.pop %v5436
    %v5453 = vtanh.pop %v5437
    %v5454 = vtanh.pop %v5438
    %v5455 = vtanh.pop %v5439
    %v5456 = vtanh.pop %v5440
    %v5457 = vtanh.pop %v5441
    %5458 = vst [vmem:[%s10] sm:$0xff] %v5442
    %5459 = vst [vmem:[%s10 + $0x8] sm:$0xff] %v5443
    %5460 = vst [vmem:[%s10 + $0x10] sm:$0xff] %v5444
    %5461 = vst [vmem:[%s10 + $0x18] sm:$0xff] %v5445
    %5462 = vst [vmem:[%s10 + $0x20] sm:$0xff] %v5446
    %5463 = vst [vmem:[%s10 + $0x28] sm:$0xff] %v5447
    %5464 = vst [vmem:[%s10 + $0x30] sm:$0xff] %v5448
    %5465 = vst [vmem:[%s10 + $0x38] sm:$0xff] %v5449
    %5466 = vst [vmem:[%s10 + $0x40] sm:$0xff] %v5450
    %5467 = vst [vmem:[%s10 + $0x48] sm:$0xff] %v5451
    %5468 = vst [vmem:[%s10 + $0x50] sm:$0xff] %v5452
    %5469 = vst [vmem:[%s10 + $0x58] sm:$0xff] %v5453
    %5470 = vst [vmem:[%s10 + $0x60] sm:$0xff] %v5454
    %5471 = vst [vmem:[%s10 + $0x68] sm:$0xff] %v5455
    %5472 = vst [vmem:[%s10 + $0x70] sm:$0xff] %v5456
    %5473 = vst [vmem:[%s10 + $0x78] sm:$0xff] %v5457
    %v5474 = vld [vmem:[%s4293] sm:$0xff]
    %v5475 = vld [vmem:[%s4293 + $0x8] sm:$0xff]
    %v5476 = vld [vmem:[%s4293 + $0x10] sm:$0xff]
    %v5477 = vld [vmem:[%s4293 + $0x18] sm:$0xff]
    %v5478 = vld [vmem:[%s4293 + $0x20] sm:$0xff]
    %v5479 = vld [vmem:[%s4293 + $0x28] sm:$0xff]
    %v5480 = vld [vmem:[%s4293 + $0x30] sm:$0xff]
    %v5481 = vld [vmem:[%s4293 + $0x38] sm:$0xff]
    %v5482 = vld [vmem:[%s4293 + $0x40] sm:$0xff]
    %v5483 = vld [vmem:[%s4293 + $0x48] sm:$0xff]
    %v5484 = vld [vmem:[%s4293 + $0x50] sm:$0xff]
    %v5485 = vld [vmem:[%s4293 + $0x58] sm:$0xff]
    %v5486 = vld [vmem:[%s4293 + $0x60] sm:$0xff]
    %v5487 = vld [vmem:[%s4293 + $0x68] sm:$0xff]
    %v5488 = vld [vmem:[%s4293 + $0x70] sm:$0xff]
    %v5489 = vld [vmem:[%s4293 + $0x78] sm:$0xff]
    %5490 = vmatprep.subr.mxu0 0.0
    %5491 = vmatpush1.msra.mxu0 %v4099
    %5492 = vmatprep.subr.mxu0 0.0
    %5493 = vmatpush1.msra.mxu0 %v4100
    %5494 = vmatprep.subr.mxu0 0.0
    %5495 = vmatpush1.msra.mxu0 %v4101
    %5496 = vmatprep.subr.mxu0 0.0
    %5497 = vmatpush1.msra.mxu0 %v4102
    %5498 = vmatprep.subr.mxu0 0.0
    %5499 = vmatpush1.msra.mxu0 %v4103
    %5500 = vmatprep.subr.mxu0 0.0
    %5501 = vmatpush1.msra.mxu0 %v4104
    %5502 = vmatprep.subr.mxu0 0.0
    %5503 = vmatpush1.msra.mxu0 %v4105
    %5504 = vmatprep.subr.mxu0 0.0
    %5505 = vmatpush1.msra.mxu0 %v4106
    %5506 = vmatprep.subr.mxu0 0.0
    %5507 = vmatpush1.msra.mxu0 %v4107
    %5508 = vmatprep.subr.mxu0 0.0
    %5509 = vmatpush1.msra.mxu0 %v4108
    %5510 = vmatprep.subr.mxu0 0.0
    %5511 = vmatpush1.msra.mxu0 %v4109
    %5512 = vmatprep.subr.mxu0 0.0
    %5513 = vmatpush1.msra.mxu0 %v4110
    %5514 = vmatprep.subr.mxu0 0.0
    %5515 = vmatpush1.msra.mxu0 %v4111
    %5516 = vmatprep.subr.mxu0 0.0
    %5517 = vmatpush1.msra.mxu0 %v4112
    %5518 = vmatprep.subr.mxu0 0.0
    %5519 = vmatpush1.msra.mxu0 %v4113
    %5520 = vmatprep.subr.mxu0 0.0
    %5521 = vmatpush1.msra.mxu0 %v4114
    %5522 = vmatprep.subr.mxu0 0.0
    %5523 = vmatpush1.msra.mxu0 0.0
    %5524 = vmatprep.subr.mxu0 0.0
    %5525 = vmatpush1.msra.mxu0 0.0
    %5526 = vmatprep.subr.mxu0 0.0
    %5527 = vmatpush1.msra.mxu0 0.0
    %5528 = vmatprep.subr.mxu0 0.0
    %5529 = vmatpush1.msra.mxu0 0.0
    %5530 = vmatprep.subr.mxu0 0.0
    %5531 = vmatpush1.msra.mxu0 0.0
    %5532 = vmatprep.subr.mxu0 0.0
    %5533 = vmatpush1.msra.mxu0 0.0
    %5534 = vmatprep.subr.mxu0 0.0
    %5535 = vmatpush1.msra.mxu0 0.0
    %5536 = vmatprep.subr.mxu0 0.0
    %5537 = vmatpush1.msra.mxu0 0.0
    %5538 = vmatprep.subr.mxu0 0.0
    %5539 = vmatpush1.msra.mxu0 0.0
    %5540 = vmatprep.subr.mxu0 0.0
    %5541 = vmatpush1.msra.mxu0 0.0
    %5542 = vmatprep.subr.mxu0 0.0
    %5543 = vmatpush1.msra.mxu0 0.0
    %5544 = vmatprep.subr.mxu0 0.0
    %5545 = vmatpush1.msra.mxu0 0.0
    %5546 = vmatprep.subr.mxu0 0.0
    %5547 = vmatpush1.msra.mxu0 0.0
    %5548 = vmatprep.subr.mxu0 0.0
    %5549 = vmatpush1.msra.mxu0 0.0
    %5550 = vmatprep.subr.mxu0 0.0
    %5551 = vmatpush1.msra.mxu0 0.0
    %5552 = vmatprep.subr.mxu0 0.0
    %5553 = vmatpush1.msra.mxu0 0.0
    %5554 = vmatprep.mubr.f32.mxu0 0.0
    %5555 = vmatmul.mubr.f32.gmra.mrb[0].mxu0 %v5474
    %v5556 = vpop.f32.mrb[0].mxu0
    %v5557 = vadd.f32 0.0, %v5556
    %v5558 = vpop.f32.mrb[0].mxu0
    %5559 = vmatprep.mubr.f32.mxu0 0.0
    %5560 = vmatmul.mubr.f32.gmra.mrb[0].mxu0 %v5475
    %v5561 = vpop.f32.mrb[0].mxu0
    %v5562 = vadd.f32 0.0, %v5561
    %v5563 = vpop.f32.mrb[0].mxu0
    %5564 = vmatprep.mubr.f32.mxu0 0.0
    %5565 = vmatmul.mubr.f32.gmra.mrb[0].mxu0 %v5476
    %v5566 = vpop.f32.mrb[0].mxu0
    %v5567 = vadd.f32 0.0, %v5566
    %v5568 = vpop.f32.mrb[0].mxu0
    %5569 = vmatprep.mubr.f32.mxu0 0.0
    %5570 = vmatmul.mubr.f32.gmra.mrb[0].mxu0 %v5477
    %v5571 = vpop.f32.mrb[0].mxu0
    %v5572 = vadd.f32 0.0, %v5571
    %v5573 = vpop.f32.mrb[0].mxu0
    %5574 = vmatprep.mubr.f32.mxu0 0.0
    %5575 = vmatmul.mubr.f32.gmra.mrb[0].mxu0 %v5478
    %v5576 = vpop.f32.mrb[0].mxu0
    %v5577 = vadd.f32 0.0, %v5576
    %v5578 = vpop.f32.mrb[0].mxu0
    %5579 = vmatprep.mubr.f32.mxu0 0.0
    %5580 = vmatmul.mubr.f32.gmra.mrb[0].mxu0 %v5479
    %v5581 = vpop.f32.mrb[0].mxu0
    %v5582 = vadd.f32 0.0, %v5581
    %v5583 = vpop.f32.mrb[0].mxu0
    %5584 = vmatprep.mubr.f32.mxu0 0.0
    %5585 = vmatmul.mubr.f32.gmra.mrb[0].mxu0 %v5480
    %v5586 = vpop.f32.mrb[0].mxu0
    %v5587 = vadd.f32 0.0, %v5586
    %v5588 = vpop.f32.mrb[0].mxu0
    %5589 = vmatprep.mubr.f32.mxu0 0.0
    %5590 = vmatmul.mubr.f32.gmra.mrb[0].mxu0 %v5481
    %v5591 = vpop.f32.mrb[0].mxu0
    %v5592 = vadd.f32 0.0, %v5591
    %v5593 = vpop.f32.mrb[0].mxu0
    %5594 = vmatprep.mubr.f32.mxu0 0.0
    %5595 = vmatmul.mubr.f32.gmra.mrb[0].mxu0 %v5482
    %v5596 = vpop.f32.mrb[0].mxu0
    %v5597 = vadd.f32 0.0, %v5596
    %v5598 = vpop.f32.mrb[0].mxu0
    %5599 = vmatprep.mubr.f32.mxu0 0.0
    %5600 = vmatmul.mubr.f32.gmra.mrb[0].mxu0 %v5483
    %v5601 = vpop.f32.mrb[0].mxu0
    %v5602 = vadd.f32 0.0, %v5601
    %v5603 = vpop.f32.mrb[0].mxu0
    %5604 = vmatprep.mubr.f32.mxu0 0.0
    %5605 = vmatmul.mubr.f32.gmra.mrb[0].mxu0 %v5484
    %v5606 = vpop.f32.mrb[0].mxu0
    %v5607 = vadd.f32 0.0, %v5606
    %v5608 = vpop.f32.mrb[0].mxu0
    %5609 = vmatprep.mubr.f32.mxu0 0.0
    %5610 = vmatmul.mubr.f32.gmra.mrb[0].mxu0 %v5485
    %v5611 = vpop.f32.mrb[0].mxu0
    %v5612 = vadd.f32 0.0, %v5611
    %v5613 = vpop.f32.mrb[0].mxu0
    %5614 = vmatprep.mubr.f32.mxu0 0.0
    %5615 = vmatmul.mubr.f32.gmra.mrb[0].mxu0 %v5486
    %v5616 = vpop.f32.mrb[0].mxu0
    %v5617 = vadd.f32 0.0, %v5616
    %v5618 = vpop.f32.mrb[0].mxu0
    %5619 = vmatprep.mubr.f32.mxu0 0.0
    %5620 = vmatmul.mubr.f32.gmra.mrb[0].mxu0 %v5487
    %v5621 = vpop.f32.mrb[0].mxu0
    %v5622 = vadd.f32 0.0, %v5621
    %v5623 = vpop.f32.mrb[0].mxu0
    %5624 = vmatprep.mubr.f32.mxu0 0.0
    %5625 = vmatmul.mubr.f32.gmra.mrb[0].mxu0 %v5488
    %v5626 = vpop.f32.mrb[0].mxu0
    %v5627 = vadd.f32 0.0, %v5626
    %v5628 = vpop.f32.mrb[0].mxu0
    %5629 = vmatprep.mubr.f32.mxu0 0.0
    %5630 = vmatmul.mubr.f32.gmra.mrb[0].mxu0 %v5489
    %v5631 = vpop.f32.mrb[0].mxu0
    %v5632 = vadd.f32 0.0, %v5631
    %v5633 = vpop.f32.mrb[0].mxu0
    %5634 = vdwg.mxu0
    %s5635 = scalar_lea.vmem [#allocation7], 1792
    %v5636 = vld [vmem:[%s5635] sm:$0xff]
    %v5637 = vld [vmem:[%s5635 + $0x8] sm:$0xff]
    %v5638 = vld [vmem:[%s5635 + $0x10] sm:$0xff]
    %v5639 = vld [vmem:[%s5635 + $0x18] sm:$0xff]
    %v5640 = vld [vmem:[%s5635 + $0x20] sm:$0xff]
    %v5641 = vld [vmem:[%s5635 + $0x28] sm:$0xff]
    %v5642 = vld [vmem:[%s5635 + $0x30] sm:$0xff]
    %v5643 = vld [vmem:[%s5635 + $0x38] sm:$0xff]
    %v5644 = vld [vmem:[%s5635 + $0x40] sm:$0xff]
    %v5645 = vld [vmem:[%s5635 + $0x48] sm:$0xff]
    %v5646 = vld [vmem:[%s5635 + $0x50] sm:$0xff]
    %v5647 = vld [vmem:[%s5635 + $0x58] sm:$0xff]
    %v5648 = vld [vmem:[%s5635 + $0x60] sm:$0xff]
    %v5649 = vld [vmem:[%s5635 + $0x68] sm:$0xff]
    %v5650 = vld [vmem:[%s5635 + $0x70] sm:$0xff]
    %v5651 = vld [vmem:[%s5635 + $0x78] sm:$0xff]
    %s5652 = scalar_lea.vmem %s9, 256
    %v5653 = vld [vmem:[%s5652] sm:$0xff]
    %v5654 = vld [vmem:[%s5652 + $0x8] sm:$0xff]
    %v5655 = vld [vmem:[%s5652 + $0x10] sm:$0xff]
    %v5656 = vld [vmem:[%s5652 + $0x18] sm:$0xff]
    %v5657 = vld [vmem:[%s5652 + $0x20] sm:$0xff]
    %v5658 = vld [vmem:[%s5652 + $0x28] sm:$0xff]
    %v5659 = vld [vmem:[%s5652 + $0x30] sm:$0xff]
    %v5660 = vld [vmem:[%s5652 + $0x38] sm:$0xff]
    %v5661 = vld [vmem:[%s5652 + $0x40] sm:$0xff]
    %v5662 = vld [vmem:[%s5652 + $0x48] sm:$0xff]
    %v5663 = vld [vmem:[%s5652 + $0x50] sm:$0xff]
    %v5664 = vld [vmem:[%s5652 + $0x58] sm:$0xff]
    %v5665 = vld [vmem:[%s5652 + $0x60] sm:$0xff]
    %v5666 = vld [vmem:[%s5652 + $0x68] sm:$0xff]
    %v5667 = vld [vmem:[%s5652 + $0x70] sm:$0xff]
    %v5668 = vld [vmem:[%s5652 + $0x78] sm:$0xff]
    %5669 = vmatprep.subr.mxu0 0.0
    %5670 = vmatpush1.msra.mxu0 %v4099
    %5671 = vmatprep.subr.mxu0 0.0
    %5672 = vmatpush1.msra.mxu0 %v4100
    %5673 = vmatprep.subr.mxu0 0.0
    %5674 = vmatpush1.msra.mxu0 %v4101
    %5675 = vmatprep.subr.mxu0 0.0
    %5676 = vmatpush1.msra.mxu0 %v4102
    %5677 = vmatprep.subr.mxu0 0.0
    %5678 = vmatpush1.msra.mxu0 %v4103
    %5679 = vmatprep.subr.mxu0 0.0
    %5680 = vmatpush1.msra.mxu0 %v4104
    %5681 = vmatprep.subr.mxu0 0.0
    %5682 = vmatpush1.msra.mxu0 %v4105
    %5683 = vmatprep.subr.mxu0 0.0
    %5684 = vmatpush1.msra.mxu0 %v4106
    %5685 = vmatprep.subr.mxu0 0.0
    %5686 = vmatpush1.msra.mxu0 %v4107
    %5687 = vmatprep.subr.mxu0 0.0
    %5688 = vmatpush1.msra.mxu0 %v4108
    %5689 = vmatprep.subr.mxu0 0.0
    %5690 = vmatpush1.msra.mxu0 %v4109
    %5691 = vmatprep.subr.mxu0 0.0
    %5692 = vmatpush1.msra.mxu0 %v4110
    %5693 = vmatprep.subr.mxu0 0.0
    %5694 = vmatpush1.msra.mxu0 %v4111
    %5695 = vmatprep.subr.mxu0 0.0
    %5696 = vmatpush1.msra.mxu0 %v4112
    %5697 = vmatprep.subr.mxu0 0.0
    %5698 = vmatpush1.msra.mxu0 %v4113
    %5699 = vmatprep.subr.mxu0 0.0
    %5700 = vmatpush1.msra.mxu0 %v4114
    %5701 = vmatprep.subr.mxu0 0.0
    %5702 = vmatpush1.msra.mxu0 0.0
    %5703 = vmatprep.subr.mxu0 0.0
    %5704 = vmatpush1.msra.mxu0 0.0
    %5705 = vmatprep.subr.mxu0 0.0
    %5706 = vmatpush1.msra.mxu0 0.0
    %5707 = vmatprep.subr.mxu0 0.0
    %5708 = vmatpush1.msra.mxu0 0.0
    %5709 = vmatprep.subr.mxu0 0.0
    %5710 = vmatpush1.msra.mxu0 0.0
    %5711 = vmatprep.subr.mxu0 0.0
    %5712 = vmatpush1.msra.mxu0 0.0
    %5713 = vmatprep.subr.mxu0 0.0
    %5714 = vmatpush1.msra.mxu0 0.0
    %5715 = vmatprep.subr.mxu0 0.0
    %5716 = vmatpush1.msra.mxu0 0.0
    %5717 = vmatprep.subr.mxu0 0.0
    %5718 = vmatpush1.msra.mxu0 0.0
    %5719 = vmatprep.subr.mxu0 0.0
    %5720 = vmatpush1.msra.mxu0 0.0
    %5721 = vmatprep.subr.mxu0 0.0
    %5722 = vmatpush1.msra.mxu0 0.0
    %5723 = vmatprep.subr.mxu0 0.0
    %5724 = vmatpush1.msra.mxu0 0.0
    %5725 = vmatprep.subr.mxu0 0.0
    %5726 = vmatpush1.msra.mxu0 0.0
    %5727 = vmatprep.subr.mxu0 0.0
    %5728 = vmatpush1.msra.mxu0 0.0
    %5729 = vmatprep.subr.mxu0 0.0
    %5730 = vmatpush1.msra.mxu0 0.0
    %5731 = vmatprep.subr.mxu0 0.0
    %5732 = vmatpush1.msra.mxu0 0.0
    %5733 = vmatprep.mubr.f32.mxu0 0.0
    %5734 = vmatmul.mubr.f32.gmra.mrb[0].mxu0 %v5653
    %v5735 = vpop.f32.mrb[0].mxu0
    %v5736 = vadd.f32 0.0, %v5735
    %v5737 = vpop.f32.mrb[0].mxu0
    %5738 = vmatprep.mubr.f32.mxu0 0.0
    %5739 = vmatmul.mubr.f32.gmra.mrb[0].mxu0 %v5654
    %v5740 = vpop.f32.mrb[0].mxu0
    %v5741 = vadd.f32 0.0, %v5740
    %v5742 = vpop.f32.mrb[0].mxu0
    %5743 = vmatprep.mubr.f32.mxu0 0.0
    %5744 = vmatmul.mubr.f32.gmra.mrb[0].mxu0 %v5655
    %v5745 = vpop.f32.mrb[0].mxu0
    %v5746 = vadd.f32 0.0, %v5745
    %v5747 = vpop.f32.mrb[0].mxu0
    %5748 = vmatprep.mubr.f32.mxu0 0.0
    %5749 = vmatmul.mubr.f32.gmra.mrb[0].mxu0 %v5656
    %v5750 = vpop.f32.mrb[0].mxu0
    %v5751 = vadd.f32 0.0, %v5750
    %v5752 = vpop.f32.mrb[0].mxu0
    %5753 = vmatprep.mubr.f32.mxu0 0.0
    %5754 = vmatmul.mubr.f32.gmra.mrb[0].mxu0 %v5657
    %v5755 = vpop.f32.mrb[0].mxu0
    %v5756 = vadd.f32 0.0, %v5755
    %v5757 = vpop.f32.mrb[0].mxu0
    %5758 = vmatprep.mubr.f32.mxu0 0.0
    %5759 = vmatmul.mubr.f32.gmra.mrb[0].mxu0 %v5658
    %v5760 = vpop.f32.mrb[0].mxu0
    %v5761 = vadd.f32 0.0, %v5760
    %v5762 = vpop.f32.mrb[0].mxu0
    %5763 = vmatprep.mubr.f32.mxu0 0.0
    %5764 = vmatmul.mubr.f32.gmra.mrb[0].mxu0 %v5659
    %v5765 = vpop.f32.mrb[0].mxu0
    %v5766 = vadd.f32 0.0, %v5765
    %v5767 = vpop.f32.mrb[0].mxu0
    %5768 = vmatprep.mubr.f32.mxu0 0.0
    %5769 = vmatmul.mubr.f32.gmra.mrb[0].mxu0 %v5660
    %v5770 = vpop.f32.mrb[0].mxu0
    %v5771 = vadd.f32 0.0, %v5770
    %v5772 = vpop.f32.mrb[0].mxu0
    %5773 = vmatprep.mubr.f32.mxu0 0.0
    %5774 = vmatmul.mubr.f32.gmra.mrb[0].mxu0 %v5661
    %v5775 = vpop.f32.mrb[0].mxu0
    %v5776 = vadd.f32 0.0, %v5775
    %v5777 = vpop.f32.mrb[0].mxu0
    %5778 = vmatprep.mubr.f32.mxu0 0.0
    %5779 = vmatmul.mubr.f32.gmra.mrb[0].mxu0 %v5662
    %v5780 = vpop.f32.mrb[0].mxu0
    %v5781 = vadd.f32 0.0, %v5780
    %v5782 = vpop.f32.mrb[0].mxu0
    %5783 = vmatprep.mubr.f32.mxu0 0.0
    %5784 = vmatmul.mubr.f32.gmra.mrb[0].mxu0 %v5663
    %v5785 = vpop.f32.mrb[0].mxu0
    %v5786 = vadd.f32 0.0, %v5785
    %v5787 = vpop.f32.mrb[0].mxu0
    %5788 = vmatprep.mubr.f32.mxu0 0.0
    %5789 = vmatmul.mubr.f32.gmra.mrb[0].mxu0 %v5664
    %v5790 = vpop.f32.mrb[0].mxu0
    %v5791 = vadd.f32 0.0, %v5790
    %v5792 = vpop.f32.mrb[0].mxu0
    %5793 = vmatprep.mubr.f32.mxu0 0.0
    %5794 = vmatmul.mubr.f32.gmra.mrb[0].mxu0 %v5665
    %v5795 = vpop.f32.mrb[0].mxu0
    %v5796 = vadd.f32 0.0, %v5795
    %v5797 = vpop.f32.mrb[0].mxu0
    %5798 = vmatprep.mubr.f32.mxu0 0.0
    %5799 = vmatmul.mubr.f32.gmra.mrb[0].mxu0 %v5666
    %v5800 = vpop.f32.mrb[0].mxu0
    %v5801 = vadd.f32 0.0, %v5800
    %v5802 = vpop.f32.mrb[0].mxu0
    %5803 = vmatprep.mubr.f32.mxu0 0.0
    %5804 = vmatmul.mubr.f32.gmra.mrb[0].mxu0 %v5667
    %v5805 = vpop.f32.mrb[0].mxu0
    %v5806 = vadd.f32 0.0, %v5805
    %v5807 = vpop.f32.mrb[0].mxu0
    %5808 = vmatprep.mubr.f32.mxu0 0.0
    %5809 = vmatmul.mubr.f32.gmra.mrb[0].mxu0 %v5668
    %v5810 = vpop.f32.mrb[0].mxu0
    %v5811 = vadd.f32 0.0, %v5810
    %v5812 = vpop.f32.mrb[0].mxu0
    %5813 = vdwg.mxu0
    %s5814 = scalar_lea.vmem [#allocation7], 1536
    %v5815 = vld [vmem:[%s5814] sm:$0xff]
    %v5816 = vld [vmem:[%s5814 + $0x8] sm:$0xff]
    %v5817 = vld [vmem:[%s5814 + $0x10] sm:$0xff]
    %v5818 = vld [vmem:[%s5814 + $0x18] sm:$0xff]
    %v5819 = vld [vmem:[%s5814 + $0x20] sm:$0xff]
    %v5820 = vld [vmem:[%s5814 + $0x28] sm:$0xff]
    %v5821 = vld [vmem:[%s5814 + $0x30] sm:$0xff]
    %v5822 = vld [vmem:[%s5814 + $0x38] sm:$0xff]
    %v5823 = vld [vmem:[%s5814 + $0x40] sm:$0xff]
    %v5824 = vld [vmem:[%s5814 + $0x48] sm:$0xff]
    %v5825 = vld [vmem:[%s5814 + $0x50] sm:$0xff]
    %v5826 = vld [vmem:[%s5814 + $0x58] sm:$0xff]
    %v5827 = vld [vmem:[%s5814 + $0x60] sm:$0xff]
    %v5828 = vld [vmem:[%s5814 + $0x68] sm:$0xff]
    %v5829 = vld [vmem:[%s5814 + $0x70] sm:$0xff]
    %v5830 = vld [vmem:[%s5814 + $0x78] sm:$0xff]
    %5831 = vmatprep.subr.mxu0 0.0
    %5832 = vmatpush1.msra.mxu0 %v5815
    %5833 = vmatprep.subr.mxu0 0.0
    %5834 = vmatpush1.msra.mxu0 %v5816
    %5835 = vmatprep.subr.mxu0 0.0
    %5836 = vmatpush1.msra.mxu0 %v5817
    %5837 = vmatprep.subr.mxu0 0.0
    %5838 = vmatpush1.msra.mxu0 %v5818
    %5839 = vmatprep.subr.mxu0 0.0
    %5840 = vmatpush1.msra.mxu0 %v5819
    %5841 = vmatprep.subr.mxu0 0.0
    %5842 = vmatpush1.msra.mxu0 %v5820
    %5843 = vmatprep.subr.mxu0 0.0
    %5844 = vmatpush1.msra.mxu0 %v5821
    %5845 = vmatprep.subr.mxu0 0.0
    %5846 = vmatpush1.msra.mxu0 %v5822
    %5847 = vmatprep.subr.mxu0 0.0
    %5848 = vmatpush1.msra.mxu0 %v5823
    %5849 = vmatprep.subr.mxu0 0.0
    %5850 = vmatpush1.msra.mxu0 %v5824
    %5851 = vmatprep.subr.mxu0 0.0
    %5852 = vmatpush1.msra.mxu0 %v5825
    %5853 = vmatprep.subr.mxu0 0.0
    %5854 = vmatpush1.msra.mxu0 %v5826
    %5855 = vmatprep.subr.mxu0 0.0
    %5856 = vmatpush1.msra.mxu0 %v5827
    %5857 = vmatprep.subr.mxu0 0.0
    %5858 = vmatpush1.msra.mxu0 %v5828
    %5859 = vmatprep.subr.mxu0 0.0
    %5860 = vmatpush1.msra.mxu0 %v5829
    %5861 = vmatprep.subr.mxu0 0.0
    %5862 = vmatpush1.msra.mxu0 %v5830
    %5863 = vmatprep.subr.mxu0 0.0
    %5864 = vmatpush1.msra.mxu0 0.0
    %5865 = vmatprep.subr.mxu0 0.0
    %5866 = vmatpush1.msra.mxu0 0.0
    %5867 = vmatprep.subr.mxu0 0.0
    %5868 = vmatpush1.msra.mxu0 0.0
    %5869 = vmatprep.subr.mxu0 0.0
    %5870 = vmatpush1.msra.mxu0 0.0
    %5871 = vmatprep.subr.mxu0 0.0
    %5872 = vmatpush1.msra.mxu0 0.0
    %5873 = vmatprep.subr.mxu0 0.0
    %5874 = vmatpush1.msra.mxu0 0.0
    %5875 = vmatprep.subr.mxu0 0.0
    %5876 = vmatpush1.msra.mxu0 0.0
    %5877 = vmatprep.subr.mxu0 0.0
    %5878 = vmatpush1.msra.mxu0 0.0
    %5879 = vmatprep.subr.mxu0 0.0
    %5880 = vmatpush1.msra.mxu0 0.0
    %5881 = vmatprep.subr.mxu0 0.0
    %5882 = vmatpush1.msra.mxu0 0.0
    %5883 = vmatprep.subr.mxu0 0.0
    %5884 = vmatpush1.msra.mxu0 0.0
    %5885 = vmatprep.subr.mxu0 0.0
    %5886 = vmatpush1.msra.mxu0 0.0
    %5887 = vmatprep.subr.mxu0 0.0
    %5888 = vmatpush1.msra.mxu0 0.0
    %5889 = vmatprep.subr.mxu0 0.0
    %5890 = vmatpush1.msra.mxu0 0.0
    %5891 = vmatprep.subr.mxu0 0.0
    %5892 = vmatpush1.msra.mxu0 0.0
    %5893 = vmatprep.subr.mxu0 0.0
    %5894 = vmatpush1.msra.mxu0 0.0
    %5895 = vmatprep.mubr.f32.mxu0 0.0
    %5896 = vmatmul.mubr.f32.gmra.mrb[0].mxu0 %v5736
    %v5897 = vpop.f32.mrb[0].mxu0
    %v5898 = vadd.f32 0.0, %v5897
    %v5899 = vpop.f32.mrb[0].mxu0
    %5900 = vmatprep.mubr.f32.mxu0 0.0
    %5901 = vmatmul.mubr.f32.gmra.mrb[0].mxu0 %v5741
    %v5902 = vpop.f32.mrb[0].mxu0
    %v5903 = vadd.f32 0.0, %v5902
    %v5904 = vpop.f32.mrb[0].mxu0
    %5905 = vmatprep.mubr.f32.mxu0 0.0
    %5906 = vmatmul.mubr.f32.gmra.mrb[0].mxu0 %v5746
    %v5907 = vpop.f32.mrb[0].mxu0
    %v5908 = vadd.f32 0.0, %v5907
    %v5909 = vpop.f32.mrb[0].mxu0
    %5910 = vmatprep.mubr.f32.mxu0 0.0
    %5911 = vmatmul.mubr.f32.gmra.mrb[0].mxu0 %v5751
    %v5912 = vpop.f32.mrb[0].mxu0
    %v5913 = vadd.f32 0.0, %v5912
    %v5914 = vpop.f32.mrb[0].mxu0
    %5915 = vmatprep.mubr.f32.mxu0 0.0
    %5916 = vmatmul.mubr.f32.gmra.mrb[0].mxu0 %v5756
    %v5917 = vpop.f32.mrb[0].mxu0
    %v5918 = vadd.f32 0.0, %v5917
    %v5919 = vpop.f32.mrb[0].mxu0
    %5920 = vmatprep.mubr.f32.mxu0 0.0
    %5921 = vmatmul.mubr.f32.gmra.mrb[0].mxu0 %v5761
    %v5922 = vpop.f32.mrb[0].mxu0
    %v5923 = vadd.f32 0.0, %v5922
    %v5924 = vpop.f32.mrb[0].mxu0
    %5925 = vmatprep.mubr.f32.mxu0 0.0
    %5926 = vmatmul.mubr.f32.gmra.mrb[0].mxu0 %v5766
    %v5927 = vpop.f32.mrb[0].mxu0
    %v5928 = vadd.f32 0.0, %v5927
    %v5929 = vpop.f32.mrb[0].mxu0
    %5930 = vmatprep.mubr.f32.mxu0 0.0
    %5931 = vmatmul.mubr.f32.gmra.mrb[0].mxu0 %v5771
    %v5932 = vpop.f32.mrb[0].mxu0
    %v5933 = vadd.f32 0.0, %v5932
    %v5934 = vpop.f32.mrb[0].mxu0
    %5935 = vmatprep.mubr.f32.mxu0 0.0
    %5936 = vmatmul.mubr.f32.gmra.mrb[0].mxu0 %v5776
    %v5937 = vpop.f32.mrb[0].mxu0
    %v5938 = vadd.f32 0.0, %v5937
    %v5939 = vpop.f32.mrb[0].mxu0
    %5940 = vmatprep.mubr.f32.mxu0 0.0
    %5941 = vmatmul.mubr.f32.gmra.mrb[0].mxu0 %v5781
    %v5942 = vpop.f32.mrb[0].mxu0
    %v5943 = vadd.f32 0.0, %v5942
    %v5944 = vpop.f32.mrb[0].mxu0
    %5945 = vmatprep.mubr.f32.mxu0 0.0
    %5946 = vmatmul.mubr.f32.gmra.mrb[0].mxu0 %v5786
    %v5947 = vpop.f32.mrb[0].mxu0
    %v5948 = vadd.f32 0.0, %v5947
    %v5949 = vpop.f32.mrb[0].mxu0
    %5950 = vmatprep.mubr.f32.mxu0 0.0
    %5951 = vmatmul.mubr.f32.gmra.mrb[0].mxu0 %v5791
    %v5952 = vpop.f32.mrb[0].mxu0
    %v5953 = vadd.f32 0.0, %v5952
    %v5954 = vpop.f32.mrb[0].mxu0
    %5955 = vmatprep.mubr.f32.mxu0 0.0
    %5956 = vmatmul.mubr.f32.gmra.mrb[0].mxu0 %v5796
    %v5957 = vpop.f32.mrb[0].mxu0
    %v5958 = vadd.f32 0.0, %v5957
    %v5959 = vpop.f32.mrb[0].mxu0
    %5960 = vmatprep.mubr.f32.mxu0 0.0
    %5961 = vmatmul.mubr.f32.gmra.mrb[0].mxu0 %v5801
    %v5962 = vpop.f32.mrb[0].mxu0
    %v5963 = vadd.f32 0.0, %v5962
    %v5964 = vpop.f32.mrb[0].mxu0
    %5965 = vmatprep.mubr.f32.mxu0 0.0
    %5966 = vmatmul.mubr.f32.gmra.mrb[0].mxu0 %v5806
    %v5967 = vpop.f32.mrb[0].mxu0
    %v5968 = vadd.f32 0.0, %v5967
    %v5969 = vpop.f32.mrb[0].mxu0
    %5970 = vmatprep.mubr.f32.mxu0 0.0
    %5971 = vmatmul.mubr.f32.gmra.mrb[0].mxu0 %v5811
    %v5972 = vpop.f32.mrb[0].mxu0
    %v5973 = vadd.f32 0.0, %v5972
    %v5974 = vpop.f32.mrb[0].mxu0
    %5975 = vdwg.mxu0
    %5976 = vmatprep.subr.mxu0 0.0
    %5977 = vmatpush1.msra.mxu0 %v5636
    %5978 = vmatprep.subr.mxu0 0.0
    %5979 = vmatpush1.msra.mxu0 %v5637
    %5980 = vmatprep.subr.mxu0 0.0
    %5981 = vmatpush1.msra.mxu0 %v5638
    %5982 = vmatprep.subr.mxu0 0.0
    %5983 = vmatpush1.msra.mxu0 %v5639
    %5984 = vmatprep.subr.mxu0 0.0
    %5985 = vmatpush1.msra.mxu0 %v5640
    %5986 = vmatprep.subr.mxu0 0.0
    %5987 = vmatpush1.msra.mxu0 %v5641
    %5988 = vmatprep.subr.mxu0 0.0
    %5989 = vmatpush1.msra.mxu0 %v5642
    %5990 = vmatprep.subr.mxu0 0.0
    %5991 = vmatpush1.msra.mxu0 %v5643
    %5992 = vmatprep.subr.mxu0 0.0
    %5993 = vmatpush1.msra.mxu0 %v5644
    %5994 = vmatprep.subr.mxu0 0.0
    %5995 = vmatpush1.msra.mxu0 %v5645
    %5996 = vmatprep.subr.mxu0 0.0
    %5997 = vmatpush1.msra.mxu0 %v5646
    %5998 = vmatprep.subr.mxu0 0.0
    %5999 = vmatpush1.msra.mxu0 %v5647
    %6000 = vmatprep.subr.mxu0 0.0
    %6001 = vmatpush1.msra.mxu0 %v5648
    %6002 = vmatprep.subr.mxu0 0.0
    %6003 = vmatpush1.msra.mxu0 %v5649
    %6004 = vmatprep.subr.mxu0 0.0
    %6005 = vmatpush1.msra.mxu0 %v5650
    %6006 = vmatprep.subr.mxu0 0.0
    %6007 = vmatpush1.msra.mxu0 %v5651
    %6008 = vmatprep.subr.mxu0 0.0
    %6009 = vmatpush1.msra.mxu0 0.0
    %6010 = vmatprep.subr.mxu0 0.0
    %6011 = vmatpush1.msra.mxu0 0.0
    %6012 = vmatprep.subr.mxu0 0.0
    %6013 = vmatpush1.msra.mxu0 0.0
    %6014 = vmatprep.subr.mxu0 0.0
    %6015 = vmatpush1.msra.mxu0 0.0
    %6016 = vmatprep.subr.mxu0 0.0
    %6017 = vmatpush1.msra.mxu0 0.0
    %6018 = vmatprep.subr.mxu0 0.0
    %6019 = vmatpush1.msra.mxu0 0.0
    %6020 = vmatprep.subr.mxu0 0.0
    %6021 = vmatpush1.msra.mxu0 0.0
    %6022 = vmatprep.subr.mxu0 0.0
    %6023 = vmatpush1.msra.mxu0 0.0
    %6024 = vmatprep.subr.mxu0 0.0
    %6025 = vmatpush1.msra.mxu0 0.0
    %6026 = vmatprep.subr.mxu0 0.0
    %6027 = vmatpush1.msra.mxu0 0.0
    %6028 = vmatprep.subr.mxu0 0.0
    %6029 = vmatpush1.msra.mxu0 0.0
    %6030 = vmatprep.subr.mxu0 0.0
    %6031 = vmatpush1.msra.mxu0 0.0
    %6032 = vmatprep.subr.mxu0 0.0
    %6033 = vmatpush1.msra.mxu0 0.0
    %6034 = vmatprep.subr.mxu0 0.0
    %6035 = vmatpush1.msra.mxu0 0.0
    %6036 = vmatprep.subr.mxu0 0.0
    %6037 = vmatpush1.msra.mxu0 0.0
    %6038 = vmatprep.subr.mxu0 0.0
    %6039 = vmatpush1.msra.mxu0 0.0
    %6040 = vmatprep.mubr.f32.mxu0 0.0
    %6041 = vmatmul.mubr.f32.gmra.mrb[0].mxu0 %v5557
    %v6042 = vpop.f32.mrb[0].mxu0
    %v6043 = vadd.f32 %v5898, %v6042
    %v6044 = vpop.f32.mrb[0].mxu0
    %6045 = vmatprep.mubr.f32.mxu0 0.0
    %6046 = vmatmul.mubr.f32.gmra.mrb[0].mxu0 %v5562
    %v6047 = vpop.f32.mrb[0].mxu0
    %v6048 = vadd.f32 %v5903, %v6047
    %v6049 = vpop.f32.mrb[0].mxu0
    %6050 = vmatprep.mubr.f32.mxu0 0.0
    %6051 = vmatmul.mubr.f32.gmra.mrb[0].mxu0 %v5567
    %v6052 = vpop.f32.mrb[0].mxu0
    %v6053 = vadd.f32 %v5908, %v6052
    %v6054 = vpop.f32.mrb[0].mxu0
    %6055 = vmatprep.mubr.f32.mxu0 0.0
    %6056 = vmatmul.mubr.f32.gmra.mrb[0].mxu0 %v5572
    %v6057 = vpop.f32.mrb[0].mxu0
    %v6058 = vadd.f32 %v5913, %v6057
    %v6059 = vpop.f32.mrb[0].mxu0
    %6060 = vmatprep.mubr.f32.mxu0 0.0
    %6061 = vmatmul.mubr.f32.gmra.mrb[0].mxu0 %v5577
    %v6062 = vpop.f32.mrb[0].mxu0
    %v6063 = vadd.f32 %v5918, %v6062
    %v6064 = vpop.f32.mrb[0].mxu0
    %6065 = vmatprep.mubr.f32.mxu0 0.0
    %6066 = vmatmul.mubr.f32.gmra.mrb[0].mxu0 %v5582
    %v6067 = vpop.f32.mrb[0].mxu0
    %v6068 = vadd.f32 %v5923, %v6067
    %v6069 = vpop.f32.mrb[0].mxu0
    %6070 = vmatprep.mubr.f32.mxu0 0.0
    %6071 = vmatmul.mubr.f32.gmra.mrb[0].mxu0 %v5587
    %v6072 = vpop.f32.mrb[0].mxu0
    %v6073 = vadd.f32 %v5928, %v6072
    %v6074 = vpop.f32.mrb[0].mxu0
    %6075 = vmatprep.mubr.f32.mxu0 0.0
    %6076 = vmatmul.mubr.f32.gmra.mrb[0].mxu0 %v5592
    %v6077 = vpop.f32.mrb[0].mxu0
    %v6078 = vadd.f32 %v5933, %v6077
    %v6079 = vpop.f32.mrb[0].mxu0
    %6080 = vmatprep.mubr.f32.mxu0 0.0
    %6081 = vmatmul.mubr.f32.gmra.mrb[0].mxu0 %v5597
    %v6082 = vpop.f32.mrb[0].mxu0
    %v6083 = vadd.f32 %v5938, %v6082
    %v6084 = vpop.f32.mrb[0].mxu0
    %6085 = vmatprep.mubr.f32.mxu0 0.0
    %6086 = vmatmul.mubr.f32.gmra.mrb[0].mxu0 %v5602
    %v6087 = vpop.f32.mrb[0].mxu0
    %v6088 = vadd.f32 %v5943, %v6087
    %v6089 = vpop.f32.mrb[0].mxu0
    %6090 = vmatprep.mubr.f32.mxu0 0.0
    %6091 = vmatmul.mubr.f32.gmra.mrb[0].mxu0 %v5607
    %v6092 = vpop.f32.mrb[0].mxu0
    %v6093 = vadd.f32 %v5948, %v6092
    %v6094 = vpop.f32.mrb[0].mxu0
    %6095 = vmatprep.mubr.f32.mxu0 0.0
    %6096 = vmatmul.mubr.f32.gmra.mrb[0].mxu0 %v5612
    %v6097 = vpop.f32.mrb[0].mxu0
    %v6098 = vadd.f32 %v5953, %v6097
    %v6099 = vpop.f32.mrb[0].mxu0
    %6100 = vmatprep.mubr.f32.mxu0 0.0
    %6101 = vmatmul.mubr.f32.gmra.mrb[0].mxu0 %v5617
    %v6102 = vpop.f32.mrb[0].mxu0
    %v6103 = vadd.f32 %v5958, %v6102
    %v6104 = vpop.f32.mrb[0].mxu0
    %6105 = vmatprep.mubr.f32.mxu0 0.0
    %6106 = vmatmul.mubr.f32.gmra.mrb[0].mxu0 %v5622
    %v6107 = vpop.f32.mrb[0].mxu0
    %v6108 = vadd.f32 %v5963, %v6107
    %v6109 = vpop.f32.mrb[0].mxu0
    %6110 = vmatprep.mubr.f32.mxu0 0.0
    %6111 = vmatmul.mubr.f32.gmra.mrb[0].mxu0 %v5627
    %v6112 = vpop.f32.mrb[0].mxu0
    %v6113 = vadd.f32 %v5968, %v6112
    %v6114 = vpop.f32.mrb[0].mxu0
    %6115 = vmatprep.mubr.f32.mxu0 0.0
    %6116 = vmatmul.mubr.f32.gmra.mrb[0].mxu0 %v5632
    %v6117 = vpop.f32.mrb[0].mxu0
    %v6118 = vadd.f32 %v5973, %v6117
    %v6119 = vpop.f32.mrb[0].mxu0
    %6120 = vdwg.mxu0
    %v6121 = vld [vmem:[%s5102] sm:$0xff]
    %v6122 = vld [vmem:[%s5102 + $0x8] sm:$0xff]
    %v6123 = vld [vmem:[%s5102 + $0x10] sm:$0xff]
    %v6124 = vld [vmem:[%s5102 + $0x18] sm:$0xff]
    %v6125 = vld [vmem:[%s5102 + $0x20] sm:$0xff]
    %v6126 = vld [vmem:[%s5102 + $0x28] sm:$0xff]
    %v6127 = vld [vmem:[%s5102 + $0x30] sm:$0xff]
    %v6128 = vld [vmem:[%s5102 + $0x38] sm:$0xff]
    %v6129 = vld [vmem:[%s5102 + $0x40] sm:$0xff]
    %v6130 = vld [vmem:[%s5102 + $0x48] sm:$0xff]
    %v6131 = vld [vmem:[%s5102 + $0x50] sm:$0xff]
    %v6132 = vld [vmem:[%s5102 + $0x58] sm:$0xff]
    %v6133 = vld [vmem:[%s5102 + $0x60] sm:$0xff]
    %v6134 = vld [vmem:[%s5102 + $0x68] sm:$0xff]
    %v6135 = vld [vmem:[%s5102 + $0x70] sm:$0xff]
    %v6136 = vld [vmem:[%s5102 + $0x78] sm:$0xff]
    %6137 = vmatprep.subr.mxu0 0.0
    %6138 = vmatpush1.msra.mxu0 %v4099
    %6139 = vmatprep.subr.mxu0 0.0
    %6140 = vmatpush1.msra.mxu0 %v4100
    %6141 = vmatprep.subr.mxu0 0.0
    %6142 = vmatpush1.msra.mxu0 %v4101
    %6143 = vmatprep.subr.mxu0 0.0
    %6144 = vmatpush1.msra.mxu0 %v4102
    %6145 = vmatprep.subr.mxu0 0.0
    %6146 = vmatpush1.msra.mxu0 %v4103
    %6147 = vmatprep.subr.mxu0 0.0
    %6148 = vmatpush1.msra.mxu0 %v4104
    %6149 = vmatprep.subr.mxu0 0.0
    %6150 = vmatpush1.msra.mxu0 %v4105
    %6151 = vmatprep.subr.mxu0 0.0
    %6152 = vmatpush1.msra.mxu0 %v4106
    %6153 = vmatprep.subr.mxu0 0.0
    %6154 = vmatpush1.msra.mxu0 %v4107
    %6155 = vmatprep.subr.mxu0 0.0
    %6156 = vmatpush1.msra.mxu0 %v4108
    %6157 = vmatprep.subr.mxu0 0.0
    %6158 = vmatpush1.msra.mxu0 %v4109
    %6159 = vmatprep.subr.mxu0 0.0
    %6160 = vmatpush1.msra.mxu0 %v4110
    %6161 = vmatprep.subr.mxu0 0.0
    %6162 = vmatpush1.msra.mxu0 %v4111
    %6163 = vmatprep.subr.mxu0 0.0
    %6164 = vmatpush1.msra.mxu0 %v4112
    %6165 = vmatprep.subr.mxu0 0.0
    %6166 = vmatpush1.msra.mxu0 %v4113
    %6167 = vmatprep.subr.mxu0 0.0
    %6168 = vmatpush1.msra.mxu0 %v4114
    %6169 = vmatprep.subr.mxu0 0.0
    %6170 = vmatpush1.msra.mxu0 0.0
    %6171 = vmatprep.subr.mxu0 0.0
    %6172 = vmatpush1.msra.mxu0 0.0
    %6173 = vmatprep.subr.mxu0 0.0
    %6174 = vmatpush1.msra.mxu0 0.0
    %6175 = vmatprep.subr.mxu0 0.0
    %6176 = vmatpush1.msra.mxu0 0.0
    %6177 = vmatprep.subr.mxu0 0.0
    %6178 = vmatpush1.msra.mxu0 0.0
    %6179 = vmatprep.subr.mxu0 0.0
    %6180 = vmatpush1.msra.mxu0 0.0
    %6181 = vmatprep.subr.mxu0 0.0
    %6182 = vmatpush1.msra.mxu0 0.0
    %6183 = vmatprep.subr.mxu0 0.0
    %6184 = vmatpush1.msra.mxu0 0.0
    %6185 = vmatprep.subr.mxu0 0.0
    %6186 = vmatpush1.msra.mxu0 0.0
    %6187 = vmatprep.subr.mxu0 0.0
    %6188 = vmatpush1.msra.mxu0 0.0
    %6189 = vmatprep.subr.mxu0 0.0
    %6190 = vmatpush1.msra.mxu0 0.0
    %6191 = vmatprep.subr.mxu0 0.0
    %6192 = vmatpush1.msra.mxu0 0.0
    %6193 = vmatprep.subr.mxu0 0.0
    %6194 = vmatpush1.msra.mxu0 0.0
    %6195 = vmatprep.subr.mxu0 0.0
    %6196 = vmatpush1.msra.mxu0 0.0
    %6197 = vmatprep.subr.mxu0 0.0
    %6198 = vmatpush1.msra.mxu0 0.0
    %6199 = vmatprep.subr.mxu0 0.0
    %6200 = vmatpush1.msra.mxu0 0.0
    %6201 = vmatprep.mubr.f32.mxu0 0.0
    %6202 = vmatmul.mubr.f32.gmra.mrb[0].mxu0 %v6121
    %v6203 = vpop.f32.mrb[0].mxu0
    %v6204 = vadd.f32 0.0, %v6203
    %v6205 = vpop.f32.mrb[0].mxu0
    %6206 = vmatprep.mubr.f32.mxu0 0.0
    %6207 = vmatmul.mubr.f32.gmra.mrb[0].mxu0 %v6122
    %v6208 = vpop.f32.mrb[0].mxu0
    %v6209 = vadd.f32 0.0, %v6208
    %v6210 = vpop.f32.mrb[0].mxu0
    %6211 = vmatprep.mubr.f32.mxu0 0.0
    %6212 = vmatmul.mubr.f32.gmra.mrb[0].mxu0 %v6123
    %v6213 = vpop.f32.mrb[0].mxu0
    %v6214 = vadd.f32 0.0, %v6213
    %v6215 = vpop.f32.mrb[0].mxu0
    %6216 = vmatprep.mubr.f32.mxu0 0.0
    %6217 = vmatmul.mubr.f32.gmra.mrb[0].mxu0 %v6124
    %v6218 = vpop.f32.mrb[0].mxu0
    %v6219 = vadd.f32 0.0, %v6218
    %v6220 = vpop.f32.mrb[0].mxu0
    %6221 = vmatprep.mubr.f32.mxu0 0.0
    %6222 = vmatmul.mubr.f32.gmra.mrb[0].mxu0 %v6125
    %v6223 = vpop.f32.mrb[0].mxu0
    %v6224 = vadd.f32 0.0, %v6223
    %v6225 = vpop.f32.mrb[0].mxu0
    %6226 = vmatprep.mubr.f32.mxu0 0.0
    %6227 = vmatmul.mubr.f32.gmra.mrb[0].mxu0 %v6126
    %v6228 = vpop.f32.mrb[0].mxu0
    %v6229 = vadd.f32 0.0, %v6228
    %v6230 = vpop.f32.mrb[0].mxu0
    %6231 = vmatprep.mubr.f32.mxu0 0.0
    %6232 = vmatmul.mubr.f32.gmra.mrb[0].mxu0 %v6127
    %v6233 = vpop.f32.mrb[0].mxu0
    %v6234 = vadd.f32 0.0, %v6233
    %v6235 = vpop.f32.mrb[0].mxu0
    %6236 = vmatprep.mubr.f32.mxu0 0.0
    %6237 = vmatmul.mubr.f32.gmra.mrb[0].mxu0 %v6128
    %v6238 = vpop.f32.mrb[0].mxu0
    %v6239 = vadd.f32 0.0, %v6238
    %v6240 = vpop.f32.mrb[0].mxu0
    %6241 = vmatprep.mubr.f32.mxu0 0.0
    %6242 = vmatmul.mubr.f32.gmra.mrb[0].mxu0 %v6129
    %v6243 = vpop.f32.mrb[0].mxu0
    %v6244 = vadd.f32 0.0, %v6243
    %v6245 = vpop.f32.mrb[0].mxu0
    %6246 = vmatprep.mubr.f32.mxu0 0.0
    %6247 = vmatmul.mubr.f32.gmra.mrb[0].mxu0 %v6130
    %v6248 = vpop.f32.mrb[0].mxu0
    %v6249 = vadd.f32 0.0, %v6248
    %v6250 = vpop.f32.mrb[0].mxu0
    %6251 = vmatprep.mubr.f32.mxu0 0.0
    %6252 = vmatmul.mubr.f32.gmra.mrb[0].mxu0 %v6131
    %v6253 = vpop.f32.mrb[0].mxu0
    %v6254 = vadd.f32 0.0, %v6253
    %v6255 = vpop.f32.mrb[0].mxu0
    %6256 = vmatprep.mubr.f32.mxu0 0.0
    %6257 = vmatmul.mubr.f32.gmra.mrb[0].mxu0 %v6132
    %v6258 = vpop.f32.mrb[0].mxu0
    %v6259 = vadd.f32 0.0, %v6258
    %v6260 = vpop.f32.mrb[0].mxu0
    %6261 = vmatprep.mubr.f32.mxu0 0.0
    %6262 = vmatmul.mubr.f32.gmra.mrb[0].mxu0 %v6133
    %v6263 = vpop.f32.mrb[0].mxu0
    %v6264 = vadd.f32 0.0, %v6263
    %v6265 = vpop.f32.mrb[0].mxu0
    %6266 = vmatprep.mubr.f32.mxu0 0.0
    %6267 = vmatmul.mubr.f32.gmra.mrb[0].mxu0 %v6134
    %v6268 = vpop.f32.mrb[0].mxu0
    %v6269 = vadd.f32 0.0, %v6268
    %v6270 = vpop.f32.mrb[0].mxu0
    %6271 = vmatprep.mubr.f32.mxu0 0.0
    %6272 = vmatmul.mubr.f32.gmra.mrb[0].mxu0 %v6135
    %v6273 = vpop.f32.mrb[0].mxu0
    %v6274 = vadd.f32 0.0, %v6273
    %v6275 = vpop.f32.mrb[0].mxu0
    %6276 = vmatprep.mubr.f32.mxu0 0.0
    %6277 = vmatmul.mubr.f32.gmra.mrb[0].mxu0 %v6136
    %v6278 = vpop.f32.mrb[0].mxu0
    %v6279 = vadd.f32 0.0, %v6278
    %v6280 = vpop.f32.mrb[0].mxu0
    %6281 = vdwg.mxu0
    %s6282 = scalar_lea.vmem [#allocation7], 768
    %v6283 = vld [vmem:[%s6282] sm:$0xff]
    %v6284 = vld [vmem:[%s6282 + $0x8] sm:$0xff]
    %v6285 = vld [vmem:[%s6282 + $0x10] sm:$0xff]
    %v6286 = vld [vmem:[%s6282 + $0x18] sm:$0xff]
    %v6287 = vld [vmem:[%s6282 + $0x20] sm:$0xff]
    %v6288 = vld [vmem:[%s6282 + $0x28] sm:$0xff]
    %v6289 = vld [vmem:[%s6282 + $0x30] sm:$0xff]
    %v6290 = vld [vmem:[%s6282 + $0x38] sm:$0xff]
    %v6291 = vld [vmem:[%s6282 + $0x40] sm:$0xff]
    %v6292 = vld [vmem:[%s6282 + $0x48] sm:$0xff]
    %v6293 = vld [vmem:[%s6282 + $0x50] sm:$0xff]
    %v6294 = vld [vmem:[%s6282 + $0x58] sm:$0xff]
    %v6295 = vld [vmem:[%s6282 + $0x60] sm:$0xff]
    %v6296 = vld [vmem:[%s6282 + $0x68] sm:$0xff]
    %v6297 = vld [vmem:[%s6282 + $0x70] sm:$0xff]
    %v6298 = vld [vmem:[%s6282 + $0x78] sm:$0xff]
    %6299 = vmatprep.subr.mxu0 0.0
    %6300 = vmatpush1.msra.mxu0 %v6283
    %6301 = vmatprep.subr.mxu0 0.0
    %6302 = vmatpush1.msra.mxu0 %v6284
    %6303 = vmatprep.subr.mxu0 0.0
    %6304 = vmatpush1.msra.mxu0 %v6285
    %6305 = vmatprep.subr.mxu0 0.0
    %6306 = vmatpush1.msra.mxu0 %v6286
    %6307 = vmatprep.subr.mxu0 0.0
    %6308 = vmatpush1.msra.mxu0 %v6287
    %6309 = vmatprep.subr.mxu0 0.0
    %6310 = vmatpush1.msra.mxu0 %v6288
    %6311 = vmatprep.subr.mxu0 0.0
    %6312 = vmatpush1.msra.mxu0 %v6289
    %6313 = vmatprep.subr.mxu0 0.0
    %6314 = vmatpush1.msra.mxu0 %v6290
    %6315 = vmatprep.subr.mxu0 0.0
    %6316 = vmatpush1.msra.mxu0 %v6291
    %6317 = vmatprep.subr.mxu0 0.0
    %6318 = vmatpush1.msra.mxu0 %v6292
    %6319 = vmatprep.subr.mxu0 0.0
    %6320 = vmatpush1.msra.mxu0 %v6293
    %6321 = vmatprep.subr.mxu0 0.0
    %6322 = vmatpush1.msra.mxu0 %v6294
    %6323 = vmatprep.subr.mxu0 0.0
    %6324 = vmatpush1.msra.mxu0 %v6295
    %6325 = vmatprep.subr.mxu0 0.0
    %6326 = vmatpush1.msra.mxu0 %v6296
    %6327 = vmatprep.subr.mxu0 0.0
    %6328 = vmatpush1.msra.mxu0 %v6297
    %6329 = vmatprep.subr.mxu0 0.0
    %6330 = vmatpush1.msra.mxu0 %v6298
    %6331 = vmatprep.subr.mxu0 0.0
    %6332 = vmatpush1.msra.mxu0 0.0
    %6333 = vmatprep.subr.mxu0 0.0
    %6334 = vmatpush1.msra.mxu0 0.0
    %6335 = vmatprep.subr.mxu0 0.0
    %6336 = vmatpush1.msra.mxu0 0.0
    %6337 = vmatprep.subr.mxu0 0.0
    %6338 = vmatpush1.msra.mxu0 0.0
    %6339 = vmatprep.subr.mxu0 0.0
    %6340 = vmatpush1.msra.mxu0 0.0
    %6341 = vmatprep.subr.mxu0 0.0
    %6342 = vmatpush1.msra.mxu0 0.0
    %6343 = vmatprep.subr.mxu0 0.0
    %6344 = vmatpush1.msra.mxu0 0.0
    %6345 = vmatprep.subr.mxu0 0.0
    %6346 = vmatpush1.msra.mxu0 0.0
    %6347 = vmatprep.subr.mxu0 0.0
    %6348 = vmatpush1.msra.mxu0 0.0
    %6349 = vmatprep.subr.mxu0 0.0
    %6350 = vmatpush1.msra.mxu0 0.0
    %6351 = vmatprep.subr.mxu0 0.0
    %6352 = vmatpush1.msra.mxu0 0.0
    %6353 = vmatprep.subr.mxu0 0.0
    %6354 = vmatpush1.msra.mxu0 0.0
    %6355 = vmatprep.subr.mxu0 0.0
    %6356 = vmatpush1.msra.mxu0 0.0
    %6357 = vmatprep.subr.mxu0 0.0
    %6358 = vmatpush1.msra.mxu0 0.0
    %6359 = vmatprep.subr.mxu0 0.0
    %6360 = vmatpush1.msra.mxu0 0.0
    %6361 = vmatprep.subr.mxu0 0.0
    %6362 = vmatpush1.msra.mxu0 0.0
    %6363 = vmatprep.mubr.f32.mxu0 0.0
    %6364 = vmatmul.mubr.f32.gmra.mrb[0].mxu0 %v6204
    %v6365 = vpop.f32.mrb[0].mxu0
    %v6366 = vadd.f32 0.0, %v6365
    %v6367 = vpop.f32.mrb[0].mxu0
    %6368 = vmatprep.mubr.f32.mxu0 0.0
    %6369 = vmatmul.mubr.f32.gmra.mrb[0].mxu0 %v6209
    %v6370 = vpop.f32.mrb[0].mxu0
    %v6371 = vadd.f32 0.0, %v6370
    %v6372 = vpop.f32.mrb[0].mxu0
    %6373 = vmatprep.mubr.f32.mxu0 0.0
    %6374 = vmatmul.mubr.f32.gmra.mrb[0].mxu0 %v6214
    %v6375 = vpop.f32.mrb[0].mxu0
    %v6376 = vadd.f32 0.0, %v6375
    %v6377 = vpop.f32.mrb[0].mxu0
    %6378 = vmatprep.mubr.f32.mxu0 0.0
    %6379 = vmatmul.mubr.f32.gmra.mrb[0].mxu0 %v6219
    %v6380 = vpop.f32.mrb[0].mxu0
    %v6381 = vadd.f32 0.0, %v6380
    %v6382 = vpop.f32.mrb[0].mxu0
    %6383 = vmatprep.mubr.f32.mxu0 0.0
    %6384 = vmatmul.mubr.f32.gmra.mrb[0].mxu0 %v6224
    %v6385 = vpop.f32.mrb[0].mxu0
    %v6386 = vadd.f32 0.0, %v6385
    %v6387 = vpop.f32.mrb[0].mxu0
    %6388 = vmatprep.mubr.f32.mxu0 0.0
    %6389 = vmatmul.mubr.f32.gmra.mrb[0].mxu0 %v6229
    %v6390 = vpop.f32.mrb[0].mxu0
    %v6391 = vadd.f32 0.0, %v6390
    %v6392 = vpop.f32.mrb[0].mxu0
    %6393 = vmatprep.mubr.f32.mxu0 0.0
    %6394 = vmatmul.mubr.f32.gmra.mrb[0].mxu0 %v6234
    %v6395 = vpop.f32.mrb[0].mxu0
    %v6396 = vadd.f32 0.0, %v6395
    %v6397 = vpop.f32.mrb[0].mxu0
    %6398 = vmatprep.mubr.f32.mxu0 0.0
    %6399 = vmatmul.mubr.f32.gmra.mrb[0].mxu0 %v6239
    %v6400 = vpop.f32.mrb[0].mxu0
    %v6401 = vadd.f32 0.0, %v6400
    %v6402 = vpop.f32.mrb[0].mxu0
    %6403 = vmatprep.mubr.f32.mxu0 0.0
    %6404 = vmatmul.mubr.f32.gmra.mrb[0].mxu0 %v6244
    %v6405 = vpop.f32.mrb[0].mxu0
    %v6406 = vadd.f32 0.0, %v6405
    %v6407 = vpop.f32.mrb[0].mxu0
    %6408 = vmatprep.mubr.f32.mxu0 0.0
    %6409 = vmatmul.mubr.f32.gmra.mrb[0].mxu0 %v6249
    %v6410 = vpop.f32.mrb[0].mxu0
    %v6411 = vadd.f32 0.0, %v6410
    %v6412 = vpop.f32.mrb[0].mxu0
    %6413 = vmatprep.mubr.f32.mxu0 0.0
    %6414 = vmatmul.mubr.f32.gmra.mrb[0].mxu0 %v6254
    %v6415 = vpop.f32.mrb[0].mxu0
    %v6416 = vadd.f32 0.0, %v6415
    %v6417 = vpop.f32.mrb[0].mxu0
    %6418 = vmatprep.mubr.f32.mxu0 0.0
    %6419 = vmatmul.mubr.f32.gmra.mrb[0].mxu0 %v6259
    %v6420 = vpop.f32.mrb[0].mxu0
    %v6421 = vadd.f32 0.0, %v6420
    %v6422 = vpop.f32.mrb[0].mxu0
    %6423 = vmatprep.mubr.f32.mxu0 0.0
    %6424 = vmatmul.mubr.f32.gmra.mrb[0].mxu0 %v6264
    %v6425 = vpop.f32.mrb[0].mxu0
    %v6426 = vadd.f32 0.0, %v6425
    %v6427 = vpop.f32.mrb[0].mxu0
    %6428 = vmatprep.mubr.f32.mxu0 0.0
    %6429 = vmatmul.mubr.f32.gmra.mrb[0].mxu0 %v6269
    %v6430 = vpop.f32.mrb[0].mxu0
    %v6431 = vadd.f32 0.0, %v6430
    %v6432 = vpop.f32.mrb[0].mxu0
    %6433 = vmatprep.mubr.f32.mxu0 0.0
    %6434 = vmatmul.mubr.f32.gmra.mrb[0].mxu0 %v6274
    %v6435 = vpop.f32.mrb[0].mxu0
    %v6436 = vadd.f32 0.0, %v6435
    %v6437 = vpop.f32.mrb[0].mxu0
    %6438 = vmatprep.mubr.f32.mxu0 0.0
    %6439 = vmatmul.mubr.f32.gmra.mrb[0].mxu0 %v6279
    %v6440 = vpop.f32.mrb[0].mxu0
    %v6441 = vadd.f32 0.0, %v6440
    %v6442 = vpop.f32.mrb[0].mxu0
    %6443 = vdwg.mxu0
    %v6444 = vadd.f32 %v6043, %v6366
    %v6445 = vadd.f32 %v6048, %v6371
    %v6446 = vadd.f32 %v6053, %v6376
    %v6447 = vadd.f32 %v6058, %v6381
    %v6448 = vadd.f32 %v6063, %v6386
    %v6449 = vadd.f32 %v6068, %v6391
    %v6450 = vadd.f32 %v6073, %v6396
    %v6451 = vadd.f32 %v6078, %v6401
    %v6452 = vadd.f32 %v6083, %v6406
    %v6453 = vadd.f32 %v6088, %v6411
    %v6454 = vadd.f32 %v6093, %v6416
    %v6455 = vadd.f32 %v6098, %v6421
    %v6456 = vadd.f32 %v6103, %v6426
    %v6457 = vadd.f32 %v6108, %v6431
    %v6458 = vadd.f32 %v6113, %v6436
    %v6459 = vadd.f32 %v6118, %v6441
    %s6460 = scalar_lea.vmem %s9, 640
    %v6461 = vld [vmem:[%s6460] sm:$0xff]
    %v6462 = vld [vmem:[%s6460 + $0x8] sm:$0xff]
    %v6463 = vld [vmem:[%s6460 + $0x10] sm:$0xff]
    %v6464 = vld [vmem:[%s6460 + $0x18] sm:$0xff]
    %v6465 = vld [vmem:[%s6460 + $0x20] sm:$0xff]
    %v6466 = vld [vmem:[%s6460 + $0x28] sm:$0xff]
    %v6467 = vld [vmem:[%s6460 + $0x30] sm:$0xff]
    %v6468 = vld [vmem:[%s6460 + $0x38] sm:$0xff]
    %v6469 = vld [vmem:[%s6460 + $0x40] sm:$0xff]
    %v6470 = vld [vmem:[%s6460 + $0x48] sm:$0xff]
    %v6471 = vld [vmem:[%s6460 + $0x50] sm:$0xff]
    %v6472 = vld [vmem:[%s6460 + $0x58] sm:$0xff]
    %v6473 = vld [vmem:[%s6460 + $0x60] sm:$0xff]
    %v6474 = vld [vmem:[%s6460 + $0x68] sm:$0xff]
    %v6475 = vld [vmem:[%s6460 + $0x70] sm:$0xff]
    %v6476 = vld [vmem:[%s6460 + $0x78] sm:$0xff]
    %6477 = vmatprep.subr.mxu0 0.0
    %6478 = vmatpush1.msra.mxu0 %v4099
    %6479 = vmatprep.subr.mxu0 0.0
    %6480 = vmatpush1.msra.mxu0 %v4100
    %6481 = vmatprep.subr.mxu0 0.0
    %6482 = vmatpush1.msra.mxu0 %v4101
    %6483 = vmatprep.subr.mxu0 0.0
    %6484 = vmatpush1.msra.mxu0 %v4102
    %6485 = vmatprep.subr.mxu0 0.0
    %6486 = vmatpush1.msra.mxu0 %v4103
    %6487 = vmatprep.subr.mxu0 0.0
    %6488 = vmatpush1.msra.mxu0 %v4104
    %6489 = vmatprep.subr.mxu0 0.0
    %6490 = vmatpush1.msra.mxu0 %v4105
    %6491 = vmatprep.subr.mxu0 0.0
    %6492 = vmatpush1.msra.mxu0 %v4106
    %6493 = vmatprep.subr.mxu0 0.0
    %6494 = vmatpush1.msra.mxu0 %v4107
    %6495 = vmatprep.subr.mxu0 0.0
    %6496 = vmatpush1.msra.mxu0 %v4108
    %6497 = vmatprep.subr.mxu0 0.0
    %6498 = vmatpush1.msra.mxu0 %v4109
    %6499 = vmatprep.subr.mxu0 0.0
    %6500 = vmatpush1.msra.mxu0 %v4110
    %6501 = vmatprep.subr.mxu0 0.0
    %6502 = vmatpush1.msra.mxu0 %v4111
    %6503 = vmatprep.subr.mxu0 0.0
    %6504 = vmatpush1.msra.mxu0 %v4112
    %6505 = vmatprep.subr.mxu0 0.0
    %6506 = vmatpush1.msra.mxu0 %v4113
    %6507 = vmatprep.subr.mxu0 0.0
    %6508 = vmatpush1.msra.mxu0 %v4114
    %6509 = vmatprep.subr.mxu0 0.0
    %6510 = vmatpush1.msra.mxu0 0.0
    %6511 = vmatprep.subr.mxu0 0.0
    %6512 = vmatpush1.msra.mxu0 0.0
    %6513 = vmatprep.subr.mxu0 0.0
    %6514 = vmatpush1.msra.mxu0 0.0
    %6515 = vmatprep.subr.mxu0 0.0
    %6516 = vmatpush1.msra.mxu0 0.0
    %6517 = vmatprep.subr.mxu0 0.0
    %6518 = vmatpush1.msra.mxu0 0.0
    %6519 = vmatprep.subr.mxu0 0.0
    %6520 = vmatpush1.msra.mxu0 0.0
    %6521 = vmatprep.subr.mxu0 0.0
    %6522 = vmatpush1.msra.mxu0 0.0
    %6523 = vmatprep.subr.mxu0 0.0
    %6524 = vmatpush1.msra.mxu0 0.0
    %6525 = vmatprep.subr.mxu0 0.0
    %6526 = vmatpush1.msra.mxu0 0.0
    %6527 = vmatprep.subr.mxu0 0.0
    %6528 = vmatpush1.msra.mxu0 0.0
    %6529 = vmatprep.subr.mxu0 0.0
    %6530 = vmatpush1.msra.mxu0 0.0
    %6531 = vmatprep.subr.mxu0 0.0
    %6532 = vmatpush1.msra.mxu0 0.0
    %6533 = vmatprep.subr.mxu0 0.0
    %6534 = vmatpush1.msra.mxu0 0.0
    %6535 = vmatprep.subr.mxu0 0.0
    %6536 = vmatpush1.msra.mxu0 0.0
    %6537 = vmatprep.subr.mxu0 0.0
    %6538 = vmatpush1.msra.mxu0 0.0
    %6539 = vmatprep.subr.mxu0 0.0
    %6540 = vmatpush1.msra.mxu0 0.0
    %6541 = vmatprep.mubr.f32.mxu0 0.0
    %6542 = vmatmul.mubr.f32.gmra.mrb[0].mxu0 %v6461
    %v6543 = vpop.f32.mrb[0].mxu0
    %v6544 = vadd.f32 0.0, %v6543
    %v6545 = vpop.f32.mrb[0].mxu0
    %6546 = vmatprep.mubr.f32.mxu0 0.0
    %6547 = vmatmul.mubr.f32.gmra.mrb[0].mxu0 %v6462
    %v6548 = vpop.f32.mrb[0].mxu0
    %v6549 = vadd.f32 0.0, %v6548
    %v6550 = vpop.f32.mrb[0].mxu0
    %6551 = vmatprep.mubr.f32.mxu0 0.0
    %6552 = vmatmul.mubr.f32.gmra.mrb[0].mxu0 %v6463
    %v6553 = vpop.f32.mrb[0].mxu0
    %v6554 = vadd.f32 0.0, %v6553
    %v6555 = vpop.f32.mrb[0].mxu0
    %6556 = vmatprep.mubr.f32.mxu0 0.0
    %6557 = vmatmul.mubr.f32.gmra.mrb[0].mxu0 %v6464
    %v6558 = vpop.f32.mrb[0].mxu0
    %v6559 = vadd.f32 0.0, %v6558
    %v6560 = vpop.f32.mrb[0].mxu0
    %6561 = vmatprep.mubr.f32.mxu0 0.0
    %6562 = vmatmul.mubr.f32.gmra.mrb[0].mxu0 %v6465
    %v6563 = vpop.f32.mrb[0].mxu0
    %v6564 = vadd.f32 0.0, %v6563
    %v6565 = vpop.f32.mrb[0].mxu0
    %6566 = vmatprep.mubr.f32.mxu0 0.0
    %6567 = vmatmul.mubr.f32.gmra.mrb[0].mxu0 %v6466
    %v6568 = vpop.f32.mrb[0].mxu0
    %v6569 = vadd.f32 0.0, %v6568
    %v6570 = vpop.f32.mrb[0].mxu0
    %6571 = vmatprep.mubr.f32.mxu0 0.0
    %6572 = vmatmul.mubr.f32.gmra.mrb[0].mxu0 %v6467
    %v6573 = vpop.f32.mrb[0].mxu0
    %v6574 = vadd.f32 0.0, %v6573
    %v6575 = vpop.f32.mrb[0].mxu0
    %6576 = vmatprep.mubr.f32.mxu0 0.0
    %6577 = vmatmul.mubr.f32.gmra.mrb[0].mxu0 %v6468
    %v6578 = vpop.f32.mrb[0].mxu0
    %v6579 = vadd.f32 0.0, %v6578
    %v6580 = vpop.f32.mrb[0].mxu0
    %6581 = vmatprep.mubr.f32.mxu0 0.0
    %6582 = vmatmul.mubr.f32.gmra.mrb[0].mxu0 %v6469
    %v6583 = vpop.f32.mrb[0].mxu0
    %v6584 = vadd.f32 0.0, %v6583
    %v6585 = vpop.f32.mrb[0].mxu0
    %6586 = vmatprep.mubr.f32.mxu0 0.0
    %6587 = vmatmul.mubr.f32.gmra.mrb[0].mxu0 %v6470
    %v6588 = vpop.f32.mrb[0].mxu0
    %v6589 = vadd.f32 0.0, %v6588
    %v6590 = vpop.f32.mrb[0].mxu0
    %6591 = vmatprep.mubr.f32.mxu0 0.0
    %6592 = vmatmul.mubr.f32.gmra.mrb[0].mxu0 %v6471
    %v6593 = vpop.f32.mrb[0].mxu0
    %v6594 = vadd.f32 0.0, %v6593
    %v6595 = vpop.f32.mrb[0].mxu0
    %6596 = vmatprep.mubr.f32.mxu0 0.0
    %6597 = vmatmul.mubr.f32.gmra.mrb[0].mxu0 %v6472
    %v6598 = vpop.f32.mrb[0].mxu0
    %v6599 = vadd.f32 0.0, %v6598
    %v6600 = vpop.f32.mrb[0].mxu0
    %6601 = vmatprep.mubr.f32.mxu0 0.0
    %6602 = vmatmul.mubr.f32.gmra.mrb[0].mxu0 %v6473
    %v6603 = vpop.f32.mrb[0].mxu0
    %v6604 = vadd.f32 0.0, %v6603
    %v6605 = vpop.f32.mrb[0].mxu0
    %6606 = vmatprep.mubr.f32.mxu0 0.0
    %6607 = vmatmul.mubr.f32.gmra.mrb[0].mxu0 %v6474
    %v6608 = vpop.f32.mrb[0].mxu0
    %v6609 = vadd.f32 0.0, %v6608
    %v6610 = vpop.f32.mrb[0].mxu0
    %6611 = vmatprep.mubr.f32.mxu0 0.0
    %6612 = vmatmul.mubr.f32.gmra.mrb[0].mxu0 %v6475
    %v6613 = vpop.f32.mrb[0].mxu0
    %v6614 = vadd.f32 0.0, %v6613
    %v6615 = vpop.f32.mrb[0].mxu0
    %6616 = vmatprep.mubr.f32.mxu0 0.0
    %6617 = vmatmul.mubr.f32.gmra.mrb[0].mxu0 %v6476
    %v6618 = vpop.f32.mrb[0].mxu0
    %v6619 = vadd.f32 0.0, %v6618
    %v6620 = vpop.f32.mrb[0].mxu0
    %6621 = vdwg.mxu0
    %s6622 = scalar_lea.vmem [#allocation7], 512
    %v6623 = vld [vmem:[%s6622] sm:$0xff]
    %v6624 = vld [vmem:[%s6622 + $0x8] sm:$0xff]
    %v6625 = vld [vmem:[%s6622 + $0x10] sm:$0xff]
    %v6626 = vld [vmem:[%s6622 + $0x18] sm:$0xff]
    %v6627 = vld [vmem:[%s6622 + $0x20] sm:$0xff]
    %v6628 = vld [vmem:[%s6622 + $0x28] sm:$0xff]
    %v6629 = vld [vmem:[%s6622 + $0x30] sm:$0xff]
    %v6630 = vld [vmem:[%s6622 + $0x38] sm:$0xff]
    %v6631 = vld [vmem:[%s6622 + $0x40] sm:$0xff]
    %v6632 = vld [vmem:[%s6622 + $0x48] sm:$0xff]
    %v6633 = vld [vmem:[%s6622 + $0x50] sm:$0xff]
    %v6634 = vld [vmem:[%s6622 + $0x58] sm:$0xff]
    %v6635 = vld [vmem:[%s6622 + $0x60] sm:$0xff]
    %v6636 = vld [vmem:[%s6622 + $0x68] sm:$0xff]
    %v6637 = vld [vmem:[%s6622 + $0x70] sm:$0xff]
    %v6638 = vld [vmem:[%s6622 + $0x78] sm:$0xff]
    %6639 = vmatprep.subr.mxu0 0.0
    %6640 = vmatpush1.msra.mxu0 %v6623
    %6641 = vmatprep.subr.mxu0 0.0
    %6642 = vmatpush1.msra.mxu0 %v6624
    %6643 = vmatprep.subr.mxu0 0.0
    %6644 = vmatpush1.msra.mxu0 %v6625
    %6645 = vmatprep.subr.mxu0 0.0
    %6646 = vmatpush1.msra.mxu0 %v6626
    %6647 = vmatprep.subr.mxu0 0.0
    %6648 = vmatpush1.msra.mxu0 %v6627
    %6649 = vmatprep.subr.mxu0 0.0
    %6650 = vmatpush1.msra.mxu0 %v6628
    %6651 = vmatprep.subr.mxu0 0.0
    %6652 = vmatpush1.msra.mxu0 %v6629
    %6653 = vmatprep.subr.mxu0 0.0
    %6654 = vmatpush1.msra.mxu0 %v6630
    %6655 = vmatprep.subr.mxu0 0.0
    %6656 = vmatpush1.msra.mxu0 %v6631
    %6657 = vmatprep.subr.mxu0 0.0
    %6658 = vmatpush1.msra.mxu0 %v6632
    %6659 = vmatprep.subr.mxu0 0.0
    %6660 = vmatpush1.msra.mxu0 %v6633
    %6661 = vmatprep.subr.mxu0 0.0
    %6662 = vmatpush1.msra.mxu0 %v6634
    %6663 = vmatprep.subr.mxu0 0.0
    %6664 = vmatpush1.msra.mxu0 %v6635
    %6665 = vmatprep.subr.mxu0 0.0
    %6666 = vmatpush1.msra.mxu0 %v6636
    %6667 = vmatprep.subr.mxu0 0.0
    %6668 = vmatpush1.msra.mxu0 %v6637
    %6669 = vmatprep.subr.mxu0 0.0
    %6670 = vmatpush1.msra.mxu0 %v6638
    %6671 = vmatprep.subr.mxu0 0.0
    %6672 = vmatpush1.msra.mxu0 0.0
    %6673 = vmatprep.subr.mxu0 0.0
    %6674 = vmatpush1.msra.mxu0 0.0
    %6675 = vmatprep.subr.mxu0 0.0
    %6676 = vmatpush1.msra.mxu0 0.0
    %6677 = vmatprep.subr.mxu0 0.0
    %6678 = vmatpush1.msra.mxu0 0.0
    %6679 = vmatprep.subr.mxu0 0.0
    %6680 = vmatpush1.msra.mxu0 0.0
    %6681 = vmatprep.subr.mxu0 0.0
    %6682 = vmatpush1.msra.mxu0 0.0
    %6683 = vmatprep.subr.mxu0 0.0
    %6684 = vmatpush1.msra.mxu0 0.0
    %6685 = vmatprep.subr.mxu0 0.0
    %6686 = vmatpush1.msra.mxu0 0.0
    %6687 = vmatprep.subr.mxu0 0.0
    %6688 = vmatpush1.msra.mxu0 0.0
    %6689 = vmatprep.subr.mxu0 0.0
    %6690 = vmatpush1.msra.mxu0 0.0
    %6691 = vmatprep.subr.mxu0 0.0
    %6692 = vmatpush1.msra.mxu0 0.0
    %6693 = vmatprep.subr.mxu0 0.0
    %6694 = vmatpush1.msra.mxu0 0.0
    %6695 = vmatprep.subr.mxu0 0.0
    %6696 = vmatpush1.msra.mxu0 0.0
    %6697 = vmatprep.subr.mxu0 0.0
    %6698 = vmatpush1.msra.mxu0 0.0
    %6699 = vmatprep.subr.mxu0 0.0
    %6700 = vmatpush1.msra.mxu0 0.0
    %6701 = vmatprep.subr.mxu0 0.0
    %6702 = vmatpush1.msra.mxu0 0.0
    %6703 = vmatprep.mubr.f32.mxu0 0.0
    %6704 = vmatmul.mubr.f32.gmra.mrb[0].mxu0 %v6544
    %v6705 = vpop.f32.mrb[0].mxu0
    %v6706 = vadd.f32 0.0, %v6705
    %v6707 = vpop.f32.mrb[0].mxu0
    %6708 = vmatprep.mubr.f32.mxu0 0.0
    %6709 = vmatmul.mubr.f32.gmra.mrb[0].mxu0 %v6549
    %v6710 = vpop.f32.mrb[0].mxu0
    %v6711 = vadd.f32 0.0, %v6710
    %v6712 = vpop.f32.mrb[0].mxu0
    %6713 = vmatprep.mubr.f32.mxu0 0.0
    %6714 = vmatmul.mubr.f32.gmra.mrb[0].mxu0 %v6554
    %v6715 = vpop.f32.mrb[0].mxu0
    %v6716 = vadd.f32 0.0, %v6715
    %v6717 = vpop.f32.mrb[0].mxu0
    %6718 = vmatprep.mubr.f32.mxu0 0.0
    %6719 = vmatmul.mubr.f32.gmra.mrb[0].mxu0 %v6559
    %v6720 = vpop.f32.mrb[0].mxu0
    %v6721 = vadd.f32 0.0, %v6720
    %v6722 = vpop.f32.mrb[0].mxu0
    %6723 = vmatprep.mubr.f32.mxu0 0.0
    %6724 = vmatmul.mubr.f32.gmra.mrb[0].mxu0 %v6564
    %v6725 = vpop.f32.mrb[0].mxu0
    %v6726 = vadd.f32 0.0, %v6725
    %v6727 = vpop.f32.mrb[0].mxu0
    %6728 = vmatprep.mubr.f32.mxu0 0.0
    %6729 = vmatmul.mubr.f32.gmra.mrb[0].mxu0 %v6569
    %v6730 = vpop.f32.mrb[0].mxu0
    %v6731 = vadd.f32 0.0, %v6730
    %v6732 = vpop.f32.mrb[0].mxu0
    %6733 = vmatprep.mubr.f32.mxu0 0.0
    %6734 = vmatmul.mubr.f32.gmra.mrb[0].mxu0 %v6574
    %v6735 = vpop.f32.mrb[0].mxu0
    %v6736 = vadd.f32 0.0, %v6735
    %v6737 = vpop.f32.mrb[0].mxu0
    %6738 = vmatprep.mubr.f32.mxu0 0.0
    %6739 = vmatmul.mubr.f32.gmra.mrb[0].mxu0 %v6579
    %v6740 = vpop.f32.mrb[0].mxu0
    %v6741 = vadd.f32 0.0, %v6740
    %v6742 = vpop.f32.mrb[0].mxu0
    %6743 = vmatprep.mubr.f32.mxu0 0.0
    %6744 = vmatmul.mubr.f32.gmra.mrb[0].mxu0 %v6584
    %v6745 = vpop.f32.mrb[0].mxu0
    %v6746 = vadd.f32 0.0, %v6745
    %v6747 = vpop.f32.mrb[0].mxu0
    %6748 = vmatprep.mubr.f32.mxu0 0.0
    %6749 = vmatmul.mubr.f32.gmra.mrb[0].mxu0 %v6589
    %v6750 = vpop.f32.mrb[0].mxu0
    %v6751 = vadd.f32 0.0, %v6750
    %v6752 = vpop.f32.mrb[0].mxu0
    %6753 = vmatprep.mubr.f32.mxu0 0.0
    %6754 = vmatmul.mubr.f32.gmra.mrb[0].mxu0 %v6594
    %v6755 = vpop.f32.mrb[0].mxu0
    %v6756 = vadd.f32 0.0, %v6755
    %v6757 = vpop.f32.mrb[0].mxu0
    %6758 = vmatprep.mubr.f32.mxu0 0.0
    %6759 = vmatmul.mubr.f32.gmra.mrb[0].mxu0 %v6599
    %v6760 = vpop.f32.mrb[0].mxu0
    %v6761 = vadd.f32 0.0, %v6760
    %v6762 = vpop.f32.mrb[0].mxu0
    %6763 = vmatprep.mubr.f32.mxu0 0.0
    %6764 = vmatmul.mubr.f32.gmra.mrb[0].mxu0 %v6604
    %v6765 = vpop.f32.mrb[0].mxu0
    %v6766 = vadd.f32 0.0, %v6765
    %v6767 = vpop.f32.mrb[0].mxu0
    %6768 = vmatprep.mubr.f32.mxu0 0.0
    %6769 = vmatmul.mubr.f32.gmra.mrb[0].mxu0 %v6609
    %v6770 = vpop.f32.mrb[0].mxu0
    %v6771 = vadd.f32 0.0, %v6770
    %v6772 = vpop.f32.mrb[0].mxu0
    %6773 = vmatprep.mubr.f32.mxu0 0.0
    %6774 = vmatmul.mubr.f32.gmra.mrb[0].mxu0 %v6614
    %v6775 = vpop.f32.mrb[0].mxu0
    %v6776 = vadd.f32 0.0, %v6775
    %v6777 = vpop.f32.mrb[0].mxu0
    %6778 = vmatprep.mubr.f32.mxu0 0.0
    %6779 = vmatmul.mubr.f32.gmra.mrb[0].mxu0 %v6619
    %v6780 = vpop.f32.mrb[0].mxu0
    %v6781 = vadd.f32 0.0, %v6780
    %v6782 = vpop.f32.mrb[0].mxu0
    %6783 = vdwg.mxu0
    %v6784 = vadd.f32 %v6444, %v6706
    %v6785 = vadd.f32 %v6445, %v6711
    %v6786 = vadd.f32 %v6446, %v6716
    %v6787 = vadd.f32 %v6447, %v6721
    %v6788 = vadd.f32 %v6448, %v6726
    %v6789 = vadd.f32 %v6449, %v6731
    %v6790 = vadd.f32 %v6450, %v6736
    %v6791 = vadd.f32 %v6451, %v6741
    %v6792 = vadd.f32 %v6452, %v6746
    %v6793 = vadd.f32 %v6453, %v6751
    %v6794 = vadd.f32 %v6454, %v6756
    %v6795 = vadd.f32 %v6455, %v6761
    %v6796 = vadd.f32 %v6456, %v6766
    %v6797 = vadd.f32 %v6457, %v6771
    %v6798 = vadd.f32 %v6458, %v6776
    %v6799 = vadd.f32 %v6459, %v6781
    %v6800 = vtanh.pop %v6784
    %v6801 = vtanh.pop %v6785
    %v6802 = vtanh.pop %v6786
    %v6803 = vtanh.pop %v6787
    %v6804 = vtanh.pop %v6788
    %v6805 = vtanh.pop %v6789
    %v6806 = vtanh.pop %v6790
    %v6807 = vtanh.pop %v6791
    %v6808 = vtanh.pop %v6792
    %v6809 = vtanh.pop %v6793
    %v6810 = vtanh.pop %v6794
    %v6811 = vtanh.pop %v6795
    %v6812 = vtanh.pop %v6796
    %v6813 = vtanh.pop %v6797
    %v6814 = vtanh.pop %v6798
    %v6815 = vtanh.pop %v6799
    %s6816 = scalar_lea.vmem %s10, 128
    %6817 = vst [vmem:[%s6816] sm:$0xff] %v6800
    %6818 = vst [vmem:[%s6816 + $0x8] sm:$0xff] %v6801
    %6819 = vst [vmem:[%s6816 + $0x10] sm:$0xff] %v6802
    %6820 = vst [vmem:[%s6816 + $0x18] sm:$0xff] %v6803
    %6821 = vst [vmem:[%s6816 + $0x20] sm:$0xff] %v6804
    %6822 = vst [vmem:[%s6816 + $0x28] sm:$0xff] %v6805
    %6823 = vst [vmem:[%s6816 + $0x30] sm:$0xff] %v6806
    %6824 = vst [vmem:[%s6816 + $0x38] sm:$0xff] %v6807
    %6825 = vst [vmem:[%s6816 + $0x40] sm:$0xff] %v6808
    %6826 = vst [vmem:[%s6816 + $0x48] sm:$0xff] %v6809
    %6827 = vst [vmem:[%s6816 + $0x50] sm:$0xff] %v6810
    %6828 = vst [vmem:[%s6816 + $0x58] sm:$0xff] %v6811
    %6829 = vst [vmem:[%s6816 + $0x60] sm:$0xff] %v6812
    %6830 = vst [vmem:[%s6816 + $0x68] sm:$0xff] %v6813
    %6831 = vst [vmem:[%s6816 + $0x70] sm:$0xff] %v6814
    %6832 = vst [vmem:[%s6816 + $0x78] sm:$0xff] %v6815
    %v6833 = vld [vmem:[%s4762] sm:$0xff]
    %v6834 = vld [vmem:[%s4762 + $0x8] sm:$0xff]
    %v6835 = vld [vmem:[%s4762 + $0x10] sm:$0xff]
    %v6836 = vld [vmem:[%s4762 + $0x18] sm:$0xff]
    %v6837 = vld [vmem:[%s4762 + $0x20] sm:$0xff]
    %v6838 = vld [vmem:[%s4762 + $0x28] sm:$0xff]
    %v6839 = vld [vmem:[%s4762 + $0x30] sm:$0xff]
    %v6840 = vld [vmem:[%s4762 + $0x38] sm:$0xff]
    %v6841 = vld [vmem:[%s4762 + $0x40] sm:$0xff]
    %v6842 = vld [vmem:[%s4762 + $0x48] sm:$0xff]
    %v6843 = vld [vmem:[%s4762 + $0x50] sm:$0xff]
    %v6844 = vld [vmem:[%s4762 + $0x58] sm:$0xff]
    %v6845 = vld [vmem:[%s4762 + $0x60] sm:$0xff]
    %v6846 = vld [vmem:[%s4762 + $0x68] sm:$0xff]
    %v6847 = vld [vmem:[%s4762 + $0x70] sm:$0xff]
    %v6848 = vld [vmem:[%s4762 + $0x78] sm:$0xff]
    %6849 = vmatprep.subr.mxu0 0.0
    %6850 = vmatpush1.msra.mxu0 %v4099
    %6851 = vmatprep.subr.mxu0 0.0
    %6852 = vmatpush1.msra.mxu0 %v4100
    %6853 = vmatprep.subr.mxu0 0.0
    %6854 = vmatpush1.msra.mxu0 %v4101
    %6855 = vmatprep.subr.mxu0 0.0
    %6856 = vmatpush1.msra.mxu0 %v4102
    %6857 = vmatprep.subr.mxu0 0.0
    %6858 = vmatpush1.msra.mxu0 %v4103
    %6859 = vmatprep.subr.mxu0 0.0
    %6860 = vmatpush1.msra.mxu0 %v4104
    %6861 = vmatprep.subr.mxu0 0.0
    %6862 = vmatpush1.msra.mxu0 %v4105
    %6863 = vmatprep.subr.mxu0 0.0
    %6864 = vmatpush1.msra.mxu0 %v4106
    %6865 = vmatprep.subr.mxu0 0.0
    %6866 = vmatpush1.msra.mxu0 %v4107
    %6867 = vmatprep.subr.mxu0 0.0
    %6868 = vmatpush1.msra.mxu0 %v4108
    %6869 = vmatprep.subr.mxu0 0.0
    %6870 = vmatpush1.msra.mxu0 %v4109
    %6871 = vmatprep.subr.mxu0 0.0
    %6872 = vmatpush1.msra.mxu0 %v4110
    %6873 = vmatprep.subr.mxu0 0.0
    %6874 = vmatpush1.msra.mxu0 %v4111
    %6875 = vmatprep.subr.mxu0 0.0
    %6876 = vmatpush1.msra.mxu0 %v4112
    %6877 = vmatprep.subr.mxu0 0.0
    %6878 = vmatpush1.msra.mxu0 %v4113
    %6879 = vmatprep.subr.mxu0 0.0
    %6880 = vmatpush1.msra.mxu0 %v4114
    %6881 = vmatprep.subr.mxu0 0.0
    %6882 = vmatpush1.msra.mxu0 0.0
    %6883 = vmatprep.subr.mxu0 0.0
    %6884 = vmatpush1.msra.mxu0 0.0
    %6885 = vmatprep.subr.mxu0 0.0
    %6886 = vmatpush1.msra.mxu0 0.0
    %6887 = vmatprep.subr.mxu0 0.0
    %6888 = vmatpush1.msra.mxu0 0.0
    %6889 = vmatprep.subr.mxu0 0.0
    %6890 = vmatpush1.msra.mxu0 0.0
    %6891 = vmatprep.subr.mxu0 0.0
    %6892 = vmatpush1.msra.mxu0 0.0
    %6893 = vmatprep.subr.mxu0 0.0
    %6894 = vmatpush1.msra.mxu0 0.0
    %6895 = vmatprep.subr.mxu0 0.0
    %6896 = vmatpush1.msra.mxu0 0.0
    %6897 = vmatprep.subr.mxu0 0.0
    %6898 = vmatpush1.msra.mxu0 0.0
    %6899 = vmatprep.subr.mxu0 0.0
    %6900 = vmatpush1.msra.mxu0 0.0
    %6901 = vmatprep.subr.mxu0 0.0
    %6902 = vmatpush1.msra.mxu0 0.0
    %6903 = vmatprep.subr.mxu0 0.0
    %6904 = vmatpush1.msra.mxu0 0.0
    %6905 = vmatprep.subr.mxu0 0.0
    %6906 = vmatpush1.msra.mxu0 0.0
    %6907 = vmatprep.subr.mxu0 0.0
    %6908 = vmatpush1.msra.mxu0 0.0
    %6909 = vmatprep.subr.mxu0 0.0
    %6910 = vmatpush1.msra.mxu0 0.0
    %6911 = vmatprep.subr.mxu0 0.0
    %6912 = vmatpush1.msra.mxu0 0.0
    %6913 = vmatprep.mubr.f32.mxu0 0.0
    %6914 = vmatmul.mubr.f32.gmra.mrb[0].mxu0 %v6833
    %v6915 = vpop.f32.mrb[0].mxu0
    %v6916 = vadd.f32 0.0, %v6915
    %v6917 = vpop.f32.mrb[0].mxu0
    %6918 = vmatprep.mubr.f32.mxu0 0.0
    %6919 = vmatmul.mubr.f32.gmra.mrb[0].mxu0 %v6834
    %v6920 = vpop.f32.mrb[0].mxu0
    %v6921 = vadd.f32 0.0, %v6920
    %v6922 = vpop.f32.mrb[0].mxu0
    %6923 = vmatprep.mubr.f32.mxu0 0.0
    %6924 = vmatmul.mubr.f32.gmra.mrb[0].mxu0 %v6835
    %v6925 = vpop.f32.mrb[0].mxu0
    %v6926 = vadd.f32 0.0, %v6925
    %v6927 = vpop.f32.mrb[0].mxu0
    %6928 = vmatprep.mubr.f32.mxu0 0.0
    %6929 = vmatmul.mubr.f32.gmra.mrb[0].mxu0 %v6836
    %v6930 = vpop.f32.mrb[0].mxu0
    %v6931 = vadd.f32 0.0, %v6930
    %v6932 = vpop.f32.mrb[0].mxu0
    %6933 = vmatprep.mubr.f32.mxu0 0.0
    %6934 = vmatmul.mubr.f32.gmra.mrb[0].mxu0 %v6837
    %v6935 = vpop.f32.mrb[0].mxu0
    %v6936 = vadd.f32 0.0, %v6935
    %v6937 = vpop.f32.mrb[0].mxu0
    %6938 = vmatprep.mubr.f32.mxu0 0.0
    %6939 = vmatmul.mubr.f32.gmra.mrb[0].mxu0 %v6838
    %v6940 = vpop.f32.mrb[0].mxu0
    %v6941 = vadd.f32 0.0, %v6940
    %v6942 = vpop.f32.mrb[0].mxu0
    %6943 = vmatprep.mubr.f32.mxu0 0.0
    %6944 = vmatmul.mubr.f32.gmra.mrb[0].mxu0 %v6839
    %v6945 = vpop.f32.mrb[0].mxu0
    %v6946 = vadd.f32 0.0, %v6945
    %v6947 = vpop.f32.mrb[0].mxu0
    %6948 = vmatprep.mubr.f32.mxu0 0.0
    %6949 = vmatmul.mubr.f32.gmra.mrb[0].mxu0 %v6840
    %v6950 = vpop.f32.mrb[0].mxu0
    %v6951 = vadd.f32 0.0, %v6950
    %v6952 = vpop.f32.mrb[0].mxu0
    %6953 = vmatprep.mubr.f32.mxu0 0.0
    %6954 = vmatmul.mubr.f32.gmra.mrb[0].mxu0 %v6841
    %v6955 = vpop.f32.mrb[0].mxu0
    %v6956 = vadd.f32 0.0, %v6955
    %v6957 = vpop.f32.mrb[0].mxu0
    %6958 = vmatprep.mubr.f32.mxu0 0.0
    %6959 = vmatmul.mubr.f32.gmra.mrb[0].mxu0 %v6842
    %v6960 = vpop.f32.mrb[0].mxu0
    %v6961 = vadd.f32 0.0, %v6960
    %v6962 = vpop.f32.mrb[0].mxu0
    %6963 = vmatprep.mubr.f32.mxu0 0.0
    %6964 = vmatmul.mubr.f32.gmra.mrb[0].mxu0 %v6843
    %v6965 = vpop.f32.mrb[0].mxu0
    %v6966 = vadd.f32 0.0, %v6965
    %v6967 = vpop.f32.mrb[0].mxu0
    %6968 = vmatprep.mubr.f32.mxu0 0.0
    %6969 = vmatmul.mubr.f32.gmra.mrb[0].mxu0 %v6844
    %v6970 = vpop.f32.mrb[0].mxu0
    %v6971 = vadd.f32 0.0, %v6970
    %v6972 = vpop.f32.mrb[0].mxu0
    %6973 = vmatprep.mubr.f32.mxu0 0.0
    %6974 = vmatmul.mubr.f32.gmra.mrb[0].mxu0 %v6845
    %v6975 = vpop.f32.mrb[0].mxu0
    %v6976 = vadd.f32 0.0, %v6975
    %v6977 = vpop.f32.mrb[0].mxu0
    %6978 = vmatprep.mubr.f32.mxu0 0.0
    %6979 = vmatmul.mubr.f32.gmra.mrb[0].mxu0 %v6846
    %v6980 = vpop.f32.mrb[0].mxu0
    %v6981 = vadd.f32 0.0, %v6980
    %v6982 = vpop.f32.mrb[0].mxu0
    %6983 = vmatprep.mubr.f32.mxu0 0.0
    %6984 = vmatmul.mubr.f32.gmra.mrb[0].mxu0 %v6847
    %v6985 = vpop.f32.mrb[0].mxu0
    %v6986 = vadd.f32 0.0, %v6985
    %v6987 = vpop.f32.mrb[0].mxu0
    %6988 = vmatprep.mubr.f32.mxu0 0.0
    %6989 = vmatmul.mubr.f32.gmra.mrb[0].mxu0 %v6848
    %v6990 = vpop.f32.mrb[0].mxu0
    %v6991 = vadd.f32 0.0, %v6990
    %v6992 = vpop.f32.mrb[0].mxu0
    %6993 = vdwg.mxu0
    %s6994 = scalar_lea.vmem [#allocation7], 1408
    %v6995 = vld [vmem:[%s6994] sm:$0xff]
    %v6996 = vld [vmem:[%s6994 + $0x8] sm:$0xff]
    %v6997 = vld [vmem:[%s6994 + $0x10] sm:$0xff]
    %v6998 = vld [vmem:[%s6994 + $0x18] sm:$0xff]
    %v6999 = vld [vmem:[%s6994 + $0x20] sm:$0xff]
    %v7000 = vld [vmem:[%s6994 + $0x28] sm:$0xff]
    %v7001 = vld [vmem:[%s6994 + $0x30] sm:$0xff]
    %v7002 = vld [vmem:[%s6994 + $0x38] sm:$0xff]
    %v7003 = vld [vmem:[%s6994 + $0x40] sm:$0xff]
    %v7004 = vld [vmem:[%s6994 + $0x48] sm:$0xff]
    %v7005 = vld [vmem:[%s6994 + $0x50] sm:$0xff]
    %v7006 = vld [vmem:[%s6994 + $0x58] sm:$0xff]
    %v7007 = vld [vmem:[%s6994 + $0x60] sm:$0xff]
    %v7008 = vld [vmem:[%s6994 + $0x68] sm:$0xff]
    %v7009 = vld [vmem:[%s6994 + $0x70] sm:$0xff]
    %v7010 = vld [vmem:[%s6994 + $0x78] sm:$0xff]
    %v7011 = vld [vmem:[%s5102] sm:$0xff]
    %v7012 = vld [vmem:[%s5102 + $0x8] sm:$0xff]
    %v7013 = vld [vmem:[%s5102 + $0x10] sm:$0xff]
    %v7014 = vld [vmem:[%s5102 + $0x18] sm:$0xff]
    %v7015 = vld [vmem:[%s5102 + $0x20] sm:$0xff]
    %v7016 = vld [vmem:[%s5102 + $0x28] sm:$0xff]
    %v7017 = vld [vmem:[%s5102 + $0x30] sm:$0xff]
    %v7018 = vld [vmem:[%s5102 + $0x38] sm:$0xff]
    %v7019 = vld [vmem:[%s5102 + $0x40] sm:$0xff]
    %v7020 = vld [vmem:[%s5102 + $0x48] sm:$0xff]
    %v7021 = vld [vmem:[%s5102 + $0x50] sm:$0xff]
    %v7022 = vld [vmem:[%s5102 + $0x58] sm:$0xff]
    %v7023 = vld [vmem:[%s5102 + $0x60] sm:$0xff]
    %v7024 = vld [vmem:[%s5102 + $0x68] sm:$0xff]
    %v7025 = vld [vmem:[%s5102 + $0x70] sm:$0xff]
    %v7026 = vld [vmem:[%s5102 + $0x78] sm:$0xff]
    %7027 = vmatprep.subr.mxu0 0.0
    %7028 = vmatpush1.msra.mxu0 %v4099
    %7029 = vmatprep.subr.mxu0 0.0
    %7030 = vmatpush1.msra.mxu0 %v4100
    %7031 = vmatprep.subr.mxu0 0.0
    %7032 = vmatpush1.msra.mxu0 %v4101
    %7033 = vmatprep.subr.mxu0 0.0
    %7034 = vmatpush1.msra.mxu0 %v4102
    %7035 = vmatprep.subr.mxu0 0.0
    %7036 = vmatpush1.msra.mxu0 %v4103
    %7037 = vmatprep.subr.mxu0 0.0
    %7038 = vmatpush1.msra.mxu0 %v4104
    %7039 = vmatprep.subr.mxu0 0.0
    %7040 = vmatpush1.msra.mxu0 %v4105
    %7041 = vmatprep.subr.mxu0 0.0
    %7042 = vmatpush1.msra.mxu0 %v4106
    %7043 = vmatprep.subr.mxu0 0.0
    %7044 = vmatpush1.msra.mxu0 %v4107
    %7045 = vmatprep.subr.mxu0 0.0
    %7046 = vmatpush1.msra.mxu0 %v4108
    %7047 = vmatprep.subr.mxu0 0.0
    %7048 = vmatpush1.msra.mxu0 %v4109
    %7049 = vmatprep.subr.mxu0 0.0
    %7050 = vmatpush1.msra.mxu0 %v4110
    %7051 = vmatprep.subr.mxu0 0.0
    %7052 = vmatpush1.msra.mxu0 %v4111
    %7053 = vmatprep.subr.mxu0 0.0
    %7054 = vmatpush1.msra.mxu0 %v4112
    %7055 = vmatprep.subr.mxu0 0.0
    %7056 = vmatpush1.msra.mxu0 %v4113
    %7057 = vmatprep.subr.mxu0 0.0
    %7058 = vmatpush1.msra.mxu0 %v4114
    %7059 = vmatprep.subr.mxu0 0.0
    %7060 = vmatpush1.msra.mxu0 0.0
    %7061 = vmatprep.subr.mxu0 0.0
    %7062 = vmatpush1.msra.mxu0 0.0
    %7063 = vmatprep.subr.mxu0 0.0
    %7064 = vmatpush1.msra.mxu0 0.0
    %7065 = vmatprep.subr.mxu0 0.0
    %7066 = vmatpush1.msra.mxu0 0.0
    %7067 = vmatprep.subr.mxu0 0.0
    %7068 = vmatpush1.msra.mxu0 0.0
    %7069 = vmatprep.subr.mxu0 0.0
    %7070 = vmatpush1.msra.mxu0 0.0
    %7071 = vmatprep.subr.mxu0 0.0
    %7072 = vmatpush1.msra.mxu0 0.0
    %7073 = vmatprep.subr.mxu0 0.0
    %7074 = vmatpush1.msra.mxu0 0.0
    %7075 = vmatprep.subr.mxu0 0.0
    %7076 = vmatpush1.msra.mxu0 0.0
    %7077 = vmatprep.subr.mxu0 0.0
    %7078 = vmatpush1.msra.mxu0 0.0
    %7079 = vmatprep.subr.mxu0 0.0
    %7080 = vmatpush1.msra.mxu0 0.0
    %7081 = vmatprep.subr.mxu0 0.0
    %7082 = vmatpush1.msra.mxu0 0.0
    %7083 = vmatprep.subr.mxu0 0.0
    %7084 = vmatpush1.msra.mxu0 0.0
    %7085 = vmatprep.subr.mxu0 0.0
    %7086 = vmatpush1.msra.mxu0 0.0
    %7087 = vmatprep.subr.mxu0 0.0
    %7088 = vmatpush1.msra.mxu0 0.0
    %7089 = vmatprep.subr.mxu0 0.0
    %7090 = vmatpush1.msra.mxu0 0.0
    %7091 = vmatprep.mubr.f32.mxu0 0.0
    %7092 = vmatmul.mubr.f32.gmra.mrb[0].mxu0 %v7011
    %v7093 = vpop.f32.mrb[0].mxu0
    %v7094 = vadd.f32 0.0, %v7093
    %v7095 = vpop.f32.mrb[0].mxu0
    %7096 = vmatprep.mubr.f32.mxu0 0.0
    %7097 = vmatmul.mubr.f32.gmra.mrb[0].mxu0 %v7012
    %v7098 = vpop.f32.mrb[0].mxu0
    %v7099 = vadd.f32 0.0, %v7098
    %v7100 = vpop.f32.mrb[0].mxu0
    %7101 = vmatprep.mubr.f32.mxu0 0.0
    %7102 = vmatmul.mubr.f32.gmra.mrb[0].mxu0 %v7013
    %v7103 = vpop.f32.mrb[0].mxu0
    %v7104 = vadd.f32 0.0, %v7103
    %v7105 = vpop.f32.mrb[0].mxu0
    %7106 = vmatprep.mubr.f32.mxu0 0.0
    %7107 = vmatmul.mubr.f32.gmra.mrb[0].mxu0 %v7014
    %v7108 = vpop.f32.mrb[0].mxu0
    %v7109 = vadd.f32 0.0, %v7108
    %v7110 = vpop.f32.mrb[0].mxu0
    %7111 = vmatprep.mubr.f32.mxu0 0.0
    %7112 = vmatmul.mubr.f32.gmra.mrb[0].mxu0 %v7015
    %v7113 = vpop.f32.mrb[0].mxu0
    %v7114 = vadd.f32 0.0, %v7113
    %v7115 = vpop.f32.mrb[0].mxu0
    %7116 = vmatprep.mubr.f32.mxu0 0.0
    %7117 = vmatmul.mubr.f32.gmra.mrb[0].mxu0 %v7016
    %v7118 = vpop.f32.mrb[0].mxu0
    %v7119 = vadd.f32 0.0, %v7118
    %v7120 = vpop.f32.mrb[0].mxu0
    %7121 = vmatprep.mubr.f32.mxu0 0.0
    %7122 = vmatmul.mubr.f32.gmra.mrb[0].mxu0 %v7017
    %v7123 = vpop.f32.mrb[0].mxu0
    %v7124 = vadd.f32 0.0, %v7123
    %v7125 = vpop.f32.mrb[0].mxu0
    %7126 = vmatprep.mubr.f32.mxu0 0.0
    %7127 = vmatmul.mubr.f32.gmra.mrb[0].mxu0 %v7018
    %v7128 = vpop.f32.mrb[0].mxu0
    %v7129 = vadd.f32 0.0, %v7128
    %v7130 = vpop.f32.mrb[0].mxu0
    %7131 = vmatprep.mubr.f32.mxu0 0.0
    %7132 = vmatmul.mubr.f32.gmra.mrb[0].mxu0 %v7019
    %v7133 = vpop.f32.mrb[0].mxu0
    %v7134 = vadd.f32 0.0, %v7133
    %v7135 = vpop.f32.mrb[0].mxu0
    %7136 = vmatprep.mubr.f32.mxu0 0.0
    %7137 = vmatmul.mubr.f32.gmra.mrb[0].mxu0 %v7020
    %v7138 = vpop.f32.mrb[0].mxu0
    %v7139 = vadd.f32 0.0, %v7138
    %v7140 = vpop.f32.mrb[0].mxu0
    %7141 = vmatprep.mubr.f32.mxu0 0.0
    %7142 = vmatmul.mubr.f32.gmra.mrb[0].mxu0 %v7021
    %v7143 = vpop.f32.mrb[0].mxu0
    %v7144 = vadd.f32 0.0, %v7143
    %v7145 = vpop.f32.mrb[0].mxu0
    %7146 = vmatprep.mubr.f32.mxu0 0.0
    %7147 = vmatmul.mubr.f32.gmra.mrb[0].mxu0 %v7022
    %v7148 = vpop.f32.mrb[0].mxu0
    %v7149 = vadd.f32 0.0, %v7148
    %v7150 = vpop.f32.mrb[0].mxu0
    %7151 = vmatprep.mubr.f32.mxu0 0.0
    %7152 = vmatmul.mubr.f32.gmra.mrb[0].mxu0 %v7023
    %v7153 = vpop.f32.mrb[0].mxu0
    %v7154 = vadd.f32 0.0, %v7153
    %v7155 = vpop.f32.mrb[0].mxu0
    %7156 = vmatprep.mubr.f32.mxu0 0.0
    %7157 = vmatmul.mubr.f32.gmra.mrb[0].mxu0 %v7024
    %v7158 = vpop.f32.mrb[0].mxu0
    %v7159 = vadd.f32 0.0, %v7158
    %v7160 = vpop.f32.mrb[0].mxu0
    %7161 = vmatprep.mubr.f32.mxu0 0.0
    %7162 = vmatmul.mubr.f32.gmra.mrb[0].mxu0 %v7025
    %v7163 = vpop.f32.mrb[0].mxu0
    %v7164 = vadd.f32 0.0, %v7163
    %v7165 = vpop.f32.mrb[0].mxu0
    %7166 = vmatprep.mubr.f32.mxu0 0.0
    %7167 = vmatmul.mubr.f32.gmra.mrb[0].mxu0 %v7026
    %v7168 = vpop.f32.mrb[0].mxu0
    %v7169 = vadd.f32 0.0, %v7168
    %v7170 = vpop.f32.mrb[0].mxu0
    %7171 = vdwg.mxu0
    %s7172 = scalar_lea.vmem [#allocation7], 1152
    %v7173 = vld [vmem:[%s7172] sm:$0xff]
    %v7174 = vld [vmem:[%s7172 + $0x8] sm:$0xff]
    %v7175 = vld [vmem:[%s7172 + $0x10] sm:$0xff]
    %v7176 = vld [vmem:[%s7172 + $0x18] sm:$0xff]
    %v7177 = vld [vmem:[%s7172 + $0x20] sm:$0xff]
    %v7178 = vld [vmem:[%s7172 + $0x28] sm:$0xff]
    %v7179 = vld [vmem:[%s7172 + $0x30] sm:$0xff]
    %v7180 = vld [vmem:[%s7172 + $0x38] sm:$0xff]
    %v7181 = vld [vmem:[%s7172 + $0x40] sm:$0xff]
    %v7182 = vld [vmem:[%s7172 + $0x48] sm:$0xff]
    %v7183 = vld [vmem:[%s7172 + $0x50] sm:$0xff]
    %v7184 = vld [vmem:[%s7172 + $0x58] sm:$0xff]
    %v7185 = vld [vmem:[%s7172 + $0x60] sm:$0xff]
    %v7186 = vld [vmem:[%s7172 + $0x68] sm:$0xff]
    %v7187 = vld [vmem:[%s7172 + $0x70] sm:$0xff]
    %v7188 = vld [vmem:[%s7172 + $0x78] sm:$0xff]
    %7189 = vmatprep.subr.mxu0 0.0
    %7190 = vmatpush1.msra.mxu0 %v7173
    %7191 = vmatprep.subr.mxu0 0.0
    %7192 = vmatpush1.msra.mxu0 %v7174
    %7193 = vmatprep.subr.mxu0 0.0
    %7194 = vmatpush1.msra.mxu0 %v7175
    %7195 = vmatprep.subr.mxu0 0.0
    %7196 = vmatpush1.msra.mxu0 %v7176
    %7197 = vmatprep.subr.mxu0 0.0
    %7198 = vmatpush1.msra.mxu0 %v7177
    %7199 = vmatprep.subr.mxu0 0.0
    %7200 = vmatpush1.msra.mxu0 %v7178
    %7201 = vmatprep.subr.mxu0 0.0
    %7202 = vmatpush1.msra.mxu0 %v7179
    %7203 = vmatprep.subr.mxu0 0.0
    %7204 = vmatpush1.msra.mxu0 %v7180
    %7205 = vmatprep.subr.mxu0 0.0
    %7206 = vmatpush1.msra.mxu0 %v7181
    %7207 = vmatprep.subr.mxu0 0.0
    %7208 = vmatpush1.msra.mxu0 %v7182
    %7209 = vmatprep.subr.mxu0 0.0
    %7210 = vmatpush1.msra.mxu0 %v7183
    %7211 = vmatprep.subr.mxu0 0.0
    %7212 = vmatpush1.msra.mxu0 %v7184
    %7213 = vmatprep.subr.mxu0 0.0
    %7214 = vmatpush1.msra.mxu0 %v7185
    %7215 = vmatprep.subr.mxu0 0.0
    %7216 = vmatpush1.msra.mxu0 %v7186
    %7217 = vmatprep.subr.mxu0 0.0
    %7218 = vmatpush1.msra.mxu0 %v7187
    %7219 = vmatprep.subr.mxu0 0.0
    %7220 = vmatpush1.msra.mxu0 %v7188
    %7221 = vmatprep.subr.mxu0 0.0
    %7222 = vmatpush1.msra.mxu0 0.0
    %7223 = vmatprep.subr.mxu0 0.0
    %7224 = vmatpush1.msra.mxu0 0.0
    %7225 = vmatprep.subr.mxu0 0.0
    %7226 = vmatpush1.msra.mxu0 0.0
    %7227 = vmatprep.subr.mxu0 0.0
    %7228 = vmatpush1.msra.mxu0 0.0
    %7229 = vmatprep.subr.mxu0 0.0
    %7230 = vmatpush1.msra.mxu0 0.0
    %7231 = vmatprep.subr.mxu0 0.0
    %7232 = vmatpush1.msra.mxu0 0.0
    %7233 = vmatprep.subr.mxu0 0.0
    %7234 = vmatpush1.msra.mxu0 0.0
    %7235 = vmatprep.subr.mxu0 0.0
    %7236 = vmatpush1.msra.mxu0 0.0
    %7237 = vmatprep.subr.mxu0 0.0
    %7238 = vmatpush1.msra.mxu0 0.0
    %7239 = vmatprep.subr.mxu0 0.0
    %7240 = vmatpush1.msra.mxu0 0.0
    %7241 = vmatprep.subr.mxu0 0.0
    %7242 = vmatpush1.msra.mxu0 0.0
    %7243 = vmatprep.subr.mxu0 0.0
    %7244 = vmatpush1.msra.mxu0 0.0
    %7245 = vmatprep.subr.mxu0 0.0
    %7246 = vmatpush1.msra.mxu0 0.0
    %7247 = vmatprep.subr.mxu0 0.0
    %7248 = vmatpush1.msra.mxu0 0.0
    %7249 = vmatprep.subr.mxu0 0.0
    %7250 = vmatpush1.msra.mxu0 0.0
    %7251 = vmatprep.subr.mxu0 0.0
    %7252 = vmatpush1.msra.mxu0 0.0
    %7253 = vmatprep.mubr.f32.mxu0 0.0
    %7254 = vmatmul.mubr.f32.gmra.mrb[0].mxu0 %v7094
    %v7255 = vpop.f32.mrb[0].mxu0
    %v7256 = vadd.f32 0.0, %v7255
    %v7257 = vpop.f32.mrb[0].mxu0
    %7258 = vmatprep.mubr.f32.mxu0 0.0
    %7259 = vmatmul.mubr.f32.gmra.mrb[0].mxu0 %v7099
    %v7260 = vpop.f32.mrb[0].mxu0
    %v7261 = vadd.f32 0.0, %v7260
    %v7262 = vpop.f32.mrb[0].mxu0
    %7263 = vmatprep.mubr.f32.mxu0 0.0
    %7264 = vmatmul.mubr.f32.gmra.mrb[0].mxu0 %v7104
    %v7265 = vpop.f32.mrb[0].mxu0
    %v7266 = vadd.f32 0.0, %v7265
    %v7267 = vpop.f32.mrb[0].mxu0
    %7268 = vmatprep.mubr.f32.mxu0 0.0
    %7269 = vmatmul.mubr.f32.gmra.mrb[0].mxu0 %v7109
    %v7270 = vpop.f32.mrb[0].mxu0
    %v7271 = vadd.f32 0.0, %v7270
    %v7272 = vpop.f32.mrb[0].mxu0
    %7273 = vmatprep.mubr.f32.mxu0 0.0
    %7274 = vmatmul.mubr.f32.gmra.mrb[0].mxu0 %v7114
    %v7275 = vpop.f32.mrb[0].mxu0
    %v7276 = vadd.f32 0.0, %v7275
    %v7277 = vpop.f32.mrb[0].mxu0
    %7278 = vmatprep.mubr.f32.mxu0 0.0
    %7279 = vmatmul.mubr.f32.gmra.mrb[0].mxu0 %v7119
    %v7280 = vpop.f32.mrb[0].mxu0
    %v7281 = vadd.f32 0.0, %v7280
    %v7282 = vpop.f32.mrb[0].mxu0
    %7283 = vmatprep.mubr.f32.mxu0 0.0
    %7284 = vmatmul.mubr.f32.gmra.mrb[0].mxu0 %v7124
    %v7285 = vpop.f32.mrb[0].mxu0
    %v7286 = vadd.f32 0.0, %v7285
    %v7287 = vpop.f32.mrb[0].mxu0
    %7288 = vmatprep.mubr.f32.mxu0 0.0
    %7289 = vmatmul.mubr.f32.gmra.mrb[0].mxu0 %v7129
    %v7290 = vpop.f32.mrb[0].mxu0
    %v7291 = vadd.f32 0.0, %v7290
    %v7292 = vpop.f32.mrb[0].mxu0
    %7293 = vmatprep.mubr.f32.mxu0 0.0
    %7294 = vmatmul.mubr.f32.gmra.mrb[0].mxu0 %v7134
    %v7295 = vpop.f32.mrb[0].mxu0
    %v7296 = vadd.f32 0.0, %v7295
    %v7297 = vpop.f32.mrb[0].mxu0
    %7298 = vmatprep.mubr.f32.mxu0 0.0
    %7299 = vmatmul.mubr.f32.gmra.mrb[0].mxu0 %v7139
    %v7300 = vpop.f32.mrb[0].mxu0
    %v7301 = vadd.f32 0.0, %v7300
    %v7302 = vpop.f32.mrb[0].mxu0
    %7303 = vmatprep.mubr.f32.mxu0 0.0
    %7304 = vmatmul.mubr.f32.gmra.mrb[0].mxu0 %v7144
    %v7305 = vpop.f32.mrb[0].mxu0
    %v7306 = vadd.f32 0.0, %v7305
    %v7307 = vpop.f32.mrb[0].mxu0
    %7308 = vmatprep.mubr.f32.mxu0 0.0
    %7309 = vmatmul.mubr.f32.gmra.mrb[0].mxu0 %v7149
    %v7310 = vpop.f32.mrb[0].mxu0
    %v7311 = vadd.f32 0.0, %v7310
    %v7312 = vpop.f32.mrb[0].mxu0
    %7313 = vmatprep.mubr.f32.mxu0 0.0
    %7314 = vmatmul.mubr.f32.gmra.mrb[0].mxu0 %v7154
    %v7315 = vpop.f32.mrb[0].mxu0
    %v7316 = vadd.f32 0.0, %v7315
    %v7317 = vpop.f32.mrb[0].mxu0
    %7318 = vmatprep.mubr.f32.mxu0 0.0
    %7319 = vmatmul.mubr.f32.gmra.mrb[0].mxu0 %v7159
    %v7320 = vpop.f32.mrb[0].mxu0
    %v7321 = vadd.f32 0.0, %v7320
    %v7322 = vpop.f32.mrb[0].mxu0
    %7323 = vmatprep.mubr.f32.mxu0 0.0
    %7324 = vmatmul.mubr.f32.gmra.mrb[0].mxu0 %v7164
    %v7325 = vpop.f32.mrb[0].mxu0
    %v7326 = vadd.f32 0.0, %v7325
    %v7327 = vpop.f32.mrb[0].mxu0
    %7328 = vmatprep.mubr.f32.mxu0 0.0
    %7329 = vmatmul.mubr.f32.gmra.mrb[0].mxu0 %v7169
    %v7330 = vpop.f32.mrb[0].mxu0
    %v7331 = vadd.f32 0.0, %v7330
    %v7332 = vpop.f32.mrb[0].mxu0
    %7333 = vdwg.mxu0
    %7334 = vmatprep.subr.mxu0 0.0
    %7335 = vmatpush1.msra.mxu0 %v6995
    %7336 = vmatprep.subr.mxu0 0.0
    %7337 = vmatpush1.msra.mxu0 %v6996
    %7338 = vmatprep.subr.mxu0 0.0
    %7339 = vmatpush1.msra.mxu0 %v6997
    %7340 = vmatprep.subr.mxu0 0.0
    %7341 = vmatpush1.msra.mxu0 %v6998
    %7342 = vmatprep.subr.mxu0 0.0
    %7343 = vmatpush1.msra.mxu0 %v6999
    %7344 = vmatprep.subr.mxu0 0.0
    %7345 = vmatpush1.msra.mxu0 %v7000
    %7346 = vmatprep.subr.mxu0 0.0
    %7347 = vmatpush1.msra.mxu0 %v7001
    %7348 = vmatprep.subr.mxu0 0.0
    %7349 = vmatpush1.msra.mxu0 %v7002
    %7350 = vmatprep.subr.mxu0 0.0
    %7351 = vmatpush1.msra.mxu0 %v7003
    %7352 = vmatprep.subr.mxu0 0.0
    %7353 = vmatpush1.msra.mxu0 %v7004
    %7354 = vmatprep.subr.mxu0 0.0
    %7355 = vmatpush1.msra.mxu0 %v7005
    %7356 = vmatprep.subr.mxu0 0.0
    %7357 = vmatpush1.msra.mxu0 %v7006
    %7358 = vmatprep.subr.mxu0 0.0
    %7359 = vmatpush1.msra.mxu0 %v7007
    %7360 = vmatprep.subr.mxu0 0.0
    %7361 = vmatpush1.msra.mxu0 %v7008
    %7362 = vmatprep.subr.mxu0 0.0
    %7363 = vmatpush1.msra.mxu0 %v7009
    %7364 = vmatprep.subr.mxu0 0.0
    %7365 = vmatpush1.msra.mxu0 %v7010
    %7366 = vmatprep.subr.mxu0 0.0
    %7367 = vmatpush1.msra.mxu0 0.0
    %7368 = vmatprep.subr.mxu0 0.0
    %7369 = vmatpush1.msra.mxu0 0.0
    %7370 = vmatprep.subr.mxu0 0.0
    %7371 = vmatpush1.msra.mxu0 0.0
    %7372 = vmatprep.subr.mxu0 0.0
    %7373 = vmatpush1.msra.mxu0 0.0
    %7374 = vmatprep.subr.mxu0 0.0
    %7375 = vmatpush1.msra.mxu0 0.0
    %7376 = vmatprep.subr.mxu0 0.0
    %7377 = vmatpush1.msra.mxu0 0.0
    %7378 = vmatprep.subr.mxu0 0.0
    %7379 = vmatpush1.msra.mxu0 0.0
    %7380 = vmatprep.subr.mxu0 0.0
    %7381 = vmatpush1.msra.mxu0 0.0
    %7382 = vmatprep.subr.mxu0 0.0
    %7383 = vmatpush1.msra.mxu0 0.0
    %7384 = vmatprep.subr.mxu0 0.0
    %7385 = vmatpush1.msra.mxu0 0.0
    %7386 = vmatprep.subr.mxu0 0.0
    %7387 = vmatpush1.msra.mxu0 0.0
    %7388 = vmatprep.subr.mxu0 0.0
    %7389 = vmatpush1.msra.mxu0 0.0
    %7390 = vmatprep.subr.mxu0 0.0
    %7391 = vmatpush1.msra.mxu0 0.0
    %7392 = vmatprep.subr.mxu0 0.0
    %7393 = vmatpush1.msra.mxu0 0.0
    %7394 = vmatprep.subr.mxu0 0.0
    %7395 = vmatpush1.msra.mxu0 0.0
    %7396 = vmatprep.subr.mxu0 0.0
    %7397 = vmatpush1.msra.mxu0 0.0
    %7398 = vmatprep.mubr.f32.mxu0 0.0
    %7399 = vmatmul.mubr.f32.gmra.mrb[0].mxu0 %v6916
    %v7400 = vpop.f32.mrb[0].mxu0
    %v7401 = vadd.f32 %v7256, %v7400
    %v7402 = vpop.f32.mrb[0].mxu0
    %7403 = vmatprep.mubr.f32.mxu0 0.0
    %7404 = vmatmul.mubr.f32.gmra.mrb[0].mxu0 %v6921
    %v7405 = vpop.f32.mrb[0].mxu0
    %v7406 = vadd.f32 %v7261, %v7405
    %v7407 = vpop.f32.mrb[0].mxu0
    %7408 = vmatprep.mubr.f32.mxu0 0.0
    %7409 = vmatmul.mubr.f32.gmra.mrb[0].mxu0 %v6926
    %v7410 = vpop.f32.mrb[0].mxu0
    %v7411 = vadd.f32 %v7266, %v7410
    %v7412 = vpop.f32.mrb[0].mxu0
    %7413 = vmatprep.mubr.f32.mxu0 0.0
    %7414 = vmatmul.mubr.f32.gmra.mrb[0].mxu0 %v6931
    %v7415 = vpop.f32.mrb[0].mxu0
    %v7416 = vadd.f32 %v7271, %v7415
    %v7417 = vpop.f32.mrb[0].mxu0
    %7418 = vmatprep.mubr.f32.mxu0 0.0
    %7419 = vmatmul.mubr.f32.gmra.mrb[0].mxu0 %v6936
    %v7420 = vpop.f32.mrb[0].mxu0
    %v7421 = vadd.f32 %v7276, %v7420
    %v7422 = vpop.f32.mrb[0].mxu0
    %7423 = vmatprep.mubr.f32.mxu0 0.0
    %7424 = vmatmul.mubr.f32.gmra.mrb[0].mxu0 %v6941
    %v7425 = vpop.f32.mrb[0].mxu0
    %v7426 = vadd.f32 %v7281, %v7425
    %v7427 = vpop.f32.mrb[0].mxu0
    %7428 = vmatprep.mubr.f32.mxu0 0.0
    %7429 = vmatmul.mubr.f32.gmra.mrb[0].mxu0 %v6946
    %v7430 = vpop.f32.mrb[0].mxu0
    %v7431 = vadd.f32 %v7286, %v7430
    %v7432 = vpop.f32.mrb[0].mxu0
    %7433 = vmatprep.mubr.f32.mxu0 0.0
    %7434 = vmatmul.mubr.f32.gmra.mrb[0].mxu0 %v6951
    %v7435 = vpop.f32.mrb[0].mxu0
    %v7436 = vadd.f32 %v7291, %v7435
    %v7437 = vpop.f32.mrb[0].mxu0
    %7438 = vmatprep.mubr.f32.mxu0 0.0
    %7439 = vmatmul.mubr.f32.gmra.mrb[0].mxu0 %v6956
    %v7440 = vpop.f32.mrb[0].mxu0
    %v7441 = vadd.f32 %v7296, %v7440
    %v7442 = vpop.f32.mrb[0].mxu0
    %7443 = vmatprep.mubr.f32.mxu0 0.0
    %7444 = vmatmul.mubr.f32.gmra.mrb[0].mxu0 %v6961
    %v7445 = vpop.f32.mrb[0].mxu0
    %v7446 = vadd.f32 %v7301, %v7445
    %v7447 = vpop.f32.mrb[0].mxu0
    %7448 = vmatprep.mubr.f32.mxu0 0.0
    %7449 = vmatmul.mubr.f32.gmra.mrb[0].mxu0 %v6966
    %v7450 = vpop.f32.mrb[0].mxu0
    %v7451 = vadd.f32 %v7306, %v7450
    %v7452 = vpop.f32.mrb[0].mxu0
    %7453 = vmatprep.mubr.f32.mxu0 0.0
    %7454 = vmatmul.mubr.f32.gmra.mrb[0].mxu0 %v6971
    %v7455 = vpop.f32.mrb[0].mxu0
    %v7456 = vadd.f32 %v7311, %v7455
    %v7457 = vpop.f32.mrb[0].mxu0
    %7458 = vmatprep.mubr.f32.mxu0 0.0
    %7459 = vmatmul.mubr.f32.gmra.mrb[0].mxu0 %v6976
    %v7460 = vpop.f32.mrb[0].mxu0
    %v7461 = vadd.f32 %v7316, %v7460
    %v7462 = vpop.f32.mrb[0].mxu0
    %7463 = vmatprep.mubr.f32.mxu0 0.0
    %7464 = vmatmul.mubr.f32.gmra.mrb[0].mxu0 %v6981
    %v7465 = vpop.f32.mrb[0].mxu0
    %v7466 = vadd.f32 %v7321, %v7465
    %v7467 = vpop.f32.mrb[0].mxu0
    %7468 = vmatprep.mubr.f32.mxu0 0.0
    %7469 = vmatmul.mubr.f32.gmra.mrb[0].mxu0 %v6986
    %v7470 = vpop.f32.mrb[0].mxu0
    %v7471 = vadd.f32 %v7326, %v7470
    %v7472 = vpop.f32.mrb[0].mxu0
    %7473 = vmatprep.mubr.f32.mxu0 0.0
    %7474 = vmatmul.mubr.f32.gmra.mrb[0].mxu0 %v6991
    %v7475 = vpop.f32.mrb[0].mxu0
    %v7476 = vadd.f32 %v7331, %v7475
    %v7477 = vpop.f32.mrb[0].mxu0
    %7478 = vdwg.mxu0
    %s7479 = scalar_lea.vmem %s9, 768
    %v7480 = vld [vmem:[%s7479] sm:$0xff]
    %v7481 = vld [vmem:[%s7479 + $0x8] sm:$0xff]
    %v7482 = vld [vmem:[%s7479 + $0x10] sm:$0xff]
    %v7483 = vld [vmem:[%s7479 + $0x18] sm:$0xff]
    %v7484 = vld [vmem:[%s7479 + $0x20] sm:$0xff]
    %v7485 = vld [vmem:[%s7479 + $0x28] sm:$0xff]
    %v7486 = vld [vmem:[%s7479 + $0x30] sm:$0xff]
    %v7487 = vld [vmem:[%s7479 + $0x38] sm:$0xff]
    %v7488 = vld [vmem:[%s7479 + $0x40] sm:$0xff]
    %v7489 = vld [vmem:[%s7479 + $0x48] sm:$0xff]
    %v7490 = vld [vmem:[%s7479 + $0x50] sm:$0xff]
    %v7491 = vld [vmem:[%s7479 + $0x58] sm:$0xff]
    %v7492 = vld [vmem:[%s7479 + $0x60] sm:$0xff]
    %v7493 = vld [vmem:[%s7479 + $0x68] sm:$0xff]
    %v7494 = vld [vmem:[%s7479 + $0x70] sm:$0xff]
    %v7495 = vld [vmem:[%s7479 + $0x78] sm:$0xff]
    %7496 = vmatprep.subr.mxu0 0.0
    %7497 = vmatpush1.msra.mxu0 %v4099
    %7498 = vmatprep.subr.mxu0 0.0
    %7499 = vmatpush1.msra.mxu0 %v4100
    %7500 = vmatprep.subr.mxu0 0.0
    %7501 = vmatpush1.msra.mxu0 %v4101
    %7502 = vmatprep.subr.mxu0 0.0
    %7503 = vmatpush1.msra.mxu0 %v4102
    %7504 = vmatprep.subr.mxu0 0.0
    %7505 = vmatpush1.msra.mxu0 %v4103
    %7506 = vmatprep.subr.mxu0 0.0
    %7507 = vmatpush1.msra.mxu0 %v4104
    %7508 = vmatprep.subr.mxu0 0.0
    %7509 = vmatpush1.msra.mxu0 %v4105
    %7510 = vmatprep.subr.mxu0 0.0
    %7511 = vmatpush1.msra.mxu0 %v4106
    %7512 = vmatprep.subr.mxu0 0.0
    %7513 = vmatpush1.msra.mxu0 %v4107
    %7514 = vmatprep.subr.mxu0 0.0
    %7515 = vmatpush1.msra.mxu0 %v4108
    %7516 = vmatprep.subr.mxu0 0.0
    %7517 = vmatpush1.msra.mxu0 %v4109
    %7518 = vmatprep.subr.mxu0 0.0
    %7519 = vmatpush1.msra.mxu0 %v4110
    %7520 = vmatprep.subr.mxu0 0.0
    %7521 = vmatpush1.msra.mxu0 %v4111
    %7522 = vmatprep.subr.mxu0 0.0
    %7523 = vmatpush1.msra.mxu0 %v4112
    %7524 = vmatprep.subr.mxu0 0.0
    %7525 = vmatpush1.msra.mxu0 %v4113
    %7526 = vmatprep.subr.mxu0 0.0
    %7527 = vmatpush1.msra.mxu0 %v4114
    %7528 = vmatprep.subr.mxu0 0.0
    %7529 = vmatpush1.msra.mxu0 0.0
    %7530 = vmatprep.subr.mxu0 0.0
    %7531 = vmatpush1.msra.mxu0 0.0
    %7532 = vmatprep.subr.mxu0 0.0
    %7533 = vmatpush1.msra.mxu0 0.0
    %7534 = vmatprep.subr.mxu0 0.0
    %7535 = vmatpush1.msra.mxu0 0.0
    %7536 = vmatprep.subr.mxu0 0.0
    %7537 = vmatpush1.msra.mxu0 0.0
    %7538 = vmatprep.subr.mxu0 0.0
    %7539 = vmatpush1.msra.mxu0 0.0
    %7540 = vmatprep.subr.mxu0 0.0
    %7541 = vmatpush1.msra.mxu0 0.0
    %7542 = vmatprep.subr.mxu0 0.0
    %7543 = vmatpush1.msra.mxu0 0.0
    %7544 = vmatprep.subr.mxu0 0.0
    %7545 = vmatpush1.msra.mxu0 0.0
    %7546 = vmatprep.subr.mxu0 0.0
    %7547 = vmatpush1.msra.mxu0 0.0
    %7548 = vmatprep.subr.mxu0 0.0
    %7549 = vmatpush1.msra.mxu0 0.0
    %7550 = vmatprep.subr.mxu0 0.0
    %7551 = vmatpush1.msra.mxu0 0.0
    %7552 = vmatprep.subr.mxu0 0.0
    %7553 = vmatpush1.msra.mxu0 0.0
    %7554 = vmatprep.subr.mxu0 0.0
    %7555 = vmatpush1.msra.mxu0 0.0
    %7556 = vmatprep.subr.mxu0 0.0
    %7557 = vmatpush1.msra.mxu0 0.0
    %7558 = vmatprep.subr.mxu0 0.0
    %7559 = vmatpush1.msra.mxu0 0.0
    %7560 = vmatprep.mubr.f32.mxu0 0.0
    %7561 = vmatmul.mubr.f32.gmra.mrb[0].mxu0 %v7480
    %v7562 = vpop.f32.mrb[0].mxu0
    %v7563 = vadd.f32 0.0, %v7562
    %v7564 = vpop.f32.mrb[0].mxu0
    %7565 = vmatprep.mubr.f32.mxu0 0.0
    %7566 = vmatmul.mubr.f32.gmra.mrb[0].mxu0 %v7481
    %v7567 = vpop.f32.mrb[0].mxu0
    %v7568 = vadd.f32 0.0, %v7567
    %v7569 = vpop.f32.mrb[0].mxu0
    %7570 = vmatprep.mubr.f32.mxu0 0.0
    %7571 = vmatmul.mubr.f32.gmra.mrb[0].mxu0 %v7482
    %v7572 = vpop.f32.mrb[0].mxu0
    %v7573 = vadd.f32 0.0, %v7572
    %v7574 = vpop.f32.mrb[0].mxu0
    %7575 = vmatprep.mubr.f32.mxu0 0.0
    %7576 = vmatmul.mubr.f32.gmra.mrb[0].mxu0 %v7483
    %v7577 = vpop.f32.mrb[0].mxu0
    %v7578 = vadd.f32 0.0, %v7577
    %v7579 = vpop.f32.mrb[0].mxu0
    %7580 = vmatprep.mubr.f32.mxu0 0.0
    %7581 = vmatmul.mubr.f32.gmra.mrb[0].mxu0 %v7484
    %v7582 = vpop.f32.mrb[0].mxu0
    %v7583 = vadd.f32 0.0, %v7582
    %v7584 = vpop.f32.mrb[0].mxu0
    %7585 = vmatprep.mubr.f32.mxu0 0.0
    %7586 = vmatmul.mubr.f32.gmra.mrb[0].mxu0 %v7485
    %v7587 = vpop.f32.mrb[0].mxu0
    %v7588 = vadd.f32 0.0, %v7587
    %v7589 = vpop.f32.mrb[0].mxu0
    %7590 = vmatprep.mubr.f32.mxu0 0.0
    %7591 = vmatmul.mubr.f32.gmra.mrb[0].mxu0 %v7486
    %v7592 = vpop.f32.mrb[0].mxu0
    %v7593 = vadd.f32 0.0, %v7592
    %v7594 = vpop.f32.mrb[0].mxu0
    %7595 = vmatprep.mubr.f32.mxu0 0.0
    %7596 = vmatmul.mubr.f32.gmra.mrb[0].mxu0 %v7487
    %v7597 = vpop.f32.mrb[0].mxu0
    %v7598 = vadd.f32 0.0, %v7597
    %v7599 = vpop.f32.mrb[0].mxu0
    %7600 = vmatprep.mubr.f32.mxu0 0.0
    %7601 = vmatmul.mubr.f32.gmra.mrb[0].mxu0 %v7488
    %v7602 = vpop.f32.mrb[0].mxu0
    %v7603 = vadd.f32 0.0, %v7602
    %v7604 = vpop.f32.mrb[0].mxu0
    %7605 = vmatprep.mubr.f32.mxu0 0.0
    %7606 = vmatmul.mubr.f32.gmra.mrb[0].mxu0 %v7489
    %v7607 = vpop.f32.mrb[0].mxu0
    %v7608 = vadd.f32 0.0, %v7607
    %v7609 = vpop.f32.mrb[0].mxu0
    %7610 = vmatprep.mubr.f32.mxu0 0.0
    %7611 = vmatmul.mubr.f32.gmra.mrb[0].mxu0 %v7490
    %v7612 = vpop.f32.mrb[0].mxu0
    %v7613 = vadd.f32 0.0, %v7612
    %v7614 = vpop.f32.mrb[0].mxu0
    %7615 = vmatprep.mubr.f32.mxu0 0.0
    %7616 = vmatmul.mubr.f32.gmra.mrb[0].mxu0 %v7491
    %v7617 = vpop.f32.mrb[0].mxu0
    %v7618 = vadd.f32 0.0, %v7617
    %v7619 = vpop.f32.mrb[0].mxu0
    %7620 = vmatprep.mubr.f32.mxu0 0.0
    %7621 = vmatmul.mubr.f32.gmra.mrb[0].mxu0 %v7492
    %v7622 = vpop.f32.mrb[0].mxu0
    %v7623 = vadd.f32 0.0, %v7622
    %v7624 = vpop.f32.mrb[0].mxu0
    %7625 = vmatprep.mubr.f32.mxu0 0.0
    %7626 = vmatmul.mubr.f32.gmra.mrb[0].mxu0 %v7493
    %v7627 = vpop.f32.mrb[0].mxu0
    %v7628 = vadd.f32 0.0, %v7627
    %v7629 = vpop.f32.mrb[0].mxu0
    %7630 = vmatprep.mubr.f32.mxu0 0.0
    %7631 = vmatmul.mubr.f32.gmra.mrb[0].mxu0 %v7494
    %v7632 = vpop.f32.mrb[0].mxu0
    %v7633 = vadd.f32 0.0, %v7632
    %v7634 = vpop.f32.mrb[0].mxu0
    %7635 = vmatprep.mubr.f32.mxu0 0.0
    %7636 = vmatmul.mubr.f32.gmra.mrb[0].mxu0 %v7495
    %v7637 = vpop.f32.mrb[0].mxu0
    %v7638 = vadd.f32 0.0, %v7637
    %v7639 = vpop.f32.mrb[0].mxu0
    %7640 = vdwg.mxu0
    %s7641 = scalar_lea.vmem [#allocation7], 384
    %v7642 = vld [vmem:[%s7641] sm:$0xff]
    %v7643 = vld [vmem:[%s7641 + $0x8] sm:$0xff]
    %v7644 = vld [vmem:[%s7641 + $0x10] sm:$0xff]
    %v7645 = vld [vmem:[%s7641 + $0x18] sm:$0xff]
    %v7646 = vld [vmem:[%s7641 + $0x20] sm:$0xff]
    %v7647 = vld [vmem:[%s7641 + $0x28] sm:$0xff]
    %v7648 = vld [vmem:[%s7641 + $0x30] sm:$0xff]
    %v7649 = vld [vmem:[%s7641 + $0x38] sm:$0xff]
    %v7650 = vld [vmem:[%s7641 + $0x40] sm:$0xff]
    %v7651 = vld [vmem:[%s7641 + $0x48] sm:$0xff]
    %v7652 = vld [vmem:[%s7641 + $0x50] sm:$0xff]
    %v7653 = vld [vmem:[%s7641 + $0x58] sm:$0xff]
    %v7654 = vld [vmem:[%s7641 + $0x60] sm:$0xff]
    %v7655 = vld [vmem:[%s7641 + $0x68] sm:$0xff]
    %v7656 = vld [vmem:[%s7641 + $0x70] sm:$0xff]
    %v7657 = vld [vmem:[%s7641 + $0x78] sm:$0xff]
    %7658 = vmatprep.subr.mxu0 0.0
    %7659 = vmatpush1.msra.mxu0 %v7642
    %7660 = vmatprep.subr.mxu0 0.0
    %7661 = vmatpush1.msra.mxu0 %v7643
    %7662 = vmatprep.subr.mxu0 0.0
    %7663 = vmatpush1.msra.mxu0 %v7644
    %7664 = vmatprep.subr.mxu0 0.0
    %7665 = vmatpush1.msra.mxu0 %v7645
    %7666 = vmatprep.subr.mxu0 0.0
    %7667 = vmatpush1.msra.mxu0 %v7646
    %7668 = vmatprep.subr.mxu0 0.0
    %7669 = vmatpush1.msra.mxu0 %v7647
    %7670 = vmatprep.subr.mxu0 0.0
    %7671 = vmatpush1.msra.mxu0 %v7648
    %7672 = vmatprep.subr.mxu0 0.0
    %7673 = vmatpush1.msra.mxu0 %v7649
    %7674 = vmatprep.subr.mxu0 0.0
    %7675 = vmatpush1.msra.mxu0 %v7650
    %7676 = vmatprep.subr.mxu0 0.0
    %7677 = vmatpush1.msra.mxu0 %v7651
    %7678 = vmatprep.subr.mxu0 0.0
    %7679 = vmatpush1.msra.mxu0 %v7652
    %7680 = vmatprep.subr.mxu0 0.0
    %7681 = vmatpush1.msra.mxu0 %v7653
    %7682 = vmatprep.subr.mxu0 0.0
    %7683 = vmatpush1.msra.mxu0 %v7654
    %7684 = vmatprep.subr.mxu0 0.0
    %7685 = vmatpush1.msra.mxu0 %v7655
    %7686 = vmatprep.subr.mxu0 0.0
    %7687 = vmatpush1.msra.mxu0 %v7656
    %7688 = vmatprep.subr.mxu0 0.0
    %7689 = vmatpush1.msra.mxu0 %v7657
    %7690 = vmatprep.subr.mxu0 0.0
    %7691 = vmatpush1.msra.mxu0 0.0
    %7692 = vmatprep.subr.mxu0 0.0
    %7693 = vmatpush1.msra.mxu0 0.0
    %7694 = vmatprep.subr.mxu0 0.0
    %7695 = vmatpush1.msra.mxu0 0.0
    %7696 = vmatprep.subr.mxu0 0.0
    %7697 = vmatpush1.msra.mxu0 0.0
    %7698 = vmatprep.subr.mxu0 0.0
    %7699 = vmatpush1.msra.mxu0 0.0
    %7700 = vmatprep.subr.mxu0 0.0
    %7701 = vmatpush1.msra.mxu0 0.0
    %7702 = vmatprep.subr.mxu0 0.0
    %7703 = vmatpush1.msra.mxu0 0.0
    %7704 = vmatprep.subr.mxu0 0.0
    %7705 = vmatpush1.msra.mxu0 0.0
    %7706 = vmatprep.subr.mxu0 0.0
    %7707 = vmatpush1.msra.mxu0 0.0
    %7708 = vmatprep.subr.mxu0 0.0
    %7709 = vmatpush1.msra.mxu0 0.0
    %7710 = vmatprep.subr.mxu0 0.0
    %7711 = vmatpush1.msra.mxu0 0.0
    %7712 = vmatprep.subr.mxu0 0.0
    %7713 = vmatpush1.msra.mxu0 0.0
    %7714 = vmatprep.subr.mxu0 0.0
    %7715 = vmatpush1.msra.mxu0 0.0
    %7716 = vmatprep.subr.mxu0 0.0
    %7717 = vmatpush1.msra.mxu0 0.0
    %7718 = vmatprep.subr.mxu0 0.0
    %7719 = vmatpush1.msra.mxu0 0.0
    %7720 = vmatprep.subr.mxu0 0.0
    %7721 = vmatpush1.msra.mxu0 0.0
    %7722 = vmatprep.mubr.f32.mxu0 0.0
    %7723 = vmatmul.mubr.f32.gmra.mrb[0].mxu0 %v7563
    %v7724 = vpop.f32.mrb[0].mxu0
    %v7725 = vadd.f32 0.0, %v7724
    %v7726 = vpop.f32.mrb[0].mxu0
    %7727 = vmatprep.mubr.f32.mxu0 0.0
    %7728 = vmatmul.mubr.f32.gmra.mrb[0].mxu0 %v7568
    %v7729 = vpop.f32.mrb[0].mxu0
    %v7730 = vadd.f32 0.0, %v7729
    %v7731 = vpop.f32.mrb[0].mxu0
    %7732 = vmatprep.mubr.f32.mxu0 0.0
    %7733 = vmatmul.mubr.f32.gmra.mrb[0].mxu0 %v7573
    %v7734 = vpop.f32.mrb[0].mxu0
    %v7735 = vadd.f32 0.0, %v7734
    %v7736 = vpop.f32.mrb[0].mxu0
    %7737 = vmatprep.mubr.f32.mxu0 0.0
    %7738 = vmatmul.mubr.f32.gmra.mrb[0].mxu0 %v7578
    %v7739 = vpop.f32.mrb[0].mxu0
    %v7740 = vadd.f32 0.0, %v7739
    %v7741 = vpop.f32.mrb[0].mxu0
    %7742 = vmatprep.mubr.f32.mxu0 0.0
    %7743 = vmatmul.mubr.f32.gmra.mrb[0].mxu0 %v7583
    %v7744 = vpop.f32.mrb[0].mxu0
    %v7745 = vadd.f32 0.0, %v7744
    %v7746 = vpop.f32.mrb[0].mxu0
    %7747 = vmatprep.mubr.f32.mxu0 0.0
    %7748 = vmatmul.mubr.f32.gmra.mrb[0].mxu0 %v7588
    %v7749 = vpop.f32.mrb[0].mxu0
    %v7750 = vadd.f32 0.0, %v7749
    %v7751 = vpop.f32.mrb[0].mxu0
    %7752 = vmatprep.mubr.f32.mxu0 0.0
    %7753 = vmatmul.mubr.f32.gmra.mrb[0].mxu0 %v7593
    %v7754 = vpop.f32.mrb[0].mxu0
    %v7755 = vadd.f32 0.0, %v7754
    %v7756 = vpop.f32.mrb[0].mxu0
    %7757 = vmatprep.mubr.f32.mxu0 0.0
    %7758 = vmatmul.mubr.f32.gmra.mrb[0].mxu0 %v7598
    %v7759 = vpop.f32.mrb[0].mxu0
    %v7760 = vadd.f32 0.0, %v7759
    %v7761 = vpop.f32.mrb[0].mxu0
    %7762 = vmatprep.mubr.f32.mxu0 0.0
    %7763 = vmatmul.mubr.f32.gmra.mrb[0].mxu0 %v7603
    %v7764 = vpop.f32.mrb[0].mxu0
    %v7765 = vadd.f32 0.0, %v7764
    %v7766 = vpop.f32.mrb[0].mxu0
    %7767 = vmatprep.mubr.f32.mxu0 0.0
    %7768 = vmatmul.mubr.f32.gmra.mrb[0].mxu0 %v7608
    %v7769 = vpop.f32.mrb[0].mxu0
    %v7770 = vadd.f32 0.0, %v7769
    %v7771 = vpop.f32.mrb[0].mxu0
    %7772 = vmatprep.mubr.f32.mxu0 0.0
    %7773 = vmatmul.mubr.f32.gmra.mrb[0].mxu0 %v7613
    %v7774 = vpop.f32.mrb[0].mxu0
    %v7775 = vadd.f32 0.0, %v7774
    %v7776 = vpop.f32.mrb[0].mxu0
    %7777 = vmatprep.mubr.f32.mxu0 0.0
    %7778 = vmatmul.mubr.f32.gmra.mrb[0].mxu0 %v7618
    %v7779 = vpop.f32.mrb[0].mxu0
    %v7780 = vadd.f32 0.0, %v7779
    %v7781 = vpop.f32.mrb[0].mxu0
    %7782 = vmatprep.mubr.f32.mxu0 0.0
    %7783 = vmatmul.mubr.f32.gmra.mrb[0].mxu0 %v7623
    %v7784 = vpop.f32.mrb[0].mxu0
    %v7785 = vadd.f32 0.0, %v7784
    %v7786 = vpop.f32.mrb[0].mxu0
    %7787 = vmatprep.mubr.f32.mxu0 0.0
    %7788 = vmatmul.mubr.f32.gmra.mrb[0].mxu0 %v7628
    %v7789 = vpop.f32.mrb[0].mxu0
    %v7790 = vadd.f32 0.0, %v7789
    %v7791 = vpop.f32.mrb[0].mxu0
    %7792 = vmatprep.mubr.f32.mxu0 0.0
    %7793 = vmatmul.mubr.f32.gmra.mrb[0].mxu0 %v7633
    %v7794 = vpop.f32.mrb[0].mxu0
    %v7795 = vadd.f32 0.0, %v7794
    %v7796 = vpop.f32.mrb[0].mxu0
    %7797 = vmatprep.mubr.f32.mxu0 0.0
    %7798 = vmatmul.mubr.f32.gmra.mrb[0].mxu0 %v7638
    %v7799 = vpop.f32.mrb[0].mxu0
    %v7800 = vadd.f32 0.0, %v7799
    %v7801 = vpop.f32.mrb[0].mxu0
    %7802 = vdwg.mxu0
    %v7803 = vadd.f32 %v7401, %v7725
    %v7804 = vadd.f32 %v7406, %v7730
    %v7805 = vadd.f32 %v7411, %v7735
    %v7806 = vadd.f32 %v7416, %v7740
    %v7807 = vadd.f32 %v7421, %v7745
    %v7808 = vadd.f32 %v7426, %v7750
    %v7809 = vadd.f32 %v7431, %v7755
    %v7810 = vadd.f32 %v7436, %v7760
    %v7811 = vadd.f32 %v7441, %v7765
    %v7812 = vadd.f32 %v7446, %v7770
    %v7813 = vadd.f32 %v7451, %v7775
    %v7814 = vadd.f32 %v7456, %v7780
    %v7815 = vadd.f32 %v7461, %v7785
    %v7816 = vadd.f32 %v7466, %v7790
    %v7817 = vadd.f32 %v7471, %v7795
    %v7818 = vadd.f32 %v7476, %v7800
    %s7819 = scalar_lea.vmem %s9, 896
    %v7820 = vld [vmem:[%s7819] sm:$0xff]
    %v7821 = vld [vmem:[%s7819 + $0x8] sm:$0xff]
    %v7822 = vld [vmem:[%s7819 + $0x10] sm:$0xff]
    %v7823 = vld [vmem:[%s7819 + $0x18] sm:$0xff]
    %v7824 = vld [vmem:[%s7819 + $0x20] sm:$0xff]
    %v7825 = vld [vmem:[%s7819 + $0x28] sm:$0xff]
    %v7826 = vld [vmem:[%s7819 + $0x30] sm:$0xff]
    %v7827 = vld [vmem:[%s7819 + $0x38] sm:$0xff]
    %v7828 = vld [vmem:[%s7819 + $0x40] sm:$0xff]
    %v7829 = vld [vmem:[%s7819 + $0x48] sm:$0xff]
    %v7830 = vld [vmem:[%s7819 + $0x50] sm:$0xff]
    %v7831 = vld [vmem:[%s7819 + $0x58] sm:$0xff]
    %v7832 = vld [vmem:[%s7819 + $0x60] sm:$0xff]
    %v7833 = vld [vmem:[%s7819 + $0x68] sm:$0xff]
    %v7834 = vld [vmem:[%s7819 + $0x70] sm:$0xff]
    %v7835 = vld [vmem:[%s7819 + $0x78] sm:$0xff]
    %7836 = vmatprep.subr.mxu0 0.0
    %7837 = vmatpush1.msra.mxu0 %v4099
    %7838 = vmatprep.subr.mxu0 0.0
    %7839 = vmatpush1.msra.mxu0 %v4100
    %7840 = vmatprep.subr.mxu0 0.0
    %7841 = vmatpush1.msra.mxu0 %v4101
    %7842 = vmatprep.subr.mxu0 0.0
    %7843 = vmatpush1.msra.mxu0 %v4102
    %7844 = vmatprep.subr.mxu0 0.0
    %7845 = vmatpush1.msra.mxu0 %v4103
    %7846 = vmatprep.subr.mxu0 0.0
    %7847 = vmatpush1.msra.mxu0 %v4104
    %7848 = vmatprep.subr.mxu0 0.0
    %7849 = vmatpush1.msra.mxu0 %v4105
    %7850 = vmatprep.subr.mxu0 0.0
    %7851 = vmatpush1.msra.mxu0 %v4106
    %7852 = vmatprep.subr.mxu0 0.0
    %7853 = vmatpush1.msra.mxu0 %v4107
    %7854 = vmatprep.subr.mxu0 0.0
    %7855 = vmatpush1.msra.mxu0 %v4108
    %7856 = vmatprep.subr.mxu0 0.0
    %7857 = vmatpush1.msra.mxu0 %v4109
    %7858 = vmatprep.subr.mxu0 0.0
    %7859 = vmatpush1.msra.mxu0 %v4110
    %7860 = vmatprep.subr.mxu0 0.0
    %7861 = vmatpush1.msra.mxu0 %v4111
    %7862 = vmatprep.subr.mxu0 0.0
    %7863 = vmatpush1.msra.mxu0 %v4112
    %7864 = vmatprep.subr.mxu0 0.0
    %7865 = vmatpush1.msra.mxu0 %v4113
    %7866 = vmatprep.subr.mxu0 0.0
    %7867 = vmatpush1.msra.mxu0 %v4114
    %7868 = vmatprep.subr.mxu0 0.0
    %7869 = vmatpush1.msra.mxu0 0.0
    %7870 = vmatprep.subr.mxu0 0.0
    %7871 = vmatpush1.msra.mxu0 0.0
    %7872 = vmatprep.subr.mxu0 0.0
    %7873 = vmatpush1.msra.mxu0 0.0
    %7874 = vmatprep.subr.mxu0 0.0
    %7875 = vmatpush1.msra.mxu0 0.0
    %7876 = vmatprep.subr.mxu0 0.0
    %7877 = vmatpush1.msra.mxu0 0.0
    %7878 = vmatprep.subr.mxu0 0.0
    %7879 = vmatpush1.msra.mxu0 0.0
    %7880 = vmatprep.subr.mxu0 0.0
    %7881 = vmatpush1.msra.mxu0 0.0
    %7882 = vmatprep.subr.mxu0 0.0
    %7883 = vmatpush1.msra.mxu0 0.0
    %7884 = vmatprep.subr.mxu0 0.0
    %7885 = vmatpush1.msra.mxu0 0.0
    %7886 = vmatprep.subr.mxu0 0.0
    %7887 = vmatpush1.msra.mxu0 0.0
    %7888 = vmatprep.subr.mxu0 0.0
    %7889 = vmatpush1.msra.mxu0 0.0
    %7890 = vmatprep.subr.mxu0 0.0
    %7891 = vmatpush1.msra.mxu0 0.0
    %7892 = vmatprep.subr.mxu0 0.0
    %7893 = vmatpush1.msra.mxu0 0.0
    %7894 = vmatprep.subr.mxu0 0.0
    %7895 = vmatpush1.msra.mxu0 0.0
    %7896 = vmatprep.subr.mxu0 0.0
    %7897 = vmatpush1.msra.mxu0 0.0
    %7898 = vmatprep.subr.mxu0 0.0
    %7899 = vmatpush1.msra.mxu0 0.0
    %7900 = vmatprep.mubr.f32.mxu0 0.0
    %7901 = vmatmul.mubr.f32.gmra.mrb[0].mxu0 %v7820
    %v7902 = vpop.f32.mrb[0].mxu0
    %v7903 = vadd.f32 0.0, %v7902
    %v7904 = vpop.f32.mrb[0].mxu0
    %7905 = vmatprep.mubr.f32.mxu0 0.0
    %7906 = vmatmul.mubr.f32.gmra.mrb[0].mxu0 %v7821
    %v7907 = vpop.f32.mrb[0].mxu0
    %v7908 = vadd.f32 0.0, %v7907
    %v7909 = vpop.f32.mrb[0].mxu0
    %7910 = vmatprep.mubr.f32.mxu0 0.0
    %7911 = vmatmul.mubr.f32.gmra.mrb[0].mxu0 %v7822
    %v7912 = vpop.f32.mrb[0].mxu0
    %v7913 = vadd.f32 0.0, %v7912
    %v7914 = vpop.f32.mrb[0].mxu0
    %7915 = vmatprep.mubr.f32.mxu0 0.0
    %7916 = vmatmul.mubr.f32.gmra.mrb[0].mxu0 %v7823
    %v7917 = vpop.f32.mrb[0].mxu0
    %v7918 = vadd.f32 0.0, %v7917
    %v7919 = vpop.f32.mrb[0].mxu0
    %7920 = vmatprep.mubr.f32.mxu0 0.0
    %7921 = vmatmul.mubr.f32.gmra.mrb[0].mxu0 %v7824
    %v7922 = vpop.f32.mrb[0].mxu0
    %v7923 = vadd.f32 0.0, %v7922
    %v7924 = vpop.f32.mrb[0].mxu0
    %7925 = vmatprep.mubr.f32.mxu0 0.0
    %7926 = vmatmul.mubr.f32.gmra.mrb[0].mxu0 %v7825
    %v7927 = vpop.f32.mrb[0].mxu0
    %v7928 = vadd.f32 0.0, %v7927
    %v7929 = vpop.f32.mrb[0].mxu0
    %7930 = vmatprep.mubr.f32.mxu0 0.0
    %7931 = vmatmul.mubr.f32.gmra.mrb[0].mxu0 %v7826
    %v7932 = vpop.f32.mrb[0].mxu0
    %v7933 = vadd.f32 0.0, %v7932
    %v7934 = vpop.f32.mrb[0].mxu0
    %7935 = vmatprep.mubr.f32.mxu0 0.0
    %7936 = vmatmul.mubr.f32.gmra.mrb[0].mxu0 %v7827
    %v7937 = vpop.f32.mrb[0].mxu0
    %v7938 = vadd.f32 0.0, %v7937
    %v7939 = vpop.f32.mrb[0].mxu0
    %7940 = vmatprep.mubr.f32.mxu0 0.0
    %7941 = vmatmul.mubr.f32.gmra.mrb[0].mxu0 %v7828
    %v7942 = vpop.f32.mrb[0].mxu0
    %v7943 = vadd.f32 0.0, %v7942
    %v7944 = vpop.f32.mrb[0].mxu0
    %7945 = vmatprep.mubr.f32.mxu0 0.0
    %7946 = vmatmul.mubr.f32.gmra.mrb[0].mxu0 %v7829
    %v7947 = vpop.f32.mrb[0].mxu0
    %v7948 = vadd.f32 0.0, %v7947
    %v7949 = vpop.f32.mrb[0].mxu0
    %7950 = vmatprep.mubr.f32.mxu0 0.0
    %7951 = vmatmul.mubr.f32.gmra.mrb[0].mxu0 %v7830
    %v7952 = vpop.f32.mrb[0].mxu0
    %v7953 = vadd.f32 0.0, %v7952
    %v7954 = vpop.f32.mrb[0].mxu0
    %7955 = vmatprep.mubr.f32.mxu0 0.0
    %7956 = vmatmul.mubr.f32.gmra.mrb[0].mxu0 %v7831
    %v7957 = vpop.f32.mrb[0].mxu0
    %v7958 = vadd.f32 0.0, %v7957
    %v7959 = vpop.f32.mrb[0].mxu0
    %7960 = vmatprep.mubr.f32.mxu0 0.0
    %7961 = vmatmul.mubr.f32.gmra.mrb[0].mxu0 %v7832
    %v7962 = vpop.f32.mrb[0].mxu0
    %v7963 = vadd.f32 0.0, %v7962
    %v7964 = vpop.f32.mrb[0].mxu0
    %7965 = vmatprep.mubr.f32.mxu0 0.0
    %7966 = vmatmul.mubr.f32.gmra.mrb[0].mxu0 %v7833
    %v7967 = vpop.f32.mrb[0].mxu0
    %v7968 = vadd.f32 0.0, %v7967
    %v7969 = vpop.f32.mrb[0].mxu0
    %7970 = vmatprep.mubr.f32.mxu0 0.0
    %7971 = vmatmul.mubr.f32.gmra.mrb[0].mxu0 %v7834
    %v7972 = vpop.f32.mrb[0].mxu0
    %v7973 = vadd.f32 0.0, %v7972
    %v7974 = vpop.f32.mrb[0].mxu0
    %7975 = vmatprep.mubr.f32.mxu0 0.0
    %7976 = vmatmul.mubr.f32.gmra.mrb[0].mxu0 %v7835
    %v7977 = vpop.f32.mrb[0].mxu0
    %v7978 = vadd.f32 0.0, %v7977
    %v7979 = vpop.f32.mrb[0].mxu0
    %7980 = vdwg.mxu0
    %s7981 = scalar_lea.vmem [#allocation7], 128
    %v7982 = vld [vmem:[%s7981] sm:$0xff]
    %v7983 = vld [vmem:[%s7981 + $0x8] sm:$0xff]
    %v7984 = vld [vmem:[%s7981 + $0x10] sm:$0xff]
    %v7985 = vld [vmem:[%s7981 + $0x18] sm:$0xff]
    %v7986 = vld [vmem:[%s7981 + $0x20] sm:$0xff]
    %v7987 = vld [vmem:[%s7981 + $0x28] sm:$0xff]
    %v7988 = vld [vmem:[%s7981 + $0x30] sm:$0xff]
    %v7989 = vld [vmem:[%s7981 + $0x38] sm:$0xff]
    %v7990 = vld [vmem:[%s7981 + $0x40] sm:$0xff]
    %v7991 = vld [vmem:[%s7981 + $0x48] sm:$0xff]
    %v7992 = vld [vmem:[%s7981 + $0x50] sm:$0xff]
    %v7993 = vld [vmem:[%s7981 + $0x58] sm:$0xff]
    %v7994 = vld [vmem:[%s7981 + $0x60] sm:$0xff]
    %v7995 = vld [vmem:[%s7981 + $0x68] sm:$0xff]
    %v7996 = vld [vmem:[%s7981 + $0x70] sm:$0xff]
    %v7997 = vld [vmem:[%s7981 + $0x78] sm:$0xff]
    %7998 = vmatprep.subr.mxu0 0.0
    %7999 = vmatpush1.msra.mxu0 %v7982
    %8000 = vmatprep.subr.mxu0 0.0
    %8001 = vmatpush1.msra.mxu0 %v7983
    %8002 = vmatprep.subr.mxu0 0.0
    %8003 = vmatpush1.msra.mxu0 %v7984
    %8004 = vmatprep.subr.mxu0 0.0
    %8005 = vmatpush1.msra.mxu0 %v7985
    %8006 = vmatprep.subr.mxu0 0.0
    %8007 = vmatpush1.msra.mxu0 %v7986
    %8008 = vmatprep.subr.mxu0 0.0
    %8009 = vmatpush1.msra.mxu0 %v7987
    %8010 = vmatprep.subr.mxu0 0.0
    %8011 = vmatpush1.msra.mxu0 %v7988
    %8012 = vmatprep.subr.mxu0 0.0
    %8013 = vmatpush1.msra.mxu0 %v7989
    %8014 = vmatprep.subr.mxu0 0.0
    %8015 = vmatpush1.msra.mxu0 %v7990
    %8016 = vmatprep.subr.mxu0 0.0
    %8017 = vmatpush1.msra.mxu0 %v7991
    %8018 = vmatprep.subr.mxu0 0.0
    %8019 = vmatpush1.msra.mxu0 %v7992
    %8020 = vmatprep.subr.mxu0 0.0
    %8021 = vmatpush1.msra.mxu0 %v7993
    %8022 = vmatprep.subr.mxu0 0.0
    %8023 = vmatpush1.msra.mxu0 %v7994
    %8024 = vmatprep.subr.mxu0 0.0
    %8025 = vmatpush1.msra.mxu0 %v7995
    %8026 = vmatprep.subr.mxu0 0.0
    %8027 = vmatpush1.msra.mxu0 %v7996
    %8028 = vmatprep.subr.mxu0 0.0
    %8029 = vmatpush1.msra.mxu0 %v7997
    %8030 = vmatprep.subr.mxu0 0.0
    %8031 = vmatpush1.msra.mxu0 0.0
    %8032 = vmatprep.subr.mxu0 0.0
    %8033 = vmatpush1.msra.mxu0 0.0
    %8034 = vmatprep.subr.mxu0 0.0
    %8035 = vmatpush1.msra.mxu0 0.0
    %8036 = vmatprep.subr.mxu0 0.0
    %8037 = vmatpush1.msra.mxu0 0.0
    %8038 = vmatprep.subr.mxu0 0.0
    %8039 = vmatpush1.msra.mxu0 0.0
    %8040 = vmatprep.subr.mxu0 0.0
    %8041 = vmatpush1.msra.mxu0 0.0
    %8042 = vmatprep.subr.mxu0 0.0
    %8043 = vmatpush1.msra.mxu0 0.0
    %8044 = vmatprep.subr.mxu0 0.0
    %8045 = vmatpush1.msra.mxu0 0.0
    %8046 = vmatprep.subr.mxu0 0.0
    %8047 = vmatpush1.msra.mxu0 0.0
    %8048 = vmatprep.subr.mxu0 0.0
    %8049 = vmatpush1.msra.mxu0 0.0
    %8050 = vmatprep.subr.mxu0 0.0
    %8051 = vmatpush1.msra.mxu0 0.0
    %8052 = vmatprep.subr.mxu0 0.0
    %8053 = vmatpush1.msra.mxu0 0.0
    %8054 = vmatprep.subr.mxu0 0.0
    %8055 = vmatpush1.msra.mxu0 0.0
    %8056 = vmatprep.subr.mxu0 0.0
    %8057 = vmatpush1.msra.mxu0 0.0
    %8058 = vmatprep.subr.mxu0 0.0
    %8059 = vmatpush1.msra.mxu0 0.0
    %8060 = vmatprep.subr.mxu0 0.0
    %8061 = vmatpush1.msra.mxu0 0.0
    %8062 = vmatprep.mubr.f32.mxu0 0.0
    %8063 = vmatmul.mubr.f32.gmra.mrb[0].mxu0 %v7903
    %v8064 = vpop.f32.mrb[0].mxu0
    %v8065 = vadd.f32 0.0, %v8064
    %v8066 = vpop.f32.mrb[0].mxu0
    %8067 = vmatprep.mubr.f32.mxu0 0.0
    %8068 = vmatmul.mubr.f32.gmra.mrb[0].mxu0 %v7908
    %v8069 = vpop.f32.mrb[0].mxu0
    %v8070 = vadd.f32 0.0, %v8069
    %v8071 = vpop.f32.mrb[0].mxu0
    %8072 = vmatprep.mubr.f32.mxu0 0.0
    %8073 = vmatmul.mubr.f32.gmra.mrb[0].mxu0 %v7913
    %v8074 = vpop.f32.mrb[0].mxu0
    %v8075 = vadd.f32 0.0, %v8074
    %v8076 = vpop.f32.mrb[0].mxu0
    %8077 = vmatprep.mubr.f32.mxu0 0.0
    %8078 = vmatmul.mubr.f32.gmra.mrb[0].mxu0 %v7918
    %v8079 = vpop.f32.mrb[0].mxu0
    %v8080 = vadd.f32 0.0, %v8079
    %v8081 = vpop.f32.mrb[0].mxu0
    %8082 = vmatprep.mubr.f32.mxu0 0.0
    %8083 = vmatmul.mubr.f32.gmra.mrb[0].mxu0 %v7923
    %v8084 = vpop.f32.mrb[0].mxu0
    %v8085 = vadd.f32 0.0, %v8084
    %v8086 = vpop.f32.mrb[0].mxu0
    %8087 = vmatprep.mubr.f32.mxu0 0.0
    %8088 = vmatmul.mubr.f32.gmra.mrb[0].mxu0 %v7928
    %v8089 = vpop.f32.mrb[0].mxu0
    %v8090 = vadd.f32 0.0, %v8089
    %v8091 = vpop.f32.mrb[0].mxu0
    %8092 = vmatprep.mubr.f32.mxu0 0.0
    %8093 = vmatmul.mubr.f32.gmra.mrb[0].mxu0 %v7933
    %v8094 = vpop.f32.mrb[0].mxu0
    %v8095 = vadd.f32 0.0, %v8094
    %v8096 = vpop.f32.mrb[0].mxu0
    %8097 = vmatprep.mubr.f32.mxu0 0.0
    %8098 = vmatmul.mubr.f32.gmra.mrb[0].mxu0 %v7938
    %v8099 = vpop.f32.mrb[0].mxu0
    %v8100 = vadd.f32 0.0, %v8099
    %v8101 = vpop.f32.mrb[0].mxu0
    %8102 = vmatprep.mubr.f32.mxu0 0.0
    %8103 = vmatmul.mubr.f32.gmra.mrb[0].mxu0 %v7943
    %v8104 = vpop.f32.mrb[0].mxu0
    %v8105 = vadd.f32 0.0, %v8104
    %v8106 = vpop.f32.mrb[0].mxu0
    %8107 = vmatprep.mubr.f32.mxu0 0.0
    %8108 = vmatmul.mubr.f32.gmra.mrb[0].mxu0 %v7948
    %v8109 = vpop.f32.mrb[0].mxu0
    %v8110 = vadd.f32 0.0, %v8109
    %v8111 = vpop.f32.mrb[0].mxu0
    %8112 = vmatprep.mubr.f32.mxu0 0.0
    %8113 = vmatmul.mubr.f32.gmra.mrb[0].mxu0 %v7953
    %v8114 = vpop.f32.mrb[0].mxu0
    %v8115 = vadd.f32 0.0, %v8114
    %v8116 = vpop.f32.mrb[0].mxu0
    %8117 = vmatprep.mubr.f32.mxu0 0.0
    %8118 = vmatmul.mubr.f32.gmra.mrb[0].mxu0 %v7958
    %v8119 = vpop.f32.mrb[0].mxu0
    %v8120 = vadd.f32 0.0, %v8119
    %v8121 = vpop.f32.mrb[0].mxu0
    %8122 = vmatprep.mubr.f32.mxu0 0.0
    %8123 = vmatmul.mubr.f32.gmra.mrb[0].mxu0 %v7963
    %v8124 = vpop.f32.mrb[0].mxu0
    %v8125 = vadd.f32 0.0, %v8124
    %v8126 = vpop.f32.mrb[0].mxu0
    %8127 = vmatprep.mubr.f32.mxu0 0.0
    %8128 = vmatmul.mubr.f32.gmra.mrb[0].mxu0 %v7968
    %v8129 = vpop.f32.mrb[0].mxu0
    %v8130 = vadd.f32 0.0, %v8129
    %v8131 = vpop.f32.mrb[0].mxu0
    %8132 = vmatprep.mubr.f32.mxu0 0.0
    %8133 = vmatmul.mubr.f32.gmra.mrb[0].mxu0 %v7973
    %v8134 = vpop.f32.mrb[0].mxu0
    %v8135 = vadd.f32 0.0, %v8134
    %v8136 = vpop.f32.mrb[0].mxu0
    %8137 = vmatprep.mubr.f32.mxu0 0.0
    %8138 = vmatmul.mubr.f32.gmra.mrb[0].mxu0 %v7978
    %v8139 = vpop.f32.mrb[0].mxu0
    %v8140 = vadd.f32 0.0, %v8139
    %v8141 = vpop.f32.mrb[0].mxu0
    %8142 = vdwg.mxu0
    %v8143 = vadd.f32 %v7803, %v8065
    %v8144 = vadd.f32 %v7804, %v8070
    %v8145 = vadd.f32 %v7805, %v8075
    %v8146 = vadd.f32 %v7806, %v8080
    %v8147 = vadd.f32 %v7807, %v8085
    %v8148 = vadd.f32 %v7808, %v8090
    %v8149 = vadd.f32 %v7809, %v8095
    %v8150 = vadd.f32 %v7810, %v8100
    %v8151 = vadd.f32 %v7811, %v8105
    %v8152 = vadd.f32 %v7812, %v8110
    %v8153 = vadd.f32 %v7813, %v8115
    %v8154 = vadd.f32 %v7814, %v8120
    %v8155 = vadd.f32 %v7815, %v8125
    %v8156 = vadd.f32 %v7816, %v8130
    %v8157 = vadd.f32 %v7817, %v8135
    %v8158 = vadd.f32 %v7818, %v8140
    %v8159 = vtanh.pop %v8143
    %v8160 = vtanh.pop %v8144
    %v8161 = vtanh.pop %v8145
    %v8162 = vtanh.pop %v8146
    %v8163 = vtanh.pop %v8147
    %v8164 = vtanh.pop %v8148
    %v8165 = vtanh.pop %v8149
    %v8166 = vtanh.pop %v8150
    %v8167 = vtanh.pop %v8151
    %v8168 = vtanh.pop %v8152
    %v8169 = vtanh.pop %v8153
    %v8170 = vtanh.pop %v8154
    %v8171 = vtanh.pop %v8155
    %v8172 = vtanh.pop %v8156
    %v8173 = vtanh.pop %v8157
    %v8174 = vtanh.pop %v8158
    %s8175 = scalar_lea.vmem %s10, 256
    %8176 = vst [vmem:[%s8175] sm:$0xff] %v8159
    %8177 = vst [vmem:[%s8175 + $0x8] sm:$0xff] %v8160
    %8178 = vst [vmem:[%s8175 + $0x10] sm:$0xff] %v8161
    %8179 = vst [vmem:[%s8175 + $0x18] sm:$0xff] %v8162
    %8180 = vst [vmem:[%s8175 + $0x20] sm:$0xff] %v8163
    %8181 = vst [vmem:[%s8175 + $0x28] sm:$0xff] %v8164
    %8182 = vst [vmem:[%s8175 + $0x30] sm:$0xff] %v8165
    %8183 = vst [vmem:[%s8175 + $0x38] sm:$0xff] %v8166
    %8184 = vst [vmem:[%s8175 + $0x40] sm:$0xff] %v8167
    %8185 = vst [vmem:[%s8175 + $0x48] sm:$0xff] %v8168
    %8186 = vst [vmem:[%s8175 + $0x50] sm:$0xff] %v8169
    %8187 = vst [vmem:[%s8175 + $0x58] sm:$0xff] %v8170
    %8188 = vst [vmem:[%s8175 + $0x60] sm:$0xff] %v8171
    %8189 = vst [vmem:[%s8175 + $0x68] sm:$0xff] %v8172
    %8190 = vst [vmem:[%s8175 + $0x70] sm:$0xff] %v8173
    %8191 = vst [vmem:[%s8175 + $0x78] sm:$0xff] %v8174
    %v8192 = vld [vmem:[%s5102] sm:$0xff]
    %v8193 = vld [vmem:[%s5102 + $0x8] sm:$0xff]
    %v8194 = vld [vmem:[%s5102 + $0x10] sm:$0xff]
    %v8195 = vld [vmem:[%s5102 + $0x18] sm:$0xff]
    %v8196 = vld [vmem:[%s5102 + $0x20] sm:$0xff]
    %v8197 = vld [vmem:[%s5102 + $0x28] sm:$0xff]
    %v8198 = vld [vmem:[%s5102 + $0x30] sm:$0xff]
    %v8199 = vld [vmem:[%s5102 + $0x38] sm:$0xff]
    %v8200 = vld [vmem:[%s5102 + $0x40] sm:$0xff]
    %v8201 = vld [vmem:[%s5102 + $0x48] sm:$0xff]
    %v8202 = vld [vmem:[%s5102 + $0x50] sm:$0xff]
    %v8203 = vld [vmem:[%s5102 + $0x58] sm:$0xff]
    %v8204 = vld [vmem:[%s5102 + $0x60] sm:$0xff]
    %v8205 = vld [vmem:[%s5102 + $0x68] sm:$0xff]
    %v8206 = vld [vmem:[%s5102 + $0x70] sm:$0xff]
    %v8207 = vld [vmem:[%s5102 + $0x78] sm:$0xff]
    %8208 = vmatprep.subr.mxu0 0.0
    %8209 = vmatpush1.msra.mxu0 %v4099
    %8210 = vmatprep.subr.mxu0 0.0
    %8211 = vmatpush1.msra.mxu0 %v4100
    %8212 = vmatprep.subr.mxu0 0.0
    %8213 = vmatpush1.msra.mxu0 %v4101
    %8214 = vmatprep.subr.mxu0 0.0
    %8215 = vmatpush1.msra.mxu0 %v4102
    %8216 = vmatprep.subr.mxu0 0.0
    %8217 = vmatpush1.msra.mxu0 %v4103
    %8218 = vmatprep.subr.mxu0 0.0
    %8219 = vmatpush1.msra.mxu0 %v4104
    %8220 = vmatprep.subr.mxu0 0.0
    %8221 = vmatpush1.msra.mxu0 %v4105
    %8222 = vmatprep.subr.mxu0 0.0
    %8223 = vmatpush1.msra.mxu0 %v4106
    %8224 = vmatprep.subr.mxu0 0.0
    %8225 = vmatpush1.msra.mxu0 %v4107
    %8226 = vmatprep.subr.mxu0 0.0
    %8227 = vmatpush1.msra.mxu0 %v4108
    %8228 = vmatprep.subr.mxu0 0.0
    %8229 = vmatpush1.msra.mxu0 %v4109
    %8230 = vmatprep.subr.mxu0 0.0
    %8231 = vmatpush1.msra.mxu0 %v4110
    %8232 = vmatprep.subr.mxu0 0.0
    %8233 = vmatpush1.msra.mxu0 %v4111
    %8234 = vmatprep.subr.mxu0 0.0
    %8235 = vmatpush1.msra.mxu0 %v4112
    %8236 = vmatprep.subr.mxu0 0.0
    %8237 = vmatpush1.msra.mxu0 %v4113
    %8238 = vmatprep.subr.mxu0 0.0
    %8239 = vmatpush1.msra.mxu0 %v4114
    %8240 = vmatprep.subr.mxu0 0.0
    %8241 = vmatpush1.msra.mxu0 0.0
    %8242 = vmatprep.subr.mxu0 0.0
    %8243 = vmatpush1.msra.mxu0 0.0
    %8244 = vmatprep.subr.mxu0 0.0
    %8245 = vmatpush1.msra.mxu0 0.0
    %8246 = vmatprep.subr.mxu0 0.0
    %8247 = vmatpush1.msra.mxu0 0.0
    %8248 = vmatprep.subr.mxu0 0.0
    %8249 = vmatpush1.msra.mxu0 0.0
    %8250 = vmatprep.subr.mxu0 0.0
    %8251 = vmatpush1.msra.mxu0 0.0
    %8252 = vmatprep.subr.mxu0 0.0
    %8253 = vmatpush1.msra.mxu0 0.0
    %8254 = vmatprep.subr.mxu0 0.0
    %8255 = vmatpush1.msra.mxu0 0.0
    %8256 = vmatprep.subr.mxu0 0.0
    %8257 = vmatpush1.msra.mxu0 0.0
    %8258 = vmatprep.subr.mxu0 0.0
    %8259 = vmatpush1.msra.mxu0 0.0
    %8260 = vmatprep.subr.mxu0 0.0
    %8261 = vmatpush1.msra.mxu0 0.0
    %8262 = vmatprep.subr.mxu0 0.0
    %8263 = vmatpush1.msra.mxu0 0.0
    %8264 = vmatprep.subr.mxu0 0.0
    %8265 = vmatpush1.msra.mxu0 0.0
    %8266 = vmatprep.subr.mxu0 0.0
    %8267 = vmatpush1.msra.mxu0 0.0
    %8268 = vmatprep.subr.mxu0 0.0
    %8269 = vmatpush1.msra.mxu0 0.0
    %8270 = vmatprep.subr.mxu0 0.0
    %8271 = vmatpush1.msra.mxu0 0.0
    %8272 = vmatprep.mubr.f32.mxu0 0.0
    %8273 = vmatmul.mubr.f32.gmra.mrb[0].mxu0 %v8192
    %v8274 = vpop.f32.mrb[0].mxu0
    %v8275 = vadd.f32 0.0, %v8274
    %v8276 = vpop.f32.mrb[0].mxu0
    %8277 = vmatprep.mubr.f32.mxu0 0.0
    %8278 = vmatmul.mubr.f32.gmra.mrb[0].mxu0 %v8193
    %v8279 = vpop.f32.mrb[0].mxu0
    %v8280 = vadd.f32 0.0, %v8279
    %v8281 = vpop.f32.mrb[0].mxu0
    %8282 = vmatprep.mubr.f32.mxu0 0.0
    %8283 = vmatmul.mubr.f32.gmra.mrb[0].mxu0 %v8194
    %v8284 = vpop.f32.mrb[0].mxu0
    %v8285 = vadd.f32 0.0, %v8284
    %v8286 = vpop.f32.mrb[0].mxu0
    %8287 = vmatprep.mubr.f32.mxu0 0.0
    %8288 = vmatmul.mubr.f32.gmra.mrb[0].mxu0 %v8195
    %v8289 = vpop.f32.mrb[0].mxu0
    %v8290 = vadd.f32 0.0, %v8289
    %v8291 = vpop.f32.mrb[0].mxu0
    %8292 = vmatprep.mubr.f32.mxu0 0.0
    %8293 = vmatmul.mubr.f32.gmra.mrb[0].mxu0 %v8196
    %v8294 = vpop.f32.mrb[0].mxu0
    %v8295 = vadd.f32 0.0, %v8294
    %v8296 = vpop.f32.mrb[0].mxu0
    %8297 = vmatprep.mubr.f32.mxu0 0.0
    %8298 = vmatmul.mubr.f32.gmra.mrb[0].mxu0 %v8197
    %v8299 = vpop.f32.mrb[0].mxu0
    %v8300 = vadd.f32 0.0, %v8299
    %v8301 = vpop.f32.mrb[0].mxu0
    %8302 = vmatprep.mubr.f32.mxu0 0.0
    %8303 = vmatmul.mubr.f32.gmra.mrb[0].mxu0 %v8198
    %v8304 = vpop.f32.mrb[0].mxu0
    %v8305 = vadd.f32 0.0, %v8304
    %v8306 = vpop.f32.mrb[0].mxu0
    %8307 = vmatprep.mubr.f32.mxu0 0.0
    %8308 = vmatmul.mubr.f32.gmra.mrb[0].mxu0 %v8199
    %v8309 = vpop.f32.mrb[0].mxu0
    %v8310 = vadd.f32 0.0, %v8309
    %v8311 = vpop.f32.mrb[0].mxu0
    %8312 = vmatprep.mubr.f32.mxu0 0.0
    %8313 = vmatmul.mubr.f32.gmra.mrb[0].mxu0 %v8200
    %v8314 = vpop.f32.mrb[0].mxu0
    %v8315 = vadd.f32 0.0, %v8314
    %v8316 = vpop.f32.mrb[0].mxu0
    %8317 = vmatprep.mubr.f32.mxu0 0.0
    %8318 = vmatmul.mubr.f32.gmra.mrb[0].mxu0 %v8201
    %v8319 = vpop.f32.mrb[0].mxu0
    %v8320 = vadd.f32 0.0, %v8319
    %v8321 = vpop.f32.mrb[0].mxu0
    %8322 = vmatprep.mubr.f32.mxu0 0.0
    %8323 = vmatmul.mubr.f32.gmra.mrb[0].mxu0 %v8202
    %v8324 = vpop.f32.mrb[0].mxu0
    %v8325 = vadd.f32 0.0, %v8324
    %v8326 = vpop.f32.mrb[0].mxu0
    %8327 = vmatprep.mubr.f32.mxu0 0.0
    %8328 = vmatmul.mubr.f32.gmra.mrb[0].mxu0 %v8203
    %v8329 = vpop.f32.mrb[0].mxu0
    %v8330 = vadd.f32 0.0, %v8329
    %v8331 = vpop.f32.mrb[0].mxu0
    %8332 = vmatprep.mubr.f32.mxu0 0.0
    %8333 = vmatmul.mubr.f32.gmra.mrb[0].mxu0 %v8204
    %v8334 = vpop.f32.mrb[0].mxu0
    %v8335 = vadd.f32 0.0, %v8334
    %v8336 = vpop.f32.mrb[0].mxu0
    %8337 = vmatprep.mubr.f32.mxu0 0.0
    %8338 = vmatmul.mubr.f32.gmra.mrb[0].mxu0 %v8205
    %v8339 = vpop.f32.mrb[0].mxu0
    %v8340 = vadd.f32 0.0, %v8339
    %v8341 = vpop.f32.mrb[0].mxu0
    %8342 = vmatprep.mubr.f32.mxu0 0.0
    %8343 = vmatmul.mubr.f32.gmra.mrb[0].mxu0 %v8206
    %v8344 = vpop.f32.mrb[0].mxu0
    %v8345 = vadd.f32 0.0, %v8344
    %v8346 = vpop.f32.mrb[0].mxu0
    %8347 = vmatprep.mubr.f32.mxu0 0.0
    %8348 = vmatmul.mubr.f32.gmra.mrb[0].mxu0 %v8207
    %v8349 = vpop.f32.mrb[0].mxu0
    %v8350 = vadd.f32 0.0, %v8349
    %v8351 = vpop.f32.mrb[0].mxu0
    %8352 = vdwg.mxu0
    %s8353 = scalar_lea.vmem [#allocation7], 1280
    %v8354 = vld [vmem:[%s8353] sm:$0xff]
    %v8355 = vld [vmem:[%s8353 + $0x8] sm:$0xff]
    %v8356 = vld [vmem:[%s8353 + $0x10] sm:$0xff]
    %v8357 = vld [vmem:[%s8353 + $0x18] sm:$0xff]
    %v8358 = vld [vmem:[%s8353 + $0x20] sm:$0xff]
    %v8359 = vld [vmem:[%s8353 + $0x28] sm:$0xff]
    %v8360 = vld [vmem:[%s8353 + $0x30] sm:$0xff]
    %v8361 = vld [vmem:[%s8353 + $0x38] sm:$0xff]
    %v8362 = vld [vmem:[%s8353 + $0x40] sm:$0xff]
    %v8363 = vld [vmem:[%s8353 + $0x48] sm:$0xff]
    %v8364 = vld [vmem:[%s8353 + $0x50] sm:$0xff]
    %v8365 = vld [vmem:[%s8353 + $0x58] sm:$0xff]
    %v8366 = vld [vmem:[%s8353 + $0x60] sm:$0xff]
    %v8367 = vld [vmem:[%s8353 + $0x68] sm:$0xff]
    %v8368 = vld [vmem:[%s8353 + $0x70] sm:$0xff]
    %v8369 = vld [vmem:[%s8353 + $0x78] sm:$0xff]
    %v8370 = vld [vmem:[%s6460] sm:$0xff]
    %v8371 = vld [vmem:[%s6460 + $0x8] sm:$0xff]
    %v8372 = vld [vmem:[%s6460 + $0x10] sm:$0xff]
    %v8373 = vld [vmem:[%s6460 + $0x18] sm:$0xff]
    %v8374 = vld [vmem:[%s6460 + $0x20] sm:$0xff]
    %v8375 = vld [vmem:[%s6460 + $0x28] sm:$0xff]
    %v8376 = vld [vmem:[%s6460 + $0x30] sm:$0xff]
    %v8377 = vld [vmem:[%s6460 + $0x38] sm:$0xff]
    %v8378 = vld [vmem:[%s6460 + $0x40] sm:$0xff]
    %v8379 = vld [vmem:[%s6460 + $0x48] sm:$0xff]
    %v8380 = vld [vmem:[%s6460 + $0x50] sm:$0xff]
    %v8381 = vld [vmem:[%s6460 + $0x58] sm:$0xff]
    %v8382 = vld [vmem:[%s6460 + $0x60] sm:$0xff]
    %v8383 = vld [vmem:[%s6460 + $0x68] sm:$0xff]
    %v8384 = vld [vmem:[%s6460 + $0x70] sm:$0xff]
    %v8385 = vld [vmem:[%s6460 + $0x78] sm:$0xff]
    %8386 = vmatprep.subr.mxu0 0.0
    %8387 = vmatpush1.msra.mxu0 %v4099
    %8388 = vmatprep.subr.mxu0 0.0
    %8389 = vmatpush1.msra.mxu0 %v4100
    %8390 = vmatprep.subr.mxu0 0.0
    %8391 = vmatpush1.msra.mxu0 %v4101
    %8392 = vmatprep.subr.mxu0 0.0
    %8393 = vmatpush1.msra.mxu0 %v4102
    %8394 = vmatprep.subr.mxu0 0.0
    %8395 = vmatpush1.msra.mxu0 %v4103
    %8396 = vmatprep.subr.mxu0 0.0
    %8397 = vmatpush1.msra.mxu0 %v4104
    %8398 = vmatprep.subr.mxu0 0.0
    %8399 = vmatpush1.msra.mxu0 %v4105
    %8400 = vmatprep.subr.mxu0 0.0
    %8401 = vmatpush1.msra.mxu0 %v4106
    %8402 = vmatprep.subr.mxu0 0.0
    %8403 = vmatpush1.msra.mxu0 %v4107
    %8404 = vmatprep.subr.mxu0 0.0
    %8405 = vmatpush1.msra.mxu0 %v4108
    %8406 = vmatprep.subr.mxu0 0.0
    %8407 = vmatpush1.msra.mxu0 %v4109
    %8408 = vmatprep.subr.mxu0 0.0
    %8409 = vmatpush1.msra.mxu0 %v4110
    %8410 = vmatprep.subr.mxu0 0.0
    %8411 = vmatpush1.msra.mxu0 %v4111
    %8412 = vmatprep.subr.mxu0 0.0
    %8413 = vmatpush1.msra.mxu0 %v4112
    %8414 = vmatprep.subr.mxu0 0.0
    %8415 = vmatpush1.msra.mxu0 %v4113
    %8416 = vmatprep.subr.mxu0 0.0
    %8417 = vmatpush1.msra.mxu0 %v4114
    %8418 = vmatprep.subr.mxu0 0.0
    %8419 = vmatpush1.msra.mxu0 0.0
    %8420 = vmatprep.subr.mxu0 0.0
    %8421 = vmatpush1.msra.mxu0 0.0
    %8422 = vmatprep.subr.mxu0 0.0
    %8423 = vmatpush1.msra.mxu0 0.0
    %8424 = vmatprep.subr.mxu0 0.0
    %8425 = vmatpush1.msra.mxu0 0.0
    %8426 = vmatprep.subr.mxu0 0.0
    %8427 = vmatpush1.msra.mxu0 0.0
    %8428 = vmatprep.subr.mxu0 0.0
    %8429 = vmatpush1.msra.mxu0 0.0
    %8430 = vmatprep.subr.mxu0 0.0
    %8431 = vmatpush1.msra.mxu0 0.0
    %8432 = vmatprep.subr.mxu0 0.0
    %8433 = vmatpush1.msra.mxu0 0.0
    %8434 = vmatprep.subr.mxu0 0.0
    %8435 = vmatpush1.msra.mxu0 0.0
    %8436 = vmatprep.subr.mxu0 0.0
    %8437 = vmatpush1.msra.mxu0 0.0
    %8438 = vmatprep.subr.mxu0 0.0
    %8439 = vmatpush1.msra.mxu0 0.0
    %8440 = vmatprep.subr.mxu0 0.0
    %8441 = vmatpush1.msra.mxu0 0.0
    %8442 = vmatprep.subr.mxu0 0.0
    %8443 = vmatpush1.msra.mxu0 0.0
    %8444 = vmatprep.subr.mxu0 0.0
    %8445 = vmatpush1.msra.mxu0 0.0
    %8446 = vmatprep.subr.mxu0 0.0
    %8447 = vmatpush1.msra.mxu0 0.0
    %8448 = vmatprep.subr.mxu0 0.0
    %8449 = vmatpush1.msra.mxu0 0.0
    %8450 = vmatprep.mubr.f32.mxu0 0.0
    %8451 = vmatmul.mubr.f32.gmra.mrb[0].mxu0 %v8370
    %v8452 = vpop.f32.mrb[0].mxu0
    %v8453 = vadd.f32 0.0, %v8452
    %v8454 = vpop.f32.mrb[0].mxu0
    %8455 = vmatprep.mubr.f32.mxu0 0.0
    %8456 = vmatmul.mubr.f32.gmra.mrb[0].mxu0 %v8371
    %v8457 = vpop.f32.mrb[0].mxu0
    %v8458 = vadd.f32 0.0, %v8457
    %v8459 = vpop.f32.mrb[0].mxu0
    %8460 = vmatprep.mubr.f32.mxu0 0.0
    %8461 = vmatmul.mubr.f32.gmra.mrb[0].mxu0 %v8372
    %v8462 = vpop.f32.mrb[0].mxu0
    %v8463 = vadd.f32 0.0, %v8462
    %v8464 = vpop.f32.mrb[0].mxu0
    %8465 = vmatprep.mubr.f32.mxu0 0.0
    %8466 = vmatmul.mubr.f32.gmra.mrb[0].mxu0 %v8373
    %v8467 = vpop.f32.mrb[0].mxu0
    %v8468 = vadd.f32 0.0, %v8467
    %v8469 = vpop.f32.mrb[0].mxu0
    %8470 = vmatprep.mubr.f32.mxu0 0.0
    %8471 = vmatmul.mubr.f32.gmra.mrb[0].mxu0 %v8374
    %v8472 = vpop.f32.mrb[0].mxu0
    %v8473 = vadd.f32 0.0, %v8472
    %v8474 = vpop.f32.mrb[0].mxu0
    %8475 = vmatprep.mubr.f32.mxu0 0.0
    %8476 = vmatmul.mubr.f32.gmra.mrb[0].mxu0 %v8375
    %v8477 = vpop.f32.mrb[0].mxu0
    %v8478 = vadd.f32 0.0, %v8477
    %v8479 = vpop.f32.mrb[0].mxu0
    %8480 = vmatprep.mubr.f32.mxu0 0.0
    %8481 = vmatmul.mubr.f32.gmra.mrb[0].mxu0 %v8376
    %v8482 = vpop.f32.mrb[0].mxu0
    %v8483 = vadd.f32 0.0, %v8482
    %v8484 = vpop.f32.mrb[0].mxu0
    %8485 = vmatprep.mubr.f32.mxu0 0.0
    %8486 = vmatmul.mubr.f32.gmra.mrb[0].mxu0 %v8377
    %v8487 = vpop.f32.mrb[0].mxu0
    %v8488 = vadd.f32 0.0, %v8487
    %v8489 = vpop.f32.mrb[0].mxu0
    %8490 = vmatprep.mubr.f32.mxu0 0.0
    %8491 = vmatmul.mubr.f32.gmra.mrb[0].mxu0 %v8378
    %v8492 = vpop.f32.mrb[0].mxu0
    %v8493 = vadd.f32 0.0, %v8492
    %v8494 = vpop.f32.mrb[0].mxu0
    %8495 = vmatprep.mubr.f32.mxu0 0.0
    %8496 = vmatmul.mubr.f32.gmra.mrb[0].mxu0 %v8379
    %v8497 = vpop.f32.mrb[0].mxu0
    %v8498 = vadd.f32 0.0, %v8497
    %v8499 = vpop.f32.mrb[0].mxu0
    %8500 = vmatprep.mubr.f32.mxu0 0.0
    %8501 = vmatmul.mubr.f32.gmra.mrb[0].mxu0 %v8380
    %v8502 = vpop.f32.mrb[0].mxu0
    %v8503 = vadd.f32 0.0, %v8502
    %v8504 = vpop.f32.mrb[0].mxu0
    %8505 = vmatprep.mubr.f32.mxu0 0.0
    %8506 = vmatmul.mubr.f32.gmra.mrb[0].mxu0 %v8381
    %v8507 = vpop.f32.mrb[0].mxu0
    %v8508 = vadd.f32 0.0, %v8507
    %v8509 = vpop.f32.mrb[0].mxu0
    %8510 = vmatprep.mubr.f32.mxu0 0.0
    %8511 = vmatmul.mubr.f32.gmra.mrb[0].mxu0 %v8382
    %v8512 = vpop.f32.mrb[0].mxu0
    %v8513 = vadd.f32 0.0, %v8512
    %v8514 = vpop.f32.mrb[0].mxu0
    %8515 = vmatprep.mubr.f32.mxu0 0.0
    %8516 = vmatmul.mubr.f32.gmra.mrb[0].mxu0 %v8383
    %v8517 = vpop.f32.mrb[0].mxu0
    %v8518 = vadd.f32 0.0, %v8517
    %v8519 = vpop.f32.mrb[0].mxu0
    %8520 = vmatprep.mubr.f32.mxu0 0.0
    %8521 = vmatmul.mubr.f32.gmra.mrb[0].mxu0 %v8384
    %v8522 = vpop.f32.mrb[0].mxu0
    %v8523 = vadd.f32 0.0, %v8522
    %v8524 = vpop.f32.mrb[0].mxu0
    %8525 = vmatprep.mubr.f32.mxu0 0.0
    %8526 = vmatmul.mubr.f32.gmra.mrb[0].mxu0 %v8385
    %v8527 = vpop.f32.mrb[0].mxu0
    %v8528 = vadd.f32 0.0, %v8527
    %v8529 = vpop.f32.mrb[0].mxu0
    %8530 = vdwg.mxu0
    %s8531 = scalar_lea.vmem [#allocation7], 1024
    %v8532 = vld [vmem:[%s8531] sm:$0xff]
    %v8533 = vld [vmem:[%s8531 + $0x8] sm:$0xff]
    %v8534 = vld [vmem:[%s8531 + $0x10] sm:$0xff]
    %v8535 = vld [vmem:[%s8531 + $0x18] sm:$0xff]
    %v8536 = vld [vmem:[%s8531 + $0x20] sm:$0xff]
    %v8537 = vld [vmem:[%s8531 + $0x28] sm:$0xff]
    %v8538 = vld [vmem:[%s8531 + $0x30] sm:$0xff]
    %v8539 = vld [vmem:[%s8531 + $0x38] sm:$0xff]
    %v8540 = vld [vmem:[%s8531 + $0x40] sm:$0xff]
    %v8541 = vld [vmem:[%s8531 + $0x48] sm:$0xff]
    %v8542 = vld [vmem:[%s8531 + $0x50] sm:$0xff]
    %v8543 = vld [vmem:[%s8531 + $0x58] sm:$0xff]
    %v8544 = vld [vmem:[%s8531 + $0x60] sm:$0xff]
    %v8545 = vld [vmem:[%s8531 + $0x68] sm:$0xff]
    %v8546 = vld [vmem:[%s8531 + $0x70] sm:$0xff]
    %v8547 = vld [vmem:[%s8531 + $0x78] sm:$0xff]
    %8548 = vmatprep.subr.mxu0 0.0
    %8549 = vmatpush1.msra.mxu0 %v8532
    %8550 = vmatprep.subr.mxu0 0.0
    %8551 = vmatpush1.msra.mxu0 %v8533
    %8552 = vmatprep.subr.mxu0 0.0
    %8553 = vmatpush1.msra.mxu0 %v8534
    %8554 = vmatprep.subr.mxu0 0.0
    %8555 = vmatpush1.msra.mxu0 %v8535
    %8556 = vmatprep.subr.mxu0 0.0
    %8557 = vmatpush1.msra.mxu0 %v8536
    %8558 = vmatprep.subr.mxu0 0.0
    %8559 = vmatpush1.msra.mxu0 %v8537
    %8560 = vmatprep.subr.mxu0 0.0
    %8561 = vmatpush1.msra.mxu0 %v8538
    %8562 = vmatprep.subr.mxu0 0.0
    %8563 = vmatpush1.msra.mxu0 %v8539
    %8564 = vmatprep.subr.mxu0 0.0
    %8565 = vmatpush1.msra.mxu0 %v8540
    %8566 = vmatprep.subr.mxu0 0.0
    %8567 = vmatpush1.msra.mxu0 %v8541
    %8568 = vmatprep.subr.mxu0 0.0
    %8569 = vmatpush1.msra.mxu0 %v8542
    %8570 = vmatprep.subr.mxu0 0.0
    %8571 = vmatpush1.msra.mxu0 %v8543
    %8572 = vmatprep.subr.mxu0 0.0
    %8573 = vmatpush1.msra.mxu0 %v8544
    %8574 = vmatprep.subr.mxu0 0.0
    %8575 = vmatpush1.msra.mxu0 %v8545
    %8576 = vmatprep.subr.mxu0 0.0
    %8577 = vmatpush1.msra.mxu0 %v8546
    %8578 = vmatprep.subr.mxu0 0.0
    %8579 = vmatpush1.msra.mxu0 %v8547
    %8580 = vmatprep.subr.mxu0 0.0
    %8581 = vmatpush1.msra.mxu0 0.0
    %8582 = vmatprep.subr.mxu0 0.0
    %8583 = vmatpush1.msra.mxu0 0.0
    %8584 = vmatprep.subr.mxu0 0.0
    %8585 = vmatpush1.msra.mxu0 0.0
    %8586 = vmatprep.subr.mxu0 0.0
    %8587 = vmatpush1.msra.mxu0 0.0
    %8588 = vmatprep.subr.mxu0 0.0
    %8589 = vmatpush1.msra.mxu0 0.0
    %8590 = vmatprep.subr.mxu0 0.0
    %8591 = vmatpush1.msra.mxu0 0.0
    %8592 = vmatprep.subr.mxu0 0.0
    %8593 = vmatpush1.msra.mxu0 0.0
    %8594 = vmatprep.subr.mxu0 0.0
    %8595 = vmatpush1.msra.mxu0 0.0
    %8596 = vmatprep.subr.mxu0 0.0
    %8597 = vmatpush1.msra.mxu0 0.0
    %8598 = vmatprep.subr.mxu0 0.0
    %8599 = vmatpush1.msra.mxu0 0.0
    %8600 = vmatprep.subr.mxu0 0.0
    %8601 = vmatpush1.msra.mxu0 0.0
    %8602 = vmatprep.subr.mxu0 0.0
    %8603 = vmatpush1.msra.mxu0 0.0
    %8604 = vmatprep.subr.mxu0 0.0
    %8605 = vmatpush1.msra.mxu0 0.0
    %8606 = vmatprep.subr.mxu0 0.0
    %8607 = vmatpush1.msra.mxu0 0.0
    %8608 = vmatprep.subr.mxu0 0.0
    %8609 = vmatpush1.msra.mxu0 0.0
    %8610 = vmatprep.subr.mxu0 0.0
    %8611 = vmatpush1.msra.mxu0 0.0
    %8612 = vmatprep.mubr.f32.mxu0 0.0
    %8613 = vmatmul.mubr.f32.gmra.mrb[0].mxu0 %v8453
    %v8614 = vpop.f32.mrb[0].mxu0
    %v8615 = vadd.f32 0.0, %v8614
    %v8616 = vpop.f32.mrb[0].mxu0
    %8617 = vmatprep.mubr.f32.mxu0 0.0
    %8618 = vmatmul.mubr.f32.gmra.mrb[0].mxu0 %v8458
    %v8619 = vpop.f32.mrb[0].mxu0
    %v8620 = vadd.f32 0.0, %v8619
    %v8621 = vpop.f32.mrb[0].mxu0
    %8622 = vmatprep.mubr.f32.mxu0 0.0
    %8623 = vmatmul.mubr.f32.gmra.mrb[0].mxu0 %v8463
    %v8624 = vpop.f32.mrb[0].mxu0
    %v8625 = vadd.f32 0.0, %v8624
    %v8626 = vpop.f32.mrb[0].mxu0
    %8627 = vmatprep.mubr.f32.mxu0 0.0
    %8628 = vmatmul.mubr.f32.gmra.mrb[0].mxu0 %v8468
    %v8629 = vpop.f32.mrb[0].mxu0
    %v8630 = vadd.f32 0.0, %v8629
    %v8631 = vpop.f32.mrb[0].mxu0
    %8632 = vmatprep.mubr.f32.mxu0 0.0
    %8633 = vmatmul.mubr.f32.gmra.mrb[0].mxu0 %v8473
    %v8634 = vpop.f32.mrb[0].mxu0
    %v8635 = vadd.f32 0.0, %v8634
    %v8636 = vpop.f32.mrb[0].mxu0
    %8637 = vmatprep.mubr.f32.mxu0 0.0
    %8638 = vmatmul.mubr.f32.gmra.mrb[0].mxu0 %v8478
    %v8639 = vpop.f32.mrb[0].mxu0
    %v8640 = vadd.f32 0.0, %v8639
    %v8641 = vpop.f32.mrb[0].mxu0
    %8642 = vmatprep.mubr.f32.mxu0 0.0
    %8643 = vmatmul.mubr.f32.gmra.mrb[0].mxu0 %v8483
    %v8644 = vpop.f32.mrb[0].mxu0
    %v8645 = vadd.f32 0.0, %v8644
    %v8646 = vpop.f32.mrb[0].mxu0
    %8647 = vmatprep.mubr.f32.mxu0 0.0
    %8648 = vmatmul.mubr.f32.gmra.mrb[0].mxu0 %v8488
    %v8649 = vpop.f32.mrb[0].mxu0
    %v8650 = vadd.f32 0.0, %v8649
    %v8651 = vpop.f32.mrb[0].mxu0
    %8652 = vmatprep.mubr.f32.mxu0 0.0
    %8653 = vmatmul.mubr.f32.gmra.mrb[0].mxu0 %v8493
    %v8654 = vpop.f32.mrb[0].mxu0
    %v8655 = vadd.f32 0.0, %v8654
    %v8656 = vpop.f32.mrb[0].mxu0
    %8657 = vmatprep.mubr.f32.mxu0 0.0
    %8658 = vmatmul.mubr.f32.gmra.mrb[0].mxu0 %v8498
    %v8659 = vpop.f32.mrb[0].mxu0
    %v8660 = vadd.f32 0.0, %v8659
    %v8661 = vpop.f32.mrb[0].mxu0
    %8662 = vmatprep.mubr.f32.mxu0 0.0
    %8663 = vmatmul.mubr.f32.gmra.mrb[0].mxu0 %v8503
    %v8664 = vpop.f32.mrb[0].mxu0
    %v8665 = vadd.f32 0.0, %v8664
    %v8666 = vpop.f32.mrb[0].mxu0
    %8667 = vmatprep.mubr.f32.mxu0 0.0
    %8668 = vmatmul.mubr.f32.gmra.mrb[0].mxu0 %v8508
    %v8669 = vpop.f32.mrb[0].mxu0
    %v8670 = vadd.f32 0.0, %v8669
    %v8671 = vpop.f32.mrb[0].mxu0
    %8672 = vmatprep.mubr.f32.mxu0 0.0
    %8673 = vmatmul.mubr.f32.gmra.mrb[0].mxu0 %v8513
    %v8674 = vpop.f32.mrb[0].mxu0
    %v8675 = vadd.f32 0.0, %v8674
    %v8676 = vpop.f32.mrb[0].mxu0
    %8677 = vmatprep.mubr.f32.mxu0 0.0
    %8678 = vmatmul.mubr.f32.gmra.mrb[0].mxu0 %v8518
    %v8679 = vpop.f32.mrb[0].mxu0
    %v8680 = vadd.f32 0.0, %v8679
    %v8681 = vpop.f32.mrb[0].mxu0
    %8682 = vmatprep.mubr.f32.mxu0 0.0
    %8683 = vmatmul.mubr.f32.gmra.mrb[0].mxu0 %v8523
    %v8684 = vpop.f32.mrb[0].mxu0
    %v8685 = vadd.f32 0.0, %v8684
    %v8686 = vpop.f32.mrb[0].mxu0
    %8687 = vmatprep.mubr.f32.mxu0 0.0
    %8688 = vmatmul.mubr.f32.gmra.mrb[0].mxu0 %v8528
    %v8689 = vpop.f32.mrb[0].mxu0
    %v8690 = vadd.f32 0.0, %v8689
    %v8691 = vpop.f32.mrb[0].mxu0
    %8692 = vdwg.mxu0
    %8693 = vmatprep.subr.mxu0 0.0
    %8694 = vmatpush1.msra.mxu0 %v8354
    %8695 = vmatprep.subr.mxu0 0.0
    %8696 = vmatpush1.msra.mxu0 %v8355
    %8697 = vmatprep.subr.mxu0 0.0
    %8698 = vmatpush1.msra.mxu0 %v8356
    %8699 = vmatprep.subr.mxu0 0.0
    %8700 = vmatpush1.msra.mxu0 %v8357
    %8701 = vmatprep.subr.mxu0 0.0
    %8702 = vmatpush1.msra.mxu0 %v8358
    %8703 = vmatprep.subr.mxu0 0.0
    %8704 = vmatpush1.msra.mxu0 %v8359
    %8705 = vmatprep.subr.mxu0 0.0
    %8706 = vmatpush1.msra.mxu0 %v8360
    %8707 = vmatprep.subr.mxu0 0.0
    %8708 = vmatpush1.msra.mxu0 %v8361
    %8709 = vmatprep.subr.mxu0 0.0
    %8710 = vmatpush1.msra.mxu0 %v8362
    %8711 = vmatprep.subr.mxu0 0.0
    %8712 = vmatpush1.msra.mxu0 %v8363
    %8713 = vmatprep.subr.mxu0 0.0
    %8714 = vmatpush1.msra.mxu0 %v8364
    %8715 = vmatprep.subr.mxu0 0.0
    %8716 = vmatpush1.msra.mxu0 %v8365
    %8717 = vmatprep.subr.mxu0 0.0
    %8718 = vmatpush1.msra.mxu0 %v8366
    %8719 = vmatprep.subr.mxu0 0.0
    %8720 = vmatpush1.msra.mxu0 %v8367
    %8721 = vmatprep.subr.mxu0 0.0
    %8722 = vmatpush1.msra.mxu0 %v8368
    %8723 = vmatprep.subr.mxu0 0.0
    %8724 = vmatpush1.msra.mxu0 %v8369
    %8725 = vmatprep.subr.mxu0 0.0
    %8726 = vmatpush1.msra.mxu0 0.0
    %8727 = vmatprep.subr.mxu0 0.0
    %8728 = vmatpush1.msra.mxu0 0.0
    %8729 = vmatprep.subr.mxu0 0.0
    %8730 = vmatpush1.msra.mxu0 0.0
    %8731 = vmatprep.subr.mxu0 0.0
    %8732 = vmatpush1.msra.mxu0 0.0
    %8733 = vmatprep.subr.mxu0 0.0
    %8734 = vmatpush1.msra.mxu0 0.0
    %8735 = vmatprep.subr.mxu0 0.0
    %8736 = vmatpush1.msra.mxu0 0.0
    %8737 = vmatprep.subr.mxu0 0.0
    %8738 = vmatpush1.msra.mxu0 0.0
    %8739 = vmatprep.subr.mxu0 0.0
    %8740 = vmatpush1.msra.mxu0 0.0
    %8741 = vmatprep.subr.mxu0 0.0
    %8742 = vmatpush1.msra.mxu0 0.0
    %8743 = vmatprep.subr.mxu0 0.0
    %8744 = vmatpush1.msra.mxu0 0.0
    %8745 = vmatprep.subr.mxu0 0.0
    %8746 = vmatpush1.msra.mxu0 0.0
    %8747 = vmatprep.subr.mxu0 0.0
    %8748 = vmatpush1.msra.mxu0 0.0
    %8749 = vmatprep.subr.mxu0 0.0
    %8750 = vmatpush1.msra.mxu0 0.0
    %8751 = vmatprep.subr.mxu0 0.0
    %8752 = vmatpush1.msra.mxu0 0.0
    %8753 = vmatprep.subr.mxu0 0.0
    %8754 = vmatpush1.msra.mxu0 0.0
    %8755 = vmatprep.subr.mxu0 0.0
    %8756 = vmatpush1.msra.mxu0 0.0
    %8757 = vmatprep.mubr.f32.mxu0 0.0
    %8758 = vmatmul.mubr.f32.gmra.mrb[0].mxu0 %v8275
    %v8759 = vpop.f32.mrb[0].mxu0
    %v8760 = vadd.f32 %v8615, %v8759
    %v8761 = vpop.f32.mrb[0].mxu0
    %8762 = vmatprep.mubr.f32.mxu0 0.0
    %8763 = vmatmul.mubr.f32.gmra.mrb[0].mxu0 %v8280
    %v8764 = vpop.f32.mrb[0].mxu0
    %v8765 = vadd.f32 %v8620, %v8764
    %v8766 = vpop.f32.mrb[0].mxu0
    %8767 = vmatprep.mubr.f32.mxu0 0.0
    %8768 = vmatmul.mubr.f32.gmra.mrb[0].mxu0 %v8285
    %v8769 = vpop.f32.mrb[0].mxu0
    %v8770 = vadd.f32 %v8625, %v8769
    %v8771 = vpop.f32.mrb[0].mxu0
    %8772 = vmatprep.mubr.f32.mxu0 0.0
    %8773 = vmatmul.mubr.f32.gmra.mrb[0].mxu0 %v8290
    %v8774 = vpop.f32.mrb[0].mxu0
    %v8775 = vadd.f32 %v8630, %v8774
    %v8776 = vpop.f32.mrb[0].mxu0
    %8777 = vmatprep.mubr.f32.mxu0 0.0
    %8778 = vmatmul.mubr.f32.gmra.mrb[0].mxu0 %v8295
    %v8779 = vpop.f32.mrb[0].mxu0
    %v8780 = vadd.f32 %v8635, %v8779
    %v8781 = vpop.f32.mrb[0].mxu0
    %8782 = vmatprep.mubr.f32.mxu0 0.0
    %8783 = vmatmul.mubr.f32.gmra.mrb[0].mxu0 %v8300
    %v8784 = vpop.f32.mrb[0].mxu0
    %v8785 = vadd.f32 %v8640, %v8784
    %v8786 = vpop.f32.mrb[0].mxu0
    %8787 = vmatprep.mubr.f32.mxu0 0.0
    %8788 = vmatmul.mubr.f32.gmra.mrb[0].mxu0 %v8305
    %v8789 = vpop.f32.mrb[0].mxu0
    %v8790 = vadd.f32 %v8645, %v8789
    %v8791 = vpop.f32.mrb[0].mxu0
    %8792 = vmatprep.mubr.f32.mxu0 0.0
    %8793 = vmatmul.mubr.f32.gmra.mrb[0].mxu0 %v8310
    %v8794 = vpop.f32.mrb[0].mxu0
    %v8795 = vadd.f32 %v8650, %v8794
    %v8796 = vpop.f32.mrb[0].mxu0
    %8797 = vmatprep.mubr.f32.mxu0 0.0
    %8798 = vmatmul.mubr.f32.gmra.mrb[0].mxu0 %v8315
    %v8799 = vpop.f32.mrb[0].mxu0
    %v8800 = vadd.f32 %v8655, %v8799
    %v8801 = vpop.f32.mrb[0].mxu0
    %8802 = vmatprep.mubr.f32.mxu0 0.0
    %8803 = vmatmul.mubr.f32.gmra.mrb[0].mxu0 %v8320
    %v8804 = vpop.f32.mrb[0].mxu0
    %v8805 = vadd.f32 %v8660, %v8804
    %v8806 = vpop.f32.mrb[0].mxu0
    %8807 = vmatprep.mubr.f32.mxu0 0.0
    %8808 = vmatmul.mubr.f32.gmra.mrb[0].mxu0 %v8325
    %v8809 = vpop.f32.mrb[0].mxu0
    %v8810 = vadd.f32 %v8665, %v8809
    %v8811 = vpop.f32.mrb[0].mxu0
    %8812 = vmatprep.mubr.f32.mxu0 0.0
    %8813 = vmatmul.mubr.f32.gmra.mrb[0].mxu0 %v8330
    %v8814 = vpop.f32.mrb[0].mxu0
    %v8815 = vadd.f32 %v8670, %v8814
    %v8816 = vpop.f32.mrb[0].mxu0
    %8817 = vmatprep.mubr.f32.mxu0 0.0
    %8818 = vmatmul.mubr.f32.gmra.mrb[0].mxu0 %v8335
    %v8819 = vpop.f32.mrb[0].mxu0
    %v8820 = vadd.f32 %v8675, %v8819
    %v8821 = vpop.f32.mrb[0].mxu0
    %8822 = vmatprep.mubr.f32.mxu0 0.0
    %8823 = vmatmul.mubr.f32.gmra.mrb[0].mxu0 %v8340
    %v8824 = vpop.f32.mrb[0].mxu0
    %v8825 = vadd.f32 %v8680, %v8824
    %v8826 = vpop.f32.mrb[0].mxu0
    %8827 = vmatprep.mubr.f32.mxu0 0.0
    %8828 = vmatmul.mubr.f32.gmra.mrb[0].mxu0 %v8345
    %v8829 = vpop.f32.mrb[0].mxu0
    %v8830 = vadd.f32 %v8685, %v8829
    %v8831 = vpop.f32.mrb[0].mxu0
    %8832 = vmatprep.mubr.f32.mxu0 0.0
    %8833 = vmatmul.mubr.f32.gmra.mrb[0].mxu0 %v8350
    %v8834 = vpop.f32.mrb[0].mxu0
    %v8835 = vadd.f32 %v8690, %v8834
    %v8836 = vpop.f32.mrb[0].mxu0
    %8837 = vdwg.mxu0
    %v8838 = vld [vmem:[%s7819] sm:$0xff]
    %v8839 = vld [vmem:[%s7819 + $0x8] sm:$0xff]
    %v8840 = vld [vmem:[%s7819 + $0x10] sm:$0xff]
    %v8841 = vld [vmem:[%s7819 + $0x18] sm:$0xff]
    %v8842 = vld [vmem:[%s7819 + $0x20] sm:$0xff]
    %v8843 = vld [vmem:[%s7819 + $0x28] sm:$0xff]
    %v8844 = vld [vmem:[%s7819 + $0x30] sm:$0xff]
    %v8845 = vld [vmem:[%s7819 + $0x38] sm:$0xff]
    %v8846 = vld [vmem:[%s7819 + $0x40] sm:$0xff]
    %v8847 = vld [vmem:[%s7819 + $0x48] sm:$0xff]
    %v8848 = vld [vmem:[%s7819 + $0x50] sm:$0xff]
    %v8849 = vld [vmem:[%s7819 + $0x58] sm:$0xff]
    %v8850 = vld [vmem:[%s7819 + $0x60] sm:$0xff]
    %v8851 = vld [vmem:[%s7819 + $0x68] sm:$0xff]
    %v8852 = vld [vmem:[%s7819 + $0x70] sm:$0xff]
    %v8853 = vld [vmem:[%s7819 + $0x78] sm:$0xff]
    %8854 = vmatprep.subr.mxu0 0.0
    %8855 = vmatpush1.msra.mxu0 %v4099
    %8856 = vmatprep.subr.mxu0 0.0
    %8857 = vmatpush1.msra.mxu0 %v4100
    %8858 = vmatprep.subr.mxu0 0.0
    %8859 = vmatpush1.msra.mxu0 %v4101
    %8860 = vmatprep.subr.mxu0 0.0
    %8861 = vmatpush1.msra.mxu0 %v4102
    %8862 = vmatprep.subr.mxu0 0.0
    %8863 = vmatpush1.msra.mxu0 %v4103
    %8864 = vmatprep.subr.mxu0 0.0
    %8865 = vmatpush1.msra.mxu0 %v4104
    %8866 = vmatprep.subr.mxu0 0.0
    %8867 = vmatpush1.msra.mxu0 %v4105
    %8868 = vmatprep.subr.mxu0 0.0
    %8869 = vmatpush1.msra.mxu0 %v4106
    %8870 = vmatprep.subr.mxu0 0.0
    %8871 = vmatpush1.msra.mxu0 %v4107
    %8872 = vmatprep.subr.mxu0 0.0
    %8873 = vmatpush1.msra.mxu0 %v4108
    %8874 = vmatprep.subr.mxu0 0.0
    %8875 = vmatpush1.msra.mxu0 %v4109
    %8876 = vmatprep.subr.mxu0 0.0
    %8877 = vmatpush1.msra.mxu0 %v4110
    %8878 = vmatprep.subr.mxu0 0.0
    %8879 = vmatpush1.msra.mxu0 %v4111
    %8880 = vmatprep.subr.mxu0 0.0
    %8881 = vmatpush1.msra.mxu0 %v4112
    %8882 = vmatprep.subr.mxu0 0.0
    %8883 = vmatpush1.msra.mxu0 %v4113
    %8884 = vmatprep.subr.mxu0 0.0
    %8885 = vmatpush1.msra.mxu0 %v4114
    %8886 = vmatprep.subr.mxu0 0.0
    %8887 = vmatpush1.msra.mxu0 0.0
    %8888 = vmatprep.subr.mxu0 0.0
    %8889 = vmatpush1.msra.mxu0 0.0
    %8890 = vmatprep.subr.mxu0 0.0
    %8891 = vmatpush1.msra.mxu0 0.0
    %8892 = vmatprep.subr.mxu0 0.0
    %8893 = vmatpush1.msra.mxu0 0.0
    %8894 = vmatprep.subr.mxu0 0.0
    %8895 = vmatpush1.msra.mxu0 0.0
    %8896 = vmatprep.subr.mxu0 0.0
    %8897 = vmatpush1.msra.mxu0 0.0
    %8898 = vmatprep.subr.mxu0 0.0
    %8899 = vmatpush1.msra.mxu0 0.0
    %8900 = vmatprep.subr.mxu0 0.0
    %8901 = vmatpush1.msra.mxu0 0.0
    %8902 = vmatprep.subr.mxu0 0.0
    %8903 = vmatpush1.msra.mxu0 0.0
    %8904 = vmatprep.subr.mxu0 0.0
    %8905 = vmatpush1.msra.mxu0 0.0
    %8906 = vmatprep.subr.mxu0 0.0
    %8907 = vmatpush1.msra.mxu0 0.0
    %8908 = vmatprep.subr.mxu0 0.0
    %8909 = vmatpush1.msra.mxu0 0.0
    %8910 = vmatprep.subr.mxu0 0.0
    %8911 = vmatpush1.msra.mxu0 0.0
    %8912 = vmatprep.subr.mxu0 0.0
    %8913 = vmatpush1.msra.mxu0 0.0
    %8914 = vmatprep.subr.mxu0 0.0
    %8915 = vmatpush1.msra.mxu0 0.0
    %8916 = vmatprep.subr.mxu0 0.0
    %8917 = vmatpush1.msra.mxu0 0.0
    %8918 = vmatprep.mubr.f32.mxu0 0.0
    %8919 = vmatmul.mubr.f32.gmra.mrb[0].mxu0 %v8838
    %v8920 = vpop.f32.mrb[0].mxu0
    %v8921 = vadd.f32 0.0, %v8920
    %v8922 = vpop.f32.mrb[0].mxu0
    %8923 = vmatprep.mubr.f32.mxu0 0.0
    %8924 = vmatmul.mubr.f32.gmra.mrb[0].mxu0 %v8839
    %v8925 = vpop.f32.mrb[0].mxu0
    %v8926 = vadd.f32 0.0, %v8925
    %v8927 = vpop.f32.mrb[0].mxu0
    %8928 = vmatprep.mubr.f32.mxu0 0.0
    %8929 = vmatmul.mubr.f32.gmra.mrb[0].mxu0 %v8840
    %v8930 = vpop.f32.mrb[0].mxu0
    %v8931 = vadd.f32 0.0, %v8930
    %v8932 = vpop.f32.mrb[0].mxu0
    %8933 = vmatprep.mubr.f32.mxu0 0.0
    %8934 = vmatmul.mubr.f32.gmra.mrb[0].mxu0 %v8841
    %v8935 = vpop.f32.mrb[0].mxu0
    %v8936 = vadd.f32 0.0, %v8935
    %v8937 = vpop.f32.mrb[0].mxu0
    %8938 = vmatprep.mubr.f32.mxu0 0.0
    %8939 = vmatmul.mubr.f32.gmra.mrb[0].mxu0 %v8842
    %v8940 = vpop.f32.mrb[0].mxu0
    %v8941 = vadd.f32 0.0, %v8940
    %v8942 = vpop.f32.mrb[0].mxu0
    %8943 = vmatprep.mubr.f32.mxu0 0.0
    %8944 = vmatmul.mubr.f32.gmra.mrb[0].mxu0 %v8843
    %v8945 = vpop.f32.mrb[0].mxu0
    %v8946 = vadd.f32 0.0, %v8945
    %v8947 = vpop.f32.mrb[0].mxu0
    %8948 = vmatprep.mubr.f32.mxu0 0.0
    %8949 = vmatmul.mubr.f32.gmra.mrb[0].mxu0 %v8844
    %v8950 = vpop.f32.mrb[0].mxu0
    %v8951 = vadd.f32 0.0, %v8950
    %v8952 = vpop.f32.mrb[0].mxu0
    %8953 = vmatprep.mubr.f32.mxu0 0.0
    %8954 = vmatmul.mubr.f32.gmra.mrb[0].mxu0 %v8845
    %v8955 = vpop.f32.mrb[0].mxu0
    %v8956 = vadd.f32 0.0, %v8955
    %v8957 = vpop.f32.mrb[0].mxu0
    %8958 = vmatprep.mubr.f32.mxu0 0.0
    %8959 = vmatmul.mubr.f32.gmra.mrb[0].mxu0 %v8846
    %v8960 = vpop.f32.mrb[0].mxu0
    %v8961 = vadd.f32 0.0, %v8960
    %v8962 = vpop.f32.mrb[0].mxu0
    %8963 = vmatprep.mubr.f32.mxu0 0.0
    %8964 = vmatmul.mubr.f32.gmra.mrb[0].mxu0 %v8847
    %v8965 = vpop.f32.mrb[0].mxu0
    %v8966 = vadd.f32 0.0, %v8965
    %v8967 = vpop.f32.mrb[0].mxu0
    %8968 = vmatprep.mubr.f32.mxu0 0.0
    %8969 = vmatmul.mubr.f32.gmra.mrb[0].mxu0 %v8848
    %v8970 = vpop.f32.mrb[0].mxu0
    %v8971 = vadd.f32 0.0, %v8970
    %v8972 = vpop.f32.mrb[0].mxu0
    %8973 = vmatprep.mubr.f32.mxu0 0.0
    %8974 = vmatmul.mubr.f32.gmra.mrb[0].mxu0 %v8849
    %v8975 = vpop.f32.mrb[0].mxu0
    %v8976 = vadd.f32 0.0, %v8975
    %v8977 = vpop.f32.mrb[0].mxu0
    %8978 = vmatprep.mubr.f32.mxu0 0.0
    %8979 = vmatmul.mubr.f32.gmra.mrb[0].mxu0 %v8850
    %v8980 = vpop.f32.mrb[0].mxu0
    %v8981 = vadd.f32 0.0, %v8980
    %v8982 = vpop.f32.mrb[0].mxu0
    %8983 = vmatprep.mubr.f32.mxu0 0.0
    %8984 = vmatmul.mubr.f32.gmra.mrb[0].mxu0 %v8851
    %v8985 = vpop.f32.mrb[0].mxu0
    %v8986 = vadd.f32 0.0, %v8985
    %v8987 = vpop.f32.mrb[0].mxu0
    %8988 = vmatprep.mubr.f32.mxu0 0.0
    %8989 = vmatmul.mubr.f32.gmra.mrb[0].mxu0 %v8852
    %v8990 = vpop.f32.mrb[0].mxu0
    %v8991 = vadd.f32 0.0, %v8990
    %v8992 = vpop.f32.mrb[0].mxu0
    %8993 = vmatprep.mubr.f32.mxu0 0.0
    %8994 = vmatmul.mubr.f32.gmra.mrb[0].mxu0 %v8853
    %v8995 = vpop.f32.mrb[0].mxu0
    %v8996 = vadd.f32 0.0, %v8995
    %v8997 = vpop.f32.mrb[0].mxu0
    %8998 = vdwg.mxu0
    %s8999 = scalar_lea.vmem [#allocation7], 256
    %v9000 = vld [vmem:[%s8999] sm:$0xff]
    %v9001 = vld [vmem:[%s8999 + $0x8] sm:$0xff]
    %v9002 = vld [vmem:[%s8999 + $0x10] sm:$0xff]
    %v9003 = vld [vmem:[%s8999 + $0x18] sm:$0xff]
    %v9004 = vld [vmem:[%s8999 + $0x20] sm:$0xff]
    %v9005 = vld [vmem:[%s8999 + $0x28] sm:$0xff]
    %v9006 = vld [vmem:[%s8999 + $0x30] sm:$0xff]
    %v9007 = vld [vmem:[%s8999 + $0x38] sm:$0xff]
    %v9008 = vld [vmem:[%s8999 + $0x40] sm:$0xff]
    %v9009 = vld [vmem:[%s8999 + $0x48] sm:$0xff]
    %v9010 = vld [vmem:[%s8999 + $0x50] sm:$0xff]
    %v9011 = vld [vmem:[%s8999 + $0x58] sm:$0xff]
    %v9012 = vld [vmem:[%s8999 + $0x60] sm:$0xff]
    %v9013 = vld [vmem:[%s8999 + $0x68] sm:$0xff]
    %v9014 = vld [vmem:[%s8999 + $0x70] sm:$0xff]
    %v9015 = vld [vmem:[%s8999 + $0x78] sm:$0xff]
    %9016 = vmatprep.subr.mxu0 0.0
    %9017 = vmatpush1.msra.mxu0 %v9000
    %9018 = vmatprep.subr.mxu0 0.0
    %9019 = vmatpush1.msra.mxu0 %v9001
    %9020 = vmatprep.subr.mxu0 0.0
    %9021 = vmatpush1.msra.mxu0 %v9002
    %9022 = vmatprep.subr.mxu0 0.0
    %9023 = vmatpush1.msra.mxu0 %v9003
    %9024 = vmatprep.subr.mxu0 0.0
    %9025 = vmatpush1.msra.mxu0 %v9004
    %9026 = vmatprep.subr.mxu0 0.0
    %9027 = vmatpush1.msra.mxu0 %v9005
    %9028 = vmatprep.subr.mxu0 0.0
    %9029 = vmatpush1.msra.mxu0 %v9006
    %9030 = vmatprep.subr.mxu0 0.0
    %9031 = vmatpush1.msra.mxu0 %v9007
    %9032 = vmatprep.subr.mxu0 0.0
    %9033 = vmatpush1.msra.mxu0 %v9008
    %9034 = vmatprep.subr.mxu0 0.0
    %9035 = vmatpush1.msra.mxu0 %v9009
    %9036 = vmatprep.subr.mxu0 0.0
    %9037 = vmatpush1.msra.mxu0 %v9010
    %9038 = vmatprep.subr.mxu0 0.0
    %9039 = vmatpush1.msra.mxu0 %v9011
    %9040 = vmatprep.subr.mxu0 0.0
    %9041 = vmatpush1.msra.mxu0 %v9012
    %9042 = vmatprep.subr.mxu0 0.0
    %9043 = vmatpush1.msra.mxu0 %v9013
    %9044 = vmatprep.subr.mxu0 0.0
    %9045 = vmatpush1.msra.mxu0 %v9014
    %9046 = vmatprep.subr.mxu0 0.0
    %9047 = vmatpush1.msra.mxu0 %v9015
    %9048 = vmatprep.subr.mxu0 0.0
    %9049 = vmatpush1.msra.mxu0 0.0
    %9050 = vmatprep.subr.mxu0 0.0
    %9051 = vmatpush1.msra.mxu0 0.0
    %9052 = vmatprep.subr.mxu0 0.0
    %9053 = vmatpush1.msra.mxu0 0.0
    %9054 = vmatprep.subr.mxu0 0.0
    %9055 = vmatpush1.msra.mxu0 0.0
    %9056 = vmatprep.subr.mxu0 0.0
    %9057 = vmatpush1.msra.mxu0 0.0
    %9058 = vmatprep.subr.mxu0 0.0
    %9059 = vmatpush1.msra.mxu0 0.0
    %9060 = vmatprep.subr.mxu0 0.0
    %9061 = vmatpush1.msra.mxu0 0.0
    %9062 = vmatprep.subr.mxu0 0.0
    %9063 = vmatpush1.msra.mxu0 0.0
    %9064 = vmatprep.subr.mxu0 0.0
    %9065 = vmatpush1.msra.mxu0 0.0
    %9066 = vmatprep.subr.mxu0 0.0
    %9067 = vmatpush1.msra.mxu0 0.0
    %9068 = vmatprep.subr.mxu0 0.0
    %9069 = vmatpush1.msra.mxu0 0.0
    %9070 = vmatprep.subr.mxu0 0.0
    %9071 = vmatpush1.msra.mxu0 0.0
    %9072 = vmatprep.subr.mxu0 0.0
    %9073 = vmatpush1.msra.mxu0 0.0
    %9074 = vmatprep.subr.mxu0 0.0
    %9075 = vmatpush1.msra.mxu0 0.0
    %9076 = vmatprep.subr.mxu0 0.0
    %9077 = vmatpush1.msra.mxu0 0.0
    %9078 = vmatprep.subr.mxu0 0.0
    %9079 = vmatpush1.msra.mxu0 0.0
    %9080 = vmatprep.mubr.f32.mxu0 0.0
    %9081 = vmatmul.mubr.f32.gmra.mrb[0].mxu0 %v8921
    %v9082 = vpop.f32.mrb[0].mxu0
    %v9083 = vadd.f32 0.0, %v9082
    %v9084 = vpop.f32.mrb[0].mxu0
    %9085 = vmatprep.mubr.f32.mxu0 0.0
    %9086 = vmatmul.mubr.f32.gmra.mrb[0].mxu0 %v8926
    %v9087 = vpop.f32.mrb[0].mxu0
    %v9088 = vadd.f32 0.0, %v9087
    %v9089 = vpop.f32.mrb[0].mxu0
    %9090 = vmatprep.mubr.f32.mxu0 0.0
    %9091 = vmatmul.mubr.f32.gmra.mrb[0].mxu0 %v8931
    %v9092 = vpop.f32.mrb[0].mxu0
    %v9093 = vadd.f32 0.0, %v9092
    %v9094 = vpop.f32.mrb[0].mxu0
    %9095 = vmatprep.mubr.f32.mxu0 0.0
    %9096 = vmatmul.mubr.f32.gmra.mrb[0].mxu0 %v8936
    %v9097 = vpop.f32.mrb[0].mxu0
    %v9098 = vadd.f32 0.0, %v9097
    %v9099 = vpop.f32.mrb[0].mxu0
    %9100 = vmatprep.mubr.f32.mxu0 0.0
    %9101 = vmatmul.mubr.f32.gmra.mrb[0].mxu0 %v8941
    %v9102 = vpop.f32.mrb[0].mxu0
    %v9103 = vadd.f32 0.0, %v9102
    %v9104 = vpop.f32.mrb[0].mxu0
    %9105 = vmatprep.mubr.f32.mxu0 0.0
    %9106 = vmatmul.mubr.f32.gmra.mrb[0].mxu0 %v8946
    %v9107 = vpop.f32.mrb[0].mxu0
    %v9108 = vadd.f32 0.0, %v9107
    %v9109 = vpop.f32.mrb[0].mxu0
    %9110 = vmatprep.mubr.f32.mxu0 0.0
    %9111 = vmatmul.mubr.f32.gmra.mrb[0].mxu0 %v8951
    %v9112 = vpop.f32.mrb[0].mxu0
    %v9113 = vadd.f32 0.0, %v9112
    %v9114 = vpop.f32.mrb[0].mxu0
    %9115 = vmatprep.mubr.f32.mxu0 0.0
    %9116 = vmatmul.mubr.f32.gmra.mrb[0].mxu0 %v8956
    %v9117 = vpop.f32.mrb[0].mxu0
    %v9118 = vadd.f32 0.0, %v9117
    %v9119 = vpop.f32.mrb[0].mxu0
    %9120 = vmatprep.mubr.f32.mxu0 0.0
    %9121 = vmatmul.mubr.f32.gmra.mrb[0].mxu0 %v8961
    %v9122 = vpop.f32.mrb[0].mxu0
    %v9123 = vadd.f32 0.0, %v9122
    %v9124 = vpop.f32.mrb[0].mxu0
    %9125 = vmatprep.mubr.f32.mxu0 0.0
    %9126 = vmatmul.mubr.f32.gmra.mrb[0].mxu0 %v8966
    %v9127 = vpop.f32.mrb[0].mxu0
    %v9128 = vadd.f32 0.0, %v9127
    %v9129 = vpop.f32.mrb[0].mxu0
    %9130 = vmatprep.mubr.f32.mxu0 0.0
    %9131 = vmatmul.mubr.f32.gmra.mrb[0].mxu0 %v8971
    %v9132 = vpop.f32.mrb[0].mxu0
    %v9133 = vadd.f32 0.0, %v9132
    %v9134 = vpop.f32.mrb[0].mxu0
    %9135 = vmatprep.mubr.f32.mxu0 0.0
    %9136 = vmatmul.mubr.f32.gmra.mrb[0].mxu0 %v8976
    %v9137 = vpop.f32.mrb[0].mxu0
    %v9138 = vadd.f32 0.0, %v9137
    %v9139 = vpop.f32.mrb[0].mxu0
    %9140 = vmatprep.mubr.f32.mxu0 0.0
    %9141 = vmatmul.mubr.f32.gmra.mrb[0].mxu0 %v8981
    %v9142 = vpop.f32.mrb[0].mxu0
    %v9143 = vadd.f32 0.0, %v9142
    %v9144 = vpop.f32.mrb[0].mxu0
    %9145 = vmatprep.mubr.f32.mxu0 0.0
    %9146 = vmatmul.mubr.f32.gmra.mrb[0].mxu0 %v8986
    %v9147 = vpop.f32.mrb[0].mxu0
    %v9148 = vadd.f32 0.0, %v9147
    %v9149 = vpop.f32.mrb[0].mxu0
    %9150 = vmatprep.mubr.f32.mxu0 0.0
    %9151 = vmatmul.mubr.f32.gmra.mrb[0].mxu0 %v8991
    %v9152 = vpop.f32.mrb[0].mxu0
    %v9153 = vadd.f32 0.0, %v9152
    %v9154 = vpop.f32.mrb[0].mxu0
    %9155 = vmatprep.mubr.f32.mxu0 0.0
    %9156 = vmatmul.mubr.f32.gmra.mrb[0].mxu0 %v8996
    %v9157 = vpop.f32.mrb[0].mxu0
    %v9158 = vadd.f32 0.0, %v9157
    %v9159 = vpop.f32.mrb[0].mxu0
    %9160 = vdwg.mxu0
    %v9161 = vadd.f32 %v8760, %v9083
    %v9162 = vadd.f32 %v8765, %v9088
    %v9163 = vadd.f32 %v8770, %v9093
    %v9164 = vadd.f32 %v8775, %v9098
    %v9165 = vadd.f32 %v8780, %v9103
    %v9166 = vadd.f32 %v8785, %v9108
    %v9167 = vadd.f32 %v8790, %v9113
    %v9168 = vadd.f32 %v8795, %v9118
    %v9169 = vadd.f32 %v8800, %v9123
    %v9170 = vadd.f32 %v8805, %v9128
    %v9171 = vadd.f32 %v8810, %v9133
    %v9172 = vadd.f32 %v8815, %v9138
    %v9173 = vadd.f32 %v8820, %v9143
    %v9174 = vadd.f32 %v8825, %v9148
    %v9175 = vadd.f32 %v8830, %v9153
    %v9176 = vadd.f32 %v8835, %v9158
    %s9177 = scalar_lea.vmem %s9, 1024
    %v9178 = vld [vmem:[%s9177] sm:$0xff]
    %v9179 = vld [vmem:[%s9177 + $0x8] sm:$0xff]
    %v9180 = vld [vmem:[%s9177 + $0x10] sm:$0xff]
    %v9181 = vld [vmem:[%s9177 + $0x18] sm:$0xff]
    %v9182 = vld [vmem:[%s9177 + $0x20] sm:$0xff]
    %v9183 = vld [vmem:[%s9177 + $0x28] sm:$0xff]
    %v9184 = vld [vmem:[%s9177 + $0x30] sm:$0xff]
    %v9185 = vld [vmem:[%s9177 + $0x38] sm:$0xff]
    %v9186 = vld [vmem:[%s9177 + $0x40] sm:$0xff]
    %v9187 = vld [vmem:[%s9177 + $0x48] sm:$0xff]
    %v9188 = vld [vmem:[%s9177 + $0x50] sm:$0xff]
    %v9189 = vld [vmem:[%s9177 + $0x58] sm:$0xff]
    %v9190 = vld [vmem:[%s9177 + $0x60] sm:$0xff]
    %v9191 = vld [vmem:[%s9177 + $0x68] sm:$0xff]
    %v9192 = vld [vmem:[%s9177 + $0x70] sm:$0xff]
    %v9193 = vld [vmem:[%s9177 + $0x78] sm:$0xff]
    %9194 = vmatprep.subr.mxu0 0.0
    %9195 = vmatpush1.msra.mxu0 %v4099
    %9196 = vmatprep.subr.mxu0 0.0
    %9197 = vmatpush1.msra.mxu0 %v4100
    %9198 = vmatprep.subr.mxu0 0.0
    %9199 = vmatpush1.msra.mxu0 %v4101
    %9200 = vmatprep.subr.mxu0 0.0
    %9201 = vmatpush1.msra.mxu0 %v4102
    %9202 = vmatprep.subr.mxu0 0.0
    %9203 = vmatpush1.msra.mxu0 %v4103
    %9204 = vmatprep.subr.mxu0 0.0
    %9205 = vmatpush1.msra.mxu0 %v4104
    %9206 = vmatprep.subr.mxu0 0.0
    %9207 = vmatpush1.msra.mxu0 %v4105
    %9208 = vmatprep.subr.mxu0 0.0
    %9209 = vmatpush1.msra.mxu0 %v4106
    %9210 = vmatprep.subr.mxu0 0.0
    %9211 = vmatpush1.msra.mxu0 %v4107
    %9212 = vmatprep.subr.mxu0 0.0
    %9213 = vmatpush1.msra.mxu0 %v4108
    %9214 = vmatprep.subr.mxu0 0.0
    %9215 = vmatpush1.msra.mxu0 %v4109
    %9216 = vmatprep.subr.mxu0 0.0
    %9217 = vmatpush1.msra.mxu0 %v4110
    %9218 = vmatprep.subr.mxu0 0.0
    %9219 = vmatpush1.msra.mxu0 %v4111
    %9220 = vmatprep.subr.mxu0 0.0
    %9221 = vmatpush1.msra.mxu0 %v4112
    %9222 = vmatprep.subr.mxu0 0.0
    %9223 = vmatpush1.msra.mxu0 %v4113
    %9224 = vmatprep.subr.mxu0 0.0
    %9225 = vmatpush1.msra.mxu0 %v4114
    %9226 = vmatprep.subr.mxu0 0.0
    %9227 = vmatpush1.msra.mxu0 0.0
    %9228 = vmatprep.subr.mxu0 0.0
    %9229 = vmatpush1.msra.mxu0 0.0
    %9230 = vmatprep.subr.mxu0 0.0
    %9231 = vmatpush1.msra.mxu0 0.0
    %9232 = vmatprep.subr.mxu0 0.0
    %9233 = vmatpush1.msra.mxu0 0.0
    %9234 = vmatprep.subr.mxu0 0.0
    %9235 = vmatpush1.msra.mxu0 0.0
    %9236 = vmatprep.subr.mxu0 0.0
    %9237 = vmatpush1.msra.mxu0 0.0
    %9238 = vmatprep.subr.mxu0 0.0
    %9239 = vmatpush1.msra.mxu0 0.0
    %9240 = vmatprep.subr.mxu0 0.0
    %9241 = vmatpush1.msra.mxu0 0.0
    %9242 = vmatprep.subr.mxu0 0.0
    %9243 = vmatpush1.msra.mxu0 0.0
    %9244 = vmatprep.subr.mxu0 0.0
    %9245 = vmatpush1.msra.mxu0 0.0
    %9246 = vmatprep.subr.mxu0 0.0
    %9247 = vmatpush1.msra.mxu0 0.0
    %9248 = vmatprep.subr.mxu0 0.0
    %9249 = vmatpush1.msra.mxu0 0.0
    %9250 = vmatprep.subr.mxu0 0.0
    %9251 = vmatpush1.msra.mxu0 0.0
    %9252 = vmatprep.subr.mxu0 0.0
    %9253 = vmatpush1.msra.mxu0 0.0
    %9254 = vmatprep.subr.mxu0 0.0
    %9255 = vmatpush1.msra.mxu0 0.0
    %9256 = vmatprep.subr.mxu0 0.0
    %9257 = vmatpush1.msra.mxu0 0.0
    %9258 = vmatprep.mubr.f32.mxu0 0.0
    %9259 = vmatmul.mubr.f32.gmra.mrb[0].mxu0 %v9178
    %v9260 = vpop.f32.mrb[0].mxu0
    %v9261 = vadd.f32 0.0, %v9260
    %v9262 = vpop.f32.mrb[0].mxu0
    %9263 = vmatprep.mubr.f32.mxu0 0.0
    %9264 = vmatmul.mubr.f32.gmra.mrb[0].mxu0 %v9179
    %v9265 = vpop.f32.mrb[0].mxu0
    %v9266 = vadd.f32 0.0, %v9265
    %v9267 = vpop.f32.mrb[0].mxu0
    %9268 = vmatprep.mubr.f32.mxu0 0.0
    %9269 = vmatmul.mubr.f32.gmra.mrb[0].mxu0 %v9180
    %v9270 = vpop.f32.mrb[0].mxu0
    %v9271 = vadd.f32 0.0, %v9270
    %v9272 = vpop.f32.mrb[0].mxu0
    %9273 = vmatprep.mubr.f32.mxu0 0.0
    %9274 = vmatmul.mubr.f32.gmra.mrb[0].mxu0 %v9181
    %v9275 = vpop.f32.mrb[0].mxu0
    %v9276 = vadd.f32 0.0, %v9275
    %v9277 = vpop.f32.mrb[0].mxu0
    %9278 = vmatprep.mubr.f32.mxu0 0.0
    %9279 = vmatmul.mubr.f32.gmra.mrb[0].mxu0 %v9182
    %v9280 = vpop.f32.mrb[0].mxu0
    %v9281 = vadd.f32 0.0, %v9280
    %v9282 = vpop.f32.mrb[0].mxu0
    %9283 = vmatprep.mubr.f32.mxu0 0.0
    %9284 = vmatmul.mubr.f32.gmra.mrb[0].mxu0 %v9183
    %v9285 = vpop.f32.mrb[0].mxu0
    %v9286 = vadd.f32 0.0, %v9285
    %v9287 = vpop.f32.mrb[0].mxu0
    %9288 = vmatprep.mubr.f32.mxu0 0.0
    %9289 = vmatmul.mubr.f32.gmra.mrb[0].mxu0 %v9184
    %v9290 = vpop.f32.mrb[0].mxu0
    %v9291 = vadd.f32 0.0, %v9290
    %v9292 = vpop.f32.mrb[0].mxu0
    %9293 = vmatprep.mubr.f32.mxu0 0.0
    %9294 = vmatmul.mubr.f32.gmra.mrb[0].mxu0 %v9185
    %v9295 = vpop.f32.mrb[0].mxu0
    %v9296 = vadd.f32 0.0, %v9295
    %v9297 = vpop.f32.mrb[0].mxu0
    %9298 = vmatprep.mubr.f32.mxu0 0.0
    %9299 = vmatmul.mubr.f32.gmra.mrb[0].mxu0 %v9186
    %v9300 = vpop.f32.mrb[0].mxu0
    %v9301 = vadd.f32 0.0, %v9300
    %v9302 = vpop.f32.mrb[0].mxu0
    %9303 = vmatprep.mubr.f32.mxu0 0.0
    %9304 = vmatmul.mubr.f32.gmra.mrb[0].mxu0 %v9187
    %v9305 = vpop.f32.mrb[0].mxu0
    %v9306 = vadd.f32 0.0, %v9305
    %v9307 = vpop.f32.mrb[0].mxu0
    %9308 = vmatprep.mubr.f32.mxu0 0.0
    %9309 = vmatmul.mubr.f32.gmra.mrb[0].mxu0 %v9188
    %v9310 = vpop.f32.mrb[0].mxu0
    %v9311 = vadd.f32 0.0, %v9310
    %v9312 = vpop.f32.mrb[0].mxu0
    %9313 = vmatprep.mubr.f32.mxu0 0.0
    %9314 = vmatmul.mubr.f32.gmra.mrb[0].mxu0 %v9189
    %v9315 = vpop.f32.mrb[0].mxu0
    %v9316 = vadd.f32 0.0, %v9315
    %v9317 = vpop.f32.mrb[0].mxu0
    %9318 = vmatprep.mubr.f32.mxu0 0.0
    %9319 = vmatmul.mubr.f32.gmra.mrb[0].mxu0 %v9190
    %v9320 = vpop.f32.mrb[0].mxu0
    %v9321 = vadd.f32 0.0, %v9320
    %v9322 = vpop.f32.mrb[0].mxu0
    %9323 = vmatprep.mubr.f32.mxu0 0.0
    %9324 = vmatmul.mubr.f32.gmra.mrb[0].mxu0 %v9191
    %v9325 = vpop.f32.mrb[0].mxu0
    %v9326 = vadd.f32 0.0, %v9325
    %v9327 = vpop.f32.mrb[0].mxu0
    %9328 = vmatprep.mubr.f32.mxu0 0.0
    %9329 = vmatmul.mubr.f32.gmra.mrb[0].mxu0 %v9192
    %v9330 = vpop.f32.mrb[0].mxu0
    %v9331 = vadd.f32 0.0, %v9330
    %v9332 = vpop.f32.mrb[0].mxu0
    %9333 = vmatprep.mubr.f32.mxu0 0.0
    %9334 = vmatmul.mubr.f32.gmra.mrb[0].mxu0 %v9193
    %v9335 = vpop.f32.mrb[0].mxu0
    %v9336 = vadd.f32 0.0, %v9335
    %v9337 = vpop.f32.mrb[0].mxu0
    %9338 = vdwg.mxu0
    %v9339 = vld [vmem:[#allocation7] sm:$0xff]
    %v9340 = vld [vmem:[#allocation7 + $0x8] sm:$0xff]
    %v9341 = vld [vmem:[#allocation7 + $0x10] sm:$0xff]
    %v9342 = vld [vmem:[#allocation7 + $0x18] sm:$0xff]
    %v9343 = vld [vmem:[#allocation7 + $0x20] sm:$0xff]
    %v9344 = vld [vmem:[#allocation7 + $0x28] sm:$0xff]
    %v9345 = vld [vmem:[#allocation7 + $0x30] sm:$0xff]
    %v9346 = vld [vmem:[#allocation7 + $0x38] sm:$0xff]
    %v9347 = vld [vmem:[#allocation7 + $0x40] sm:$0xff]
    %v9348 = vld [vmem:[#allocation7 + $0x48] sm:$0xff]
    %v9349 = vld [vmem:[#allocation7 + $0x50] sm:$0xff]
    %v9350 = vld [vmem:[#allocation7 + $0x58] sm:$0xff]
    %v9351 = vld [vmem:[#allocation7 + $0x60] sm:$0xff]
    %v9352 = vld [vmem:[#allocation7 + $0x68] sm:$0xff]
    %v9353 = vld [vmem:[#allocation7 + $0x70] sm:$0xff]
    %v9354 = vld [vmem:[#allocation7 + $0x78] sm:$0xff]
    %9355 = vmatprep.subr.mxu0 0.0
    %9356 = vmatpush1.msra.mxu0 %v9339
    %9357 = vmatprep.subr.mxu0 0.0
    %9358 = vmatpush1.msra.mxu0 %v9340
    %9359 = vmatprep.subr.mxu0 0.0
    %9360 = vmatpush1.msra.mxu0 %v9341
    %9361 = vmatprep.subr.mxu0 0.0
    %9362 = vmatpush1.msra.mxu0 %v9342
    %9363 = vmatprep.subr.mxu0 0.0
    %9364 = vmatpush1.msra.mxu0 %v9343
    %9365 = vmatprep.subr.mxu0 0.0
    %9366 = vmatpush1.msra.mxu0 %v9344
    %9367 = vmatprep.subr.mxu0 0.0
    %9368 = vmatpush1.msra.mxu0 %v9345
    %9369 = vmatprep.subr.mxu0 0.0
    %9370 = vmatpush1.msra.mxu0 %v9346
    %9371 = vmatprep.subr.mxu0 0.0
    %9372 = vmatpush1.msra.mxu0 %v9347
    %9373 = vmatprep.subr.mxu0 0.0
    %9374 = vmatpush1.msra.mxu0 %v9348
    %9375 = vmatprep.subr.mxu0 0.0
    %9376 = vmatpush1.msra.mxu0 %v9349
    %9377 = vmatprep.subr.mxu0 0.0
    %9378 = vmatpush1.msra.mxu0 %v9350
    %9379 = vmatprep.subr.mxu0 0.0
    %9380 = vmatpush1.msra.mxu0 %v9351
    %9381 = vmatprep.subr.mxu0 0.0
    %9382 = vmatpush1.msra.mxu0 %v9352
    %9383 = vmatprep.subr.mxu0 0.0
    %9384 = vmatpush1.msra.mxu0 %v9353
    %9385 = vmatprep.subr.mxu0 0.0
    %9386 = vmatpush1.msra.mxu0 %v9354
    %9387 = vmatprep.subr.mxu0 0.0
    %9388 = vmatpush1.msra.mxu0 0.0
    %9389 = vmatprep.subr.mxu0 0.0
    %9390 = vmatpush1.msra.mxu0 0.0
    %9391 = vmatprep.subr.mxu0 0.0
    %9392 = vmatpush1.msra.mxu0 0.0
    %9393 = vmatprep.subr.mxu0 0.0
    %9394 = vmatpush1.msra.mxu0 0.0
    %9395 = vmatprep.subr.mxu0 0.0
    %9396 = vmatpush1.msra.mxu0 0.0
    %9397 = vmatprep.subr.mxu0 0.0
    %9398 = vmatpush1.msra.mxu0 0.0
    %9399 = vmatprep.subr.mxu0 0.0
    %9400 = vmatpush1.msra.mxu0 0.0
    %9401 = vmatprep.subr.mxu0 0.0
    %9402 = vmatpush1.msra.mxu0 0.0
    %9403 = vmatprep.subr.mxu0 0.0
    %9404 = vmatpush1.msra.mxu0 0.0
    %9405 = vmatprep.subr.mxu0 0.0
    %9406 = vmatpush1.msra.mxu0 0.0
    %9407 = vmatprep.subr.mxu0 0.0
    %9408 = vmatpush1.msra.mxu0 0.0
    %9409 = vmatprep.subr.mxu0 0.0
    %9410 = vmatpush1.msra.mxu0 0.0
    %9411 = vmatprep.subr.mxu0 0.0
    %9412 = vmatpush1.msra.mxu0 0.0
    %9413 = vmatprep.subr.mxu0 0.0
    %9414 = vmatpush1.msra.mxu0 0.0
    %9415 = vmatprep.subr.mxu0 0.0
    %9416 = vmatpush1.msra.mxu0 0.0
    %9417 = vmatprep.subr.mxu0 0.0
    %9418 = vmatpush1.msra.mxu0 0.0
    %9419 = vmatprep.mubr.f32.mxu0 0.0
    %9420 = vmatmul.mubr.f32.gmra.mrb[0].mxu0 %v9261
    %v9421 = vpop.f32.mrb[0].mxu0
    %v9422 = vadd.f32 0.0, %v9421
    %v9423 = vpop.f32.mrb[0].mxu0
    %9424 = vmatprep.mubr.f32.mxu0 0.0
    %9425 = vmatmul.mubr.f32.gmra.mrb[0].mxu0 %v9266
    %v9426 = vpop.f32.mrb[0].mxu0
    %v9427 = vadd.f32 0.0, %v9426
    %v9428 = vpop.f32.mrb[0].mxu0
    %9429 = vmatprep.mubr.f32.mxu0 0.0
    %9430 = vmatmul.mubr.f32.gmra.mrb[0].mxu0 %v9271
    %v9431 = vpop.f32.mrb[0].mxu0
    %v9432 = vadd.f32 0.0, %v9431
    %v9433 = vpop.f32.mrb[0].mxu0
    %9434 = vmatprep.mubr.f32.mxu0 0.0
    %9435 = vmatmul.mubr.f32.gmra.mrb[0].mxu0 %v9276
    %v9436 = vpop.f32.mrb[0].mxu0
    %v9437 = vadd.f32 0.0, %v9436
    %v9438 = vpop.f32.mrb[0].mxu0
    %9439 = vmatprep.mubr.f32.mxu0 0.0
    %9440 = vmatmul.mubr.f32.gmra.mrb[0].mxu0 %v9281
    %v9441 = vpop.f32.mrb[0].mxu0
    %v9442 = vadd.f32 0.0, %v9441
    %v9443 = vpop.f32.mrb[0].mxu0
    %9444 = vmatprep.mubr.f32.mxu0 0.0
    %9445 = vmatmul.mubr.f32.gmra.mrb[0].mxu0 %v9286
    %v9446 = vpop.f32.mrb[0].mxu0
    %v9447 = vadd.f32 0.0, %v9446
    %v9448 = vpop.f32.mrb[0].mxu0
    %9449 = vmatprep.mubr.f32.mxu0 0.0
    %9450 = vmatmul.mubr.f32.gmra.mrb[0].mxu0 %v9291
    %v9451 = vpop.f32.mrb[0].mxu0
    %v9452 = vadd.f32 0.0, %v9451
    %v9453 = vpop.f32.mrb[0].mxu0
    %9454 = vmatprep.mubr.f32.mxu0 0.0
    %9455 = vmatmul.mubr.f32.gmra.mrb[0].mxu0 %v9296
    %v9456 = vpop.f32.mrb[0].mxu0
    %v9457 = vadd.f32 0.0, %v9456
    %v9458 = vpop.f32.mrb[0].mxu0
    %9459 = vmatprep.mubr.f32.mxu0 0.0
    %9460 = vmatmul.mubr.f32.gmra.mrb[0].mxu0 %v9301
    %v9461 = vpop.f32.mrb[0].mxu0
    %v9462 = vadd.f32 0.0, %v9461
    %v9463 = vpop.f32.mrb[0].mxu0
    %9464 = vmatprep.mubr.f32.mxu0 0.0
    %9465 = vmatmul.mubr.f32.gmra.mrb[0].mxu0 %v9306
    %v9466 = vpop.f32.mrb[0].mxu0
    %v9467 = vadd.f32 0.0, %v9466
    %v9468 = vpop.f32.mrb[0].mxu0
    %9469 = vmatprep.mubr.f32.mxu0 0.0
    %9470 = vmatmul.mubr.f32.gmra.mrb[0].mxu0 %v9311
    %v9471 = vpop.f32.mrb[0].mxu0
    %v9472 = vadd.f32 0.0, %v9471
    %v9473 = vpop.f32.mrb[0].mxu0
    %9474 = vmatprep.mubr.f32.mxu0 0.0
    %9475 = vmatmul.mubr.f32.gmra.mrb[0].mxu0 %v9316
    %v9476 = vpop.f32.mrb[0].mxu0
    %v9477 = vadd.f32 0.0, %v9476
    %v9478 = vpop.f32.mrb[0].mxu0
    %9479 = vmatprep.mubr.f32.mxu0 0.0
    %9480 = vmatmul.mubr.f32.gmra.mrb[0].mxu0 %v9321
    %v9481 = vpop.f32.mrb[0].mxu0
    %v9482 = vadd.f32 0.0, %v9481
    %v9483 = vpop.f32.mrb[0].mxu0
    %9484 = vmatprep.mubr.f32.mxu0 0.0
    %9485 = vmatmul.mubr.f32.gmra.mrb[0].mxu0 %v9326
    %v9486 = vpop.f32.mrb[0].mxu0
    %v9487 = vadd.f32 0.0, %v9486
    %v9488 = vpop.f32.mrb[0].mxu0
    %9489 = vmatprep.mubr.f32.mxu0 0.0
    %9490 = vmatmul.mubr.f32.gmra.mrb[0].mxu0 %v9331
    %v9491 = vpop.f32.mrb[0].mxu0
    %v9492 = vadd.f32 0.0, %v9491
    %v9493 = vpop.f32.mrb[0].mxu0
    %9494 = vmatprep.mubr.f32.mxu0 0.0
    %9495 = vmatmul.mubr.f32.gmra.mrb[0].mxu0 %v9336
    %v9496 = vpop.f32.mrb[0].mxu0
    %v9497 = vadd.f32 0.0, %v9496
    %v9498 = vpop.f32.mrb[0].mxu0
    %9499 = vdwg.mxu0
    %v9500 = vadd.f32 %v9161, %v9422
    %v9501 = vadd.f32 %v9162, %v9427
    %v9502 = vadd.f32 %v9163, %v9432
    %v9503 = vadd.f32 %v9164, %v9437
    %v9504 = vadd.f32 %v9165, %v9442
    %v9505 = vadd.f32 %v9166, %v9447
    %v9506 = vadd.f32 %v9167, %v9452
    %v9507 = vadd.f32 %v9168, %v9457
    %v9508 = vadd.f32 %v9169, %v9462
    %v9509 = vadd.f32 %v9170, %v9467
    %v9510 = vadd.f32 %v9171, %v9472
    %v9511 = vadd.f32 %v9172, %v9477
    %v9512 = vadd.f32 %v9173, %v9482
    %v9513 = vadd.f32 %v9174, %v9487
    %v9514 = vadd.f32 %v9175, %v9492
    %v9515 = vadd.f32 %v9176, %v9497
    %v9516 = vtanh.pop %v9500
    %v9517 = vtanh.pop %v9501
    %v9518 = vtanh.pop %v9502
    %v9519 = vtanh.pop %v9503
    %v9520 = vtanh.pop %v9504
    %v9521 = vtanh.pop %v9505
    %v9522 = vtanh.pop %v9506
    %v9523 = vtanh.pop %v9507
    %v9524 = vtanh.pop %v9508
    %v9525 = vtanh.pop %v9509
    %v9526 = vtanh.pop %v9510
    %v9527 = vtanh.pop %v9511
    %v9528 = vtanh.pop %v9512
    %v9529 = vtanh.pop %v9513
    %v9530 = vtanh.pop %v9514
    %v9531 = vtanh.pop %v9515
    %s9532 = scalar_lea.vmem %s10, 384
    %9533 = vst [vmem:[%s9532] sm:$0xff] %v9516
    %9534 = vst [vmem:[%s9532 + $0x8] sm:$0xff] %v9517
    %9535 = vst [vmem:[%s9532 + $0x10] sm:$0xff] %v9518
    %9536 = vst [vmem:[%s9532 + $0x18] sm:$0xff] %v9519
    %9537 = vst [vmem:[%s9532 + $0x20] sm:$0xff] %v9520
    %9538 = vst [vmem:[%s9532 + $0x28] sm:$0xff] %v9521
    %9539 = vst [vmem:[%s9532 + $0x30] sm:$0xff] %v9522
    %9540 = vst [vmem:[%s9532 + $0x38] sm:$0xff] %v9523
    %9541 = vst [vmem:[%s9532 + $0x40] sm:$0xff] %v9524
    %9542 = vst [vmem:[%s9532 + $0x48] sm:$0xff] %v9525
    %9543 = vst [vmem:[%s9532 + $0x50] sm:$0xff] %v9526
    %9544 = vst [vmem:[%s9532 + $0x58] sm:$0xff] %v9527
    %9545 = vst [vmem:[%s9532 + $0x60] sm:$0xff] %v9528
    %9546 = vst [vmem:[%s9532 + $0x68] sm:$0xff] %v9529
    %9547 = vst [vmem:[%s9532 + $0x70] sm:$0xff] %v9530
    %9548 = vst [vmem:[%s9532 + $0x78] sm:$0xff] %v9531
    // Predicated region
    $region58: #{_forward.1} parent=1 // pred_check
      _
    $region59: #{_forward.1} parent=1 // pred_check_branch
      %9550 = sbr.rel (0) target = $region61
    $region60: #{_forward.1} parent=1 // pred_region
      _
    $region61: #{_forward.1} parent=1 // pred_fallthru
      _
    // Predicated region
    $region62: #{_forward.1} parent=1 // pred_check
      _
    $region63: #{_forward.1} parent=1 // pred_check_branch
      %9552 = sbr.rel (0) target = $region65
    $region64: #{_forward.1} parent=1 // pred_region
      _
    $region65: #{_forward.1} parent=1 // pred_fallthru
      _
    %9553 = vsyncpa [#allocation4], 1
    %9554 = vsyncpa [#allocation6], 1
    %9555 = vsyncpa [#allocation9], 1

</llo_original>
